<compile_context>
chip_gen: v7x
topology: tpu7x:2x2x1
jax: 0.10.0
libtpu: 0.0.40
codegen_flags: <defaults>
</compile_context>

<pallas_src>
import functools

import jax
import jax.numpy as jnp
from jax.experimental import pallas as pl
from jax.experimental.pallas import tpu as pltpu


def _silu(z):
    return z * jax.nn.sigmoid(z)


# ---------------------------------------------------------------------------
# Fused forward kernel.
#   Conv activations live as (L*group, C) f32 rows (row = l*group + b, group=8),
#   inside a zero-haloed VMEM scratch, so every conv layer is one im2col matmul
#   with 8-aligned shifted windows. The channel-major flatten is materialized
#   once into a lane-dense (group, L*C) scratch feeding a single chunked fc1 dot
#   whose weight chunks are double-buffered from HBM.
# ---------------------------------------------------------------------------
def _fused_forward_kernel(
    x_ref,                                  # (L*group, Cin)  f32
    c1w_ref, c1b_ref,                       # (K*Cin, Cout) bf16, (1, Cout) f32
    c2w_ref, c2b_ref,
    c3w_ref, c3b_ref,
    c4w_ref, c4b_ref,
    f1w_hbm,                                # (n_chunks, chunk, 512) bf16, HBM (pl.ANY)
    f1b_ref,                                # (1, 512) f32
    f2w_ref, f2b_ref,                       # (512, 64) bf16, (1, 64) f32
    f3w_ref, f3b_ref,                       # (64, seq) bf16, (1, seq) f32
    out_ref,                                # (B, seq) f32
    pad_ref,                                # VMEM (pad_rows, 128) f32: conv halo scratch
    flat_ref,                               # VMEM (group, n_chunks*chunk) f32
    w_buf,                                  # VMEM (2, chunk, 512) bf16: fc1 landing buf
    w_sem,                                  # DMA semaphores (2,)
    *, length, group, act_off, conv_cfg):
    rows = group * length
    c4 = c4w_ref.shape[1]
    n_chunks, chunk, n1 = f1w_hbm.shape

    def fc1_chunk_copy(i):                  # chunk i -> double-buffer slot i % 2
        return pltpu.make_async_copy(f1w_hbm.at[i], w_buf.at[i % 2], w_sem.at[i % 2])

    # Start the first two fc1-weight chunks immediately: they transfer while the
    # conv stack runs; the remaining chunks are prefetched inside the fc1 loop.
    for i in range(min(2, n_chunks)):
        fc1_chunk_copy(i).start()

    # Zero the padded conv scratch once: halo rows stay zero for all four layers
    # (only the activation band is ever rewritten).
    pad_ref[...] = jnp.zeros_like(pad_ref)

    # ---- conv stack: one im2col matmul per layer ------------------------------
    act = x_ref[...]                                        # (rows, Cin) f32
    conv_layers = ((c1w_ref, c1b_ref), (c2w_ref, c2b_ref),
                   (c3w_ref, c3b_ref), (c4w_ref, c4b_ref))
    for (w_ref, b_ref), (ksz, pad) in zip(conv_layers, conv_cfg):
        cin = act.shape[1]
        pad_ref[act_off:act_off + rows, :cin] = act         # 8-aligned band store
        taps = []
        for k in range(ksz):                                # 8-aligned shifted windows
            start = act_off + (k - pad) * group
            taps.append(pad_ref[start:start + rows, :cin])
        lhs = jnp.concatenate(taps, axis=1).astype(jnp.bfloat16)   # (rows, K*Cin)
        z = jnp.dot(lhs, w_ref[...], preferred_element_type=jnp.float32) + b_ref[...]
        act = _silu(z)                                      # (rows, Cout) f32

    # ---- channel-major flatten: (rows, C) -> (group, L*C), feature = l*C + c ---
    flat_ref[...] = jnp.zeros_like(flat_ref)                # also zeroes padded tail lanes
    for l in range(length):
        flat_ref[:, l * c4:(l + 1) * c4] = act[l * group:(l + 1) * group, :]

    # ---- fc1: single K = n_chunks*chunk contraction, chunked to hide its DMA ---
    acc = jnp.zeros((group, n1), jnp.float32)
    for i in range(n_chunks):
        fc1_chunk_copy(i).wait()
        a = flat_ref[:, i * chunk:(i + 1) * chunk].astype(jnp.bfloat16)
        acc += jnp.dot(a, w_buf[i % 2], preferred_element_type=jnp.float32)
        if i + 2 < n_chunks:                                 # prefetch into the slot the
            fc1_chunk_copy(i + 2).start()                    # dot above just finished with
    h = _silu(acc + f1b_ref[...])                            # SiLU(fc1)

    h = jnp.dot(h.astype(jnp.bfloat16), f2w_ref[...],
                preferred_element_type=jnp.float32) + f2b_ref[...]
    h = _silu(h)                                             # SiLU(fc2)

    h = jnp.dot(h.astype(jnp.bfloat16), f3w_ref[...],
                preferred_element_type=jnp.float32) + f3b_ref[...]
    out_ref[...] = h[:out_ref.shape[0], :].astype(out_ref.dtype)   # fc3 (no activation)


# ---------------------------------------------------------------------------
# Wrapper: single fused pallas_call for the whole model.
# ---------------------------------------------------------------------------
def conv1d_model_forward(x_ncl, kp):
    """x_ncl: (B, num_features, L) like the PyTorch module; kp: prepared params."""
    x = x_ncl.astype(jnp.float32)
    B, cin, L = x.shape

    conv_cfg = ((7, 3), (5, 2), (3, 1), (3, 1))              # (kernel_size, padding)
    max_pad = max(p for _, p in conv_cfg)
    group = ((B + 7) // 8) * 8                               # batch rows padded to 8
    rows = group * L
    act_off = max_pad * group                                # 8-aligned left halo
    pad_rows = rows + 2 * act_off

    # NCL -> (L, group, Cin) with batch zero-padded to `group`, flattened to rows
    # ordered l-major / b-minor (row = l*group + b). Only wrapper-side layout op.
    xt = jnp.transpose(x, (2, 0, 1))                         # (L, B, Cin)
    xt = jnp.pad(xt, ((0, 0), (0, group - B), (0, 0)))
    x2 = xt.reshape(rows, cin)

    n_chunks, chunk, n1 = kp["fc1_w"].shape
    n_out = kp["fc3_w"].shape[1]

    def full(a):                                             # whole array VMEM-resident
        return pl.BlockSpec(a.shape, lambda: (0,) * a.ndim)

    kernel = functools.partial(
        _fused_forward_kernel,
        length=L, group=group, act_off=act_off, conv_cfg=conv_cfg)

    # TODO(synk): for large batches add a leading "parallel" batch-block grid axis so
    # both v7x TensorCores engage; at B=2 a single gridless invocation is optimal.
    return pl.pallas_call(
        kernel,
        out_shape=jax.ShapeDtypeStruct((B, n_out), jnp.float32),
        in_specs=[
            full(x2),
            full(kp["conv1_w"]), full(kp["conv1_b"]),
            full(kp["conv2_w"]), full(kp["conv2_b"]),
            full(kp["conv3_w"]), full(kp["conv3_b"]),
            full(kp["conv4_w"]), full(kp["conv4_b"]),
            pl.BlockSpec(memory_space=pl.ANY),               # fc1 weight stays in HBM
            full(kp["fc1_b"]),
            full(kp["fc2_w"]), full(kp["fc2_b"]),
            full(kp["fc3_w"]), full(kp["fc3_b"]),
        ],
        out_specs=pl.BlockSpec((B, n_out), lambda: (0, 0)),
        scratch_shapes=[
            pltpu.VMEM((pad_rows, 128), jnp.float32),               # conv halo scratch
            pltpu.VMEM((group, n_chunks * chunk), jnp.float32),     # flattened activation
            pltpu.VMEM((2, chunk, n1), kp["fc1_w"].dtype),          # fc1 double buffer
            pltpu.SemaphoreType.DMA((2,)),                          # per-slot DMA sems
        ],
        compiler_params=pltpu.CompilerParams(vmem_limit_bytes=16 * 1024 * 1024),
    )(x2,
      kp["conv1_w"], kp["conv1_b"], kp["conv2_w"], kp["conv2_b"],
      kp["conv3_w"], kp["conv3_b"], kp["conv4_w"], kp["conv4_b"],
      kp["fc1_w"], kp["fc1_b"], kp["fc2_w"], kp["fc2_b"],
      kp["fc3_w"], kp["fc3_b"])


# ---------------------------------------------------------------------------
# Parameter creation (PyTorch layouts) and conversion to the kernel layout.
# ---------------------------------------------------------------------------
def init_torch_layout_params(key, num_features, seq_len):
    """Random params in the same layouts nn.Conv1d / nn.Linear use."""
    ks = jax.random.split(key, 14)

    def w(k, shape, scale=0.05):
        return scale * jax.random.normal(k, shape, dtype=jnp.float32)

    return {
        "conv1_w": w(ks[0], (28, num_features, 7)),          # (Cout, Cin, K)
        "conv1_b": w(ks[1], (28,)),
        "conv2_w": w(ks[2], (48, 28, 5)),
        "conv2_b": w(ks[3], (48,)),
        "conv3_w": w(ks[4], (84, 48, 3)),
        "conv3_b": w(ks[5], (84,)),
        "conv4_w": w(ks[6], (108, 84, 3)),
        "conv4_b": w(ks[7], (108,)),
        "fc1_w": w(ks[8], (512, 108 * seq_len), scale=0.02), # (out, in)
        "fc1_b": w(ks[9], (512,)),
        "fc2_w": w(ks[10], (64, 512)),
        "fc2_b": w(ks[11], (64,)),
        "fc3_w": w(ks[12], (seq_len, 64)),
        "fc3_b": w(ks[13], (seq_len,)),
    }


def prepare_params(p, seq_len, fc1_chunk=512):
    """PyTorch-layout params -> kernel layout (bf16 matmul weights, f32 biases)."""
    def conv_w(w):                       # (Cout, Cin, K) -> (K*Cin, Cout), im2col row order
        cout, cin, k = w.shape
        return jnp.transpose(w, (2, 1, 0)).reshape(k * cin, cout).astype(jnp.bfloat16)

    n1 = p["fc1_w"].shape[0]
    c4 = p["conv4_w"].shape[0]
    # PyTorch flattens the conv output channel-major (feature = c*L + l); re-lay
    # the fc1 weight as (L*C, 512) with row = l*C + c to match the kernel's
    # flatten, zero-pad the contraction dim to a multiple of fc1_chunk so chunks
    # are lane-aligned, and split into (n_chunks, chunk, 512) DMA slabs.
    w1 = p["fc1_w"].reshape(n1, c4, seq_len)                 # (512, C, L)
    w1 = jnp.transpose(w1, (2, 1, 0)).reshape(seq_len * c4, n1)   # (L*C, 512)
    n_chunks = -(-w1.shape[0] // fc1_chunk)
    w1 = jnp.pad(w1, ((0, n_chunks * fc1_chunk - w1.shape[0]), (0, 0)))
    w1 = w1.reshape(n_chunks, fc1_chunk, n1).astype(jnp.bfloat16)

    return {
        "conv1_w": conv_w(p["conv1_w"]), "conv1_b": p["conv1_b"].reshape(1, -1),
        "conv2_w": conv_w(p["conv2_w"]), "conv2_b": p["conv2_b"].reshape(1, -1),
        "conv3_w": conv_w(p["conv3_w"]), "conv3_b": p["conv3_b"].reshape(1, -1),
        "conv4_w": conv_w(p["conv4_w"]), "conv4_b": p["conv4_b"].reshape(1, -1),
        "fc1_w": w1,
        "fc1_b": p["fc1_b"].reshape(1, -1),
        "fc2_w": jnp.transpose(p["fc2_w"]).astype(jnp.bfloat16),   # (512, 64)
        "fc2_b": p["fc2_b"].reshape(1, -1),
        "fc3_w": jnp.transpose(p["fc3_w"]).astype(jnp.bfloat16),   # (64, seq_len)
        "fc3_b": p["fc3_b"].reshape(1, -1),
    }


if __name__ == "__main__":
    key = jax.random.PRNGKey(0)
    k_x, k_p = jax.random.split(key)

    batch, num_features, seq_len = 2, 4, 28                  # seq_len ties to fc1 (108*seq_len)
    x = jax.random.normal(k_x, (batch, num_features, seq_len), dtype=jnp.float32)
    params = prepare_params(init_torch_layout_params(k_p, num_features, seq_len), seq_len)

    fwd = jax.jit(conv1d_model_forward)
    out = jax.block_until_ready(fwd(x, params))

    assert out.shape == (batch, seq_len), out.shape
    assert bool(jnp.all(jnp.isfinite(out)))
    print("KERNEL_OK")
</pallas_src>

<mosaic_0001>
module attributes {stable_mosaic.version = 11 : i64} {
  func.func @_fused_forward_kernel(%arg0: memref<224x4xf32, #tpu.memory_space<vmem>>, %arg1: memref<28x28xbf16, #tpu.memory_space<vmem>>, %arg2: memref<1x28xf32, #tpu.memory_space<vmem>>, %arg3: memref<140x48xbf16, #tpu.memory_space<vmem>>, %arg4: memref<1x48xf32, #tpu.memory_space<vmem>>, %arg5: memref<144x84xbf16, #tpu.memory_space<vmem>>, %arg6: memref<1x84xf32, #tpu.memory_space<vmem>>, %arg7: memref<252x108xbf16, #tpu.memory_space<vmem>>, %arg8: memref<1x108xf32, #tpu.memory_space<vmem>>, %arg9: memref<6x512x512xbf16, #tpu.memory_space<any>>, %arg10: memref<1x512xf32, #tpu.memory_space<vmem>>, %arg11: memref<512x64xbf16, #tpu.memory_space<vmem>>, %arg12: memref<1x64xf32, #tpu.memory_space<vmem>>, %arg13: memref<64x28xbf16, #tpu.memory_space<vmem>>, %arg14: memref<1x28xf32, #tpu.memory_space<vmem>>, %arg15: memref<2x28xf32, #tpu.memory_space<vmem>>, %arg16: memref<272x128xf32, #tpu.memory_space<vmem>>, %arg17: memref<8x3072xf32, #tpu.memory_space<vmem>>, %arg18: memref<2x512x512xbf16, #tpu.memory_space<vmem>>, %arg19: memref<2x!tpu.dma_semaphore, #tpu.memory_space<semaphore_mem>>) attributes {dimension_semantics = [], scalar_prefetch = 0 : i64, scratch_operands = 4 : i64, tpu.core_type = #tpu.core_type<tc>} {
    %c0_i32 = arith.constant 0 : i32
    %c0_i32_0 = arith.constant 0 : i32
    %c0_i32_1 = arith.constant 0 : i32
    %c0_i32_2 = arith.constant 0 : i32
    %c0_i32_3 = arith.constant 0 : i32
    %0 = tpu.memref_slice %arg9[%c0_i32, %c0_i32_2, %c0_i32_3] : memref<6x512x512xbf16, #tpu.memory_space<any>> -> memref<1x512x512xbf16, #tpu.memory_space<any>>
    %1 = tpu.memref_squeeze %0 : memref<1x512x512xbf16, #tpu.memory_space<any>> -> memref<512x512xbf16, #tpu.memory_space<any>>
    %c0_i32_4 = arith.constant 0 : i32
    %c0_i32_5 = arith.constant 0 : i32
    %2 = tpu.memref_slice %arg18[%c0_i32_0, %c0_i32_4, %c0_i32_5] : memref<2x512x512xbf16, #tpu.memory_space<vmem>> -> memref<1x512x512xbf16, #tpu.memory_space<vmem>>
    %3 = tpu.memref_squeeze %2 : memref<1x512x512xbf16, #tpu.memory_space<vmem>> -> memref<512x512xbf16, #tpu.memory_space<vmem>>
    %4 = tpu.memref_slice %arg19[%c0_i32_1] : memref<2x!tpu.dma_semaphore, #tpu.memory_space<semaphore_mem>> -> memref<1x!tpu.dma_semaphore, #tpu.memory_space<semaphore_mem>>
    %5 = tpu.memref_squeeze %4 : memref<1x!tpu.dma_semaphore, #tpu.memory_space<semaphore_mem>> -> memref<!tpu.dma_semaphore, #tpu.memory_space<semaphore_mem>>
    tpu.enqueue_dma source(%1 : memref<512x512xbf16, #tpu.memory_space<any>>) target(%3 : memref<512x512xbf16, #tpu.memory_space<vmem>>) target_semaphore(%5 : memref<!tpu.dma_semaphore, #tpu.memory_space<semaphore_mem>>)
    %c1_i32 = arith.constant 1 : i32
    %c1_i32_6 = arith.constant 1 : i32
    %c1_i32_7 = arith.constant 1 : i32
    %c0_i32_8 = arith.constant 0 : i32
    %c0_i32_9 = arith.constant 0 : i32
    %6 = tpu.memref_slice %arg9[%c1_i32, %c0_i32_8, %c0_i32_9] : memref<6x512x512xbf16, #tpu.memory_space<any>> -> memref<1x512x512xbf16, #tpu.memory_space<any>>
    %7 = tpu.memref_squeeze %6 : memref<1x512x512xbf16, #tpu.memory_space<any>> -> memref<512x512xbf16, #tpu.memory_space<any>>
    %c0_i32_10 = arith.constant 0 : i32
    %c0_i32_11 = arith.constant 0 : i32
    %8 = tpu.memref_slice %arg18[%c1_i32_6, %c0_i32_10, %c0_i32_11] : memref<2x512x512xbf16, #tpu.memory_space<vmem>> -> memref<1x512x512xbf16, #tpu.memory_space<vmem>>
    %9 = tpu.memref_squeeze %8 : memref<1x512x512xbf16, #tpu.memory_space<vmem>> -> memref<512x512xbf16, #tpu.memory_space<vmem>>
    %10 = tpu.memref_slice %arg19[%c1_i32_7] : memref<2x!tpu.dma_semaphore, #tpu.memory_space<semaphore_mem>> -> memref<1x!tpu.dma_semaphore, #tpu.memory_space<semaphore_mem>>
    %11 = tpu.memref_squeeze %10 : memref<1x!tpu.dma_semaphore, #tpu.memory_space<semaphore_mem>> -> memref<!tpu.dma_semaphore, #tpu.memory_space<semaphore_mem>>
    tpu.enqueue_dma source(%7 : memref<512x512xbf16, #tpu.memory_space<any>>) target(%9 : memref<512x512xbf16, #tpu.memory_space<vmem>>) target_semaphore(%11 : memref<!tpu.dma_semaphore, #tpu.memory_space<semaphore_mem>>)
    %cst = arith.constant 0.000000e+00 : f32
    %12 = vector.broadcast %cst : f32 to vector<272x128xf32>
    %c0 = arith.constant 0 : index
    %c0_12 = arith.constant 0 : index
    %13 = vector.load %arg16[%c0, %c0_12] : memref<272x128xf32, #tpu.memory_space<vmem>>, vector<272x128xf32>
    tpu.vector_store %arg16[%c0, %c0_12], %12 {strides = array<i32>} : memref<272x128xf32, #tpu.memory_space<vmem>>, vector<272x128xf32>,
    %c0_13 = arith.constant 0 : index
    %c0_14 = arith.constant 0 : index
    %14 = vector.load %arg0[%c0_13, %c0_14] : memref<224x4xf32, #tpu.memory_space<vmem>>, vector<224x4xf32>
    %c24 = arith.constant 24 : index
    %c0_15 = arith.constant 0 : index
    %15 = vector.load %arg16[%c24, %c0_15] : memref<272x128xf32, #tpu.memory_space<vmem>>, vector<224x4xf32>
    tpu.vector_store %arg16[%c24, %c0_15], %14 {strides = array<i32>} : memref<272x128xf32, #tpu.memory_space<vmem>>, vector<224x4xf32>,
    %c0_16 = arith.constant 0 : index
    %c0_17 = arith.constant 0 : index
    %16 = vector.load %arg16[%c0_16, %c0_17] : memref<272x128xf32, #tpu.memory_space<vmem>>, vector<224x4xf32>
    %c8 = arith.constant 8 : index
    %c0_18 = arith.constant 0 : index
    %17 = vector.load %arg16[%c8, %c0_18] : memref<272x128xf32, #tpu.memory_space<vmem>>, vector<224x4xf32>
    %c16 = arith.constant 16 : index
    %c0_19 = arith.constant 0 : index
    %18 = vector.load %arg16[%c16, %c0_19] : memref<272x128xf32, #tpu.memory_space<vmem>>, vector<224x4xf32>
    %c24_20 = arith.constant 24 : index
    %c0_21 = arith.constant 0 : index
    %19 = vector.load %arg16[%c24_20, %c0_21] : memref<272x128xf32, #tpu.memory_space<vmem>>, vector<224x4xf32>
    %c32 = arith.constant 32 : index
    %c0_22 = arith.constant 0 : index
    %20 = vector.load %arg16[%c32, %c0_22] : memref<272x128xf32, #tpu.memory_space<vmem>>, vector<224x4xf32>
    %c40 = arith.constant 40 : index
    %c0_23 = arith.constant 0 : index
    %21 = vector.load %arg16[%c40, %c0_23] : memref<272x128xf32, #tpu.memory_space<vmem>>, vector<224x4xf32>
    %c48 = arith.constant 48 : index
    %c0_24 = arith.constant 0 : index
    %22 = vector.load %arg16[%c48, %c0_24] : memref<272x128xf32, #tpu.memory_space<vmem>>, vector<224x4xf32>
    %23 = tpu.concatenate %16, %17, %18, %19, %20, %21, %22 in 1 : vector<224x4xf32>, vector<224x4xf32>, vector<224x4xf32>, vector<224x4xf32>, vector<224x4xf32>, vector<224x4xf32>, vector<224x4xf32> -> vector<224x28xf32>
    %24 = arith.truncf %23 : vector<224x28xf32> to vector<224x28xbf16>
    %c0_25 = arith.constant 0 : index
    %c0_26 = arith.constant 0 : index
    %25 = vector.load %arg1[%c0_25, %c0_26] : memref<28x28xbf16, #tpu.memory_space<vmem>>, vector<28x28xbf16>
    %cst_27 = arith.constant dense<0.000000e+00> : vector<224x28xf32>
    %26 = tpu.matmul %24, %25, %cst_27 {dimension_numbers = #tpu.dot_dimension_numbers<[1], [0], [0], [1], [0, 0, 1, 1], [], []>} : vector<224x28xbf16>, vector<28x28xbf16>, vector<224x28xf32> -> vector<224x28xf32>
    %c0_28 = arith.constant 0 : index
    %c0_29 = arith.constant 0 : index
    %27 = vector.load %arg2[%c0_28, %c0_29] : memref<1x28xf32, #tpu.memory_space<vmem>>, vector<1x28xf32>
    %28 = vector.broadcast %27 : vector<1x28xf32> to vector<224x28xf32>
    %29 = arith.addf %26, %28 : vector<224x28xf32>
    %30 = arith.negf %29 : vector<224x28xf32>
    %31 = math.exp %30 : vector<224x28xf32>
    %cst_30 = arith.constant 1.000000e+00 : f32
    %32 = vector.broadcast %cst_30 : f32 to vector<224x28xf32>
    %33 = arith.addf %32, %31 : vector<224x28xf32>
    %34 = arith.divf %32, %33 : vector<224x28xf32>
    %35 = arith.mulf %29, %34 : vector<224x28xf32>
    %c24_31 = arith.constant 24 : index
    %c0_32 = arith.constant 0 : index
    %36 = vector.load %arg16[%c24_31, %c0_32] : memref<272x128xf32, #tpu.memory_space<vmem>>, vector<224x28xf32>
    tpu.vector_store %arg16[%c24_31, %c0_32], %35 {strides = array<i32>} : memref<272x128xf32, #tpu.memory_space<vmem>>, vector<224x28xf32>,
    %c8_33 = arith.constant 8 : index
    %c0_34 = arith.constant 0 : index
    %37 = vector.load %arg16[%c8_33, %c0_34] : memref<272x128xf32, #tpu.memory_space<vmem>>, vector<224x28xf32>
    %c16_35 = arith.constant 16 : index
    %c0_36 = arith.constant 0 : index
    %38 = vector.load %arg16[%c16_35, %c0_36] : memref<272x128xf32, #tpu.memory_space<vmem>>, vector<224x28xf32>
    %c24_37 = arith.constant 24 : index
    %c0_38 = arith.constant 0 : index
    %39 = vector.load %arg16[%c24_37, %c0_38] : memref<272x128xf32, #tpu.memory_space<vmem>>, vector<224x28xf32>
    %c32_39 = arith.constant 32 : index
    %c0_40 = arith.constant 0 : index
    %40 = vector.load %arg16[%c32_39, %c0_40] : memref<272x128xf32, #tpu.memory_space<vmem>>, vector<224x28xf32>
    %c40_41 = arith.constant 40 : index
    %c0_42 = arith.constant 0 : index
    %41 = vector.load %arg16[%c40_41, %c0_42] : memref<272x128xf32, #tpu.memory_space<vmem>>, vector<224x28xf32>
    %42 = tpu.concatenate %37, %38, %39, %40, %41 in 1 : vector<224x28xf32>, vector<224x28xf32>, vector<224x28xf32>, vector<224x28xf32>, vector<224x28xf32> -> vector<224x140xf32>
    %43 = arith.truncf %42 : vector<224x140xf32> to vector<224x140xbf16>
    %c0_43 = arith.constant 0 : index
    %c0_44 = arith.constant 0 : index
    %44 = vector.load %arg3[%c0_43, %c0_44] : memref<140x48xbf16, #tpu.memory_space<vmem>>, vector<140x48xbf16>
    %cst_45 = arith.constant dense<0.000000e+00> : vector<224x48xf32>
    %45 = tpu.matmul %43, %44, %cst_45 {dimension_numbers = #tpu.dot_dimension_numbers<[1], [0], [0], [1], [0, 0, 1, 1], [], []>} : vector<224x140xbf16>, vector<140x48xbf16>, vector<224x48xf32> -> vector<224x48xf32>
    %c0_46 = arith.constant 0 : index
    %c0_47 = arith.constant 0 : index
    %46 = vector.load %arg4[%c0_46, %c0_47] : memref<1x48xf32, #tpu.memory_space<vmem>>, vector<1x48xf32>
    %47 = vector.broadcast %46 : vector<1x48xf32> to vector<224x48xf32>
    %48 = arith.addf %45, %47 : vector<224x48xf32>
    %49 = arith.negf %48 : vector<224x48xf32>
    %50 = math.exp %49 : vector<224x48xf32>
    %cst_48 = arith.constant 1.000000e+00 : f32
    %51 = vector.broadcast %cst_48 : f32 to vector<224x48xf32>
    %52 = arith.addf %51, %50 : vector<224x48xf32>
    %53 = arith.divf %51, %52 : vector<224x48xf32>
    %54 = arith.mulf %48, %53 : vector<224x48xf32>
    %c24_49 = arith.constant 24 : index
    %c0_50 = arith.constant 0 : index
    %55 = vector.load %arg16[%c24_49, %c0_50] : memref<272x128xf32, #tpu.memory_space<vmem>>, vector<224x48xf32>
    tpu.vector_store %arg16[%c24_49, %c0_50], %54 {strides = array<i32>} : memref<272x128xf32, #tpu.memory_space<vmem>>, vector<224x48xf32>,
    %c16_51 = arith.constant 16 : index
    %c0_52 = arith.constant 0 : index
    %56 = vector.load %arg16[%c16_51, %c0_52] : memref<272x128xf32, #tpu.memory_space<vmem>>, vector<224x48xf32>
    %c24_53 = arith.constant 24 : index
    %c0_54 = arith.constant 0 : index
    %57 = vector.load %arg16[%c24_53, %c0_54] : memref<272x128xf32, #tpu.memory_space<vmem>>, vector<224x48xf32>
    %c32_55 = arith.constant 32 : index
    %c0_56 = arith.constant 0 : index
    %58 = vector.load %arg16[%c32_55, %c0_56] : memref<272x128xf32, #tpu.memory_space<vmem>>, vector<224x48xf32>
    %59 = tpu.concatenate %56, %57, %58 in 1 : vector<224x48xf32>, vector<224x48xf32>, vector<224x48xf32> -> vector<224x144xf32>
    %60 = arith.truncf %59 : vector<224x144xf32> to vector<224x144xbf16>
    %c0_57 = arith.constant 0 : index
    %c0_58 = arith.constant 0 : index
    %61 = vector.load %arg5[%c0_57, %c0_58] : memref<144x84xbf16, #tpu.memory_space<vmem>>, vector<144x84xbf16>
    %cst_59 = arith.constant dense<0.000000e+00> : vector<224x84xf32>
    %62 = tpu.matmul %60, %61, %cst_59 {dimension_numbers = #tpu.dot_dimension_numbers<[1], [0], [0], [1], [0, 0, 1, 1], [], []>} : vector<224x144xbf16>, vector<144x84xbf16>, vector<224x84xf32> -> vector<224x84xf32>
    %c0_60 = arith.constant 0 : index
    %c0_61 = arith.constant 0 : index
    %63 = vector.load %arg6[%c0_60, %c0_61] : memref<1x84xf32, #tpu.memory_space<vmem>>, vector<1x84xf32>
    %64 = vector.broadcast %63 : vector<1x84xf32> to vector<224x84xf32>
    %65 = arith.addf %62, %64 : vector<224x84xf32>
    %66 = arith.negf %65 : vector<224x84xf32>
    %67 = math.exp %66 : vector<224x84xf32>
    %cst_62 = arith.constant 1.000000e+00 : f32
    %68 = vector.broadcast %cst_62 : f32 to vector<224x84xf32>
    %69 = arith.addf %68, %67 : vector<224x84xf32>
    %70 = arith.divf %68, %69 : vector<224x84xf32>
    %71 = arith.mulf %65, %70 : vector<224x84xf32>
    %c24_63 = arith.constant 24 : index
    %c0_64 = arith.constant 0 : index
    %72 = vector.load %arg16[%c24_63, %c0_64] : memref<272x128xf32, #tpu.memory_space<vmem>>, vector<224x84xf32>
    tpu.vector_store %arg16[%c24_63, %c0_64], %71 {strides = array<i32>} : memref<272x128xf32, #tpu.memory_space<vmem>>, vector<224x84xf32>,
    %c16_65 = arith.constant 16 : index
    %c0_66 = arith.constant 0 : index
    %73 = vector.load %arg16[%c16_65, %c0_66] : memref<272x128xf32, #tpu.memory_space<vmem>>, vector<224x84xf32>
    %c24_67 = arith.constant 24 : index
    %c0_68 = arith.constant 0 : index
    %74 = vector.load %arg16[%c24_67, %c0_68] : memref<272x128xf32, #tpu.memory_space<vmem>>, vector<224x84xf32>
    %c32_69 = arith.constant 32 : index
    %c0_70 = arith.constant 0 : index
    %75 = vector.load %arg16[%c32_69, %c0_70] : memref<272x128xf32, #tpu.memory_space<vmem>>, vector<224x84xf32>
    %76 = tpu.concatenate %73, %74, %75 in 1 : vector<224x84xf32>, vector<224x84xf32>, vector<224x84xf32> -> vector<224x252xf32>
    %77 = arith.truncf %76 : vector<224x252xf32> to vector<224x252xbf16>
    %c0_71 = arith.constant 0 : index
    %c0_72 = arith.constant 0 : index
    %78 = vector.load %arg7[%c0_71, %c0_72] : memref<252x108xbf16, #tpu.memory_space<vmem>>, vector<252x108xbf16>
    %cst_73 = arith.constant dense<0.000000e+00> : vector<224x108xf32>
    %79 = tpu.matmul %77, %78, %cst_73 {dimension_numbers = #tpu.dot_dimension_numbers<[1], [0], [0], [1], [0, 0, 1, 1], [], []>} : vector<224x252xbf16>, vector<252x108xbf16>, vector<224x108xf32> -> vector<224x108xf32>
    %c0_74 = arith.constant 0 : index
    %c0_75 = arith.constant 0 : index
    %80 = vector.load %arg8[%c0_74, %c0_75] : memref<1x108xf32, #tpu.memory_space<vmem>>, vector<1x108xf32>
    %81 = vector.broadcast %80 : vector<1x108xf32> to vector<224x108xf32>
    %82 = arith.addf %79, %81 : vector<224x108xf32>
    %83 = arith.negf %82 : vector<224x108xf32>
    %84 = math.exp %83 : vector<224x108xf32>
    %cst_76 = arith.constant 1.000000e+00 : f32
    %85 = vector.broadcast %cst_76 : f32 to vector<224x108xf32>
    %86 = arith.addf %85, %84 : vector<224x108xf32>
    %87 = arith.divf %85, %86 : vector<224x108xf32>
    %88 = arith.mulf %82, %87 : vector<224x108xf32>
    %cst_77 = arith.constant 0.000000e+00 : f32
    %89 = vector.broadcast %cst_77 : f32 to vector<8x3072xf32>
    %c0_78 = arith.constant 0 : index
    %c0_79 = arith.constant 0 : index
    %90 = vector.load %arg17[%c0_78, %c0_79] : memref<8x3072xf32, #tpu.memory_space<vmem>>, vector<8x3072xf32>
    tpu.vector_store %arg17[%c0_78, %c0_79], %89 {strides = array<i32>} : memref<8x3072xf32, #tpu.memory_space<vmem>>, vector<8x3072xf32>,
    %91 = vector.extract_strided_slice %88 {offsets = [0, 0], sizes = [8, 108], strides = [1, 1]} : vector<224x108xf32> to vector<8x108xf32>
    %c0_80 = arith.constant 0 : index
    %c0_81 = arith.constant 0 : index
    %92 = vector.load %arg17[%c0_80, %c0_81] : memref<8x3072xf32, #tpu.memory_space<vmem>>, vector<8x108xf32>
    tpu.vector_store %arg17[%c0_80, %c0_81], %91 {strides = array<i32>} : memref<8x3072xf32, #tpu.memory_space<vmem>>, vector<8x108xf32>,
    %93 = vector.extract_strided_slice %88 {offsets = [8, 0], sizes = [8, 108], strides = [1, 1]} : vector<224x108xf32> to vector<8x108xf32>
    %c0_82 = arith.constant 0 : index
    %c108 = arith.constant 108 : index
    %94 = vector.load %arg17[%c0_82, %c108] : memref<8x3072xf32, #tpu.memory_space<vmem>>, vector<8x108xf32>
    tpu.vector_store %arg17[%c0_82, %c108], %93 {strides = array<i32>} : memref<8x3072xf32, #tpu.memory_space<vmem>>, vector<8x108xf32>,
    %95 = vector.extract_strided_slice %88 {offsets = [16, 0], sizes = [8, 108], strides = [1, 1]} : vector<224x108xf32> to vector<8x108xf32>
    %c0_83 = arith.constant 0 : index
    %c216 = arith.constant 216 : index
    %96 = vector.load %arg17[%c0_83, %c216] : memref<8x3072xf32, #tpu.memory_space<vmem>>, vector<8x108xf32>
    tpu.vector_store %arg17[%c0_83, %c216], %95 {strides = array<i32>} : memref<8x3072xf32, #tpu.memory_space<vmem>>, vector<8x108xf32>,
    %97 = vector.extract_strided_slice %88 {offsets = [24, 0], sizes = [8, 108], strides = [1, 1]} : vector<224x108xf32> to vector<8x108xf32>
    %c0_84 = arith.constant 0 : index
    %c324 = arith.constant 324 : index
    %98 = vector.load %arg17[%c0_84, %c324] : memref<8x3072xf32, #tpu.memory_space<vmem>>, vector<8x108xf32>
    tpu.vector_store %arg17[%c0_84, %c324], %97 {strides = array<i32>} : memref<8x3072xf32, #tpu.memory_space<vmem>>, vector<8x108xf32>,
    %99 = vector.extract_strided_slice %88 {offsets = [32, 0], sizes = [8, 108], strides = [1, 1]} : vector<224x108xf32> to vector<8x108xf32>
    %c0_85 = arith.constant 0 : index
    %c432 = arith.constant 432 : index
    %100 = vector.load %arg17[%c0_85, %c432] : memref<8x3072xf32, #tpu.memory_space<vmem>>, vector<8x108xf32>
    tpu.vector_store %arg17[%c0_85, %c432], %99 {strides = array<i32>} : memref<8x3072xf32, #tpu.memory_space<vmem>>, vector<8x108xf32>,
    %101 = vector.extract_strided_slice %88 {offsets = [40, 0], sizes = [8, 108], strides = [1, 1]} : vector<224x108xf32> to vector<8x108xf32>
    %c0_86 = arith.constant 0 : index
    %c540 = arith.constant 540 : index
    %102 = vector.load %arg17[%c0_86, %c540] : memref<8x3072xf32, #tpu.memory_space<vmem>>, vector<8x108xf32>
    tpu.vector_store %arg17[%c0_86, %c540], %101 {strides = array<i32>} : memref<8x3072xf32, #tpu.memory_space<vmem>>, vector<8x108xf32>,
    %103 = vector.extract_strided_slice %88 {offsets = [48, 0], sizes = [8, 108], strides = [1, 1]} : vector<224x108xf32> to vector<8x108xf32>
    %c0_87 = arith.constant 0 : index
    %c648 = arith.constant 648 : index
    %104 = vector.load %arg17[%c0_87, %c648] : memref<8x3072xf32, #tpu.memory_space<vmem>>, vector<8x108xf32>
    tpu.vector_store %arg17[%c0_87, %c648], %103 {strides = array<i32>} : memref<8x3072xf32, #tpu.memory_space<vmem>>, vector<8x108xf32>,
    %105 = vector.extract_strided_slice %88 {offsets = [56, 0], sizes = [8, 108], strides = [1, 1]} : vector<224x108xf32> to vector<8x108xf32>
    %c0_88 = arith.constant 0 : index
    %c756 = arith.constant 756 : index
    %106 = vector.load %arg17[%c0_88, %c756] : memref<8x3072xf32, #tpu.memory_space<vmem>>, vector<8x108xf32>
    tpu.vector_store %arg17[%c0_88, %c756], %105 {strides = array<i32>} : memref<8x3072xf32, #tpu.memory_space<vmem>>, vector<8x108xf32>,
    %107 = vector.extract_strided_slice %88 {offsets = [64, 0], sizes = [8, 108], strides = [1, 1]} : vector<224x108xf32> to vector<8x108xf32>
    %c0_89 = arith.constant 0 : index
    %c864 = arith.constant 864 : index
    %108 = vector.load %arg17[%c0_89, %c864] : memref<8x3072xf32, #tpu.memory_space<vmem>>, vector<8x108xf32>
    tpu.vector_store %arg17[%c0_89, %c864], %107 {strides = array<i32>} : memref<8x3072xf32, #tpu.memory_space<vmem>>, vector<8x108xf32>,
    %109 = vector.extract_strided_slice %88 {offsets = [72, 0], sizes = [8, 108], strides = [1, 1]} : vector<224x108xf32> to vector<8x108xf32>
    %c0_90 = arith.constant 0 : index
    %c972 = arith.constant 972 : index
    %110 = vector.load %arg17[%c0_90, %c972] : memref<8x3072xf32, #tpu.memory_space<vmem>>, vector<8x108xf32>
    tpu.vector_store %arg17[%c0_90, %c972], %109 {strides = array<i32>} : memref<8x3072xf32, #tpu.memory_space<vmem>>, vector<8x108xf32>,
    %111 = vector.extract_strided_slice %88 {offsets = [80, 0], sizes = [8, 108], strides = [1, 1]} : vector<224x108xf32> to vector<8x108xf32>
    %c0_91 = arith.constant 0 : index
    %c1080 = arith.constant 1080 : index
    %112 = vector.load %arg17[%c0_91, %c1080] : memref<8x3072xf32, #tpu.memory_space<vmem>>, vector<8x108xf32>
    tpu.vector_store %arg17[%c0_91, %c1080], %111 {strides = array<i32>} : memref<8x3072xf32, #tpu.memory_space<vmem>>, vector<8x108xf32>,
    %113 = vector.extract_strided_slice %88 {offsets = [88, 0], sizes = [8, 108], strides = [1, 1]} : vector<224x108xf32> to vector<8x108xf32>
    %c0_92 = arith.constant 0 : index
    %c1188 = arith.constant 1188 : index
    %114 = vector.load %arg17[%c0_92, %c1188] : memref<8x3072xf32, #tpu.memory_space<vmem>>, vector<8x108xf32>
    tpu.vector_store %arg17[%c0_92, %c1188], %113 {strides = array<i32>} : memref<8x3072xf32, #tpu.memory_space<vmem>>, vector<8x108xf32>,
    %115 = vector.extract_strided_slice %88 {offsets = [96, 0], sizes = [8, 108], strides = [1, 1]} : vector<224x108xf32> to vector<8x108xf32>
    %c0_93 = arith.constant 0 : index
    %c1296 = arith.constant 1296 : index
    %116 = vector.load %arg17[%c0_93, %c1296] : memref<8x3072xf32, #tpu.memory_space<vmem>>, vector<8x108xf32>
    tpu.vector_store %arg17[%c0_93, %c1296], %115 {strides = array<i32>} : memref<8x3072xf32, #tpu.memory_space<vmem>>, vector<8x108xf32>,
    %117 = vector.extract_strided_slice %88 {offsets = [104, 0], sizes = [8, 108], strides = [1, 1]} : vector<224x108xf32> to vector<8x108xf32>
    %c0_94 = arith.constant 0 : index
    %c1404 = arith.constant 1404 : index
    %118 = vector.load %arg17[%c0_94, %c1404] : memref<8x3072xf32, #tpu.memory_space<vmem>>, vector<8x108xf32>
    tpu.vector_store %arg17[%c0_94, %c1404], %117 {strides = array<i32>} : memref<8x3072xf32, #tpu.memory_space<vmem>>, vector<8x108xf32>,
    %119 = vector.extract_strided_slice %88 {offsets = [112, 0], sizes = [8, 108], strides = [1, 1]} : vector<224x108xf32> to vector<8x108xf32>
    %c0_95 = arith.constant 0 : index
    %c1512 = arith.constant 1512 : index
    %120 = vector.load %arg17[%c0_95, %c1512] : memref<8x3072xf32, #tpu.memory_space<vmem>>, vector<8x108xf32>
    tpu.vector_store %arg17[%c0_95, %c1512], %119 {strides = array<i32>} : memref<8x3072xf32, #tpu.memory_space<vmem>>, vector<8x108xf32>,
    %121 = vector.extract_strided_slice %88 {offsets = [120, 0], sizes = [8, 108], strides = [1, 1]} : vector<224x108xf32> to vector<8x108xf32>
    %c0_96 = arith.constant 0 : index
    %c1620 = arith.constant 1620 : index
    %122 = vector.load %arg17[%c0_96, %c1620] : memref<8x3072xf32, #tpu.memory_space<vmem>>, vector<8x108xf32>
    tpu.vector_store %arg17[%c0_96, %c1620], %121 {strides = array<i32>} : memref<8x3072xf32, #tpu.memory_space<vmem>>, vector<8x108xf32>,
    %123 = vector.extract_strided_slice %88 {offsets = [128, 0], sizes = [8, 108], strides = [1, 1]} : vector<224x108xf32> to vector<8x108xf32>
    %c0_97 = arith.constant 0 : index
    %c1728 = arith.constant 1728 : index
    %124 = vector.load %arg17[%c0_97, %c1728] : memref<8x3072xf32, #tpu.memory_space<vmem>>, vector<8x108xf32>
    tpu.vector_store %arg17[%c0_97, %c1728], %123 {strides = array<i32>} : memref<8x3072xf32, #tpu.memory_space<vmem>>, vector<8x108xf32>,
    %125 = vector.extract_strided_slice %88 {offsets = [136, 0], sizes = [8, 108], strides = [1, 1]} : vector<224x108xf32> to vector<8x108xf32>
    %c0_98 = arith.constant 0 : index
    %c1836 = arith.constant 1836 : index
    %126 = vector.load %arg17[%c0_98, %c1836] : memref<8x3072xf32, #tpu.memory_space<vmem>>, vector<8x108xf32>
    tpu.vector_store %arg17[%c0_98, %c1836], %125 {strides = array<i32>} : memref<8x3072xf32, #tpu.memory_space<vmem>>, vector<8x108xf32>,
    %127 = vector.extract_strided_slice %88 {offsets = [144, 0], sizes = [8, 108], strides = [1, 1]} : vector<224x108xf32> to vector<8x108xf32>
    %c0_99 = arith.constant 0 : index
    %c1944 = arith.constant 1944 : index
    %128 = vector.load %arg17[%c0_99, %c1944] : memref<8x3072xf32, #tpu.memory_space<vmem>>, vector<8x108xf32>
    tpu.vector_store %arg17[%c0_99, %c1944], %127 {strides = array<i32>} : memref<8x3072xf32, #tpu.memory_space<vmem>>, vector<8x108xf32>,
    %129 = vector.extract_strided_slice %88 {offsets = [152, 0], sizes = [8, 108], strides = [1, 1]} : vector<224x108xf32> to vector<8x108xf32>
    %c0_100 = arith.constant 0 : index
    %c2052 = arith.constant 2052 : index
    %130 = vector.load %arg17[%c0_100, %c2052] : memref<8x3072xf32, #tpu.memory_space<vmem>>, vector<8x108xf32>
    tpu.vector_store %arg17[%c0_100, %c2052], %129 {strides = array<i32>} : memref<8x3072xf32, #tpu.memory_space<vmem>>, vector<8x108xf32>,
    %131 = vector.extract_strided_slice %88 {offsets = [160, 0], sizes = [8, 108], strides = [1, 1]} : vector<224x108xf32> to vector<8x108xf32>
    %c0_101 = arith.constant 0 : index
    %c2160 = arith.constant 2160 : index
    %132 = vector.load %arg17[%c0_101, %c2160] : memref<8x3072xf32, #tpu.memory_space<vmem>>, vector<8x108xf32>
    tpu.vector_store %arg17[%c0_101, %c2160], %131 {strides = array<i32>} : memref<8x3072xf32, #tpu.memory_space<vmem>>, vector<8x108xf32>,
    %133 = vector.extract_strided_slice %88 {offsets = [168, 0], sizes = [8, 108], strides = [1, 1]} : vector<224x108xf32> to vector<8x108xf32>
    %c0_102 = arith.constant 0 : index
    %c2268 = arith.constant 2268 : index
    %134 = vector.load %arg17[%c0_102, %c2268] : memref<8x3072xf32, #tpu.memory_space<vmem>>, vector<8x108xf32>
    tpu.vector_store %arg17[%c0_102, %c2268], %133 {strides = array<i32>} : memref<8x3072xf32, #tpu.memory_space<vmem>>, vector<8x108xf32>,
    %135 = vector.extract_strided_slice %88 {offsets = [176, 0], sizes = [8, 108], strides = [1, 1]} : vector<224x108xf32> to vector<8x108xf32>
    %c0_103 = arith.constant 0 : index
    %c2376 = arith.constant 2376 : index
    %136 = vector.load %arg17[%c0_103, %c2376] : memref<8x3072xf32, #tpu.memory_space<vmem>>, vector<8x108xf32>
    tpu.vector_store %arg17[%c0_103, %c2376], %135 {strides = array<i32>} : memref<8x3072xf32, #tpu.memory_space<vmem>>, vector<8x108xf32>,
    %137 = vector.extract_strided_slice %88 {offsets = [184, 0], sizes = [8, 108], strides = [1, 1]} : vector<224x108xf32> to vector<8x108xf32>
    %c0_104 = arith.constant 0 : index
    %c2484 = arith.constant 2484 : index
    %138 = vector.load %arg17[%c0_104, %c2484] : memref<8x3072xf32, #tpu.memory_space<vmem>>, vector<8x108xf32>
    tpu.vector_store %arg17[%c0_104, %c2484], %137 {strides = array<i32>} : memref<8x3072xf32, #tpu.memory_space<vmem>>, vector<8x108xf32>,
    %139 = vector.extract_strided_slice %88 {offsets = [192, 0], sizes = [8, 108], strides = [1, 1]} : vector<224x108xf32> to vector<8x108xf32>
    %c0_105 = arith.constant 0 : index
    %c2592 = arith.constant 2592 : index
    %140 = vector.load %arg17[%c0_105, %c2592] : memref<8x3072xf32, #tpu.memory_space<vmem>>, vector<8x108xf32>
    tpu.vector_store %arg17[%c0_105, %c2592], %139 {strides = array<i32>} : memref<8x3072xf32, #tpu.memory_space<vmem>>, vector<8x108xf32>,
    %141 = vector.extract_strided_slice %88 {offsets = [200, 0], sizes = [8, 108], strides = [1, 1]} : vector<224x108xf32> to vector<8x108xf32>
    %c0_106 = arith.constant 0 : index
    %c2700 = arith.constant 2700 : index
    %142 = vector.load %arg17[%c0_106, %c2700] : memref<8x3072xf32, #tpu.memory_space<vmem>>, vector<8x108xf32>
    tpu.vector_store %arg17[%c0_106, %c2700], %141 {strides = array<i32>} : memref<8x3072xf32, #tpu.memory_space<vmem>>, vector<8x108xf32>,
    %143 = vector.extract_strided_slice %88 {offsets = [208, 0], sizes = [8, 108], strides = [1, 1]} : vector<224x108xf32> to vector<8x108xf32>
    %c0_107 = arith.constant 0 : index
    %c2808 = arith.constant 2808 : index
    %144 = vector.load %arg17[%c0_107, %c2808] : memref<8x3072xf32, #tpu.memory_space<vmem>>, vector<8x108xf32>
    tpu.vector_store %arg17[%c0_107, %c2808], %143 {strides = array<i32>} : memref<8x3072xf32, #tpu.memory_space<vmem>>, vector<8x108xf32>,
    %145 = vector.extract_strided_slice %88 {offsets = [216, 0], sizes = [8, 108], strides = [1, 1]} : vector<224x108xf32> to vector<8x108xf32>
    %c0_108 = arith.constant 0 : index
    %c2916 = arith.constant 2916 : index
    %146 = vector.load %arg17[%c0_108, %c2916] : memref<8x3072xf32, #tpu.memory_space<vmem>>, vector<8x108xf32>
    tpu.vector_store %arg17[%c0_108, %c2916], %145 {strides = array<i32>} : memref<8x3072xf32, #tpu.memory_space<vmem>>, vector<8x108xf32>,
    %cst_109 = arith.constant 0.000000e+00 : f32
    %147 = vector.broadcast %cst_109 : f32 to vector<8x512xf32>
    %c0_i32_110 = arith.constant 0 : i32
    %c0_i32_111 = arith.constant 0 : i32
    %c0_i32_112 = arith.constant 0 : i32
    %c0_i32_113 = arith.constant 0 : i32
    %c0_i32_114 = arith.constant 0 : i32
    %148 = tpu.memref_slice %arg9[%c0_i32_110, %c0_i32_113, %c0_i32_114] : memref<6x512x512xbf16, #tpu.memory_space<any>> -> memref<1x512x512xbf16, #tpu.memory_space<any>>
    %149 = tpu.memref_squeeze %148 : memref<1x512x512xbf16, #tpu.memory_space<any>> -> memref<512x512xbf16, #tpu.memory_space<any>>
    %c0_i32_115 = arith.constant 0 : i32
    %c0_i32_116 = arith.constant 0 : i32
    %150 = tpu.memref_slice %arg18[%c0_i32_111, %c0_i32_115, %c0_i32_116] : memref<2x512x512xbf16, #tpu.memory_space<vmem>> -> memref<1x512x512xbf16, #tpu.memory_space<vmem>>
    %151 = tpu.memref_squeeze %150 : memref<1x512x512xbf16, #tpu.memory_space<vmem>> -> memref<512x512xbf16, #tpu.memory_space<vmem>>
    %152 = tpu.memref_slice %arg19[%c0_i32_112] : memref<2x!tpu.dma_semaphore, #tpu.memory_space<semaphore_mem>> -> memref<1x!tpu.dma_semaphore, #tpu.memory_space<semaphore_mem>>
    %153 = tpu.memref_squeeze %152 : memref<1x!tpu.dma_semaphore, #tpu.memory_space<semaphore_mem>> -> memref<!tpu.dma_semaphore, #tpu.memory_space<semaphore_mem>>
    tpu.wait_dma2 semaphore(%153 : memref<!tpu.dma_semaphore, #tpu.memory_space<semaphore_mem>>) src(%149 : memref<512x512xbf16, #tpu.memory_space<any>>) dst(%151 : memref<512x512xbf16, #tpu.memory_space<vmem>>)
    %c0_117 = arith.constant 0 : index
    %c0_118 = arith.constant 0 : index
    %154 = vector.load %arg17[%c0_117, %c0_118] : memref<8x3072xf32, #tpu.memory_space<vmem>>, vector<8x512xf32>
    %155 = arith.truncf %154 : vector<8x512xf32> to vector<8x512xbf16>
    %c0_119 = arith.constant 0 : index
    %c0_120 = arith.constant 0 : index
    %c0_121 = arith.constant 0 : index
    %156 = vector.load %arg18[%c0_119, %c0_120, %c0_121] : memref<2x512x512xbf16, #tpu.memory_space<vmem>>, vector<1x512x512xbf16>
    %157 = vector.shape_cast %156 : vector<1x512x512xbf16> to vector<512x512xbf16>
    %cst_122 = arith.constant dense<0.000000e+00> : vector<8x512xf32>
    %158 = tpu.matmul %155, %157, %cst_122 {dimension_numbers = #tpu.dot_dimension_numbers<[1], [0], [0], [1], [0, 0, 1, 1], [], []>} : vector<8x512xbf16>, vector<512x512xbf16>, vector<8x512xf32> -> vector<8x512xf32>
    %159 = arith.addf %147, %158 : vector<8x512xf32>
    %c2_i32 = arith.constant 2 : i32
    %c0_i32_123 = arith.constant 0 : i32
    %c0_i32_124 = arith.constant 0 : i32
    %c0_i32_125 = arith.constant 0 : i32
    %c0_i32_126 = arith.constant 0 : i32
    %160 = tpu.memref_slice %arg9[%c2_i32, %c0_i32_125, %c0_i32_126] : memref<6x512x512xbf16, #tpu.memory_space<any>> -> memref<1x512x512xbf16, #tpu.memory_space<any>>
    %161 = tpu.memref_squeeze %160 : memref<1x512x512xbf16, #tpu.memory_space<any>> -> memref<512x512xbf16, #tpu.memory_space<any>>
    %c0_i32_127 = arith.constant 0 : i32
    %c0_i32_128 = arith.constant 0 : i32
    %162 = tpu.memref_slice %arg18[%c0_i32_123, %c0_i32_127, %c0_i32_128] : memref<2x512x512xbf16, #tpu.memory_space<vmem>> -> memref<1x512x512xbf16, #tpu.memory_space<vmem>>
    %163 = tpu.memref_squeeze %162 : memref<1x512x512xbf16, #tpu.memory_space<vmem>> -> memref<512x512xbf16, #tpu.memory_space<vmem>>
    %164 = tpu.memref_slice %arg19[%c0_i32_124] : memref<2x!tpu.dma_semaphore, #tpu.memory_space<semaphore_mem>> -> memref<1x!tpu.dma_semaphore, #tpu.memory_space<semaphore_mem>>
    %165 = tpu.memref_squeeze %164 : memref<1x!tpu.dma_semaphore, #tpu.memory_space<semaphore_mem>> -> memref<!tpu.dma_semaphore, #tpu.memory_space<semaphore_mem>>
    tpu.enqueue_dma source(%161 : memref<512x512xbf16, #tpu.memory_space<any>>) target(%163 : memref<512x512xbf16, #tpu.memory_space<vmem>>) target_semaphore(%165 : memref<!tpu.dma_semaphore, #tpu.memory_space<semaphore_mem>>)
    %c1_i32_129 = arith.constant 1 : i32
    %c1_i32_130 = arith.constant 1 : i32
    %c1_i32_131 = arith.constant 1 : i32
    %c0_i32_132 = arith.constant 0 : i32
    %c0_i32_133 = arith.constant 0 : i32
    %166 = tpu.memref_slice %arg9[%c1_i32_129, %c0_i32_132, %c0_i32_133] : memref<6x512x512xbf16, #tpu.memory_space<any>> -> memref<1x512x512xbf16, #tpu.memory_space<any>>
    %167 = tpu.memref_squeeze %166 : memref<1x512x512xbf16, #tpu.memory_space<any>> -> memref<512x512xbf16, #tpu.memory_space<any>>
    %c0_i32_134 = arith.constant 0 : i32
    %c0_i32_135 = arith.constant 0 : i32
    %168 = tpu.memref_slice %arg18[%c1_i32_130, %c0_i32_134, %c0_i32_135] : memref<2x512x512xbf16, #tpu.memory_space<vmem>> -> memref<1x512x512xbf16, #tpu.memory_space<vmem>>
    %169 = tpu.memref_squeeze %168 : memref<1x512x512xbf16, #tpu.memory_space<vmem>> -> memref<512x512xbf16, #tpu.memory_space<vmem>>
    %170 = tpu.memref_slice %arg19[%c1_i32_131] : memref<2x!tpu.dma_semaphore, #tpu.memory_space<semaphore_mem>> -> memref<1x!tpu.dma_semaphore, #tpu.memory_space<semaphore_mem>>
    %171 = tpu.memref_squeeze %170 : memref<1x!tpu.dma_semaphore, #tpu.memory_space<semaphore_mem>> -> memref<!tpu.dma_semaphore, #tpu.memory_space<semaphore_mem>>
    tpu.wait_dma2 semaphore(%171 : memref<!tpu.dma_semaphore, #tpu.memory_space<semaphore_mem>>) src(%167 : memref<512x512xbf16, #tpu.memory_space<any>>) dst(%169 : memref<512x512xbf16, #tpu.memory_space<vmem>>)
    %c0_136 = arith.constant 0 : index
    %c512 = arith.constant 512 : index
    %172 = vector.load %arg17[%c0_136, %c512] : memref<8x3072xf32, #tpu.memory_space<vmem>>, vector<8x512xf32>
    %173 = arith.truncf %172 : vector<8x512xf32> to vector<8x512xbf16>
    %c1 = arith.constant 1 : index
    %c0_137 = arith.constant 0 : index
    %c0_138 = arith.constant 0 : index
    %174 = vector.load %arg18[%c1, %c0_137, %c0_138] : memref<2x512x512xbf16, #tpu.memory_space<vmem>>, vector<1x512x512xbf16>
    %175 = vector.shape_cast %174 : vector<1x512x512xbf16> to vector<512x512xbf16>
    %cst_139 = arith.constant dense<0.000000e+00> : vector<8x512xf32>
    %176 = tpu.matmul %173, %175, %cst_139 {dimension_numbers = #tpu.dot_dimension_numbers<[1], [0], [0], [1], [0, 0, 1, 1], [], []>} : vector<8x512xbf16>, vector<512x512xbf16>, vector<8x512xf32> -> vector<8x512xf32>
    %177 = arith.addf %159, %176 : vector<8x512xf32>
    %c3_i32 = arith.constant 3 : i32
    %c1_i32_140 = arith.constant 1 : i32
    %c1_i32_141 = arith.constant 1 : i32
    %c0_i32_142 = arith.constant 0 : i32
    %c0_i32_143 = arith.constant 0 : i32
    %178 = tpu.memref_slice %arg9[%c3_i32, %c0_i32_142, %c0_i32_143] : memref<6x512x512xbf16, #tpu.memory_space<any>> -> memref<1x512x512xbf16, #tpu.memory_space<any>>
    %179 = tpu.memref_squeeze %178 : memref<1x512x512xbf16, #tpu.memory_space<any>> -> memref<512x512xbf16, #tpu.memory_space<any>>
    %c0_i32_144 = arith.constant 0 : i32
    %c0_i32_145 = arith.constant 0 : i32
    %180 = tpu.memref_slice %arg18[%c1_i32_140, %c0_i32_144, %c0_i32_145] : memref<2x512x512xbf16, #tpu.memory_space<vmem>> -> memref<1x512x512xbf16, #tpu.memory_space<vmem>>
    %181 = tpu.memref_squeeze %180 : memref<1x512x512xbf16, #tpu.memory_space<vmem>> -> memref<512x512xbf16, #tpu.memory_space<vmem>>
    %182 = tpu.memref_slice %arg19[%c1_i32_141] : memref<2x!tpu.dma_semaphore, #tpu.memory_space<semaphore_mem>> -> memref<1x!tpu.dma_semaphore, #tpu.memory_space<semaphore_mem>>
    %183 = tpu.memref_squeeze %182 : memref<1x!tpu.dma_semaphore, #tpu.memory_space<semaphore_mem>> -> memref<!tpu.dma_semaphore, #tpu.memory_space<semaphore_mem>>
    tpu.enqueue_dma source(%179 : memref<512x512xbf16, #tpu.memory_space<any>>) target(%181 : memref<512x512xbf16, #tpu.memory_space<vmem>>) target_semaphore(%183 : memref<!tpu.dma_semaphore, #tpu.memory_space<semaphore_mem>>)
    %c2_i32_146 = arith.constant 2 : i32
    %c0_i32_147 = arith.constant 0 : i32
    %c0_i32_148 = arith.constant 0 : i32
    %c0_i32_149 = arith.constant 0 : i32
    %c0_i32_150 = arith.constant 0 : i32
    %184 = tpu.memref_slice %arg9[%c2_i32_146, %c0_i32_149, %c0_i32_150] : memref<6x512x512xbf16, #tpu.memory_space<any>> -> memref<1x512x512xbf16, #tpu.memory_space<any>>
    %185 = tpu.memref_squeeze %184 : memref<1x512x512xbf16, #tpu.memory_space<any>> -> memref<512x512xbf16, #tpu.memory_space<any>>
    %c0_i32_151 = arith.constant 0 : i32
    %c0_i32_152 = arith.constant 0 : i32
    %186 = tpu.memref_slice %arg18[%c0_i32_147, %c0_i32_151, %c0_i32_152] : memref<2x512x512xbf16, #tpu.memory_space<vmem>> -> memref<1x512x512xbf16, #tpu.memory_space<vmem>>
    %187 = tpu.memref_squeeze %186 : memref<1x512x512xbf16, #tpu.memory_space<vmem>> -> memref<512x512xbf16, #tpu.memory_space<vmem>>
    %188 = tpu.memref_slice %arg19[%c0_i32_148] : memref<2x!tpu.dma_semaphore, #tpu.memory_space<semaphore_mem>> -> memref<1x!tpu.dma_semaphore, #tpu.memory_space<semaphore_mem>>
    %189 = tpu.memref_squeeze %188 : memref<1x!tpu.dma_semaphore, #tpu.memory_space<semaphore_mem>> -> memref<!tpu.dma_semaphore, #tpu.memory_space<semaphore_mem>>
    tpu.wait_dma2 semaphore(%189 : memref<!tpu.dma_semaphore, #tpu.memory_space<semaphore_mem>>) src(%185 : memref<512x512xbf16, #tpu.memory_space<any>>) dst(%187 : memref<512x512xbf16, #tpu.memory_space<vmem>>)
    %c0_153 = arith.constant 0 : index
    %c1024 = arith.constant 1024 : index
    %190 = vector.load %arg17[%c0_153, %c1024] : memref<8x3072xf32, #tpu.memory_space<vmem>>, vector<8x512xf32>
    %191 = arith.truncf %190 : vector<8x512xf32> to vector<8x512xbf16>
    %c0_154 = arith.constant 0 : index
    %c0_155 = arith.constant 0 : index
    %c0_156 = arith.constant 0 : index
    %192 = vector.load %arg18[%c0_154, %c0_155, %c0_156] : memref<2x512x512xbf16, #tpu.memory_space<vmem>>, vector<1x512x512xbf16>
    %193 = vector.shape_cast %192 : vector<1x512x512xbf16> to vector<512x512xbf16>
    %cst_157 = arith.constant dense<0.000000e+00> : vector<8x512xf32>
    %194 = tpu.matmul %191, %193, %cst_157 {dimension_numbers = #tpu.dot_dimension_numbers<[1], [0], [0], [1], [0, 0, 1, 1], [], []>} : vector<8x512xbf16>, vector<512x512xbf16>, vector<8x512xf32> -> vector<8x512xf32>
    %195 = arith.addf %177, %194 : vector<8x512xf32>
    %c4_i32 = arith.constant 4 : i32
    %c0_i32_158 = arith.constant 0 : i32
    %c0_i32_159 = arith.constant 0 : i32
    %c0_i32_160 = arith.constant 0 : i32
    %c0_i32_161 = arith.constant 0 : i32
    %196 = tpu.memref_slice %arg9[%c4_i32, %c0_i32_160, %c0_i32_161] : memref<6x512x512xbf16, #tpu.memory_space<any>> -> memref<1x512x512xbf16, #tpu.memory_space<any>>
    %197 = tpu.memref_squeeze %196 : memref<1x512x512xbf16, #tpu.memory_space<any>> -> memref<512x512xbf16, #tpu.memory_space<any>>
    %c0_i32_162 = arith.constant 0 : i32
    %c0_i32_163 = arith.constant 0 : i32
    %198 = tpu.memref_slice %arg18[%c0_i32_158, %c0_i32_162, %c0_i32_163] : memref<2x512x512xbf16, #tpu.memory_space<vmem>> -> memref<1x512x512xbf16, #tpu.memory_space<vmem>>
    %199 = tpu.memref_squeeze %198 : memref<1x512x512xbf16, #tpu.memory_space<vmem>> -> memref<512x512xbf16, #tpu.memory_space<vmem>>
    %200 = tpu.memref_slice %arg19[%c0_i32_159] : memref<2x!tpu.dma_semaphore, #tpu.memory_space<semaphore_mem>> -> memref<1x!tpu.dma_semaphore, #tpu.memory_space<semaphore_mem>>
    %201 = tpu.memref_squeeze %200 : memref<1x!tpu.dma_semaphore, #tpu.memory_space<semaphore_mem>> -> memref<!tpu.dma_semaphore, #tpu.memory_space<semaphore_mem>>
    tpu.enqueue_dma source(%197 : memref<512x512xbf16, #tpu.memory_space<any>>) target(%199 : memref<512x512xbf16, #tpu.memory_space<vmem>>) target_semaphore(%201 : memref<!tpu.dma_semaphore, #tpu.memory_space<semaphore_mem>>)
    %c3_i32_164 = arith.constant 3 : i32
    %c1_i32_165 = arith.constant 1 : i32
    %c1_i32_166 = arith.constant 1 : i32
    %c0_i32_167 = arith.constant 0 : i32
    %c0_i32_168 = arith.constant 0 : i32
    %202 = tpu.memref_slice %arg9[%c3_i32_164, %c0_i32_167, %c0_i32_168] : memref<6x512x512xbf16, #tpu.memory_space<any>> -> memref<1x512x512xbf16, #tpu.memory_space<any>>
    %203 = tpu.memref_squeeze %202 : memref<1x512x512xbf16, #tpu.memory_space<any>> -> memref<512x512xbf16, #tpu.memory_space<any>>
    %c0_i32_169 = arith.constant 0 : i32
    %c0_i32_170 = arith.constant 0 : i32
    %204 = tpu.memref_slice %arg18[%c1_i32_165, %c0_i32_169, %c0_i32_170] : memref<2x512x512xbf16, #tpu.memory_space<vmem>> -> memref<1x512x512xbf16, #tpu.memory_space<vmem>>
    %205 = tpu.memref_squeeze %204 : memref<1x512x512xbf16, #tpu.memory_space<vmem>> -> memref<512x512xbf16, #tpu.memory_space<vmem>>
    %206 = tpu.memref_slice %arg19[%c1_i32_166] : memref<2x!tpu.dma_semaphore, #tpu.memory_space<semaphore_mem>> -> memref<1x!tpu.dma_semaphore, #tpu.memory_space<semaphore_mem>>
    %207 = tpu.memref_squeeze %206 : memref<1x!tpu.dma_semaphore, #tpu.memory_space<semaphore_mem>> -> memref<!tpu.dma_semaphore, #tpu.memory_space<semaphore_mem>>
    tpu.wait_dma2 semaphore(%207 : memref<!tpu.dma_semaphore, #tpu.memory_space<semaphore_mem>>) src(%203 : memref<512x512xbf16, #tpu.memory_space<any>>) dst(%205 : memref<512x512xbf16, #tpu.memory_space<vmem>>)
    %c0_171 = arith.constant 0 : index
    %c1536 = arith.constant 1536 : index
    %208 = vector.load %arg17[%c0_171, %c1536] : memref<8x3072xf32, #tpu.memory_space<vmem>>, vector<8x512xf32>
    %209 = arith.truncf %208 : vector<8x512xf32> to vector<8x512xbf16>
    %c1_172 = arith.constant 1 : index
    %c0_173 = arith.constant 0 : index
    %c0_174 = arith.constant 0 : index
    %210 = vector.load %arg18[%c1_172, %c0_173, %c0_174] : memref<2x512x512xbf16, #tpu.memory_space<vmem>>, vector<1x512x512xbf16>
    %211 = vector.shape_cast %210 : vector<1x512x512xbf16> to vector<512x512xbf16>
    %cst_175 = arith.constant dense<0.000000e+00> : vector<8x512xf32>
    %212 = tpu.matmul %209, %211, %cst_175 {dimension_numbers = #tpu.dot_dimension_numbers<[1], [0], [0], [1], [0, 0, 1, 1], [], []>} : vector<8x512xbf16>, vector<512x512xbf16>, vector<8x512xf32> -> vector<8x512xf32>
    %213 = arith.addf %195, %212 : vector<8x512xf32>
    %c5_i32 = arith.constant 5 : i32
    %c1_i32_176 = arith.constant 1 : i32
    %c1_i32_177 = arith.constant 1 : i32
    %c0_i32_178 = arith.constant 0 : i32
    %c0_i32_179 = arith.constant 0 : i32
    %214 = tpu.memref_slice %arg9[%c5_i32, %c0_i32_178, %c0_i32_179] : memref<6x512x512xbf16, #tpu.memory_space<any>> -> memref<1x512x512xbf16, #tpu.memory_space<any>>
    %215 = tpu.memref_squeeze %214 : memref<1x512x512xbf16, #tpu.memory_space<any>> -> memref<512x512xbf16, #tpu.memory_space<any>>
    %c0_i32_180 = arith.constant 0 : i32
    %c0_i32_181 = arith.constant 0 : i32
    %216 = tpu.memref_slice %arg18[%c1_i32_176, %c0_i32_180, %c0_i32_181] : memref<2x512x512xbf16, #tpu.memory_space<vmem>> -> memref<1x512x512xbf16, #tpu.memory_space<vmem>>
    %217 = tpu.memref_squeeze %216 : memref<1x512x512xbf16, #tpu.memory_space<vmem>> -> memref<512x512xbf16, #tpu.memory_space<vmem>>
    %218 = tpu.memref_slice %arg19[%c1_i32_177] : memref<2x!tpu.dma_semaphore, #tpu.memory_space<semaphore_mem>> -> memref<1x!tpu.dma_semaphore, #tpu.memory_space<semaphore_mem>>
    %219 = tpu.memref_squeeze %218 : memref<1x!tpu.dma_semaphore, #tpu.memory_space<semaphore_mem>> -> memref<!tpu.dma_semaphore, #tpu.memory_space<semaphore_mem>>
    tpu.enqueue_dma source(%215 : memref<512x512xbf16, #tpu.memory_space<any>>) target(%217 : memref<512x512xbf16, #tpu.memory_space<vmem>>) target_semaphore(%219 : memref<!tpu.dma_semaphore, #tpu.memory_space<semaphore_mem>>)
    %c4_i32_182 = arith.constant 4 : i32
    %c0_i32_183 = arith.constant 0 : i32
    %c0_i32_184 = arith.constant 0 : i32
    %c0_i32_185 = arith.constant 0 : i32
    %c0_i32_186 = arith.constant 0 : i32
    %220 = tpu.memref_slice %arg9[%c4_i32_182, %c0_i32_185, %c0_i32_186] : memref<6x512x512xbf16, #tpu.memory_space<any>> -> memref<1x512x512xbf16, #tpu.memory_space<any>>
    %221 = tpu.memref_squeeze %220 : memref<1x512x512xbf16, #tpu.memory_space<any>> -> memref<512x512xbf16, #tpu.memory_space<any>>
    %c0_i32_187 = arith.constant 0 : i32
    %c0_i32_188 = arith.constant 0 : i32
    %222 = tpu.memref_slice %arg18[%c0_i32_183, %c0_i32_187, %c0_i32_188] : memref<2x512x512xbf16, #tpu.memory_space<vmem>> -> memref<1x512x512xbf16, #tpu.memory_space<vmem>>
    %223 = tpu.memref_squeeze %222 : memref<1x512x512xbf16, #tpu.memory_space<vmem>> -> memref<512x512xbf16, #tpu.memory_space<vmem>>
    %224 = tpu.memref_slice %arg19[%c0_i32_184] : memref<2x!tpu.dma_semaphore, #tpu.memory_space<semaphore_mem>> -> memref<1x!tpu.dma_semaphore, #tpu.memory_space<semaphore_mem>>
    %225 = tpu.memref_squeeze %224 : memref<1x!tpu.dma_semaphore, #tpu.memory_space<semaphore_mem>> -> memref<!tpu.dma_semaphore, #tpu.memory_space<semaphore_mem>>
    tpu.wait_dma2 semaphore(%225 : memref<!tpu.dma_semaphore, #tpu.memory_space<semaphore_mem>>) src(%221 : memref<512x512xbf16, #tpu.memory_space<any>>) dst(%223 : memref<512x512xbf16, #tpu.memory_space<vmem>>)
    %c0_189 = arith.constant 0 : index
    %c2048 = arith.constant 2048 : index
    %226 = vector.load %arg17[%c0_189, %c2048] : memref<8x3072xf32, #tpu.memory_space<vmem>>, vector<8x512xf32>
    %227 = arith.truncf %226 : vector<8x512xf32> to vector<8x512xbf16>
    %c0_190 = arith.constant 0 : index
    %c0_191 = arith.constant 0 : index
    %c0_192 = arith.constant 0 : index
    %228 = vector.load %arg18[%c0_190, %c0_191, %c0_192] : memref<2x512x512xbf16, #tpu.memory_space<vmem>>, vector<1x512x512xbf16>
    %229 = vector.shape_cast %228 : vector<1x512x512xbf16> to vector<512x512xbf16>
    %cst_193 = arith.constant dense<0.000000e+00> : vector<8x512xf32>
    %230 = tpu.matmul %227, %229, %cst_193 {dimension_numbers = #tpu.dot_dimension_numbers<[1], [0], [0], [1], [0, 0, 1, 1], [], []>} : vector<8x512xbf16>, vector<512x512xbf16>, vector<8x512xf32> -> vector<8x512xf32>
    %231 = arith.addf %213, %230 : vector<8x512xf32>
    %c5_i32_194 = arith.constant 5 : i32
    %c1_i32_195 = arith.constant 1 : i32
    %c1_i32_196 = arith.constant 1 : i32
    %c0_i32_197 = arith.constant 0 : i32
    %c0_i32_198 = arith.constant 0 : i32
    %232 = tpu.memref_slice %arg9[%c5_i32_194, %c0_i32_197, %c0_i32_198] : memref<6x512x512xbf16, #tpu.memory_space<any>> -> memref<1x512x512xbf16, #tpu.memory_space<any>>
    %233 = tpu.memref_squeeze %232 : memref<1x512x512xbf16, #tpu.memory_space<any>> -> memref<512x512xbf16, #tpu.memory_space<any>>
    %c0_i32_199 = arith.constant 0 : i32
    %c0_i32_200 = arith.constant 0 : i32
    %234 = tpu.memref_slice %arg18[%c1_i32_195, %c0_i32_199, %c0_i32_200] : memref<2x512x512xbf16, #tpu.memory_space<vmem>> -> memref<1x512x512xbf16, #tpu.memory_space<vmem>>
    %235 = tpu.memref_squeeze %234 : memref<1x512x512xbf16, #tpu.memory_space<vmem>> -> memref<512x512xbf16, #tpu.memory_space<vmem>>
    %236 = tpu.memref_slice %arg19[%c1_i32_196] : memref<2x!tpu.dma_semaphore, #tpu.memory_space<semaphore_mem>> -> memref<1x!tpu.dma_semaphore, #tpu.memory_space<semaphore_mem>>
    %237 = tpu.memref_squeeze %236 : memref<1x!tpu.dma_semaphore, #tpu.memory_space<semaphore_mem>> -> memref<!tpu.dma_semaphore, #tpu.memory_space<semaphore_mem>>
    tpu.wait_dma2 semaphore(%237 : memref<!tpu.dma_semaphore, #tpu.memory_space<semaphore_mem>>) src(%233 : memref<512x512xbf16, #tpu.memory_space<any>>) dst(%235 : memref<512x512xbf16, #tpu.memory_space<vmem>>)
    %c0_201 = arith.constant 0 : index
    %c2560 = arith.constant 2560 : index
    %238 = vector.load %arg17[%c0_201, %c2560] : memref<8x3072xf32, #tpu.memory_space<vmem>>, vector<8x512xf32>
    %239 = arith.truncf %238 : vector<8x512xf32> to vector<8x512xbf16>
    %c1_202 = arith.constant 1 : index
    %c0_203 = arith.constant 0 : index
    %c0_204 = arith.constant 0 : index
    %240 = vector.load %arg18[%c1_202, %c0_203, %c0_204] : memref<2x512x512xbf16, #tpu.memory_space<vmem>>, vector<1x512x512xbf16>
    %241 = vector.shape_cast %240 : vector<1x512x512xbf16> to vector<512x512xbf16>
    %cst_205 = arith.constant dense<0.000000e+00> : vector<8x512xf32>
    %242 = tpu.matmul %239, %241, %cst_205 {dimension_numbers = #tpu.dot_dimension_numbers<[1], [0], [0], [1], [0, 0, 1, 1], [], []>} : vector<8x512xbf16>, vector<512x512xbf16>, vector<8x512xf32> -> vector<8x512xf32>
    %243 = arith.addf %231, %242 : vector<8x512xf32>
    %c0_206 = arith.constant 0 : index
    %c0_207 = arith.constant 0 : index
    %244 = vector.load %arg10[%c0_206, %c0_207] : memref<1x512xf32, #tpu.memory_space<vmem>>, vector<1x512xf32>
    %245 = vector.broadcast %244 : vector<1x512xf32> to vector<8x512xf32>
    %246 = arith.addf %243, %245 : vector<8x512xf32>
    %247 = arith.negf %246 : vector<8x512xf32>
    %248 = math.exp %247 : vector<8x512xf32>
    %cst_208 = arith.constant 1.000000e+00 : f32
    %249 = vector.broadcast %cst_208 : f32 to vector<8x512xf32>
    %250 = arith.addf %249, %248 : vector<8x512xf32>
    %251 = arith.divf %249, %250 : vector<8x512xf32>
    %252 = arith.mulf %246, %251 : vector<8x512xf32>
    %253 = arith.truncf %252 : vector<8x512xf32> to vector<8x512xbf16>
    %c0_209 = arith.constant 0 : index
    %c0_210 = arith.constant 0 : index
    %254 = vector.load %arg11[%c0_209, %c0_210] : memref<512x64xbf16, #tpu.memory_space<vmem>>, vector<512x64xbf16>
    %cst_211 = arith.constant dense<0.000000e+00> : vector<8x64xf32>
    %255 = tpu.matmul %253, %254, %cst_211 {dimension_numbers = #tpu.dot_dimension_numbers<[1], [0], [0], [1], [0, 0, 1, 1], [], []>} : vector<8x512xbf16>, vector<512x64xbf16>, vector<8x64xf32> -> vector<8x64xf32>
    %c0_212 = arith.constant 0 : index
    %c0_213 = arith.constant 0 : index
    %256 = vector.load %arg12[%c0_212, %c0_213] : memref<1x64xf32, #tpu.memory_space<vmem>>, vector<1x64xf32>
    %257 = vector.broadcast %256 : vector<1x64xf32> to vector<8x64xf32>
    %258 = arith.addf %255, %257 : vector<8x64xf32>
    %259 = arith.negf %258 : vector<8x64xf32>
    %260 = math.exp %259 : vector<8x64xf32>
    %cst_214 = arith.constant 1.000000e+00 : f32
    %261 = vector.broadcast %cst_214 : f32 to vector<8x64xf32>
    %262 = arith.addf %261, %260 : vector<8x64xf32>
    %263 = arith.divf %261, %262 : vector<8x64xf32>
    %264 = arith.mulf %258, %263 : vector<8x64xf32>
    %265 = arith.truncf %264 : vector<8x64xf32> to vector<8x64xbf16>
    %c0_215 = arith.constant 0 : index
    %c0_216 = arith.constant 0 : index
    %266 = vector.load %arg13[%c0_215, %c0_216] : memref<64x28xbf16, #tpu.memory_space<vmem>>, vector<64x28xbf16>
    %cst_217 = arith.constant dense<0.000000e+00> : vector<8x28xf32>
    %267 = tpu.matmul %265, %266, %cst_217 {dimension_numbers = #tpu.dot_dimension_numbers<[1], [0], [0], [1], [0, 0, 1, 1], [], []>} : vector<8x64xbf16>, vector<64x28xbf16>, vector<8x28xf32> -> vector<8x28xf32>
    %c0_218 = arith.constant 0 : index
    %c0_219 = arith.constant 0 : index
    %268 = vector.load %arg14[%c0_218, %c0_219] : memref<1x28xf32, #tpu.memory_space<vmem>>, vector<1x28xf32>
    %269 = vector.broadcast %268 : vector<1x28xf32> to vector<8x28xf32>
    %270 = arith.addf %267, %269 : vector<8x28xf32>
    %271 = vector.extract_strided_slice %270 {offsets = [0, 0], sizes = [2, 28], strides = [1, 1]} : vector<8x28xf32> to vector<2x28xf32>
    %c0_220 = arith.constant 0 : index
    %c0_221 = arith.constant 0 : index
    %272 = vector.load %arg15[%c0_220, %c0_221] : memref<2x28xf32, #tpu.memory_space<vmem>>, vector<2x28xf32>
    tpu.vector_store %arg15[%c0_220, %c0_221], %271 {strides = array<i32>} : memref<2x28xf32, #tpu.memory_space<vmem>>, vector<2x28xf32>,
    return
  }
}

</mosaic_0001>

<llo_original>
// kernel: conv1d_model_forward.1
$region0: #{conv1d_model_forward.1}
  #allocation0 [shape = 'u32[]', space=smem, size = 0x4, offset = 0x4, fixed_abs, tag = 'smem constant byte address 0x4 - core index']
  #allocation1 [shape = 'u32[144,128]{1,0:T(1,128)}', space=vmem, size = 0x12000, scoped, tag = 'internal scratch']
  #allocation2 [shape = 'f32[272,128]{1,0:T(8,128)}', space=vmem, size = 0x22000, scoped, tag = 'scratch operand']
  #allocation3 [shape = 'f32[8,3072]{1,0:T(8,128)}', space=vmem, size = 0x18000, scoped, tag = 'scratch operand']
  #allocation4 [shape = 'bf16[2,512,512]{2,1,0:T(16,128)(2,1)}', space=vmem, size = 0x100000, scoped, tag = 'scratch operand']
  #allocation5 [shape = 's32[2]{0}', space=sflag, size = 0x8, scoped, tag = 'scratch operand']
  #allocation22 [shape = 's32[]', space=sflag, size = 0x4, offset = 0, fixed_abs, tag = 'sflag constant byte address 0x0 - dummy sync flag']
  #allocation24 [shape = 's32[]', space=sflag, size = 0x4, offset = 0, fixed_abs, tag = 'sflag constant byte address 0x0 - dummy sync flag']
  #allocation26 [shape = 's32[]', space=sflag, size = 0x4, offset = 0, fixed_abs, tag = 'sflag constant byte address 0x0 - dummy sync flag']
  #allocation28 [shape = 's32[]', space=sflag, size = 0x4, offset = 0, fixed_abs, tag = 'sflag constant byte address 0x0 - dummy sync flag']
  #allocation30 [shape = 's32[]', space=sflag, size = 0x4, offset = 0, fixed_abs, tag = 'sflag constant byte address 0x0 - dummy sync flag']
  #allocation32 [shape = 's32[]', space=sflag, size = 0x4, offset = 0, fixed_abs, tag = 'sflag constant byte address 0x0 - dummy sync flag']
  %s0 = inlined_call_operand.vmem [shape: f32[224,4], index: 0, kind: input, shape index: {}]
  %s1 = inlined_call_operand.hbm [shape: bf16[28,28], index: 1, kind: input, shape index: {}]
  %s2 = inlined_call_operand.hbm [shape: f32[1,28], index: 2, kind: input, shape index: {}]
  %s3 = inlined_call_operand.vmem [shape: bf16[140,48], index: 3, kind: input, shape index: {}]
  %s4 = inlined_call_operand.hbm [shape: f32[1,48], index: 4, kind: input, shape index: {}]
  %s5 = inlined_call_operand.hbm [shape: bf16[144,84], index: 5, kind: input, shape index: {}]
  %s6 = inlined_call_operand.hbm [shape: f32[1,84], index: 6, kind: input, shape index: {}]
  %s7 = inlined_call_operand.vmem [shape: bf16[252,108], index: 7, kind: input, shape index: {}]
  %s8 = inlined_call_operand.hbm [shape: f32[1,108], index: 8, kind: input, shape index: {}]
  %s9 = inlined_call_operand.hbm [shape: bf16[6,512,512], index: 9, kind: input, shape index: {}]
  %s10 = inlined_call_operand.hbm [shape: f32[1,512], index: 10, kind: input, shape index: {}]
  %s11 = inlined_call_operand.vmem [shape: bf16[512,64], index: 11, kind: input, shape index: {}]
  %s12 = inlined_call_operand.hbm [shape: f32[1,64], index: 12, kind: input, shape index: {}]
  %s13 = inlined_call_operand.vmem [shape: bf16[64,28], index: 13, kind: input, shape index: {}]
  %s14 = inlined_call_operand.hbm [shape: f32[1,28], index: 14, kind: input, shape index: {}]
  %s15 = inlined_call_operand.hbm [shape: f32[2,28], index: 15, kind: output, shape index: {}]
  %s16 = sld [smem:[#allocation0]]
  $region102: #{conv1d_model_forward.1} parent=0
    _
  %s18 = ssub.s32 1, %s16
  %s19 = scalar_select 0, %s18, %s16
  $region1: #{conv1d_model_forward.1} parent=0
    #allocation6 [shape = 'u8[8192]{0}', space=vmem, size = 0x2000, scoped, tag = 'input window, operand 1, single buffered']
    #allocation7 [shape = 's32[1]{0}', space=sflag, size = 0x4, scoped, tag = 'scoped memory for conv1d_model_forward.1']
    #allocation8 [shape = 's32[1]{0}', space=sflag, size = 0x4, scoped, tag = 'scoped memory for conv1d_model_forward.1']
    #allocation9 [shape = 'u8[512]{0}', space=vmem, size = 0x400, scoped, tag = 'input window, operand 2, single buffered']
    #allocation10 [shape = 's32[1]{0}', space=sflag, size = 0x4, scoped, tag = 'scoped memory for conv1d_model_forward.1']
    #allocation11 [shape = 'u8[512]{0}', space=vmem, size = 0x400, scoped, tag = 'input window, operand 4, single buffered']
    #allocation12 [shape = 'u8[36864]{0}', space=vmem, size = 0x9000, scoped, tag = 'input window, operand 5, single buffered']
    #allocation13 [shape = 's32[1]{0}', space=sflag, size = 0x4, scoped, tag = 'scoped memory for conv1d_model_forward.1']
    #allocation14 [shape = 'u8[512]{0}', space=vmem, size = 0x400, scoped, tag = 'input window, operand 6, single buffered']
    #allocation15 [shape = 'u8[512]{0}', space=vmem, size = 0x400, scoped, tag = 'input window, operand 8, single buffered']
    #allocation16 [shape = 's32[1]{0}', space=sflag, size = 0x4, scoped, tag = 'scoped memory for conv1d_model_forward.1']
    #allocation17 [shape = 'u8[2048]{0}', space=vmem, size = 0x800, scoped, tag = 'input window, operand 10, single buffered']
    #allocation18 [shape = 'u8[512]{0}', space=vmem, size = 0x400, scoped, tag = 'input window, operand 12, single buffered']
    #allocation19 [shape = 's32[1]{0}', space=sflag, size = 0x4, scoped, tag = 'scoped memory for conv1d_model_forward.1']
    #allocation20 [shape = 'u8[512]{0}', space=vmem, size = 0x400, scoped, tag = 'input window, operand 14, single buffered']
    #allocation21 [shape = 'u8[1024]{0}', space=vmem, size = 0x400, scoped, tag = 'output window, operand 0, single buffered']
    #allocation23 [shape = 'u32[9]{0}', space=smem, size = 0x24, scoped, tag = 'DMA stride descriptor']
    #allocation25 [shape = 'u32[9]{0}', space=smem, size = 0x24, scoped, tag = 'DMA stride descriptor']
    #allocation27 [shape = 'u32[9]{0}', space=smem, size = 0x24, scoped, tag = 'DMA stride descriptor']
    #allocation29 [shape = 'u32[9]{0}', space=smem, size = 0x24, scoped, tag = 'DMA stride descriptor']
    #allocation31 [shape = 'u32[9]{0}', space=smem, size = 0x24, scoped, tag = 'DMA stride descriptor']
    #allocation33 [shape = 'u32[9]{0}', space=smem, size = 0x24, scoped, tag = 'DMA stride descriptor']
    %20 = vsyncpa [#allocation7], 0
    %21 = vsyncpa [#allocation10], 0
    %22 = vsyncpa [#allocation13], 0
    %23 = vsyncpa [#allocation16], 0
    %24 = vsyncpa [#allocation19], 0
    %25 = vsyncpa [#allocation8], 0
    // Predicated region
    $region2: #{conv1d_model_forward.1} parent=1 // pred_check
      _
    $region3: #{conv1d_model_forward.1} parent=1 // pred_check_branch
      %27 = sbr.rel (0) target = $region5
    $region4: #{conv1d_model_forward.1} parent=1 // pred_region
      _
    $region5: #{conv1d_model_forward.1} parent=1 // pred_fallthru
      _
    // Predicated region
    $region6: #{conv1d_model_forward.1} parent=1 // pred_check
      _
    $region7: #{conv1d_model_forward.1} parent=1 // pred_check_branch
      %29 = sbr.rel (0) target = $region9
    $region8: #{conv1d_model_forward.1} parent=1 // pred_region
      %s31 = ssub.s32 256, 256
      %32 = vsyncadd [#allocation7], %s31
      %s33 = sshll.u32 [#allocation6], 4
      %s34 = int_to_ptr.vmem [resolvable:$true] %s33
      %39 = dma.hbm_to_vmem [thread:$0]  %s1, 256, %s34, [#allocation7], 64, 64, 4
    $region9: #{conv1d_model_forward.1} parent=1 // pred_fallthru
      _
    // Predicated region
    $region10: #{conv1d_model_forward.1} parent=1 // pred_check
      _
    $region11: #{conv1d_model_forward.1} parent=1 // pred_check_branch
      %41 = sbr.rel (0) target = $region13
    $region12: #{conv1d_model_forward.1} parent=1 // pred_region
      %s43 = ssub.s32 16, 16
      %44 = vsyncadd [#allocation10], %s43
      %s46 = sshll.u32 [#allocation9], 4
      %s47 = int_to_ptr.vmem [resolvable:$true] %s46
      %49 = dma.hbm_to_vmem [thread:$0]  %s2, 16, %s47, [#allocation10]
    $region13: #{conv1d_model_forward.1} parent=1 // pred_fallthru
      _
    // Predicated region
    $region14: #{conv1d_model_forward.1} parent=1 // pred_check
      _
    $region15: #{conv1d_model_forward.1} parent=1 // pred_check_branch
      %51 = sbr.rel (0) target = $region17
    $region16: #{conv1d_model_forward.1} parent=1 // pred_region
      _
    $region17: #{conv1d_model_forward.1} parent=1 // pred_fallthru
      _
    // Predicated region
    $region18: #{conv1d_model_forward.1} parent=1 // pred_check
      _
    $region19: #{conv1d_model_forward.1} parent=1 // pred_check_branch
      %53 = sbr.rel (0) target = $region21
    $region20: #{conv1d_model_forward.1} parent=1 // pred_region
      %s55 = ssub.s32 16, 16
      %56 = vsyncadd [#allocation10], %s55
      %s58 = sshll.u32 [#allocation11], 4
      %s59 = int_to_ptr.vmem [resolvable:$true] %s58
      %61 = dma.hbm_to_vmem [thread:$0]  %s4, 16, %s59, [#allocation10]
    $region21: #{conv1d_model_forward.1} parent=1 // pred_fallthru
      _
    // Predicated region
    $region22: #{conv1d_model_forward.1} parent=1 // pred_check
      _
    $region23: #{conv1d_model_forward.1} parent=1 // pred_check_branch
      %63 = sbr.rel (0) target = $region25
    $region24: #{conv1d_model_forward.1} parent=1 // pred_region
      %s65 = ssub.s32 1152, 1152
      %66 = vsyncadd [#allocation13], %s65
      %s67 = sshll.u32 [#allocation12], 4
      %s68 = int_to_ptr.vmem [resolvable:$true] %s67
      %73 = dma.hbm_to_vmem [thread:$0]  %s5, 1152, %s68, [#allocation13], 64, 64, 4
    $region25: #{conv1d_model_forward.1} parent=1 // pred_fallthru
      _
    // Predicated region
    $region26: #{conv1d_model_forward.1} parent=1 // pred_check
      _
    $region27: #{conv1d_model_forward.1} parent=1 // pred_check_branch
      %75 = sbr.rel (0) target = $region29
    $region28: #{conv1d_model_forward.1} parent=1 // pred_region
      %s77 = ssub.s32 16, 16
      %78 = vsyncadd [#allocation13], %s77
      %s80 = sshll.u32 [#allocation14], 4
      %s81 = int_to_ptr.vmem [resolvable:$true] %s80
      %83 = dma.hbm_to_vmem [thread:$0]  %s6, 16, %s81, [#allocation13]
    $region29: #{conv1d_model_forward.1} parent=1 // pred_fallthru
      _
    // Predicated region
    $region30: #{conv1d_model_forward.1} parent=1 // pred_check
      _
    $region31: #{conv1d_model_forward.1} parent=1 // pred_check_branch
      %85 = sbr.rel (0) target = $region33
    $region32: #{conv1d_model_forward.1} parent=1 // pred_region
      _
    $region33: #{conv1d_model_forward.1} parent=1 // pred_fallthru
      _
    // Predicated region
    $region34: #{conv1d_model_forward.1} parent=1 // pred_check
      _
    $region35: #{conv1d_model_forward.1} parent=1 // pred_check_branch
      %87 = sbr.rel (0) target = $region37
    $region36: #{conv1d_model_forward.1} parent=1 // pred_region
      %s89 = ssub.s32 16, 16
      %90 = vsyncadd [#allocation16], %s89
      %s92 = sshll.u32 [#allocation15], 4
      %s93 = int_to_ptr.vmem [resolvable:$true] %s92
      %95 = dma.hbm_to_vmem [thread:$0]  %s8, 16, %s93, [#allocation16]
    $region37: #{conv1d_model_forward.1} parent=1 // pred_fallthru
      _
    // Predicated region
    $region38: #{conv1d_model_forward.1} parent=1 // pred_check
      _
    $region39: #{conv1d_model_forward.1} parent=1 // pred_check_branch
      %97 = sbr.rel (0) target = $region41
    $region40: #{conv1d_model_forward.1} parent=1 // pred_region
      %s99 = ssub.s32 64, 64
      %100 = vsyncadd [#allocation16], %s99
      %s102 = sshll.u32 [#allocation17], 4
      %s103 = int_to_ptr.vmem [resolvable:$true] %s102
      %105 = dma.hbm_to_vmem [thread:$0]  %s10, 64, %s103, [#allocation16]
    $region41: #{conv1d_model_forward.1} parent=1 // pred_fallthru
      _
    // Predicated region
    $region42: #{conv1d_model_forward.1} parent=1 // pred_check
      _
    $region43: #{conv1d_model_forward.1} parent=1 // pred_check_branch
      %107 = sbr.rel (0) target = $region45
    $region44: #{conv1d_model_forward.1} parent=1 // pred_region
      _
    $region45: #{conv1d_model_forward.1} parent=1 // pred_fallthru
      _
    // Predicated region
    $region46: #{conv1d_model_forward.1} parent=1 // pred_check
      _
    $region47: #{conv1d_model_forward.1} parent=1 // pred_check_branch
      %109 = sbr.rel (0) target = $region49
    $region48: #{conv1d_model_forward.1} parent=1 // pred_region
      %s111 = ssub.s32 16, 16
      %112 = vsyncadd [#allocation19], %s111
      %s114 = sshll.u32 [#allocation18], 4
      %s115 = int_to_ptr.vmem [resolvable:$true] %s114
      %117 = dma.hbm_to_vmem [thread:$0]  %s12, 16, %s115, [#allocation19]
    $region49: #{conv1d_model_forward.1} parent=1 // pred_fallthru
      _
    // Predicated region
    $region50: #{conv1d_model_forward.1} parent=1 // pred_check
      _
    $region51: #{conv1d_model_forward.1} parent=1 // pred_check_branch
      %119 = sbr.rel (0) target = $region53
    $region52: #{conv1d_model_forward.1} parent=1 // pred_region
      _
    $region53: #{conv1d_model_forward.1} parent=1 // pred_fallthru
      _
    // Predicated region
    $region54: #{conv1d_model_forward.1} parent=1 // pred_check
      _
    $region55: #{conv1d_model_forward.1} parent=1 // pred_check_branch
      %121 = sbr.rel (0) target = $region57
    $region56: #{conv1d_model_forward.1} parent=1 // pred_region
      %s123 = ssub.s32 16, 16
      %124 = vsyncadd [#allocation19], %s123
      %s126 = sshll.u32 [#allocation20], 4
      %s127 = int_to_ptr.vmem [resolvable:$true] %s126
      %129 = dma.hbm_to_vmem [thread:$0]  %s14, 16, %s127, [#allocation19]
    $region57: #{conv1d_model_forward.1} parent=1 // pred_fallthru
      _
    // Predicated region
    $region58: #{conv1d_model_forward.1} parent=1 // pred_check
      _
    $region59: #{conv1d_model_forward.1} parent=1 // pred_check_branch
      %131 = sbr.rel (0) target = $region61
    $region60: #{conv1d_model_forward.1} parent=1 // pred_region
      %132 = dma.done [#allocation7], 256
    $region61: #{conv1d_model_forward.1} parent=1 // pred_fallthru
      _
    // Predicated region
    $region62: #{conv1d_model_forward.1} parent=1 // pred_check
      _
    $region63: #{conv1d_model_forward.1} parent=1 // pred_check_branch
      %134 = sbr.rel (0) target = $region65
    $region64: #{conv1d_model_forward.1} parent=1 // pred_region
      %135 = dma.done [#allocation10], 16
    $region65: #{conv1d_model_forward.1} parent=1 // pred_fallthru
      _
    // Predicated region
    $region66: #{conv1d_model_forward.1} parent=1 // pred_check
      _
    $region67: #{conv1d_model_forward.1} parent=1 // pred_check_branch
      %137 = sbr.rel (0) target = $region69
    $region68: #{conv1d_model_forward.1} parent=1 // pred_region
      %138 = dma.done [#allocation10], 16
    $region69: #{conv1d_model_forward.1} parent=1 // pred_fallthru
      _
    // Predicated region
    $region70: #{conv1d_model_forward.1} parent=1 // pred_check
      _
    $region71: #{conv1d_model_forward.1} parent=1 // pred_check_branch
      %140 = sbr.rel (0) target = $region73
    $region72: #{conv1d_model_forward.1} parent=1 // pred_region
      %141 = dma.done [#allocation13], 1152
    $region73: #{conv1d_model_forward.1} parent=1 // pred_fallthru
      _
    // Predicated region
    $region74: #{conv1d_model_forward.1} parent=1 // pred_check
      _
    $region75: #{conv1d_model_forward.1} parent=1 // pred_check_branch
      %143 = sbr.rel (0) target = $region77
    $region76: #{conv1d_model_forward.1} parent=1 // pred_region
      %144 = dma.done [#allocation13], 16
    $region77: #{conv1d_model_forward.1} parent=1 // pred_fallthru
      _
    // Predicated region
    $region78: #{conv1d_model_forward.1} parent=1 // pred_check
      _
    $region79: #{conv1d_model_forward.1} parent=1 // pred_check_branch
      %146 = sbr.rel (0) target = $region81
    $region80: #{conv1d_model_forward.1} parent=1 // pred_region
      %147 = dma.done [#allocation16], 16
    $region81: #{conv1d_model_forward.1} parent=1 // pred_fallthru
      _
    // Predicated region
    $region82: #{conv1d_model_forward.1} parent=1 // pred_check
      _
    $region83: #{conv1d_model_forward.1} parent=1 // pred_check_branch
      %149 = sbr.rel (0) target = $region85
    $region84: #{conv1d_model_forward.1} parent=1 // pred_region
      %150 = dma.done [#allocation16], 64
    $region85: #{conv1d_model_forward.1} parent=1 // pred_fallthru
      _
    // Predicated region
    $region86: #{conv1d_model_forward.1} parent=1 // pred_check
      _
    $region87: #{conv1d_model_forward.1} parent=1 // pred_check_branch
      %152 = sbr.rel (0) target = $region89
    $region88: #{conv1d_model_forward.1} parent=1 // pred_region
      %153 = dma.done [#allocation19], 16
    $region89: #{conv1d_model_forward.1} parent=1 // pred_fallthru
      _
    // Predicated region
    $region90: #{conv1d_model_forward.1} parent=1 // pred_check
      _
    $region91: #{conv1d_model_forward.1} parent=1 // pred_check_branch
      %155 = sbr.rel (0) target = $region93
    $region92: #{conv1d_model_forward.1} parent=1 // pred_region
      %156 = dma.done [#allocation19], 16
    $region93: #{conv1d_model_forward.1} parent=1 // pred_fallthru
      _
    %s159 = sshll.u32 1, 14
    %s160 = sxor.u32 4294967295, %s159
    %s162 = sld [smem:[#allocation0]]
    %s163 = sadd.s32 2, %s162
    %s165 = sshll.u32 7, 26
    %s166 = sxor.u32 4294967295, %s165
    %s167 = sand.u32 0, %s166
    %s168 = sshll.u32 %s163, 26
    %s169 = sor.u32 %s167, %s168
    %s170 = sshll.u32 [#allocation4], 4
    %s171 = int_to_ptr.vmem [resolvable:$true] %s170
    %174 = sst [smem:[#allocation23]] 512
    %s175 = scalar_lea.smem [#allocation23], 1
    %176 = sst [smem:[%s175]] 512
    %s177 = scalar_lea.smem [#allocation23], 2
    %178 = sst [smem:[%s177]] 4
    %s179 = scalar_lea.smem [#allocation23], 3
    %180 = sst [smem:[%s179]] 64
    %s181 = scalar_lea.smem [#allocation23], 4
    %182 = sst [smem:[%s181]] 128
    %s183 = scalar_lea.smem [#allocation23], 5
    %184 = sst [smem:[%s183]] 2
    %s185 = scalar_lea.smem [#allocation23], 6
    %186 = sst [smem:[%s185]] 256
    %s187 = scalar_lea.smem [#allocation23], 7
    %188 = sst [smem:[%s187]] 64
    %s189 = scalar_lea.smem [#allocation23], 8
    %190 = sst [smem:[%s189]] 4
    %192 = dma.general %s9, 16384, %s171, [#allocation5], [#allocation22], [#allocation23], %s169, 0
    %s193 = scalar_lea.hbm %s9, 16384
    %s194 = scalar_lea.vmem [#allocation4], 1024
    %s195 = scalar_lea.sflag [#allocation5], 1
    %s197 = sshll.u32 1, 14
    %s198 = sxor.u32 4294967295, %s197
    %s200 = sadd.s32 2, %s162
    %s202 = sshll.u32 7, 26
    %s203 = sxor.u32 4294967295, %s202
    %s204 = sand.u32 0, %s203
    %s205 = sshll.u32 %s200, 26
    %s206 = sor.u32 %s204, %s205
    %s207 = sshll.u32 %s194, 4
    %s208 = int_to_ptr.vmem [resolvable:$true] %s207
    %211 = sst [smem:[#allocation25]] 512
    %s212 = scalar_lea.smem [#allocation25], 1
    %213 = sst [smem:[%s212]] 512
    %s214 = scalar_lea.smem [#allocation25], 2
    %215 = sst [smem:[%s214]] 4
    %s216 = scalar_lea.smem [#allocation25], 3
    %217 = sst [smem:[%s216]] 64
    %s218 = scalar_lea.smem [#allocation25], 4
    %219 = sst [smem:[%s218]] 128
    %s220 = scalar_lea.smem [#allocation25], 5
    %221 = sst [smem:[%s220]] 2
    %s222 = scalar_lea.smem [#allocation25], 6
    %223 = sst [smem:[%s222]] 256
    %s224 = scalar_lea.smem [#allocation25], 7
    %225 = sst [smem:[%s224]] 64
    %s226 = scalar_lea.smem [#allocation25], 8
    %227 = sst [smem:[%s226]] 4
    %229 = dma.general %s193, 16384, %s208, %s195, [#allocation24], [#allocation25], %s206, 0
    %230 = vst [vmem:[#allocation2] sm:$0xff] 0.0
    %231 = vst [vmem:[#allocation2 + $0x8] sm:$0xff] 0.0
    %232 = vst [vmem:[#allocation2 + $0x10] sm:$0xff] 0.0
    %233 = vst [vmem:[#allocation2 + $0x18] sm:$0xff] 0.0
    %234 = vst [vmem:[#allocation2 + $0x20] sm:$0xff] 0.0
    %235 = vst [vmem:[#allocation2 + $0x28] sm:$0xff] 0.0
    %236 = vst [vmem:[#allocation2 + $0x30] sm:$0xff] 0.0
    %237 = vst [vmem:[#allocation2 + $0x38] sm:$0xff] 0.0
    %238 = vst [vmem:[#allocation2 + $0x40] sm:$0xff] 0.0
    %239 = vst [vmem:[#allocation2 + $0x48] sm:$0xff] 0.0
    %240 = vst [vmem:[#allocation2 + $0x50] sm:$0xff] 0.0
    %241 = vst [vmem:[#allocation2 + $0x58] sm:$0xff] 0.0
    %242 = vst [vmem:[#allocation2 + $0x60] sm:$0xff] 0.0
    %243 = vst [vmem:[#allocation2 + $0x68] sm:$0xff] 0.0
    %244 = vst [vmem:[#allocation2 + $0x70] sm:$0xff] 0.0
    %245 = vst [vmem:[#allocation2 + $0x78] sm:$0xff] 0.0
    %246 = vst [vmem:[#allocation2 + $0x80] sm:$0xff] 0.0
    %247 = vst [vmem:[#allocation2 + $0x88] sm:$0xff] 0.0
    %248 = vst [vmem:[#allocation2 + $0x90] sm:$0xff] 0.0
    %249 = vst [vmem:[#allocation2 + $0x98] sm:$0xff] 0.0
    %250 = vst [vmem:[#allocation2 + $0xa0] sm:$0xff] 0.0
    %251 = vst [vmem:[#allocation2 + $0xa8] sm:$0xff] 0.0
    %252 = vst [vmem:[#allocation2 + $0xb0] sm:$0xff] 0.0
    %253 = vst [vmem:[#allocation2 + $0xb8] sm:$0xff] 0.0
    %254 = vst [vmem:[#allocation2 + $0xc0] sm:$0xff] 0.0
    %255 = vst [vmem:[#allocation2 + $0xc8] sm:$0xff] 0.0
    %256 = vst [vmem:[#allocation2 + $0xd0] sm:$0xff] 0.0
    %257 = vst [vmem:[#allocation2 + $0xd8] sm:$0xff] 0.0
    %258 = vst [vmem:[#allocation2 + $0xe0] sm:$0xff] 0.0
    %259 = vst [vmem:[#allocation2 + $0xe8] sm:$0xff] 0.0
    %260 = vst [vmem:[#allocation2 + $0xf0] sm:$0xff] 0.0
    %261 = vst [vmem:[#allocation2 + $0xf8] sm:$0xff] 0.0
    %262 = vst [vmem:[#allocation2 + $0x100] sm:$0xff] 0.0
    %263 = vst [vmem:[#allocation2 + $0x108] sm:$0xff] 0.0
    %v264 = vld [vmem:[%s0] sm:$0xff]
    %v265 = vld [vmem:[%s0 + $0x8] sm:$0xff]
    %v266 = vld [vmem:[%s0 + $0x10] sm:$0xff]
    %v267 = vld [vmem:[%s0 + $0x18] sm:$0xff]
    %v268 = vld [vmem:[%s0 + $0x20] sm:$0xff]
    %v269 = vld [vmem:[%s0 + $0x28] sm:$0xff]
    %v270 = vld [vmem:[%s0 + $0x30] sm:$0xff]
    %v271 = vld [vmem:[%s0 + $0x38] sm:$0xff]
    %v272 = vld [vmem:[%s0 + $0x40] sm:$0xff]
    %v273 = vld [vmem:[%s0 + $0x48] sm:$0xff]
    %v274 = vld [vmem:[%s0 + $0x50] sm:$0xff]
    %v275 = vld [vmem:[%s0 + $0x58] sm:$0xff]
    %v276 = vld [vmem:[%s0 + $0x60] sm:$0xff]
    %v277 = vld [vmem:[%s0 + $0x68] sm:$0xff]
    %v278 = vld [vmem:[%s0 + $0x70] sm:$0xff]
    %v279 = vld [vmem:[%s0 + $0x78] sm:$0xff]
    %v280 = vld [vmem:[%s0 + $0x80] sm:$0xff]
    %v281 = vld [vmem:[%s0 + $0x88] sm:$0xff]
    %v282 = vld [vmem:[%s0 + $0x90] sm:$0xff]
    %v283 = vld [vmem:[%s0 + $0x98] sm:$0xff]
    %v284 = vld [vmem:[%s0 + $0xa0] sm:$0xff]
    %v285 = vld [vmem:[%s0 + $0xa8] sm:$0xff]
    %v286 = vld [vmem:[%s0 + $0xb0] sm:$0xff]
    %v287 = vld [vmem:[%s0 + $0xb8] sm:$0xff]
    %v288 = vld [vmem:[%s0 + $0xc0] sm:$0xff]
    %v289 = vld [vmem:[%s0 + $0xc8] sm:$0xff]
    %v290 = vld [vmem:[%s0 + $0xd0] sm:$0xff]
    %v291 = vld [vmem:[%s0 + $0xd8] sm:$0xff]
    %vm292 = vcmask 31744
    %293 = vst.msk [vmem:[#allocation2 + $0x18] sm:$0xff] %vm292, %v264
    %294 = vst.msk [vmem:[#allocation2 + $0x20] sm:$0xff] %vm292, %v265
    %295 = vst.msk [vmem:[#allocation2 + $0x28] sm:$0xff] %vm292, %v266
    %296 = vst.msk [vmem:[#allocation2 + $0x30] sm:$0xff] %vm292, %v267
    %297 = vst.msk [vmem:[#allocation2 + $0x38] sm:$0xff] %vm292, %v268
    %298 = vst.msk [vmem:[#allocation2 + $0x40] sm:$0xff] %vm292, %v269
    %299 = vst.msk [vmem:[#allocation2 + $0x48] sm:$0xff] %vm292, %v270
    %300 = vst.msk [vmem:[#allocation2 + $0x50] sm:$0xff] %vm292, %v271
    %301 = vst.msk [vmem:[#allocation2 + $0x58] sm:$0xff] %vm292, %v272
    %302 = vst.msk [vmem:[#allocation2 + $0x60] sm:$0xff] %vm292, %v273
    %303 = vst.msk [vmem:[#allocation2 + $0x68] sm:$0xff] %vm292, %v274
    %304 = vst.msk [vmem:[#allocation2 + $0x70] sm:$0xff] %vm292, %v275
    %305 = vst.msk [vmem:[#allocation2 + $0x78] sm:$0xff] %vm292, %v276
    %306 = vst.msk [vmem:[#allocation2 + $0x80] sm:$0xff] %vm292, %v277
    %307 = vst.msk [vmem:[#allocation2 + $0x88] sm:$0xff] %vm292, %v278
    %308 = vst.msk [vmem:[#allocation2 + $0x90] sm:$0xff] %vm292, %v279
    %309 = vst.msk [vmem:[#allocation2 + $0x98] sm:$0xff] %vm292, %v280
    %310 = vst.msk [vmem:[#allocation2 + $0xa0] sm:$0xff] %vm292, %v281
    %311 = vst.msk [vmem:[#allocation2 + $0xa8] sm:$0xff] %vm292, %v282
    %312 = vst.msk [vmem:[#allocation2 + $0xb0] sm:$0xff] %vm292, %v283
    %313 = vst.msk [vmem:[#allocation2 + $0xb8] sm:$0xff] %vm292, %v284
    %314 = vst.msk [vmem:[#allocation2 + $0xc0] sm:$0xff] %vm292, %v285
    %315 = vst.msk [vmem:[#allocation2 + $0xc8] sm:$0xff] %vm292, %v286
    %316 = vst.msk [vmem:[#allocation2 + $0xd0] sm:$0xff] %vm292, %v287
    %317 = vst.msk [vmem:[#allocation2 + $0xd8] sm:$0xff] %vm292, %v288
    %318 = vst.msk [vmem:[#allocation2 + $0xe0] sm:$0xff] %vm292, %v289
    %319 = vst.msk [vmem:[#allocation2 + $0xe8] sm:$0xff] %vm292, %v290
    %320 = vst.msk [vmem:[#allocation2 + $0xf0] sm:$0xff] %vm292, %v291
    %v321 = vld [vmem:[#allocation2] sm:$0xff]
    %v322 = vld [vmem:[#allocation2 + $0x8] sm:$0xff]
    %v323 = vld [vmem:[#allocation2 + $0x10] sm:$0xff]
    %v324 = vld [vmem:[#allocation2 + $0x18] sm:$0xff]
    %v325 = vld [vmem:[#allocation2 + $0x20] sm:$0xff]
    %v326 = vld [vmem:[#allocation2 + $0x28] sm:$0xff]
    %v327 = vld [vmem:[#allocation2 + $0x30] sm:$0xff]
    %v328 = vld [vmem:[#allocation2 + $0x38] sm:$0xff]
    %v329 = vld [vmem:[#allocation2 + $0x40] sm:$0xff]
    %v330 = vld [vmem:[#allocation2 + $0x48] sm:$0xff]
    %v331 = vld [vmem:[#allocation2 + $0x50] sm:$0xff]
    %v332 = vld [vmem:[#allocation2 + $0x58] sm:$0xff]
    %v333 = vld [vmem:[#allocation2 + $0x60] sm:$0xff]
    %v334 = vld [vmem:[#allocation2 + $0x68] sm:$0xff]
    %v335 = vld [vmem:[#allocation2 + $0x70] sm:$0xff]
    %v336 = vld [vmem:[#allocation2 + $0x78] sm:$0xff]
    %v337 = vld [vmem:[#allocation2 + $0x80] sm:$0xff]
    %v338 = vld [vmem:[#allocation2 + $0x88] sm:$0xff]
    %v339 = vld [vmem:[#allocation2 + $0x90] sm:$0xff]
    %v340 = vld [vmem:[#allocation2 + $0x98] sm:$0xff]
    %v341 = vld [vmem:[#allocation2 + $0xa0] sm:$0xff]
    %v342 = vld [vmem:[#allocation2 + $0xa8] sm:$0xff]
    %v343 = vld [vmem:[#allocation2 + $0xb0] sm:$0xff]
    %v344 = vld [vmem:[#allocation2 + $0xb8] sm:$0xff]
    %v345 = vld [vmem:[#allocation2 + $0xc0] sm:$0xff]
    %v346 = vld [vmem:[#allocation2 + $0xc8] sm:$0xff]
    %v347 = vld [vmem:[#allocation2 + $0xd0] sm:$0xff]
    %v348 = vld [vmem:[#allocation2 + $0xd8] sm:$0xff]
    %v349 = vld [vmem:[#allocation2 + $0xe0] sm:$0xff]
    %v350 = vld [vmem:[#allocation2 + $0xe8] sm:$0xff]
    %v351 = vld [vmem:[#allocation2 + $0xf0] sm:$0xff]
    %v352 = vld [vmem:[#allocation2 + $0xf8] sm:$0xff]
    %v353 = vld [vmem:[#allocation2 + $0x100] sm:$0xff]
    %v354 = vld [vmem:[#allocation2 + $0x30] sm:$0xff]
    %v355 = vld [vmem:[#allocation2 + $0x38] sm:$0xff]
    %v356 = vld [vmem:[#allocation2 + $0x40] sm:$0xff]
    %v357 = vld [vmem:[#allocation2 + $0x48] sm:$0xff]
    %v358 = vld [vmem:[#allocation2 + $0x50] sm:$0xff]
    %v359 = vld [vmem:[#allocation2 + $0x58] sm:$0xff]
    %v360 = vld [vmem:[#allocation2 + $0x60] sm:$0xff]
    %v361 = vld [vmem:[#allocation2 + $0x68] sm:$0xff]
    %v362 = vld [vmem:[#allocation2 + $0x70] sm:$0xff]
    %v363 = vld [vmem:[#allocation2 + $0x78] sm:$0xff]
    %v364 = vld [vmem:[#allocation2 + $0x80] sm:$0xff]
    %v365 = vld [vmem:[#allocation2 + $0x88] sm:$0xff]
    %v366 = vld [vmem:[#allocation2 + $0x90] sm:$0xff]
    %v367 = vld [vmem:[#allocation2 + $0x98] sm:$0xff]
    %v368 = vld [vmem:[#allocation2 + $0xa0] sm:$0xff]
    %v369 = vld [vmem:[#allocation2 + $0xa8] sm:$0xff]
    %v370 = vld [vmem:[#allocation2 + $0xb0] sm:$0xff]
    %v371 = vld [vmem:[#allocation2 + $0xb8] sm:$0xff]
    %v372 = vld [vmem:[#allocation2 + $0xc0] sm:$0xff]
    %v373 = vld [vmem:[#allocation2 + $0xc8] sm:$0xff]
    %v374 = vld [vmem:[#allocation2 + $0xd0] sm:$0xff]
    %v375 = vld [vmem:[#allocation2 + $0xd8] sm:$0xff]
    %v376 = vld [vmem:[#allocation2 + $0xe0] sm:$0xff]
    %v377 = vld [vmem:[#allocation2 + $0xe8] sm:$0xff]
    %v378 = vld [vmem:[#allocation2 + $0xf0] sm:$0xff]
    %v379 = vld [vmem:[#allocation2 + $0xf8] sm:$0xff]
    %v380 = vld [vmem:[#allocation2 + $0x100] sm:$0xff]
    %v381 = vld [vmem:[#allocation2 + $0x108] sm:$0xff]
    %410 = vrot.lane.b32.xlu0 %v322, 4
    %v411 = vpop.permute.xlu0 %410
    %412 = vrot.lane.b32.xlu0 %v323, 4
    %v413 = vpop.permute.xlu0 %412
    %414 = vrot.lane.b32.xlu0 %v324, 4
    %v415 = vpop.permute.xlu0 %414
    %416 = vrot.lane.b32.xlu0 %v325, 4
    %v417 = vpop.permute.xlu0 %416
    %418 = vrot.lane.b32.xlu0 %v326, 4
    %v419 = vpop.permute.xlu0 %418
    %420 = vrot.lane.b32.xlu0 %v327, 4
    %v421 = vpop.permute.xlu0 %420
    %422 = vrot.lane.b32.xlu0 %v328, 4
    %v423 = vpop.permute.xlu0 %422
    %424 = vrot.lane.b32.xlu0 %v329, 4
    %v425 = vpop.permute.xlu0 %424
    %426 = vrot.lane.b32.xlu0 %v330, 4
    %v427 = vpop.permute.xlu0 %426
    %428 = vrot.lane.b32.xlu0 %v331, 4
    %v429 = vpop.permute.xlu0 %428
    %430 = vrot.lane.b32.xlu0 %v332, 4
    %v431 = vpop.permute.xlu0 %430
    %432 = vrot.lane.b32.xlu0 %v333, 4
    %v433 = vpop.permute.xlu0 %432
    %434 = vrot.lane.b32.xlu0 %v334, 4
    %v435 = vpop.permute.xlu0 %434
    %436 = vrot.lane.b32.xlu0 %v335, 4
    %v437 = vpop.permute.xlu0 %436
    %438 = vrot.lane.b32.xlu0 %v336, 4
    %v439 = vpop.permute.xlu0 %438
    %440 = vrot.lane.b32.xlu0 %v337, 4
    %v441 = vpop.permute.xlu0 %440
    %442 = vrot.lane.b32.xlu0 %v338, 4
    %v443 = vpop.permute.xlu0 %442
    %444 = vrot.lane.b32.xlu0 %v339, 4
    %v445 = vpop.permute.xlu0 %444
    %446 = vrot.lane.b32.xlu0 %v340, 4
    %v447 = vpop.permute.xlu0 %446
    %448 = vrot.lane.b32.xlu0 %v341, 4
    %v449 = vpop.permute.xlu0 %448
    %450 = vrot.lane.b32.xlu0 %v342, 4
    %v451 = vpop.permute.xlu0 %450
    %452 = vrot.lane.b32.xlu0 %v343, 4
    %v453 = vpop.permute.xlu0 %452
    %454 = vrot.lane.b32.xlu0 %v344, 4
    %v455 = vpop.permute.xlu0 %454
    %456 = vrot.lane.b32.xlu0 %v345, 4
    %v457 = vpop.permute.xlu0 %456
    %458 = vrot.lane.b32.xlu0 %v346, 4
    %v459 = vpop.permute.xlu0 %458
    %460 = vrot.lane.b32.xlu0 %v347, 4
    %v461 = vpop.permute.xlu0 %460
    %462 = vrot.lane.b32.xlu0 %v348, 4
    %v463 = vpop.permute.xlu0 %462
    %464 = vrot.lane.b32.xlu0 %v349, 4
    %v465 = vpop.permute.xlu0 %464
    %495 = vrot.lane.b32.xlu0 %v323, 8
    %v496 = vpop.permute.xlu0 %495
    %497 = vrot.lane.b32.xlu0 %v324, 8
    %v498 = vpop.permute.xlu0 %497
    %499 = vrot.lane.b32.xlu0 %v325, 8
    %v500 = vpop.permute.xlu0 %499
    %501 = vrot.lane.b32.xlu0 %v326, 8
    %v502 = vpop.permute.xlu0 %501
    %503 = vrot.lane.b32.xlu0 %v327, 8
    %v504 = vpop.permute.xlu0 %503
    %505 = vrot.lane.b32.xlu0 %v328, 8
    %v506 = vpop.permute.xlu0 %505
    %507 = vrot.lane.b32.xlu0 %v329, 8
    %v508 = vpop.permute.xlu0 %507
    %509 = vrot.lane.b32.xlu0 %v330, 8
    %v510 = vpop.permute.xlu0 %509
    %511 = vrot.lane.b32.xlu0 %v331, 8
    %v512 = vpop.permute.xlu0 %511
    %513 = vrot.lane.b32.xlu0 %v332, 8
    %v514 = vpop.permute.xlu0 %513
    %515 = vrot.lane.b32.xlu0 %v333, 8
    %v516 = vpop.permute.xlu0 %515
    %517 = vrot.lane.b32.xlu0 %v334, 8
    %v518 = vpop.permute.xlu0 %517
    %519 = vrot.lane.b32.xlu0 %v335, 8
    %v520 = vpop.permute.xlu0 %519
    %521 = vrot.lane.b32.xlu0 %v336, 8
    %v522 = vpop.permute.xlu0 %521
    %523 = vrot.lane.b32.xlu0 %v337, 8
    %v524 = vpop.permute.xlu0 %523
    %525 = vrot.lane.b32.xlu0 %v338, 8
    %v526 = vpop.permute.xlu0 %525
    %527 = vrot.lane.b32.xlu0 %v339, 8
    %v528 = vpop.permute.xlu0 %527
    %529 = vrot.lane.b32.xlu0 %v340, 8
    %v530 = vpop.permute.xlu0 %529
    %531 = vrot.lane.b32.xlu0 %v341, 8
    %v532 = vpop.permute.xlu0 %531
    %533 = vrot.lane.b32.xlu0 %v342, 8
    %v534 = vpop.permute.xlu0 %533
    %535 = vrot.lane.b32.xlu0 %v343, 8
    %v536 = vpop.permute.xlu0 %535
    %537 = vrot.lane.b32.xlu0 %v344, 8
    %v538 = vpop.permute.xlu0 %537
    %539 = vrot.lane.b32.xlu0 %v345, 8
    %v540 = vpop.permute.xlu0 %539
    %541 = vrot.lane.b32.xlu0 %v346, 8
    %v542 = vpop.permute.xlu0 %541
    %543 = vrot.lane.b32.xlu0 %v347, 8
    %v544 = vpop.permute.xlu0 %543
    %545 = vrot.lane.b32.xlu0 %v348, 8
    %v546 = vpop.permute.xlu0 %545
    %547 = vrot.lane.b32.xlu0 %v349, 8
    %v548 = vpop.permute.xlu0 %547
    %549 = vrot.lane.b32.xlu0 %v350, 8
    %v550 = vpop.permute.xlu0 %549
    %580 = vrot.lane.b32.xlu0 %v324, 12
    %v581 = vpop.permute.xlu0 %580
    %582 = vrot.lane.b32.xlu0 %v325, 12
    %v583 = vpop.permute.xlu0 %582
    %584 = vrot.lane.b32.xlu0 %v326, 12
    %v585 = vpop.permute.xlu0 %584
    %586 = vrot.lane.b32.xlu0 %v327, 12
    %v587 = vpop.permute.xlu0 %586
    %588 = vrot.lane.b32.xlu0 %v328, 12
    %v589 = vpop.permute.xlu0 %588
    %590 = vrot.lane.b32.xlu0 %v329, 12
    %v591 = vpop.permute.xlu0 %590
    %592 = vrot.lane.b32.xlu0 %v330, 12
    %v593 = vpop.permute.xlu0 %592
    %594 = vrot.lane.b32.xlu0 %v331, 12
    %v595 = vpop.permute.xlu0 %594
    %596 = vrot.lane.b32.xlu0 %v332, 12
    %v597 = vpop.permute.xlu0 %596
    %598 = vrot.lane.b32.xlu0 %v333, 12
    %v599 = vpop.permute.xlu0 %598
    %600 = vrot.lane.b32.xlu0 %v334, 12
    %v601 = vpop.permute.xlu0 %600
    %602 = vrot.lane.b32.xlu0 %v335, 12
    %v603 = vpop.permute.xlu0 %602
    %604 = vrot.lane.b32.xlu0 %v336, 12
    %v605 = vpop.permute.xlu0 %604
    %606 = vrot.lane.b32.xlu0 %v337, 12
    %v607 = vpop.permute.xlu0 %606
    %608 = vrot.lane.b32.xlu0 %v338, 12
    %v609 = vpop.permute.xlu0 %608
    %610 = vrot.lane.b32.xlu0 %v339, 12
    %v611 = vpop.permute.xlu0 %610
    %612 = vrot.lane.b32.xlu0 %v340, 12
    %v613 = vpop.permute.xlu0 %612
    %614 = vrot.lane.b32.xlu0 %v341, 12
    %v615 = vpop.permute.xlu0 %614
    %616 = vrot.lane.b32.xlu0 %v342, 12
    %v617 = vpop.permute.xlu0 %616
    %618 = vrot.lane.b32.xlu0 %v343, 12
    %v619 = vpop.permute.xlu0 %618
    %620 = vrot.lane.b32.xlu0 %v344, 12
    %v621 = vpop.permute.xlu0 %620
    %622 = vrot.lane.b32.xlu0 %v345, 12
    %v623 = vpop.permute.xlu0 %622
    %624 = vrot.lane.b32.xlu0 %v346, 12
    %v625 = vpop.permute.xlu0 %624
    %626 = vrot.lane.b32.xlu0 %v347, 12
    %v627 = vpop.permute.xlu0 %626
    %628 = vrot.lane.b32.xlu0 %v348, 12
    %v629 = vpop.permute.xlu0 %628
    %630 = vrot.lane.b32.xlu0 %v349, 12
    %v631 = vpop.permute.xlu0 %630
    %632 = vrot.lane.b32.xlu0 %v350, 12
    %v633 = vpop.permute.xlu0 %632
    %634 = vrot.lane.b32.xlu0 %v351, 12
    %v635 = vpop.permute.xlu0 %634
    %665 = vrot.lane.b32.xlu0 %v325, 16
    %v666 = vpop.permute.xlu0 %665
    %667 = vrot.lane.b32.xlu0 %v326, 16
    %v668 = vpop.permute.xlu0 %667
    %669 = vrot.lane.b32.xlu0 %v327, 16
    %v670 = vpop.permute.xlu0 %669
    %671 = vrot.lane.b32.xlu0 %v328, 16
    %v672 = vpop.permute.xlu0 %671
    %673 = vrot.lane.b32.xlu0 %v329, 16
    %v674 = vpop.permute.xlu0 %673
    %675 = vrot.lane.b32.xlu0 %v330, 16
    %v676 = vpop.permute.xlu0 %675
    %677 = vrot.lane.b32.xlu0 %v331, 16
    %v678 = vpop.permute.xlu0 %677
    %679 = vrot.lane.b32.xlu0 %v332, 16
    %v680 = vpop.permute.xlu0 %679
    %681 = vrot.lane.b32.xlu0 %v333, 16
    %v682 = vpop.permute.xlu0 %681
    %683 = vrot.lane.b32.xlu0 %v334, 16
    %v684 = vpop.permute.xlu0 %683
    %685 = vrot.lane.b32.xlu0 %v335, 16
    %v686 = vpop.permute.xlu0 %685
    %687 = vrot.lane.b32.xlu0 %v336, 16
    %v688 = vpop.permute.xlu0 %687
    %689 = vrot.lane.b32.xlu0 %v337, 16
    %v690 = vpop.permute.xlu0 %689
    %691 = vrot.lane.b32.xlu0 %v338, 16
    %v692 = vpop.permute.xlu0 %691
    %693 = vrot.lane.b32.xlu0 %v339, 16
    %v694 = vpop.permute.xlu0 %693
    %695 = vrot.lane.b32.xlu0 %v340, 16
    %v696 = vpop.permute.xlu0 %695
    %697 = vrot.lane.b32.xlu0 %v341, 16
    %v698 = vpop.permute.xlu0 %697
    %699 = vrot.lane.b32.xlu0 %v342, 16
    %v700 = vpop.permute.xlu0 %699
    %701 = vrot.lane.b32.xlu0 %v343, 16
    %v702 = vpop.permute.xlu0 %701
    %703 = vrot.lane.b32.xlu0 %v344, 16
    %v704 = vpop.permute.xlu0 %703
    %705 = vrot.lane.b32.xlu0 %v345, 16
    %v706 = vpop.permute.xlu0 %705
    %707 = vrot.lane.b32.xlu0 %v346, 16
    %v708 = vpop.permute.xlu0 %707
    %709 = vrot.lane.b32.xlu0 %v347, 16
    %v710 = vpop.permute.xlu0 %709
    %711 = vrot.lane.b32.xlu0 %v348, 16
    %v712 = vpop.permute.xlu0 %711
    %713 = vrot.lane.b32.xlu0 %v349, 16
    %v714 = vpop.permute.xlu0 %713
    %715 = vrot.lane.b32.xlu0 %v350, 16
    %v716 = vpop.permute.xlu0 %715
    %717 = vrot.lane.b32.xlu0 %v351, 16
    %v718 = vpop.permute.xlu0 %717
    %719 = vrot.lane.b32.xlu0 %v352, 16
    %v720 = vpop.permute.xlu0 %719
    %750 = vrot.lane.b32.xlu0 %v326, 20
    %v751 = vpop.permute.xlu0 %750
    %752 = vrot.lane.b32.xlu0 %v327, 20
    %v753 = vpop.permute.xlu0 %752
    %754 = vrot.lane.b32.xlu0 %v328, 20
    %v755 = vpop.permute.xlu0 %754
    %756 = vrot.lane.b32.xlu0 %v329, 20
    %v757 = vpop.permute.xlu0 %756
    %758 = vrot.lane.b32.xlu0 %v330, 20
    %v759 = vpop.permute.xlu0 %758
    %760 = vrot.lane.b32.xlu0 %v331, 20
    %v761 = vpop.permute.xlu0 %760
    %762 = vrot.lane.b32.xlu0 %v332, 20
    %v763 = vpop.permute.xlu0 %762
    %764 = vrot.lane.b32.xlu0 %v333, 20
    %v765 = vpop.permute.xlu0 %764
    %766 = vrot.lane.b32.xlu0 %v334, 20
    %v767 = vpop.permute.xlu0 %766
    %768 = vrot.lane.b32.xlu0 %v335, 20
    %v769 = vpop.permute.xlu0 %768
    %770 = vrot.lane.b32.xlu0 %v336, 20
    %v771 = vpop.permute.xlu0 %770
    %772 = vrot.lane.b32.xlu0 %v337, 20
    %v773 = vpop.permute.xlu0 %772
    %774 = vrot.lane.b32.xlu0 %v338, 20
    %v775 = vpop.permute.xlu0 %774
    %776 = vrot.lane.b32.xlu0 %v339, 20
    %v777 = vpop.permute.xlu0 %776
    %778 = vrot.lane.b32.xlu0 %v340, 20
    %v779 = vpop.permute.xlu0 %778
    %780 = vrot.lane.b32.xlu0 %v341, 20
    %v781 = vpop.permute.xlu0 %780
    %782 = vrot.lane.b32.xlu0 %v342, 20
    %v783 = vpop.permute.xlu0 %782
    %784 = vrot.lane.b32.xlu0 %v343, 20
    %v785 = vpop.permute.xlu0 %784
    %786 = vrot.lane.b32.xlu0 %v344, 20
    %v787 = vpop.permute.xlu0 %786
    %788 = vrot.lane.b32.xlu0 %v345, 20
    %v789 = vpop.permute.xlu0 %788
    %790 = vrot.lane.b32.xlu0 %v346, 20
    %v791 = vpop.permute.xlu0 %790
    %792 = vrot.lane.b32.xlu0 %v347, 20
    %v793 = vpop.permute.xlu0 %792
    %794 = vrot.lane.b32.xlu0 %v348, 20
    %v795 = vpop.permute.xlu0 %794
    %796 = vrot.lane.b32.xlu0 %v349, 20
    %v797 = vpop.permute.xlu0 %796
    %798 = vrot.lane.b32.xlu0 %v350, 20
    %v799 = vpop.permute.xlu0 %798
    %800 = vrot.lane.b32.xlu0 %v351, 20
    %v801 = vpop.permute.xlu0 %800
    %802 = vrot.lane.b32.xlu0 %v352, 20
    %v803 = vpop.permute.xlu0 %802
    %804 = vrot.lane.b32.xlu0 %v353, 20
    %v805 = vpop.permute.xlu0 %804
    %862 = vrot.lane.b32.xlu0 %v354, 24
    %v863 = vpop.permute.xlu0 %862
    %864 = vrot.lane.b32.xlu0 %v355, 24
    %v865 = vpop.permute.xlu0 %864
    %866 = vrot.lane.b32.xlu0 %v356, 24
    %v867 = vpop.permute.xlu0 %866
    %868 = vrot.lane.b32.xlu0 %v357, 24
    %v869 = vpop.permute.xlu0 %868
    %870 = vrot.lane.b32.xlu0 %v358, 24
    %v871 = vpop.permute.xlu0 %870
    %872 = vrot.lane.b32.xlu0 %v359, 24
    %v873 = vpop.permute.xlu0 %872
    %874 = vrot.lane.b32.xlu0 %v360, 24
    %v875 = vpop.permute.xlu0 %874
    %876 = vrot.lane.b32.xlu0 %v361, 24
    %v877 = vpop.permute.xlu0 %876
    %878 = vrot.lane.b32.xlu0 %v362, 24
    %v879 = vpop.permute.xlu0 %878
    %880 = vrot.lane.b32.xlu0 %v363, 24
    %v881 = vpop.permute.xlu0 %880
    %882 = vrot.lane.b32.xlu0 %v364, 24
    %v883 = vpop.permute.xlu0 %882
    %884 = vrot.lane.b32.xlu0 %v365, 24
    %v885 = vpop.permute.xlu0 %884
    %886 = vrot.lane.b32.xlu0 %v366, 24
    %v887 = vpop.permute.xlu0 %886
    %888 = vrot.lane.b32.xlu0 %v367, 24
    %v889 = vpop.permute.xlu0 %888
    %890 = vrot.lane.b32.xlu0 %v368, 24
    %v891 = vpop.permute.xlu0 %890
    %892 = vrot.lane.b32.xlu0 %v369, 24
    %v893 = vpop.permute.xlu0 %892
    %894 = vrot.lane.b32.xlu0 %v370, 24
    %v895 = vpop.permute.xlu0 %894
    %896 = vrot.lane.b32.xlu0 %v371, 24
    %v897 = vpop.permute.xlu0 %896
    %898 = vrot.lane.b32.xlu0 %v372, 24
    %v899 = vpop.permute.xlu0 %898
    %900 = vrot.lane.b32.xlu0 %v373, 24
    %v901 = vpop.permute.xlu0 %900
    %902 = vrot.lane.b32.xlu0 %v374, 24
    %v903 = vpop.permute.xlu0 %902
    %904 = vrot.lane.b32.xlu0 %v375, 24
    %v905 = vpop.permute.xlu0 %904
    %906 = vrot.lane.b32.xlu0 %v376, 24
    %v907 = vpop.permute.xlu0 %906
    %908 = vrot.lane.b32.xlu0 %v377, 24
    %v909 = vpop.permute.xlu0 %908
    %910 = vrot.lane.b32.xlu0 %v378, 24
    %v911 = vpop.permute.xlu0 %910
    %912 = vrot.lane.b32.xlu0 %v379, 24
    %v913 = vpop.permute.xlu0 %912
    %914 = vrot.lane.b32.xlu0 %v380, 24
    %v915 = vpop.permute.xlu0 %914
    %916 = vrot.lane.b32.xlu0 %v381, 24
    %v917 = vpop.permute.xlu0 %916
    %v946 = vsel %vm292, %v321, %v411
    %v947 = vsel %vm292, %v322, %v413
    %v948 = vsel %vm292, %v323, %v415
    %v949 = vsel %vm292, %v324, %v417
    %v950 = vsel %vm292, %v325, %v419
    %v951 = vsel %vm292, %v326, %v421
    %v952 = vsel %vm292, %v327, %v423
    %v953 = vsel %vm292, %v328, %v425
    %v954 = vsel %vm292, %v329, %v427
    %v955 = vsel %vm292, %v330, %v429
    %v956 = vsel %vm292, %v331, %v431
    %v957 = vsel %vm292, %v332, %v433
    %v958 = vsel %vm292, %v333, %v435
    %v959 = vsel %vm292, %v334, %v437
    %v960 = vsel %vm292, %v335, %v439
    %v961 = vsel %vm292, %v336, %v441
    %v962 = vsel %vm292, %v337, %v443
    %v963 = vsel %vm292, %v338, %v445
    %v964 = vsel %vm292, %v339, %v447
    %v965 = vsel %vm292, %v340, %v449
    %v966 = vsel %vm292, %v341, %v451
    %v967 = vsel %vm292, %v342, %v453
    %v968 = vsel %vm292, %v343, %v455
    %v969 = vsel %vm292, %v344, %v457
    %v970 = vsel %vm292, %v345, %v459
    %v971 = vsel %vm292, %v346, %v461
    %v972 = vsel %vm292, %v347, %v463
    %v973 = vsel %vm292, %v348, %v465
    %vm974 = vcmask 64512
    %v975 = vsel %vm974, %v946, %v496
    %v976 = vsel %vm974, %v947, %v498
    %v977 = vsel %vm974, %v948, %v500
    %v978 = vsel %vm974, %v949, %v502
    %v979 = vsel %vm974, %v950, %v504
    %v980 = vsel %vm974, %v951, %v506
    %v981 = vsel %vm974, %v952, %v508
    %v982 = vsel %vm974, %v953, %v510
    %v983 = vsel %vm974, %v954, %v512
    %v984 = vsel %vm974, %v955, %v514
    %v985 = vsel %vm974, %v956, %v516
    %v986 = vsel %vm974, %v957, %v518
    %v987 = vsel %vm974, %v958, %v520
    %v988 = vsel %vm974, %v959, %v522
    %v989 = vsel %vm974, %v960, %v524
    %v990 = vsel %vm974, %v961, %v526
    %v991 = vsel %vm974, %v962, %v528
    %v992 = vsel %vm974, %v963, %v530
    %v993 = vsel %vm974, %v964, %v532
    %v994 = vsel %vm974, %v965, %v534
    %v995 = vsel %vm974, %v966, %v536
    %v996 = vsel %vm974, %v967, %v538
    %v997 = vsel %vm974, %v968, %v540
    %v998 = vsel %vm974, %v969, %v542
    %v999 = vsel %vm974, %v970, %v544
    %v1000 = vsel %vm974, %v971, %v546
    %v1001 = vsel %vm974, %v972, %v548
    %v1002 = vsel %vm974, %v973, %v550
    %vm1003 = vcmask 97280
    %v1004 = vsel %vm1003, %v975, %v581
    %v1005 = vsel %vm1003, %v976, %v583
    %v1006 = vsel %vm1003, %v977, %v585
    %v1007 = vsel %vm1003, %v978, %v587
    %v1008 = vsel %vm1003, %v979, %v589
    %v1009 = vsel %vm1003, %v980, %v591
    %v1010 = vsel %vm1003, %v981, %v593
    %v1011 = vsel %vm1003, %v982, %v595
    %v1012 = vsel %vm1003, %v983, %v597
    %v1013 = vsel %vm1003, %v984, %v599
    %v1014 = vsel %vm1003, %v985, %v601
    %v1015 = vsel %vm1003, %v986, %v603
    %v1016 = vsel %vm1003, %v987, %v605
    %v1017 = vsel %vm1003, %v988, %v607
    %v1018 = vsel %vm1003, %v989, %v609
    %v1019 = vsel %vm1003, %v990, %v611
    %v1020 = vsel %vm1003, %v991, %v613
    %v1021 = vsel %vm1003, %v992, %v615
    %v1022 = vsel %vm1003, %v993, %v617
    %v1023 = vsel %vm1003, %v994, %v619
    %v1024 = vsel %vm1003, %v995, %v621
    %v1025 = vsel %vm1003, %v996, %v623
    %v1026 = vsel %vm1003, %v997, %v625
    %v1027 = vsel %vm1003, %v998, %v627
    %v1028 = vsel %vm1003, %v999, %v629
    %v1029 = vsel %vm1003, %v1000, %v631
    %v1030 = vsel %vm1003, %v1001, %v633
    %v1031 = vsel %vm1003, %v1002, %v635
    %vm1032 = vcmask 130048
    %v1033 = vsel %vm1032, %v1004, %v666
    %v1034 = vsel %vm1032, %v1005, %v668
    %v1035 = vsel %vm1032, %v1006, %v670
    %v1036 = vsel %vm1032, %v1007, %v672
    %v1037 = vsel %vm1032, %v1008, %v674
    %v1038 = vsel %vm1032, %v1009, %v676
    %v1039 = vsel %vm1032, %v1010, %v678
    %v1040 = vsel %vm1032, %v1011, %v680
    %v1041 = vsel %vm1032, %v1012, %v682
    %v1042 = vsel %vm1032, %v1013, %v684
    %v1043 = vsel %vm1032, %v1014, %v686
    %v1044 = vsel %vm1032, %v1015, %v688
    %v1045 = vsel %vm1032, %v1016, %v690
    %v1046 = vsel %vm1032, %v1017, %v692
    %v1047 = vsel %vm1032, %v1018, %v694
    %v1048 = vsel %vm1032, %v1019, %v696
    %v1049 = vsel %vm1032, %v1020, %v698
    %v1050 = vsel %vm1032, %v1021, %v700
    %v1051 = vsel %vm1032, %v1022, %v702
    %v1052 = vsel %vm1032, %v1023, %v704
    %v1053 = vsel %vm1032, %v1024, %v706
    %v1054 = vsel %vm1032, %v1025, %v708
    %v1055 = vsel %vm1032, %v1026, %v710
    %v1056 = vsel %vm1032, %v1027, %v712
    %v1057 = vsel %vm1032, %v1028, %v714
    %v1058 = vsel %vm1032, %v1029, %v716
    %v1059 = vsel %vm1032, %v1030, %v718
    %v1060 = vsel %vm1032, %v1031, %v720
    %vm1061 = vcmask 162816
    %v1062 = vsel %vm1061, %v1033, %v751
    %v1063 = vsel %vm1061, %v1034, %v753
    %v1064 = vsel %vm1061, %v1035, %v755
    %v1065 = vsel %vm1061, %v1036, %v757
    %v1066 = vsel %vm1061, %v1037, %v759
    %v1067 = vsel %vm1061, %v1038, %v761
    %v1068 = vsel %vm1061, %v1039, %v763
    %v1069 = vsel %vm1061, %v1040, %v765
    %v1070 = vsel %vm1061, %v1041, %v767
    %v1071 = vsel %vm1061, %v1042, %v769
    %v1072 = vsel %vm1061, %v1043, %v771
    %v1073 = vsel %vm1061, %v1044, %v773
    %v1074 = vsel %vm1061, %v1045, %v775
    %v1075 = vsel %vm1061, %v1046, %v777
    %v1076 = vsel %vm1061, %v1047, %v779
    %v1077 = vsel %vm1061, %v1048, %v781
    %v1078 = vsel %vm1061, %v1049, %v783
    %v1079 = vsel %vm1061, %v1050, %v785
    %v1080 = vsel %vm1061, %v1051, %v787
    %v1081 = vsel %vm1061, %v1052, %v789
    %v1082 = vsel %vm1061, %v1053, %v791
    %v1083 = vsel %vm1061, %v1054, %v793
    %v1084 = vsel %vm1061, %v1055, %v795
    %v1085 = vsel %vm1061, %v1056, %v797
    %v1086 = vsel %vm1061, %v1057, %v799
    %v1087 = vsel %vm1061, %v1058, %v801
    %v1088 = vsel %vm1061, %v1059, %v803
    %v1089 = vsel %vm1061, %v1060, %v805
    %vm1090 = vcmask 195584
    %v1091 = vsel %vm1090, %v1062, %v863
    %v1092 = vsel %vm1090, %v1063, %v865
    %v1093 = vsel %vm1090, %v1064, %v867
    %v1094 = vsel %vm1090, %v1065, %v869
    %v1095 = vsel %vm1090, %v1066, %v871
    %v1096 = vsel %vm1090, %v1067, %v873
    %v1097 = vsel %vm1090, %v1068, %v875
    %v1098 = vsel %vm1090, %v1069, %v877
    %v1099 = vsel %vm1090, %v1070, %v879
    %v1100 = vsel %vm1090, %v1071, %v881
    %v1101 = vsel %vm1090, %v1072, %v883
    %v1102 = vsel %vm1090, %v1073, %v885
    %v1103 = vsel %vm1090, %v1074, %v887
    %v1104 = vsel %vm1090, %v1075, %v889
    %v1105 = vsel %vm1090, %v1076, %v891
    %v1106 = vsel %vm1090, %v1077, %v893
    %v1107 = vsel %vm1090, %v1078, %v895
    %v1108 = vsel %vm1090, %v1079, %v897
    %v1109 = vsel %vm1090, %v1080, %v899
    %v1110 = vsel %vm1090, %v1081, %v901
    %v1111 = vsel %vm1090, %v1082, %v903
    %v1112 = vsel %vm1090, %v1083, %v905
    %v1113 = vsel %vm1090, %v1084, %v907
    %v1114 = vsel %vm1090, %v1085, %v909
    %v1115 = vsel %vm1090, %v1086, %v911
    %v1116 = vsel %vm1090, %v1087, %v913
    %v1117 = vsel %vm1090, %v1088, %v915
    %v1118 = vsel %vm1090, %v1089, %v917
    %v1119 = vpack.c.bf16 %v1092, %v1091
    %v1120 = vpack.c.bf16 %v1094, %v1093
    %v1121 = vpack.c.bf16 %v1096, %v1095
    %v1122 = vpack.c.bf16 %v1098, %v1097
    %v1123 = vpack.c.bf16 %v1100, %v1099
    %v1124 = vpack.c.bf16 %v1102, %v1101
    %v1125 = vpack.c.bf16 %v1104, %v1103
    %v1126 = vpack.c.bf16 %v1106, %v1105
    %v1127 = vpack.c.bf16 %v1108, %v1107
    %v1128 = vpack.c.bf16 %v1110, %v1109
    %v1129 = vpack.c.bf16 %v1112, %v1111
    %v1130 = vpack.c.bf16 %v1114, %v1113
    %v1131 = vpack.c.bf16 %v1116, %v1115
    %v1132 = vpack.c.bf16 %v1118, %v1117
    %v1133 = vld [vmem:[#allocation6] sm:$0xf]
    %v1134 = vld [vmem:[#allocation6 + $0x4] sm:$0xf]
    %v1135 = vld [vmem:[#allocation6 + $0x8] sm:$0xf]
    %v1136 = vld [vmem:[#allocation6 + $0xc] sm:$0x3]
    %v1137 = vld [vmem:[#allocation9] sm:$0x1]
    %v1139 = vlaneseq
    %v1140 = vshrl.u32 %v1139, 7
    %v1141 = vsub.s32 0, %v1140
    %v1142 = vrot.slane %v1137, %v1141
    %v1148 = vunpack.c.l.b16 %v1133
    %v1149 = vunpack.c.l.b16 %v1134
    %v1150 = vunpack.c.l.b16 %v1135
    %v1151 = vunpack.c.l.b16 %v1136
    %v1152 = vpack.c.b16 %v1149, %v1148
    %v1153 = vpack.c.b16 %v1151, %v1150
    %vm1155 = vcmask 228352
    %v1157 = vsel %vm1155, %v1119, 0
    %v1160 = vsel %vm1155, %v1120, 0
    %v1163 = vsel %vm1155, %v1121, 0
    %v1166 = vsel %vm1155, %v1122, 0
    %v1169 = vsel %vm1155, %v1123, 0
    %v1172 = vsel %vm1155, %v1124, 0
    %v1175 = vsel %vm1155, %v1125, 0
    %v1178 = vsel %vm1155, %v1126, 0
    %v1181 = vsel %vm1155, %v1127, 0
    %v1184 = vsel %vm1155, %v1128, 0
    %v1187 = vsel %vm1155, %v1129, 0
    %v1190 = vsel %vm1155, %v1130, 0
    %v1193 = vsel %vm1155, %v1131, 0
    %v1196 = vsel %vm1155, %v1132, 0
    %vm1198 = vcmask 1045504
    %v1200 = vsel %vm1198, %v1153, 0
    %1202 = vmatprep.subr.bf16.mxu0 0
    %1203 = vmatpush1.bf16.msra.mxu0 %v1152
    %1204 = vmatprep.subr.bf16.mxu0 0
    %1205 = vmatpush1.bf16.msra.mxu0 %v1200
    %1206 = vmatprep.subr.bf16.mxu0 0
    %1207 = vmatpush1.bf16.msra.mxu0 0
    %1208 = vmatprep.subr.bf16.mxu0 0
    %1209 = vmatpush1.bf16.msra.mxu0 0
    %1210 = vmatprep.subr.bf16.mxu0 0
    %1211 = vmatpush1.bf16.msra.mxu0 0
    %1212 = vmatprep.subr.bf16.mxu0 0
    %1213 = vmatpush1.bf16.msra.mxu0 0
    %1214 = vmatprep.subr.bf16.mxu0 0
    %1215 = vmatpush1.bf16.msra.mxu0 0
    %1216 = vmatprep.subr.bf16.mxu0 0
    %1217 = vmatpush1.bf16.msra.mxu0 0
    %1218 = vmatprep.subr.bf16.mxu0 0
    %1219 = vmatpush1.bf16.msra.mxu0 0
    %1220 = vmatprep.subr.bf16.mxu0 0
    %1221 = vmatpush1.bf16.msra.mxu0 0
    %1222 = vmatprep.subr.bf16.mxu0 0
    %1223 = vmatpush1.bf16.msra.mxu0 0
    %1224 = vmatprep.subr.bf16.mxu0 0
    %1225 = vmatpush1.bf16.msra.mxu0 0
    %1226 = vmatprep.subr.bf16.mxu0 0
    %1227 = vmatpush1.bf16.msra.mxu0 0
    %1228 = vmatprep.subr.bf16.mxu0 0
    %1229 = vmatpush1.bf16.msra.mxu0 0
    %1230 = vmatprep.subr.bf16.mxu0 0
    %1231 = vmatpush1.bf16.msra.mxu0 0
    %1232 = vmatprep.subr.bf16.mxu0 0
    %1233 = vmatpush1.bf16.msra.mxu0 0
    %1234 = vmatprep.mubr.bf16.mxu0 0
    %1235 = vmatmul.mubr.bf16.gmra.mrb[0].mxu0 %v1157
    %v1236 = vpop.f32.mrb[0].mxu0
    %v1237 = vadd.f32 %v1142, %v1236
    %v1238 = vpop.f32.mrb[0].mxu0
    %v1239 = vpop.f32.mrb[0].mxu0
    %v1240 = vadd.f32 %v1142, %v1239
    %v1241 = vpop.f32.mrb[0].mxu0
    %1242 = vmatprep.mubr.bf16.mxu0 0
    %1243 = vmatmul.mubr.bf16.gmra.mrb[0].mxu0 %v1160
    %v1244 = vpop.f32.mrb[0].mxu0
    %v1245 = vadd.f32 %v1142, %v1244
    %v1246 = vpop.f32.mrb[0].mxu0
    %v1247 = vpop.f32.mrb[0].mxu0
    %v1248 = vadd.f32 %v1142, %v1247
    %v1249 = vpop.f32.mrb[0].mxu0
    %1250 = vmatprep.mubr.bf16.mxu0 0
    %1251 = vmatmul.mubr.bf16.gmra.mrb[0].mxu0 %v1163
    %v1252 = vpop.f32.mrb[0].mxu0
    %v1253 = vadd.f32 %v1142, %v1252
    %v1254 = vpop.f32.mrb[0].mxu0
    %v1255 = vpop.f32.mrb[0].mxu0
    %v1256 = vadd.f32 %v1142, %v1255
    %v1257 = vpop.f32.mrb[0].mxu0
    %1258 = vmatprep.mubr.bf16.mxu0 0
    %1259 = vmatmul.mubr.bf16.gmra.mrb[0].mxu0 %v1166
    %v1260 = vpop.f32.mrb[0].mxu0
    %v1261 = vadd.f32 %v1142, %v1260
    %v1262 = vpop.f32.mrb[0].mxu0
    %v1263 = vpop.f32.mrb[0].mxu0
    %v1264 = vadd.f32 %v1142, %v1263
    %v1265 = vpop.f32.mrb[0].mxu0
    %1266 = vmatprep.mubr.bf16.mxu0 0
    %1267 = vmatmul.mubr.bf16.gmra.mrb[0].mxu0 %v1169
    %v1268 = vpop.f32.mrb[0].mxu0
    %v1269 = vadd.f32 %v1142, %v1268
    %v1270 = vpop.f32.mrb[0].mxu0
    %v1271 = vpop.f32.mrb[0].mxu0
    %v1272 = vadd.f32 %v1142, %v1271
    %v1273 = vpop.f32.mrb[0].mxu0
    %1274 = vmatprep.mubr.bf16.mxu0 0
    %1275 = vmatmul.mubr.bf16.gmra.mrb[0].mxu0 %v1172
    %v1276 = vpop.f32.mrb[0].mxu0
    %v1277 = vadd.f32 %v1142, %v1276
    %v1278 = vpop.f32.mrb[0].mxu0
    %v1279 = vpop.f32.mrb[0].mxu0
    %v1280 = vadd.f32 %v1142, %v1279
    %v1281 = vpop.f32.mrb[0].mxu0
    %1282 = vmatprep.mubr.bf16.mxu0 0
    %1283 = vmatmul.mubr.bf16.gmra.mrb[0].mxu0 %v1175
    %v1284 = vpop.f32.mrb[0].mxu0
    %v1285 = vadd.f32 %v1142, %v1284
    %v1286 = vpop.f32.mrb[0].mxu0
    %v1287 = vpop.f32.mrb[0].mxu0
    %v1288 = vadd.f32 %v1142, %v1287
    %v1289 = vpop.f32.mrb[0].mxu0
    %1290 = vmatprep.mubr.bf16.mxu0 0
    %1291 = vmatmul.mubr.bf16.gmra.mrb[0].mxu0 %v1178
    %v1292 = vpop.f32.mrb[0].mxu0
    %v1293 = vadd.f32 %v1142, %v1292
    %v1294 = vpop.f32.mrb[0].mxu0
    %v1295 = vpop.f32.mrb[0].mxu0
    %v1296 = vadd.f32 %v1142, %v1295
    %v1297 = vpop.f32.mrb[0].mxu0
    %1298 = vmatprep.mubr.bf16.mxu0 0
    %1299 = vmatmul.mubr.bf16.gmra.mrb[0].mxu0 %v1181
    %v1300 = vpop.f32.mrb[0].mxu0
    %v1301 = vadd.f32 %v1142, %v1300
    %v1302 = vpop.f32.mrb[0].mxu0
    %v1303 = vpop.f32.mrb[0].mxu0
    %v1304 = vadd.f32 %v1142, %v1303
    %v1305 = vpop.f32.mrb[0].mxu0
    %1306 = vmatprep.mubr.bf16.mxu0 0
    %1307 = vmatmul.mubr.bf16.gmra.mrb[0].mxu0 %v1184
    %v1308 = vpop.f32.mrb[0].mxu0
    %v1309 = vadd.f32 %v1142, %v1308
    %v1310 = vpop.f32.mrb[0].mxu0
    %v1311 = vpop.f32.mrb[0].mxu0
    %v1312 = vadd.f32 %v1142, %v1311
    %v1313 = vpop.f32.mrb[0].mxu0
    %1314 = vmatprep.mubr.bf16.mxu0 0
    %1315 = vmatmul.mubr.bf16.gmra.mrb[0].mxu0 %v1187
    %v1316 = vpop.f32.mrb[0].mxu0
    %v1317 = vadd.f32 %v1142, %v1316
    %v1318 = vpop.f32.mrb[0].mxu0
    %v1319 = vpop.f32.mrb[0].mxu0
    %v1320 = vadd.f32 %v1142, %v1319
    %v1321 = vpop.f32.mrb[0].mxu0
    %1322 = vmatprep.mubr.bf16.mxu0 0
    %1323 = vmatmul.mubr.bf16.gmra.mrb[0].mxu0 %v1190
    %v1324 = vpop.f32.mrb[0].mxu0
    %v1325 = vadd.f32 %v1142, %v1324
    %v1326 = vpop.f32.mrb[0].mxu0
    %v1327 = vpop.f32.mrb[0].mxu0
    %v1328 = vadd.f32 %v1142, %v1327
    %v1329 = vpop.f32.mrb[0].mxu0
    %1330 = vmatprep.mubr.bf16.mxu0 0
    %1331 = vmatmul.mubr.bf16.gmra.mrb[0].mxu0 %v1193
    %v1332 = vpop.f32.mrb[0].mxu0
    %v1333 = vadd.f32 %v1142, %v1332
    %v1334 = vpop.f32.mrb[0].mxu0
    %v1335 = vpop.f32.mrb[0].mxu0
    %v1336 = vadd.f32 %v1142, %v1335
    %v1337 = vpop.f32.mrb[0].mxu0
    %1338 = vmatprep.mubr.bf16.mxu0 0
    %1339 = vmatmul.mubr.bf16.gmra.mrb[0].mxu0 %v1196
    %v1340 = vpop.f32.mrb[0].mxu0
    %v1341 = vadd.f32 %v1142, %v1340
    %v1342 = vpop.f32.mrb[0].mxu0
    %v1343 = vpop.f32.mrb[0].mxu0
    %v1344 = vadd.f32 %v1142, %v1343
    %v1345 = vpop.f32.mrb[0].mxu0
    %1346 = vdwg.mxu0
    %v1347 = vxor.u32 %v1237, 2147483648
    %v1348 = vxor.u32 %v1240, 2147483648
    %v1349 = vxor.u32 %v1245, 2147483648
    %v1350 = vxor.u32 %v1248, 2147483648
    %v1351 = vxor.u32 %v1253, 2147483648
    %v1352 = vxor.u32 %v1256, 2147483648
    %v1353 = vxor.u32 %v1261, 2147483648
    %v1354 = vxor.u32 %v1264, 2147483648
    %v1355 = vxor.u32 %v1269, 2147483648
    %v1356 = vxor.u32 %v1272, 2147483648
    %v1357 = vxor.u32 %v1277, 2147483648
    %v1358 = vxor.u32 %v1280, 2147483648
    %v1359 = vxor.u32 %v1285, 2147483648
    %v1360 = vxor.u32 %v1288, 2147483648
    %v1361 = vxor.u32 %v1293, 2147483648
    %v1362 = vxor.u32 %v1296, 2147483648
    %v1363 = vxor.u32 %v1301, 2147483648
    %v1364 = vxor.u32 %v1304, 2147483648
    %v1365 = vxor.u32 %v1309, 2147483648
    %v1366 = vxor.u32 %v1312, 2147483648
    %v1367 = vxor.u32 %v1317, 2147483648
    %v1368 = vxor.u32 %v1320, 2147483648
    %v1369 = vxor.u32 %v1325, 2147483648
    %v1370 = vxor.u32 %v1328, 2147483648
    %v1371 = vxor.u32 %v1333, 2147483648
    %v1372 = vxor.u32 %v1336, 2147483648
    %v1373 = vxor.u32 %v1341, 2147483648
    %v1374 = vxor.u32 %v1344, 2147483648
    %v1375 = vmul.f32 %v1347, 1.442695
    %v1376 = vpow.pop %v1375
    %v1377 = vmul.f32 %v1348, 1.442695
    %v1378 = vpow.pop %v1377
    %v1379 = vmul.f32 %v1349, 1.442695
    %v1380 = vpow.pop %v1379
    %v1381 = vmul.f32 %v1350, 1.442695
    %v1382 = vpow.pop %v1381
    %v1383 = vmul.f32 %v1351, 1.442695
    %v1384 = vpow.pop %v1383
    %v1385 = vmul.f32 %v1352, 1.442695
    %v1386 = vpow.pop %v1385
    %v1387 = vmul.f32 %v1353, 1.442695
    %v1388 = vpow.pop %v1387
    %v1389 = vmul.f32 %v1354, 1.442695
    %v1390 = vpow.pop %v1389
    %v1391 = vmul.f32 %v1355, 1.442695
    %v1392 = vpow.pop %v1391
    %v1393 = vmul.f32 %v1356, 1.442695
    %v1394 = vpow.pop %v1393
    %v1395 = vmul.f32 %v1357, 1.442695
    %v1396 = vpow.pop %v1395
    %v1397 = vmul.f32 %v1358, 1.442695
    %v1398 = vpow.pop %v1397
    %v1399 = vmul.f32 %v1359, 1.442695
    %v1400 = vpow.pop %v1399
    %v1401 = vmul.f32 %v1360, 1.442695
    %v1402 = vpow.pop %v1401
    %v1403 = vmul.f32 %v1361, 1.442695
    %v1404 = vpow.pop %v1403
    %v1405 = vmul.f32 %v1362, 1.442695
    %v1406 = vpow.pop %v1405
    %v1407 = vmul.f32 %v1363, 1.442695
    %v1408 = vpow.pop %v1407
    %v1409 = vmul.f32 %v1364, 1.442695
    %v1410 = vpow.pop %v1409
    %v1411 = vmul.f32 %v1365, 1.442695
    %v1412 = vpow.pop %v1411
    %v1413 = vmul.f32 %v1366, 1.442695
    %v1414 = vpow.pop %v1413
    %v1415 = vmul.f32 %v1367, 1.442695
    %v1416 = vpow.pop %v1415
    %v1417 = vmul.f32 %v1368, 1.442695
    %v1418 = vpow.pop %v1417
    %v1419 = vmul.f32 %v1369, 1.442695
    %v1420 = vpow.pop %v1419
    %v1421 = vmul.f32 %v1370, 1.442695
    %v1422 = vpow.pop %v1421
    %v1423 = vmul.f32 %v1371, 1.442695
    %v1424 = vpow.pop %v1423
    %v1425 = vmul.f32 %v1372, 1.442695
    %v1426 = vpow.pop %v1425
    %v1427 = vmul.f32 %v1373, 1.442695
    %v1428 = vpow.pop %v1427
    %v1429 = vmul.f32 %v1374, 1.442695
    %v1430 = vpow.pop %v1429
    %v1431 = vadd.f32 %v1376, 1.0
    %v1432 = vadd.f32 %v1378, 1.0
    %v1433 = vadd.f32 %v1380, 1.0
    %v1434 = vadd.f32 %v1382, 1.0
    %v1435 = vadd.f32 %v1384, 1.0
    %v1436 = vadd.f32 %v1386, 1.0
    %v1437 = vadd.f32 %v1388, 1.0
    %v1438 = vadd.f32 %v1390, 1.0
    %v1439 = vadd.f32 %v1392, 1.0
    %v1440 = vadd.f32 %v1394, 1.0
    %v1441 = vadd.f32 %v1396, 1.0
    %v1442 = vadd.f32 %v1398, 1.0
    %v1443 = vadd.f32 %v1400, 1.0
    %v1444 = vadd.f32 %v1402, 1.0
    %v1445 = vadd.f32 %v1404, 1.0
    %v1446 = vadd.f32 %v1406, 1.0
    %v1447 = vadd.f32 %v1408, 1.0
    %v1448 = vadd.f32 %v1410, 1.0
    %v1449 = vadd.f32 %v1412, 1.0
    %v1450 = vadd.f32 %v1414, 1.0
    %v1451 = vadd.f32 %v1416, 1.0
    %v1452 = vadd.f32 %v1418, 1.0
    %v1453 = vadd.f32 %v1420, 1.0
    %v1454 = vadd.f32 %v1422, 1.0
    %v1455 = vadd.f32 %v1424, 1.0
    %v1456 = vadd.f32 %v1426, 1.0
    %v1457 = vadd.f32 %v1428, 1.0
    %v1458 = vadd.f32 %v1430, 1.0
    %v1459 = vrcp.pop %v1431
    %v1460 = vmul.f32 1.0, %v1459
    %v1461 = vrcp.pop %v1432
    %v1462 = vmul.f32 1.0, %v1461
    %v1463 = vrcp.pop %v1433
    %v1464 = vmul.f32 1.0, %v1463
    %v1465 = vrcp.pop %v1434
    %v1466 = vmul.f32 1.0, %v1465
    %v1467 = vrcp.pop %v1435
    %v1468 = vmul.f32 1.0, %v1467
    %v1469 = vrcp.pop %v1436
    %v1470 = vmul.f32 1.0, %v1469
    %v1471 = vrcp.pop %v1437
    %v1472 = vmul.f32 1.0, %v1471
    %v1473 = vrcp.pop %v1438
    %v1474 = vmul.f32 1.0, %v1473
    %v1475 = vrcp.pop %v1439
    %v1476 = vmul.f32 1.0, %v1475
    %v1477 = vrcp.pop %v1440
    %v1478 = vmul.f32 1.0, %v1477
    %v1479 = vrcp.pop %v1441
    %v1480 = vmul.f32 1.0, %v1479
    %v1481 = vrcp.pop %v1442
    %v1482 = vmul.f32 1.0, %v1481
    %v1483 = vrcp.pop %v1443
    %v1484 = vmul.f32 1.0, %v1483
    %v1485 = vrcp.pop %v1444
    %v1486 = vmul.f32 1.0, %v1485
    %v1487 = vrcp.pop %v1445
    %v1488 = vmul.f32 1.0, %v1487
    %v1489 = vrcp.pop %v1446
    %v1490 = vmul.f32 1.0, %v1489
    %v1491 = vrcp.pop %v1447
    %v1492 = vmul.f32 1.0, %v1491
    %v1493 = vrcp.pop %v1448
    %v1494 = vmul.f32 1.0, %v1493
    %v1495 = vrcp.pop %v1449
    %v1496 = vmul.f32 1.0, %v1495
    %v1497 = vrcp.pop %v1450
    %v1498 = vmul.f32 1.0, %v1497
    %v1499 = vrcp.pop %v1451
    %v1500 = vmul.f32 1.0, %v1499
    %v1501 = vrcp.pop %v1452
    %v1502 = vmul.f32 1.0, %v1501
    %v1503 = vrcp.pop %v1453
    %v1504 = vmul.f32 1.0, %v1503
    %v1505 = vrcp.pop %v1454
    %v1506 = vmul.f32 1.0, %v1505
    %v1507 = vrcp.pop %v1455
    %v1508 = vmul.f32 1.0, %v1507
    %v1509 = vrcp.pop %v1456
    %v1510 = vmul.f32 1.0, %v1509
    %v1511 = vrcp.pop %v1457
    %v1512 = vmul.f32 1.0, %v1511
    %v1513 = vrcp.pop %v1458
    %v1514 = vmul.f32 1.0, %v1513
    %v1515 = vmul.f32 %v1237, %v1460
    %v1516 = vmul.f32 %v1240, %v1462
    %v1517 = vmul.f32 %v1245, %v1464
    %v1518 = vmul.f32 %v1248, %v1466
    %v1519 = vmul.f32 %v1253, %v1468
    %v1520 = vmul.f32 %v1256, %v1470
    %v1521 = vmul.f32 %v1261, %v1472
    %v1522 = vmul.f32 %v1264, %v1474
    %v1523 = vmul.f32 %v1269, %v1476
    %v1524 = vmul.f32 %v1272, %v1478
    %v1525 = vmul.f32 %v1277, %v1480
    %v1526 = vmul.f32 %v1280, %v1482
    %v1527 = vmul.f32 %v1285, %v1484
    %v1528 = vmul.f32 %v1288, %v1486
    %v1529 = vmul.f32 %v1293, %v1488
    %v1530 = vmul.f32 %v1296, %v1490
    %v1531 = vmul.f32 %v1301, %v1492
    %v1532 = vmul.f32 %v1304, %v1494
    %v1533 = vmul.f32 %v1309, %v1496
    %v1534 = vmul.f32 %v1312, %v1498
    %v1535 = vmul.f32 %v1317, %v1500
    %v1536 = vmul.f32 %v1320, %v1502
    %v1537 = vmul.f32 %v1325, %v1504
    %v1538 = vmul.f32 %v1328, %v1506
    %v1539 = vmul.f32 %v1333, %v1508
    %v1540 = vmul.f32 %v1336, %v1510
    %v1541 = vmul.f32 %v1341, %v1512
    %v1542 = vmul.f32 %v1344, %v1514
    %1543 = vst.msk [vmem:[#allocation2 + $0x18] sm:$0xff] %vm1155, %v1515
    %1544 = vst.msk [vmem:[#allocation2 + $0x20] sm:$0xff] %vm1155, %v1516
    %1545 = vst.msk [vmem:[#allocation2 + $0x28] sm:$0xff] %vm1155, %v1517
    %1546 = vst.msk [vmem:[#allocation2 + $0x30] sm:$0xff] %vm1155, %v1518
    %1547 = vst.msk [vmem:[#allocation2 + $0x38] sm:$0xff] %vm1155, %v1519
    %1548 = vst.msk [vmem:[#allocation2 + $0x40] sm:$0xff] %vm1155, %v1520
    %1549 = vst.msk [vmem:[#allocation2 + $0x48] sm:$0xff] %vm1155, %v1521
    %1550 = vst.msk [vmem:[#allocation2 + $0x50] sm:$0xff] %vm1155, %v1522
    %1551 = vst.msk [vmem:[#allocation2 + $0x58] sm:$0xff] %vm1155, %v1523
    %1552 = vst.msk [vmem:[#allocation2 + $0x60] sm:$0xff] %vm1155, %v1524
    %1553 = vst.msk [vmem:[#allocation2 + $0x68] sm:$0xff] %vm1155, %v1525
    %1554 = vst.msk [vmem:[#allocation2 + $0x70] sm:$0xff] %vm1155, %v1526
    %1555 = vst.msk [vmem:[#allocation2 + $0x78] sm:$0xff] %vm1155, %v1527
    %1556 = vst.msk [vmem:[#allocation2 + $0x80] sm:$0xff] %vm1155, %v1528
    %1557 = vst.msk [vmem:[#allocation2 + $0x88] sm:$0xff] %vm1155, %v1529
    %1558 = vst.msk [vmem:[#allocation2 + $0x90] sm:$0xff] %vm1155, %v1530
    %1559 = vst.msk [vmem:[#allocation2 + $0x98] sm:$0xff] %vm1155, %v1531
    %1560 = vst.msk [vmem:[#allocation2 + $0xa0] sm:$0xff] %vm1155, %v1532
    %1561 = vst.msk [vmem:[#allocation2 + $0xa8] sm:$0xff] %vm1155, %v1533
    %1562 = vst.msk [vmem:[#allocation2 + $0xb0] sm:$0xff] %vm1155, %v1534
    %1563 = vst.msk [vmem:[#allocation2 + $0xb8] sm:$0xff] %vm1155, %v1535
    %1564 = vst.msk [vmem:[#allocation2 + $0xc0] sm:$0xff] %vm1155, %v1536
    %1565 = vst.msk [vmem:[#allocation2 + $0xc8] sm:$0xff] %vm1155, %v1537
    %1566 = vst.msk [vmem:[#allocation2 + $0xd0] sm:$0xff] %vm1155, %v1538
    %1567 = vst.msk [vmem:[#allocation2 + $0xd8] sm:$0xff] %vm1155, %v1539
    %1568 = vst.msk [vmem:[#allocation2 + $0xe0] sm:$0xff] %vm1155, %v1540
    %1569 = vst.msk [vmem:[#allocation2 + $0xe8] sm:$0xff] %vm1155, %v1541
    %1570 = vst.msk [vmem:[#allocation2 + $0xf0] sm:$0xff] %vm1155, %v1542
    %v1571 = vld [vmem:[#allocation2 + $0x8] sm:$0xff]
    %v1572 = vld [vmem:[#allocation2 + $0x10] sm:$0xff]
    %v1573 = vld [vmem:[#allocation2 + $0x18] sm:$0xff]
    %v1574 = vld [vmem:[#allocation2 + $0x20] sm:$0xff]
    %v1575 = vld [vmem:[#allocation2 + $0x28] sm:$0xff]
    %v1576 = vld [vmem:[#allocation2 + $0x30] sm:$0xff]
    %v1577 = vld [vmem:[#allocation2 + $0x38] sm:$0xff]
    %v1578 = vld [vmem:[#allocation2 + $0x40] sm:$0xff]
    %v1579 = vld [vmem:[#allocation2 + $0x48] sm:$0xff]
    %v1580 = vld [vmem:[#allocation2 + $0x50] sm:$0xff]
    %v1581 = vld [vmem:[#allocation2 + $0x58] sm:$0xff]
    %v1582 = vld [vmem:[#allocation2 + $0x60] sm:$0xff]
    %v1583 = vld [vmem:[#allocation2 + $0x68] sm:$0xff]
    %v1584 = vld [vmem:[#allocation2 + $0x70] sm:$0xff]
    %v1585 = vld [vmem:[#allocation2 + $0x78] sm:$0xff]
    %v1586 = vld [vmem:[#allocation2 + $0x80] sm:$0xff]
    %v1587 = vld [vmem:[#allocation2 + $0x88] sm:$0xff]
    %v1588 = vld [vmem:[#allocation2 + $0x90] sm:$0xff]
    %v1589 = vld [vmem:[#allocation2 + $0x98] sm:$0xff]
    %v1590 = vld [vmem:[#allocation2 + $0xa0] sm:$0xff]
    %v1591 = vld [vmem:[#allocation2 + $0xa8] sm:$0xff]
    %v1592 = vld [vmem:[#allocation2 + $0xb0] sm:$0xff]
    %v1593 = vld [vmem:[#allocation2 + $0xb8] sm:$0xff]
    %v1594 = vld [vmem:[#allocation2 + $0xc0] sm:$0xff]
    %v1595 = vld [vmem:[#allocation2 + $0xc8] sm:$0xff]
    %v1596 = vld [vmem:[#allocation2 + $0xd0] sm:$0xff]
    %v1597 = vld [vmem:[#allocation2 + $0xd8] sm:$0xff]
    %v1598 = vld [vmem:[#allocation2 + $0xe0] sm:$0xff]
    %v1599 = vld [vmem:[#allocation2 + $0xe8] sm:$0xff]
    %v1600 = vld [vmem:[#allocation2 + $0xf0] sm:$0xff]
    %v1601 = vld [vmem:[#allocation2 + $0xf8] sm:$0xff]
    %v1602 = vld [vmem:[#allocation2 + $0x100] sm:$0xff]
    %1631 = vrot.lane.b32.xlu0 %v1572, 28
    %v1632 = vpop.permute.xlu0 %1631
    %1633 = vrot.lane.b32.xlu0 %v1573, 28
    %v1634 = vpop.permute.xlu0 %1633
    %1635 = vrot.lane.b32.xlu0 %v1574, 28
    %v1636 = vpop.permute.xlu0 %1635
    %1637 = vrot.lane.b32.xlu0 %v1575, 28
    %v1638 = vpop.permute.xlu0 %1637
    %1639 = vrot.lane.b32.xlu0 %v1576, 28
    %v1640 = vpop.permute.xlu0 %1639
    %1641 = vrot.lane.b32.xlu0 %v1577, 28
    %v1642 = vpop.permute.xlu0 %1641
    %1643 = vrot.lane.b32.xlu0 %v1578, 28
    %v1644 = vpop.permute.xlu0 %1643
    %1645 = vrot.lane.b32.xlu0 %v1579, 28
    %v1646 = vpop.permute.xlu0 %1645
    %1647 = vrot.lane.b32.xlu0 %v1580, 28
    %v1648 = vpop.permute.xlu0 %1647
    %1649 = vrot.lane.b32.xlu0 %v1581, 28
    %v1650 = vpop.permute.xlu0 %1649
    %1651 = vrot.lane.b32.xlu0 %v1582, 28
    %v1652 = vpop.permute.xlu0 %1651
    %1653 = vrot.lane.b32.xlu0 %v1583, 28
    %v1654 = vpop.permute.xlu0 %1653
    %1655 = vrot.lane.b32.xlu0 %v1584, 28
    %v1656 = vpop.permute.xlu0 %1655
    %1657 = vrot.lane.b32.xlu0 %v1585, 28
    %v1658 = vpop.permute.xlu0 %1657
    %1659 = vrot.lane.b32.xlu0 %v1586, 28
    %v1660 = vpop.permute.xlu0 %1659
    %1661 = vrot.lane.b32.xlu0 %v1587, 28
    %v1662 = vpop.permute.xlu0 %1661
    %1663 = vrot.lane.b32.xlu0 %v1588, 28
    %v1664 = vpop.permute.xlu0 %1663
    %1665 = vrot.lane.b32.xlu0 %v1589, 28
    %v1666 = vpop.permute.xlu0 %1665
    %1667 = vrot.lane.b32.xlu0 %v1590, 28
    %v1668 = vpop.permute.xlu0 %1667
    %1669 = vrot.lane.b32.xlu0 %v1591, 28
    %v1670 = vpop.permute.xlu0 %1669
    %1671 = vrot.lane.b32.xlu0 %v1592, 28
    %v1672 = vpop.permute.xlu0 %1671
    %1673 = vrot.lane.b32.xlu0 %v1593, 28
    %v1674 = vpop.permute.xlu0 %1673
    %1675 = vrot.lane.b32.xlu0 %v1594, 28
    %v1676 = vpop.permute.xlu0 %1675
    %1677 = vrot.lane.b32.xlu0 %v1595, 28
    %v1678 = vpop.permute.xlu0 %1677
    %1679 = vrot.lane.b32.xlu0 %v1596, 28
    %v1680 = vpop.permute.xlu0 %1679
    %1681 = vrot.lane.b32.xlu0 %v1597, 28
    %v1682 = vpop.permute.xlu0 %1681
    %1683 = vrot.lane.b32.xlu0 %v1598, 28
    %v1684 = vpop.permute.xlu0 %1683
    %1685 = vrot.lane.b32.xlu0 %v1599, 28
    %v1686 = vpop.permute.xlu0 %1685
    %1716 = vrot.lane.b32.xlu0 %v1573, 56
    %v1717 = vpop.permute.xlu0 %1716
    %1718 = vrot.lane.b32.xlu0 %v1574, 56
    %v1719 = vpop.permute.xlu0 %1718
    %1720 = vrot.lane.b32.xlu0 %v1575, 56
    %v1721 = vpop.permute.xlu0 %1720
    %1722 = vrot.lane.b32.xlu0 %v1576, 56
    %v1723 = vpop.permute.xlu0 %1722
    %1724 = vrot.lane.b32.xlu0 %v1577, 56
    %v1725 = vpop.permute.xlu0 %1724
    %1726 = vrot.lane.b32.xlu0 %v1578, 56
    %v1727 = vpop.permute.xlu0 %1726
    %1728 = vrot.lane.b32.xlu0 %v1579, 56
    %v1729 = vpop.permute.xlu0 %1728
    %1730 = vrot.lane.b32.xlu0 %v1580, 56
    %v1731 = vpop.permute.xlu0 %1730
    %1732 = vrot.lane.b32.xlu0 %v1581, 56
    %v1733 = vpop.permute.xlu0 %1732
    %1734 = vrot.lane.b32.xlu0 %v1582, 56
    %v1735 = vpop.permute.xlu0 %1734
    %1736 = vrot.lane.b32.xlu0 %v1583, 56
    %v1737 = vpop.permute.xlu0 %1736
    %1738 = vrot.lane.b32.xlu0 %v1584, 56
    %v1739 = vpop.permute.xlu0 %1738
    %1740 = vrot.lane.b32.xlu0 %v1585, 56
    %v1741 = vpop.permute.xlu0 %1740
    %1742 = vrot.lane.b32.xlu0 %v1586, 56
    %v1743 = vpop.permute.xlu0 %1742
    %1744 = vrot.lane.b32.xlu0 %v1587, 56
    %v1745 = vpop.permute.xlu0 %1744
    %1746 = vrot.lane.b32.xlu0 %v1588, 56
    %v1747 = vpop.permute.xlu0 %1746
    %1748 = vrot.lane.b32.xlu0 %v1589, 56
    %v1749 = vpop.permute.xlu0 %1748
    %1750 = vrot.lane.b32.xlu0 %v1590, 56
    %v1751 = vpop.permute.xlu0 %1750
    %1752 = vrot.lane.b32.xlu0 %v1591, 56
    %v1753 = vpop.permute.xlu0 %1752
    %1754 = vrot.lane.b32.xlu0 %v1592, 56
    %v1755 = vpop.permute.xlu0 %1754
    %1756 = vrot.lane.b32.xlu0 %v1593, 56
    %v1757 = vpop.permute.xlu0 %1756
    %1758 = vrot.lane.b32.xlu0 %v1594, 56
    %v1759 = vpop.permute.xlu0 %1758
    %1760 = vrot.lane.b32.xlu0 %v1595, 56
    %v1761 = vpop.permute.xlu0 %1760
    %1762 = vrot.lane.b32.xlu0 %v1596, 56
    %v1763 = vpop.permute.xlu0 %1762
    %1764 = vrot.lane.b32.xlu0 %v1597, 56
    %v1765 = vpop.permute.xlu0 %1764
    %1766 = vrot.lane.b32.xlu0 %v1598, 56
    %v1767 = vpop.permute.xlu0 %1766
    %1768 = vrot.lane.b32.xlu0 %v1599, 56
    %v1769 = vpop.permute.xlu0 %1768
    %1770 = vrot.lane.b32.xlu0 %v1600, 56
    %v1771 = vpop.permute.xlu0 %1770
    %1801 = vrot.lane.b32.xlu0 %v1574, 84
    %v1802 = vpop.permute.xlu0 %1801
    %1803 = vrot.lane.b32.xlu0 %v1575, 84
    %v1804 = vpop.permute.xlu0 %1803
    %1805 = vrot.lane.b32.xlu0 %v1576, 84
    %v1806 = vpop.permute.xlu0 %1805
    %1807 = vrot.lane.b32.xlu0 %v1577, 84
    %v1808 = vpop.permute.xlu0 %1807
    %1809 = vrot.lane.b32.xlu0 %v1578, 84
    %v1810 = vpop.permute.xlu0 %1809
    %1811 = vrot.lane.b32.xlu0 %v1579, 84
    %v1812 = vpop.permute.xlu0 %1811
    %1813 = vrot.lane.b32.xlu0 %v1580, 84
    %v1814 = vpop.permute.xlu0 %1813
    %1815 = vrot.lane.b32.xlu0 %v1581, 84
    %v1816 = vpop.permute.xlu0 %1815
    %1817 = vrot.lane.b32.xlu0 %v1582, 84
    %v1818 = vpop.permute.xlu0 %1817
    %1819 = vrot.lane.b32.xlu0 %v1583, 84
    %v1820 = vpop.permute.xlu0 %1819
    %1821 = vrot.lane.b32.xlu0 %v1584, 84
    %v1822 = vpop.permute.xlu0 %1821
    %1823 = vrot.lane.b32.xlu0 %v1585, 84
    %v1824 = vpop.permute.xlu0 %1823
    %1825 = vrot.lane.b32.xlu0 %v1586, 84
    %v1826 = vpop.permute.xlu0 %1825
    %1827 = vrot.lane.b32.xlu0 %v1587, 84
    %v1828 = vpop.permute.xlu0 %1827
    %1829 = vrot.lane.b32.xlu0 %v1588, 84
    %v1830 = vpop.permute.xlu0 %1829
    %1831 = vrot.lane.b32.xlu0 %v1589, 84
    %v1832 = vpop.permute.xlu0 %1831
    %1833 = vrot.lane.b32.xlu0 %v1590, 84
    %v1834 = vpop.permute.xlu0 %1833
    %1835 = vrot.lane.b32.xlu0 %v1591, 84
    %v1836 = vpop.permute.xlu0 %1835
    %1837 = vrot.lane.b32.xlu0 %v1592, 84
    %v1838 = vpop.permute.xlu0 %1837
    %1839 = vrot.lane.b32.xlu0 %v1593, 84
    %v1840 = vpop.permute.xlu0 %1839
    %1841 = vrot.lane.b32.xlu0 %v1594, 84
    %v1842 = vpop.permute.xlu0 %1841
    %1843 = vrot.lane.b32.xlu0 %v1595, 84
    %v1844 = vpop.permute.xlu0 %1843
    %1845 = vrot.lane.b32.xlu0 %v1596, 84
    %v1846 = vpop.permute.xlu0 %1845
    %1847 = vrot.lane.b32.xlu0 %v1597, 84
    %v1848 = vpop.permute.xlu0 %1847
    %1849 = vrot.lane.b32.xlu0 %v1598, 84
    %v1850 = vpop.permute.xlu0 %1849
    %1851 = vrot.lane.b32.xlu0 %v1599, 84
    %v1852 = vpop.permute.xlu0 %1851
    %1853 = vrot.lane.b32.xlu0 %v1600, 84
    %v1854 = vpop.permute.xlu0 %1853
    %1855 = vrot.lane.b32.xlu0 %v1601, 84
    %v1856 = vpop.permute.xlu0 %1855
    %1886 = vrot.lane.b32.xlu0 %v1575, 112
    %v1887 = vpop.permute.xlu0 %1886
    %1888 = vrot.lane.b32.xlu0 %v1576, 112
    %v1889 = vpop.permute.xlu0 %1888
    %1890 = vrot.lane.b32.xlu0 %v1577, 112
    %v1891 = vpop.permute.xlu0 %1890
    %1892 = vrot.lane.b32.xlu0 %v1578, 112
    %v1893 = vpop.permute.xlu0 %1892
    %1894 = vrot.lane.b32.xlu0 %v1579, 112
    %v1895 = vpop.permute.xlu0 %1894
    %1896 = vrot.lane.b32.xlu0 %v1580, 112
    %v1897 = vpop.permute.xlu0 %1896
    %1898 = vrot.lane.b32.xlu0 %v1581, 112
    %v1899 = vpop.permute.xlu0 %1898
    %1900 = vrot.lane.b32.xlu0 %v1582, 112
    %v1901 = vpop.permute.xlu0 %1900
    %1902 = vrot.lane.b32.xlu0 %v1583, 112
    %v1903 = vpop.permute.xlu0 %1902
    %1904 = vrot.lane.b32.xlu0 %v1584, 112
    %v1905 = vpop.permute.xlu0 %1904
    %1906 = vrot.lane.b32.xlu0 %v1585, 112
    %v1907 = vpop.permute.xlu0 %1906
    %1908 = vrot.lane.b32.xlu0 %v1586, 112
    %v1909 = vpop.permute.xlu0 %1908
    %1910 = vrot.lane.b32.xlu0 %v1587, 112
    %v1911 = vpop.permute.xlu0 %1910
    %1912 = vrot.lane.b32.xlu0 %v1588, 112
    %v1913 = vpop.permute.xlu0 %1912
    %1914 = vrot.lane.b32.xlu0 %v1589, 112
    %v1915 = vpop.permute.xlu0 %1914
    %1916 = vrot.lane.b32.xlu0 %v1590, 112
    %v1917 = vpop.permute.xlu0 %1916
    %1918 = vrot.lane.b32.xlu0 %v1591, 112
    %v1919 = vpop.permute.xlu0 %1918
    %1920 = vrot.lane.b32.xlu0 %v1592, 112
    %v1921 = vpop.permute.xlu0 %1920
    %1922 = vrot.lane.b32.xlu0 %v1593, 112
    %v1923 = vpop.permute.xlu0 %1922
    %1924 = vrot.lane.b32.xlu0 %v1594, 112
    %v1925 = vpop.permute.xlu0 %1924
    %1926 = vrot.lane.b32.xlu0 %v1595, 112
    %v1927 = vpop.permute.xlu0 %1926
    %1928 = vrot.lane.b32.xlu0 %v1596, 112
    %v1929 = vpop.permute.xlu0 %1928
    %1930 = vrot.lane.b32.xlu0 %v1597, 112
    %v1931 = vpop.permute.xlu0 %1930
    %1932 = vrot.lane.b32.xlu0 %v1598, 112
    %v1933 = vpop.permute.xlu0 %1932
    %1934 = vrot.lane.b32.xlu0 %v1599, 112
    %v1935 = vpop.permute.xlu0 %1934
    %1936 = vrot.lane.b32.xlu0 %v1600, 112
    %v1937 = vpop.permute.xlu0 %1936
    %1938 = vrot.lane.b32.xlu0 %v1601, 112
    %v1939 = vpop.permute.xlu0 %1938
    %1940 = vrot.lane.b32.xlu0 %v1602, 112
    %v1941 = vpop.permute.xlu0 %1940
    %v1970 = vsel %vm1155, %v1571, %v1632
    %v1971 = vsel %vm1155, %v1572, %v1634
    %v1972 = vsel %vm1155, %v1573, %v1636
    %v1973 = vsel %vm1155, %v1574, %v1638
    %v1974 = vsel %vm1155, %v1575, %v1640
    %v1975 = vsel %vm1155, %v1576, %v1642
    %v1976 = vsel %vm1155, %v1577, %v1644
    %v1977 = vsel %vm1155, %v1578, %v1646
    %v1978 = vsel %vm1155, %v1579, %v1648
    %v1979 = vsel %vm1155, %v1580, %v1650
    %v1980 = vsel %vm1155, %v1581, %v1652
    %v1981 = vsel %vm1155, %v1582, %v1654
    %v1982 = vsel %vm1155, %v1583, %v1656
    %v1983 = vsel %vm1155, %v1584, %v1658
    %v1984 = vsel %vm1155, %v1585, %v1660
    %v1985 = vsel %vm1155, %v1586, %v1662
    %v1986 = vsel %vm1155, %v1587, %v1664
    %v1987 = vsel %vm1155, %v1588, %v1666
    %v1988 = vsel %vm1155, %v1589, %v1668
    %v1989 = vsel %vm1155, %v1590, %v1670
    %v1990 = vsel %vm1155, %v1591, %v1672
    %v1991 = vsel %vm1155, %v1592, %v1674
    %v1992 = vsel %vm1155, %v1593, %v1676
    %v1993 = vsel %vm1155, %v1594, %v1678
    %v1994 = vsel %vm1155, %v1595, %v1680
    %v1995 = vsel %vm1155, %v1596, %v1682
    %v1996 = vsel %vm1155, %v1597, %v1684
    %v1997 = vsel %vm1155, %v1598, %v1686
    %vm1998 = vcmask 457728
    %v1999 = vsel %vm1998, %v1970, %v1717
    %v2000 = vsel %vm1998, %v1971, %v1719
    %v2001 = vsel %vm1998, %v1972, %v1721
    %v2002 = vsel %vm1998, %v1973, %v1723
    %v2003 = vsel %vm1998, %v1974, %v1725
    %v2004 = vsel %vm1998, %v1975, %v1727
    %v2005 = vsel %vm1998, %v1976, %v1729
    %v2006 = vsel %vm1998, %v1977, %v1731
    %v2007 = vsel %vm1998, %v1978, %v1733
    %v2008 = vsel %vm1998, %v1979, %v1735
    %v2009 = vsel %vm1998, %v1980, %v1737
    %v2010 = vsel %vm1998, %v1981, %v1739
    %v2011 = vsel %vm1998, %v1982, %v1741
    %v2012 = vsel %vm1998, %v1983, %v1743
    %v2013 = vsel %vm1998, %v1984, %v1745
    %v2014 = vsel %vm1998, %v1985, %v1747
    %v2015 = vsel %vm1998, %v1986, %v1749
    %v2016 = vsel %vm1998, %v1987, %v1751
    %v2017 = vsel %vm1998, %v1988, %v1753
    %v2018 = vsel %vm1998, %v1989, %v1755
    %v2019 = vsel %vm1998, %v1990, %v1757
    %v2020 = vsel %vm1998, %v1991, %v1759
    %v2021 = vsel %vm1998, %v1992, %v1761
    %v2022 = vsel %vm1998, %v1993, %v1763
    %v2023 = vsel %vm1998, %v1994, %v1765
    %v2024 = vsel %vm1998, %v1995, %v1767
    %v2025 = vsel %vm1998, %v1996, %v1769
    %v2026 = vsel %vm1998, %v1997, %v1771
    %vm2027 = vcmask 687104
    %v2028 = vsel %vm2027, %v1999, %v1802
    %v2029 = vsel %vm2027, %v2000, %v1804
    %v2030 = vsel %vm2027, %v2001, %v1806
    %v2031 = vsel %vm2027, %v2002, %v1808
    %v2032 = vsel %vm2027, %v2003, %v1810
    %v2033 = vsel %vm2027, %v2004, %v1812
    %v2034 = vsel %vm2027, %v2005, %v1814
    %v2035 = vsel %vm2027, %v2006, %v1816
    %v2036 = vsel %vm2027, %v2007, %v1818
    %v2037 = vsel %vm2027, %v2008, %v1820
    %v2038 = vsel %vm2027, %v2009, %v1822
    %v2039 = vsel %vm2027, %v2010, %v1824
    %v2040 = vsel %vm2027, %v2011, %v1826
    %v2041 = vsel %vm2027, %v2012, %v1828
    %v2042 = vsel %vm2027, %v2013, %v1830
    %v2043 = vsel %vm2027, %v2014, %v1832
    %v2044 = vsel %vm2027, %v2015, %v1834
    %v2045 = vsel %vm2027, %v2016, %v1836
    %v2046 = vsel %vm2027, %v2017, %v1838
    %v2047 = vsel %vm2027, %v2018, %v1840
    %v2048 = vsel %vm2027, %v2019, %v1842
    %v2049 = vsel %vm2027, %v2020, %v1844
    %v2050 = vsel %vm2027, %v2021, %v1846
    %v2051 = vsel %vm2027, %v2022, %v1848
    %v2052 = vsel %vm2027, %v2023, %v1850
    %v2053 = vsel %vm2027, %v2024, %v1852
    %v2054 = vsel %vm2027, %v2025, %v1854
    %v2055 = vsel %vm2027, %v2026, %v1856
    %vm2056 = vcmask 916480
    %v2057 = vsel %vm2056, %v2028, %v1887
    %v2058 = vsel %vm2056, %v2029, %v1889
    %v2059 = vsel %vm2056, %v2030, %v1891
    %v2060 = vsel %vm2056, %v2031, %v1893
    %v2061 = vsel %vm2056, %v2032, %v1895
    %v2062 = vsel %vm2056, %v2033, %v1897
    %v2063 = vsel %vm2056, %v2034, %v1899
    %v2064 = vsel %vm2056, %v2035, %v1901
    %v2065 = vsel %vm2056, %v2036, %v1903
    %v2066 = vsel %vm2056, %v2037, %v1905
    %v2067 = vsel %vm2056, %v2038, %v1907
    %v2068 = vsel %vm2056, %v2039, %v1909
    %v2069 = vsel %vm2056, %v2040, %v1911
    %v2070 = vsel %vm2056, %v2041, %v1913
    %v2071 = vsel %vm2056, %v2042, %v1915
    %v2072 = vsel %vm2056, %v2043, %v1917
    %v2073 = vsel %vm2056, %v2044, %v1919
    %v2074 = vsel %vm2056, %v2045, %v1921
    %v2075 = vsel %vm2056, %v2046, %v1923
    %v2076 = vsel %vm2056, %v2047, %v1925
    %v2077 = vsel %vm2056, %v2048, %v1927
    %v2078 = vsel %vm2056, %v2049, %v1929
    %v2079 = vsel %vm2056, %v2050, %v1931
    %v2080 = vsel %vm2056, %v2051, %v1933
    %v2081 = vsel %vm2056, %v2052, %v1935
    %v2082 = vsel %vm2056, %v2053, %v1937
    %v2083 = vsel %vm2056, %v2054, %v1939
    %v2084 = vsel %vm2056, %v2055, %v1941
    %v2085 = vpack.c.bf16 %v2058, %v2057
    %v2086 = vpack.c.bf16 %v1889, %v1887
    %v2087 = vpack.c.bf16 %v2060, %v2059
    %v2088 = vpack.c.bf16 %v1893, %v1891
    %v2089 = vpack.c.bf16 %v2062, %v2061
    %v2090 = vpack.c.bf16 %v1897, %v1895
    %v2091 = vpack.c.bf16 %v2064, %v2063
    %v2092 = vpack.c.bf16 %v1901, %v1899
    %v2093 = vpack.c.bf16 %v2066, %v2065
    %v2094 = vpack.c.bf16 %v1905, %v1903
    %v2095 = vpack.c.bf16 %v2068, %v2067
    %v2096 = vpack.c.bf16 %v1909, %v1907
    %v2097 = vpack.c.bf16 %v2070, %v2069
    %v2098 = vpack.c.bf16 %v1913, %v1911
    %v2099 = vpack.c.bf16 %v2072, %v2071
    %v2100 = vpack.c.bf16 %v1917, %v1915
    %v2101 = vpack.c.bf16 %v2074, %v2073
    %v2102 = vpack.c.bf16 %v1921, %v1919
    %v2103 = vpack.c.bf16 %v2076, %v2075
    %v2104 = vpack.c.bf16 %v1925, %v1923
    %v2105 = vpack.c.bf16 %v2078, %v2077
    %v2106 = vpack.c.bf16 %v1929, %v1927
    %v2107 = vpack.c.bf16 %v2080, %v2079
    %v2108 = vpack.c.bf16 %v1933, %v1931
    %v2109 = vpack.c.bf16 %v2082, %v2081
    %v2110 = vpack.c.bf16 %v1937, %v1935
    %v2111 = vpack.c.bf16 %v2084, %v2083
    %v2112 = vpack.c.bf16 %v1941, %v1939
    %v2113 = vld [vmem:[%s3] sm:$0xf]
    %v2114 = vld [vmem:[%s3 + $0x4] sm:$0xf]
    %v2115 = vld [vmem:[%s3 + $0x8] sm:$0xf]
    %v2116 = vld [vmem:[%s3 + $0xc] sm:$0xf]
    %v2117 = vld [vmem:[%s3 + $0x10] sm:$0xf]
    %v2118 = vld [vmem:[%s3 + $0x14] sm:$0xf]
    %v2119 = vld [vmem:[%s3 + $0x18] sm:$0xf]
    %v2120 = vld [vmem:[%s3 + $0x1c] sm:$0xf]
    %v2121 = vld [vmem:[%s3 + $0x20] sm:$0xf]
    %v2122 = vld [vmem:[%s3 + $0x24] sm:$0xf]
    %v2123 = vld [vmem:[%s3 + $0x28] sm:$0xf]
    %v2124 = vld [vmem:[%s3 + $0x2c] sm:$0xf]
    %v2125 = vld [vmem:[%s3 + $0x30] sm:$0xf]
    %v2126 = vld [vmem:[%s3 + $0x34] sm:$0xf]
    %v2127 = vld [vmem:[%s3 + $0x38] sm:$0xf]
    %v2128 = vld [vmem:[%s3 + $0x3c] sm:$0xf]
    %v2129 = vld [vmem:[%s3 + $0x40] sm:$0xf]
    %v2130 = vld [vmem:[%s3 + $0x44] sm:$0x3]
    %v2131 = vld [vmem:[#allocation11] sm:$0x1]
    %v2133 = vlaneseq
    %v2134 = vshrl.u32 %v2133, 7
    %v2135 = vsub.s32 0, %v2134
    %v2136 = vrot.slane %v2131, %v2135
    %v2156 = vunpack.c.l.b16 %v2113
    %v2157 = vunpack.c.l.b16 %v2114
    %v2158 = vunpack.c.l.b16 %v2115
    %v2159 = vunpack.c.l.b16 %v2116
    %v2160 = vunpack.c.l.b16 %v2117
    %v2161 = vunpack.c.l.b16 %v2118
    %v2162 = vunpack.c.l.b16 %v2119
    %v2163 = vunpack.c.l.b16 %v2120
    %v2164 = vunpack.c.l.b16 %v2121
    %v2165 = vunpack.c.l.b16 %v2122
    %v2166 = vunpack.c.l.b16 %v2123
    %v2167 = vunpack.c.l.b16 %v2124
    %v2168 = vunpack.c.l.b16 %v2125
    %v2169 = vunpack.c.l.b16 %v2126
    %v2170 = vunpack.c.l.b16 %v2127
    %v2171 = vunpack.c.l.b16 %v2128
    %v2172 = vunpack.c.l.b16 %v2129
    %v2173 = vunpack.c.l.b16 %v2130
    %v2174 = vpack.c.b16 %v2157, %v2156
    %v2175 = vpack.c.b16 %v2159, %v2158
    %v2176 = vpack.c.b16 %v2161, %v2160
    %v2177 = vpack.c.b16 %v2163, %v2162
    %v2178 = vpack.c.b16 %v2165, %v2164
    %v2179 = vpack.c.b16 %v2167, %v2166
    %v2180 = vpack.c.b16 %v2169, %v2168
    %v2181 = vpack.c.b16 %v2171, %v2170
    %v2182 = vpack.c.b16 %v2173, %v2172
    %v2192 = vsel %vm1003, %v2086, 0
    %v2195 = vsel %vm1003, %v2088, 0
    %v2198 = vsel %vm1003, %v2090, 0
    %v2201 = vsel %vm1003, %v2092, 0
    %v2204 = vsel %vm1003, %v2094, 0
    %v2207 = vsel %vm1003, %v2096, 0
    %v2210 = vsel %vm1003, %v2098, 0
    %v2213 = vsel %vm1003, %v2100, 0
    %v2216 = vsel %vm1003, %v2102, 0
    %v2219 = vsel %vm1003, %v2104, 0
    %v2222 = vsel %vm1003, %v2106, 0
    %v2225 = vsel %vm1003, %v2108, 0
    %v2228 = vsel %vm1003, %v2110, 0
    %v2231 = vsel %vm1003, %v2112, 0
    %v2234 = vsel %vm1198, %v2182, 0
    %2236 = vmatprep.subr.bf16.mxu0 0
    %2237 = vmatpush1.bf16.msra.mxu0 %v2174
    %2238 = vmatprep.subr.bf16.mxu0 0
    %2239 = vmatpush1.bf16.msra.mxu0 %v2175
    %2240 = vmatprep.subr.bf16.mxu0 0
    %2241 = vmatpush1.bf16.msra.mxu0 %v2176
    %2242 = vmatprep.subr.bf16.mxu0 0
    %2243 = vmatpush1.bf16.msra.mxu0 %v2177
    %2244 = vmatprep.subr.bf16.mxu0 0
    %2245 = vmatpush1.bf16.msra.mxu0 %v2178
    %2246 = vmatprep.subr.bf16.mxu0 0
    %2247 = vmatpush1.bf16.msra.mxu0 %v2179
    %2248 = vmatprep.subr.bf16.mxu0 0
    %2249 = vmatpush1.bf16.msra.mxu0 %v2180
    %2250 = vmatprep.subr.bf16.mxu0 0
    %2251 = vmatpush1.bf16.msra.mxu0 %v2181
    %2252 = vmatprep.subr.bf16.mxu0 0
    %2253 = vmatpush1.bf16.msra.mxu0 %v2234
    %2254 = vmatprep.subr.bf16.mxu0 0
    %2255 = vmatpush1.bf16.msra.mxu0 0
    %2256 = vmatprep.subr.bf16.mxu0 0
    %2257 = vmatpush1.bf16.msra.mxu0 0
    %2258 = vmatprep.subr.bf16.mxu0 0
    %2259 = vmatpush1.bf16.msra.mxu0 0
    %2260 = vmatprep.subr.bf16.mxu0 0
    %2261 = vmatpush1.bf16.msra.mxu0 0
    %2262 = vmatprep.subr.bf16.mxu0 0
    %2263 = vmatpush1.bf16.msra.mxu0 0
    %2264 = vmatprep.subr.bf16.mxu0 0
    %2265 = vmatpush1.bf16.msra.mxu0 0
    %2266 = vmatprep.subr.bf16.mxu0 0
    %2267 = vmatpush1.bf16.msra.mxu0 0
    %2268 = vmatprep.mubr.bf16.mxu0 %v2192
    %2269 = vmatmul.mubr.bf16.gmra.mrb[0].mxu0 %v2085
    %v2270 = vpop.f32.mrb[0].mxu0
    %v2271 = vadd.f32 %v2136, %v2270
    %v2272 = vpop.f32.mrb[0].mxu0
    %v2273 = vpop.f32.mrb[0].mxu0
    %v2274 = vadd.f32 %v2136, %v2273
    %v2275 = vpop.f32.mrb[0].mxu0
    %2276 = vmatprep.mubr.bf16.mxu0 %v2195
    %2277 = vmatmul.mubr.bf16.gmra.mrb[0].mxu0 %v2087
    %v2278 = vpop.f32.mrb[0].mxu0
    %v2279 = vadd.f32 %v2136, %v2278
    %v2280 = vpop.f32.mrb[0].mxu0
    %v2281 = vpop.f32.mrb[0].mxu0
    %v2282 = vadd.f32 %v2136, %v2281
    %v2283 = vpop.f32.mrb[0].mxu0
    %2284 = vmatprep.mubr.bf16.mxu0 %v2198
    %2285 = vmatmul.mubr.bf16.gmra.mrb[0].mxu0 %v2089
    %v2286 = vpop.f32.mrb[0].mxu0
    %v2287 = vadd.f32 %v2136, %v2286
    %v2288 = vpop.f32.mrb[0].mxu0
    %v2289 = vpop.f32.mrb[0].mxu0
    %v2290 = vadd.f32 %v2136, %v2289
    %v2291 = vpop.f32.mrb[0].mxu0
    %2292 = vmatprep.mubr.bf16.mxu0 %v2201
    %2293 = vmatmul.mubr.bf16.gmra.mrb[0].mxu0 %v2091
    %v2294 = vpop.f32.mrb[0].mxu0
    %v2295 = vadd.f32 %v2136, %v2294
    %v2296 = vpop.f32.mrb[0].mxu0
    %v2297 = vpop.f32.mrb[0].mxu0
    %v2298 = vadd.f32 %v2136, %v2297
    %v2299 = vpop.f32.mrb[0].mxu0
    %2300 = vmatprep.mubr.bf16.mxu0 %v2204
    %2301 = vmatmul.mubr.bf16.gmra.mrb[0].mxu0 %v2093
    %v2302 = vpop.f32.mrb[0].mxu0
    %v2303 = vadd.f32 %v2136, %v2302
    %v2304 = vpop.f32.mrb[0].mxu0
    %v2305 = vpop.f32.mrb[0].mxu0
    %v2306 = vadd.f32 %v2136, %v2305
    %v2307 = vpop.f32.mrb[0].mxu0
    %2308 = vmatprep.mubr.bf16.mxu0 %v2207
    %2309 = vmatmul.mubr.bf16.gmra.mrb[0].mxu0 %v2095
    %v2310 = vpop.f32.mrb[0].mxu0
    %v2311 = vadd.f32 %v2136, %v2310
    %v2312 = vpop.f32.mrb[0].mxu0
    %v2313 = vpop.f32.mrb[0].mxu0
    %v2314 = vadd.f32 %v2136, %v2313
    %v2315 = vpop.f32.mrb[0].mxu0
    %2316 = vmatprep.mubr.bf16.mxu0 %v2210
    %2317 = vmatmul.mubr.bf16.gmra.mrb[0].mxu0 %v2097
    %v2318 = vpop.f32.mrb[0].mxu0
    %v2319 = vadd.f32 %v2136, %v2318
    %v2320 = vpop.f32.mrb[0].mxu0
    %v2321 = vpop.f32.mrb[0].mxu0
    %v2322 = vadd.f32 %v2136, %v2321
    %v2323 = vpop.f32.mrb[0].mxu0
    %2324 = vmatprep.mubr.bf16.mxu0 %v2213
    %2325 = vmatmul.mubr.bf16.gmra.mrb[0].mxu0 %v2099
    %v2326 = vpop.f32.mrb[0].mxu0
    %v2327 = vadd.f32 %v2136, %v2326
    %v2328 = vpop.f32.mrb[0].mxu0
    %v2329 = vpop.f32.mrb[0].mxu0
    %v2330 = vadd.f32 %v2136, %v2329
    %v2331 = vpop.f32.mrb[0].mxu0
    %2332 = vmatprep.mubr.bf16.mxu0 %v2216
    %2333 = vmatmul.mubr.bf16.gmra.mrb[0].mxu0 %v2101
    %v2334 = vpop.f32.mrb[0].mxu0
    %v2335 = vadd.f32 %v2136, %v2334
    %v2336 = vpop.f32.mrb[0].mxu0
    %v2337 = vpop.f32.mrb[0].mxu0
    %v2338 = vadd.f32 %v2136, %v2337
    %v2339 = vpop.f32.mrb[0].mxu0
    %2340 = vmatprep.mubr.bf16.mxu0 %v2219
    %2341 = vmatmul.mubr.bf16.gmra.mrb[0].mxu0 %v2103
    %v2342 = vpop.f32.mrb[0].mxu0
    %v2343 = vadd.f32 %v2136, %v2342
    %v2344 = vpop.f32.mrb[0].mxu0
    %v2345 = vpop.f32.mrb[0].mxu0
    %v2346 = vadd.f32 %v2136, %v2345
    %v2347 = vpop.f32.mrb[0].mxu0
    %2348 = vmatprep.mubr.bf16.mxu0 %v2222
    %2349 = vmatmul.mubr.bf16.gmra.mrb[0].mxu0 %v2105
    %v2350 = vpop.f32.mrb[0].mxu0
    %v2351 = vadd.f32 %v2136, %v2350
    %v2352 = vpop.f32.mrb[0].mxu0
    %v2353 = vpop.f32.mrb[0].mxu0
    %v2354 = vadd.f32 %v2136, %v2353
    %v2355 = vpop.f32.mrb[0].mxu0
    %2356 = vmatprep.mubr.bf16.mxu0 %v2225
    %2357 = vmatmul.mubr.bf16.gmra.mrb[0].mxu0 %v2107
    %v2358 = vpop.f32.mrb[0].mxu0
    %v2359 = vadd.f32 %v2136, %v2358
    %v2360 = vpop.f32.mrb[0].mxu0
    %v2361 = vpop.f32.mrb[0].mxu0
    %v2362 = vadd.f32 %v2136, %v2361
    %v2363 = vpop.f32.mrb[0].mxu0
    %2364 = vmatprep.mubr.bf16.mxu0 %v2228
    %2365 = vmatmul.mubr.bf16.gmra.mrb[0].mxu0 %v2109
    %v2366 = vpop.f32.mrb[0].mxu0
    %v2367 = vadd.f32 %v2136, %v2366
    %v2368 = vpop.f32.mrb[0].mxu0
    %v2369 = vpop.f32.mrb[0].mxu0
    %v2370 = vadd.f32 %v2136, %v2369
    %v2371 = vpop.f32.mrb[0].mxu0
    %2372 = vmatprep.mubr.bf16.mxu0 %v2231
    %2373 = vmatmul.mubr.bf16.gmra.mrb[0].mxu0 %v2111
    %v2374 = vpop.f32.mrb[0].mxu0
    %v2375 = vadd.f32 %v2136, %v2374
    %v2376 = vpop.f32.mrb[0].mxu0
    %v2377 = vpop.f32.mrb[0].mxu0
    %v2378 = vadd.f32 %v2136, %v2377
    %v2379 = vpop.f32.mrb[0].mxu0
    %2380 = vdwg.mxu0
    %v2381 = vxor.u32 %v2271, 2147483648
    %v2382 = vxor.u32 %v2274, 2147483648
    %v2383 = vxor.u32 %v2279, 2147483648
    %v2384 = vxor.u32 %v2282, 2147483648
    %v2385 = vxor.u32 %v2287, 2147483648
    %v2386 = vxor.u32 %v2290, 2147483648
    %v2387 = vxor.u32 %v2295, 2147483648
    %v2388 = vxor.u32 %v2298, 2147483648
    %v2389 = vxor.u32 %v2303, 2147483648
    %v2390 = vxor.u32 %v2306, 2147483648
    %v2391 = vxor.u32 %v2311, 2147483648
    %v2392 = vxor.u32 %v2314, 2147483648
    %v2393 = vxor.u32 %v2319, 2147483648
    %v2394 = vxor.u32 %v2322, 2147483648
    %v2395 = vxor.u32 %v2327, 2147483648
    %v2396 = vxor.u32 %v2330, 2147483648
    %v2397 = vxor.u32 %v2335, 2147483648
    %v2398 = vxor.u32 %v2338, 2147483648
    %v2399 = vxor.u32 %v2343, 2147483648
    %v2400 = vxor.u32 %v2346, 2147483648
    %v2401 = vxor.u32 %v2351, 2147483648
    %v2402 = vxor.u32 %v2354, 2147483648
    %v2403 = vxor.u32 %v2359, 2147483648
    %v2404 = vxor.u32 %v2362, 2147483648
    %v2405 = vxor.u32 %v2367, 2147483648
    %v2406 = vxor.u32 %v2370, 2147483648
    %v2407 = vxor.u32 %v2375, 2147483648
    %v2408 = vxor.u32 %v2378, 2147483648
    %v2409 = vmul.f32 %v2381, 1.442695
    %v2410 = vpow.pop %v2409
    %v2411 = vmul.f32 %v2382, 1.442695
    %v2412 = vpow.pop %v2411
    %v2413 = vmul.f32 %v2383, 1.442695
    %v2414 = vpow.pop %v2413
    %v2415 = vmul.f32 %v2384, 1.442695
    %v2416 = vpow.pop %v2415
    %v2417 = vmul.f32 %v2385, 1.442695
    %v2418 = vpow.pop %v2417
    %v2419 = vmul.f32 %v2386, 1.442695
    %v2420 = vpow.pop %v2419
    %v2421 = vmul.f32 %v2387, 1.442695
    %v2422 = vpow.pop %v2421
    %v2423 = vmul.f32 %v2388, 1.442695
    %v2424 = vpow.pop %v2423
    %v2425 = vmul.f32 %v2389, 1.442695
    %v2426 = vpow.pop %v2425
    %v2427 = vmul.f32 %v2390, 1.442695
    %v2428 = vpow.pop %v2427
    %v2429 = vmul.f32 %v2391, 1.442695
    %v2430 = vpow.pop %v2429
    %v2431 = vmul.f32 %v2392, 1.442695
    %v2432 = vpow.pop %v2431
    %v2433 = vmul.f32 %v2393, 1.442695
    %v2434 = vpow.pop %v2433
    %v2435 = vmul.f32 %v2394, 1.442695
    %v2436 = vpow.pop %v2435
    %v2437 = vmul.f32 %v2395, 1.442695
    %v2438 = vpow.pop %v2437
    %v2439 = vmul.f32 %v2396, 1.442695
    %v2440 = vpow.pop %v2439
    %v2441 = vmul.f32 %v2397, 1.442695
    %v2442 = vpow.pop %v2441
    %v2443 = vmul.f32 %v2398, 1.442695
    %v2444 = vpow.pop %v2443
    %v2445 = vmul.f32 %v2399, 1.442695
    %v2446 = vpow.pop %v2445
    %v2447 = vmul.f32 %v2400, 1.442695
    %v2448 = vpow.pop %v2447
    %v2449 = vmul.f32 %v2401, 1.442695
    %v2450 = vpow.pop %v2449
    %v2451 = vmul.f32 %v2402, 1.442695
    %v2452 = vpow.pop %v2451
    %v2453 = vmul.f32 %v2403, 1.442695
    %v2454 = vpow.pop %v2453
    %v2455 = vmul.f32 %v2404, 1.442695
    %v2456 = vpow.pop %v2455
    %v2457 = vmul.f32 %v2405, 1.442695
    %v2458 = vpow.pop %v2457
    %v2459 = vmul.f32 %v2406, 1.442695
    %v2460 = vpow.pop %v2459
    %v2461 = vmul.f32 %v2407, 1.442695
    %v2462 = vpow.pop %v2461
    %v2463 = vmul.f32 %v2408, 1.442695
    %v2464 = vpow.pop %v2463
    %v2465 = vadd.f32 %v2410, 1.0
    %v2466 = vadd.f32 %v2412, 1.0
    %v2467 = vadd.f32 %v2414, 1.0
    %v2468 = vadd.f32 %v2416, 1.0
    %v2469 = vadd.f32 %v2418, 1.0
    %v2470 = vadd.f32 %v2420, 1.0
    %v2471 = vadd.f32 %v2422, 1.0
    %v2472 = vadd.f32 %v2424, 1.0
    %v2473 = vadd.f32 %v2426, 1.0
    %v2474 = vadd.f32 %v2428, 1.0
    %v2475 = vadd.f32 %v2430, 1.0
    %v2476 = vadd.f32 %v2432, 1.0
    %v2477 = vadd.f32 %v2434, 1.0
    %v2478 = vadd.f32 %v2436, 1.0
    %v2479 = vadd.f32 %v2438, 1.0
    %v2480 = vadd.f32 %v2440, 1.0
    %v2481 = vadd.f32 %v2442, 1.0
    %v2482 = vadd.f32 %v2444, 1.0
    %v2483 = vadd.f32 %v2446, 1.0
    %v2484 = vadd.f32 %v2448, 1.0
    %v2485 = vadd.f32 %v2450, 1.0
    %v2486 = vadd.f32 %v2452, 1.0
    %v2487 = vadd.f32 %v2454, 1.0
    %v2488 = vadd.f32 %v2456, 1.0
    %v2489 = vadd.f32 %v2458, 1.0
    %v2490 = vadd.f32 %v2460, 1.0
    %v2491 = vadd.f32 %v2462, 1.0
    %v2492 = vadd.f32 %v2464, 1.0
    %v2493 = vrcp.pop %v2465
    %v2494 = vmul.f32 1.0, %v2493
    %v2495 = vrcp.pop %v2466
    %v2496 = vmul.f32 1.0, %v2495
    %v2497 = vrcp.pop %v2467
    %v2498 = vmul.f32 1.0, %v2497
    %v2499 = vrcp.pop %v2468
    %v2500 = vmul.f32 1.0, %v2499
    %v2501 = vrcp.pop %v2469
    %v2502 = vmul.f32 1.0, %v2501
    %v2503 = vrcp.pop %v2470
    %v2504 = vmul.f32 1.0, %v2503
    %v2505 = vrcp.pop %v2471
    %v2506 = vmul.f32 1.0, %v2505
    %v2507 = vrcp.pop %v2472
    %v2508 = vmul.f32 1.0, %v2507
    %v2509 = vrcp.pop %v2473
    %v2510 = vmul.f32 1.0, %v2509
    %v2511 = vrcp.pop %v2474
    %v2512 = vmul.f32 1.0, %v2511
    %v2513 = vrcp.pop %v2475
    %v2514 = vmul.f32 1.0, %v2513
    %v2515 = vrcp.pop %v2476
    %v2516 = vmul.f32 1.0, %v2515
    %v2517 = vrcp.pop %v2477
    %v2518 = vmul.f32 1.0, %v2517
    %v2519 = vrcp.pop %v2478
    %v2520 = vmul.f32 1.0, %v2519
    %v2521 = vrcp.pop %v2479
    %v2522 = vmul.f32 1.0, %v2521
    %v2523 = vrcp.pop %v2480
    %v2524 = vmul.f32 1.0, %v2523
    %v2525 = vrcp.pop %v2481
    %v2526 = vmul.f32 1.0, %v2525
    %v2527 = vrcp.pop %v2482
    %v2528 = vmul.f32 1.0, %v2527
    %v2529 = vrcp.pop %v2483
    %v2530 = vmul.f32 1.0, %v2529
    %v2531 = vrcp.pop %v2484
    %v2532 = vmul.f32 1.0, %v2531
    %v2533 = vrcp.pop %v2485
    %v2534 = vmul.f32 1.0, %v2533
    %v2535 = vrcp.pop %v2486
    %v2536 = vmul.f32 1.0, %v2535
    %v2537 = vrcp.pop %v2487
    %v2538 = vmul.f32 1.0, %v2537
    %v2539 = vrcp.pop %v2488
    %v2540 = vmul.f32 1.0, %v2539
    %v2541 = vrcp.pop %v2489
    %v2542 = vmul.f32 1.0, %v2541
    %v2543 = vrcp.pop %v2490
    %v2544 = vmul.f32 1.0, %v2543
    %v2545 = vrcp.pop %v2491
    %v2546 = vmul.f32 1.0, %v2545
    %v2547 = vrcp.pop %v2492
    %v2548 = vmul.f32 1.0, %v2547
    %v2549 = vmul.f32 %v2271, %v2494
    %v2550 = vmul.f32 %v2274, %v2496
    %v2551 = vmul.f32 %v2279, %v2498
    %v2552 = vmul.f32 %v2282, %v2500
    %v2553 = vmul.f32 %v2287, %v2502
    %v2554 = vmul.f32 %v2290, %v2504
    %v2555 = vmul.f32 %v2295, %v2506
    %v2556 = vmul.f32 %v2298, %v2508
    %v2557 = vmul.f32 %v2303, %v2510
    %v2558 = vmul.f32 %v2306, %v2512
    %v2559 = vmul.f32 %v2311, %v2514
    %v2560 = vmul.f32 %v2314, %v2516
    %v2561 = vmul.f32 %v2319, %v2518
    %v2562 = vmul.f32 %v2322, %v2520
    %v2563 = vmul.f32 %v2327, %v2522
    %v2564 = vmul.f32 %v2330, %v2524
    %v2565 = vmul.f32 %v2335, %v2526
    %v2566 = vmul.f32 %v2338, %v2528
    %v2567 = vmul.f32 %v2343, %v2530
    %v2568 = vmul.f32 %v2346, %v2532
    %v2569 = vmul.f32 %v2351, %v2534
    %v2570 = vmul.f32 %v2354, %v2536
    %v2571 = vmul.f32 %v2359, %v2538
    %v2572 = vmul.f32 %v2362, %v2540
    %v2573 = vmul.f32 %v2367, %v2542
    %v2574 = vmul.f32 %v2370, %v2544
    %v2575 = vmul.f32 %v2375, %v2546
    %v2576 = vmul.f32 %v2378, %v2548
    %vm2577 = vcmask 392192
    %2578 = vst.msk [vmem:[#allocation2 + $0x18] sm:$0xff] %vm2577, %v2549
    %2579 = vst.msk [vmem:[#allocation2 + $0x20] sm:$0xff] %vm2577, %v2550
    %2580 = vst.msk [vmem:[#allocation2 + $0x28] sm:$0xff] %vm2577, %v2551
    %2581 = vst.msk [vmem:[#allocation2 + $0x30] sm:$0xff] %vm2577, %v2552
    %2582 = vst.msk [vmem:[#allocation2 + $0x38] sm:$0xff] %vm2577, %v2553
    %2583 = vst.msk [vmem:[#allocation2 + $0x40] sm:$0xff] %vm2577, %v2554
    %2584 = vst.msk [vmem:[#allocation2 + $0x48] sm:$0xff] %vm2577, %v2555
    %2585 = vst.msk [vmem:[#allocation2 + $0x50] sm:$0xff] %vm2577, %v2556
    %2586 = vst.msk [vmem:[#allocation2 + $0x58] sm:$0xff] %vm2577, %v2557
    %2587 = vst.msk [vmem:[#allocation2 + $0x60] sm:$0xff] %vm2577, %v2558
    %2588 = vst.msk [vmem:[#allocation2 + $0x68] sm:$0xff] %vm2577, %v2559
    %2589 = vst.msk [vmem:[#allocation2 + $0x70] sm:$0xff] %vm2577, %v2560
    %2590 = vst.msk [vmem:[#allocation2 + $0x78] sm:$0xff] %vm2577, %v2561
    %2591 = vst.msk [vmem:[#allocation2 + $0x80] sm:$0xff] %vm2577, %v2562
    %2592 = vst.msk [vmem:[#allocation2 + $0x88] sm:$0xff] %vm2577, %v2563
    %2593 = vst.msk [vmem:[#allocation2 + $0x90] sm:$0xff] %vm2577, %v2564
    %2594 = vst.msk [vmem:[#allocation2 + $0x98] sm:$0xff] %vm2577, %v2565
    %2595 = vst.msk [vmem:[#allocation2 + $0xa0] sm:$0xff] %vm2577, %v2566
    %2596 = vst.msk [vmem:[#allocation2 + $0xa8] sm:$0xff] %vm2577, %v2567
    %2597 = vst.msk [vmem:[#allocation2 + $0xb0] sm:$0xff] %vm2577, %v2568
    %2598 = vst.msk [vmem:[#allocation2 + $0xb8] sm:$0xff] %vm2577, %v2569
    %2599 = vst.msk [vmem:[#allocation2 + $0xc0] sm:$0xff] %vm2577, %v2570
    %2600 = vst.msk [vmem:[#allocation2 + $0xc8] sm:$0xff] %vm2577, %v2571
    %2601 = vst.msk [vmem:[#allocation2 + $0xd0] sm:$0xff] %vm2577, %v2572
    %2602 = vst.msk [vmem:[#allocation2 + $0xd8] sm:$0xff] %vm2577, %v2573
    %2603 = vst.msk [vmem:[#allocation2 + $0xe0] sm:$0xff] %vm2577, %v2574
    %2604 = vst.msk [vmem:[#allocation2 + $0xe8] sm:$0xff] %vm2577, %v2575
    %2605 = vst.msk [vmem:[#allocation2 + $0xf0] sm:$0xff] %vm2577, %v2576
    %v2606 = vld [vmem:[#allocation2 + $0x10] sm:$0xff]
    %v2607 = vld [vmem:[#allocation2 + $0x18] sm:$0xff]
    %v2608 = vld [vmem:[#allocation2 + $0x20] sm:$0xff]
    %v2609 = vld [vmem:[#allocation2 + $0x28] sm:$0xff]
    %v2610 = vld [vmem:[#allocation2 + $0x30] sm:$0xff]
    %v2611 = vld [vmem:[#allocation2 + $0x38] sm:$0xff]
    %v2612 = vld [vmem:[#allocation2 + $0x40] sm:$0xff]
    %v2613 = vld [vmem:[#allocation2 + $0x48] sm:$0xff]
    %v2614 = vld [vmem:[#allocation2 + $0x50] sm:$0xff]
    %v2615 = vld [vmem:[#allocation2 + $0x58] sm:$0xff]
    %v2616 = vld [vmem:[#allocation2 + $0x60] sm:$0xff]
    %v2617 = vld [vmem:[#allocation2 + $0x68] sm:$0xff]
    %v2618 = vld [vmem:[#allocation2 + $0x70] sm:$0xff]
    %v2619 = vld [vmem:[#allocation2 + $0x78] sm:$0xff]
    %v2620 = vld [vmem:[#allocation2 + $0x80] sm:$0xff]
    %v2621 = vld [vmem:[#allocation2 + $0x88] sm:$0xff]
    %v2622 = vld [vmem:[#allocation2 + $0x90] sm:$0xff]
    %v2623 = vld [vmem:[#allocation2 + $0x98] sm:$0xff]
    %v2624 = vld [vmem:[#allocation2 + $0xa0] sm:$0xff]
    %v2625 = vld [vmem:[#allocation2 + $0xa8] sm:$0xff]
    %v2626 = vld [vmem:[#allocation2 + $0xb0] sm:$0xff]
    %v2627 = vld [vmem:[#allocation2 + $0xb8] sm:$0xff]
    %v2628 = vld [vmem:[#allocation2 + $0xc0] sm:$0xff]
    %v2629 = vld [vmem:[#allocation2 + $0xc8] sm:$0xff]
    %v2630 = vld [vmem:[#allocation2 + $0xd0] sm:$0xff]
    %v2631 = vld [vmem:[#allocation2 + $0xd8] sm:$0xff]
    %v2632 = vld [vmem:[#allocation2 + $0xe0] sm:$0xff]
    %v2633 = vld [vmem:[#allocation2 + $0xe8] sm:$0xff]
    %v2634 = vld [vmem:[#allocation2 + $0xf0] sm:$0xff]
    %v2635 = vld [vmem:[#allocation2 + $0xf8] sm:$0xff]
    %2664 = vrot.lane.b32.xlu0 %v2607, 48
    %v2665 = vpop.permute.xlu0 %2664
    %2666 = vrot.lane.b32.xlu0 %v2608, 48
    %v2667 = vpop.permute.xlu0 %2666
    %2668 = vrot.lane.b32.xlu0 %v2609, 48
    %v2669 = vpop.permute.xlu0 %2668
    %2670 = vrot.lane.b32.xlu0 %v2610, 48
    %v2671 = vpop.permute.xlu0 %2670
    %2672 = vrot.lane.b32.xlu0 %v2611, 48
    %v2673 = vpop.permute.xlu0 %2672
    %2674 = vrot.lane.b32.xlu0 %v2612, 48
    %v2675 = vpop.permute.xlu0 %2674
    %2676 = vrot.lane.b32.xlu0 %v2613, 48
    %v2677 = vpop.permute.xlu0 %2676
    %2678 = vrot.lane.b32.xlu0 %v2614, 48
    %v2679 = vpop.permute.xlu0 %2678
    %2680 = vrot.lane.b32.xlu0 %v2615, 48
    %v2681 = vpop.permute.xlu0 %2680
    %2682 = vrot.lane.b32.xlu0 %v2616, 48
    %v2683 = vpop.permute.xlu0 %2682
    %2684 = vrot.lane.b32.xlu0 %v2617, 48
    %v2685 = vpop.permute.xlu0 %2684
    %2686 = vrot.lane.b32.xlu0 %v2618, 48
    %v2687 = vpop.permute.xlu0 %2686
    %2688 = vrot.lane.b32.xlu0 %v2619, 48
    %v2689 = vpop.permute.xlu0 %2688
    %2690 = vrot.lane.b32.xlu0 %v2620, 48
    %v2691 = vpop.permute.xlu0 %2690
    %2692 = vrot.lane.b32.xlu0 %v2621, 48
    %v2693 = vpop.permute.xlu0 %2692
    %2694 = vrot.lane.b32.xlu0 %v2622, 48
    %v2695 = vpop.permute.xlu0 %2694
    %2696 = vrot.lane.b32.xlu0 %v2623, 48
    %v2697 = vpop.permute.xlu0 %2696
    %2698 = vrot.lane.b32.xlu0 %v2624, 48
    %v2699 = vpop.permute.xlu0 %2698
    %2700 = vrot.lane.b32.xlu0 %v2625, 48
    %v2701 = vpop.permute.xlu0 %2700
    %2702 = vrot.lane.b32.xlu0 %v2626, 48
    %v2703 = vpop.permute.xlu0 %2702
    %2704 = vrot.lane.b32.xlu0 %v2627, 48
    %v2705 = vpop.permute.xlu0 %2704
    %2706 = vrot.lane.b32.xlu0 %v2628, 48
    %v2707 = vpop.permute.xlu0 %2706
    %2708 = vrot.lane.b32.xlu0 %v2629, 48
    %v2709 = vpop.permute.xlu0 %2708
    %2710 = vrot.lane.b32.xlu0 %v2630, 48
    %v2711 = vpop.permute.xlu0 %2710
    %2712 = vrot.lane.b32.xlu0 %v2631, 48
    %v2713 = vpop.permute.xlu0 %2712
    %2714 = vrot.lane.b32.xlu0 %v2632, 48
    %v2715 = vpop.permute.xlu0 %2714
    %2716 = vrot.lane.b32.xlu0 %v2633, 48
    %v2717 = vpop.permute.xlu0 %2716
    %2718 = vrot.lane.b32.xlu0 %v2634, 48
    %v2719 = vpop.permute.xlu0 %2718
    %2749 = vrot.lane.b32.xlu0 %v2608, 96
    %v2750 = vpop.permute.xlu0 %2749
    %2751 = vrot.lane.b32.xlu0 %v2609, 96
    %v2752 = vpop.permute.xlu0 %2751
    %2753 = vrot.lane.b32.xlu0 %v2610, 96
    %v2754 = vpop.permute.xlu0 %2753
    %2755 = vrot.lane.b32.xlu0 %v2611, 96
    %v2756 = vpop.permute.xlu0 %2755
    %2757 = vrot.lane.b32.xlu0 %v2612, 96
    %v2758 = vpop.permute.xlu0 %2757
    %2759 = vrot.lane.b32.xlu0 %v2613, 96
    %v2760 = vpop.permute.xlu0 %2759
    %2761 = vrot.lane.b32.xlu0 %v2614, 96
    %v2762 = vpop.permute.xlu0 %2761
    %2763 = vrot.lane.b32.xlu0 %v2615, 96
    %v2764 = vpop.permute.xlu0 %2763
    %2765 = vrot.lane.b32.xlu0 %v2616, 96
    %v2766 = vpop.permute.xlu0 %2765
    %2767 = vrot.lane.b32.xlu0 %v2617, 96
    %v2768 = vpop.permute.xlu0 %2767
    %2769 = vrot.lane.b32.xlu0 %v2618, 96
    %v2770 = vpop.permute.xlu0 %2769
    %2771 = vrot.lane.b32.xlu0 %v2619, 96
    %v2772 = vpop.permute.xlu0 %2771
    %2773 = vrot.lane.b32.xlu0 %v2620, 96
    %v2774 = vpop.permute.xlu0 %2773
    %2775 = vrot.lane.b32.xlu0 %v2621, 96
    %v2776 = vpop.permute.xlu0 %2775
    %2777 = vrot.lane.b32.xlu0 %v2622, 96
    %v2778 = vpop.permute.xlu0 %2777
    %2779 = vrot.lane.b32.xlu0 %v2623, 96
    %v2780 = vpop.permute.xlu0 %2779
    %2781 = vrot.lane.b32.xlu0 %v2624, 96
    %v2782 = vpop.permute.xlu0 %2781
    %2783 = vrot.lane.b32.xlu0 %v2625, 96
    %v2784 = vpop.permute.xlu0 %2783
    %2785 = vrot.lane.b32.xlu0 %v2626, 96
    %v2786 = vpop.permute.xlu0 %2785
    %2787 = vrot.lane.b32.xlu0 %v2627, 96
    %v2788 = vpop.permute.xlu0 %2787
    %2789 = vrot.lane.b32.xlu0 %v2628, 96
    %v2790 = vpop.permute.xlu0 %2789
    %2791 = vrot.lane.b32.xlu0 %v2629, 96
    %v2792 = vpop.permute.xlu0 %2791
    %2793 = vrot.lane.b32.xlu0 %v2630, 96
    %v2794 = vpop.permute.xlu0 %2793
    %2795 = vrot.lane.b32.xlu0 %v2631, 96
    %v2796 = vpop.permute.xlu0 %2795
    %2797 = vrot.lane.b32.xlu0 %v2632, 96
    %v2798 = vpop.permute.xlu0 %2797
    %2799 = vrot.lane.b32.xlu0 %v2633, 96
    %v2800 = vpop.permute.xlu0 %2799
    %2801 = vrot.lane.b32.xlu0 %v2634, 96
    %v2802 = vpop.permute.xlu0 %2801
    %2803 = vrot.lane.b32.xlu0 %v2635, 96
    %v2804 = vpop.permute.xlu0 %2803
    %v2833 = vsel %vm2577, %v2606, %v2665
    %v2834 = vsel %vm2577, %v2607, %v2667
    %v2835 = vsel %vm2577, %v2608, %v2669
    %v2836 = vsel %vm2577, %v2609, %v2671
    %v2837 = vsel %vm2577, %v2610, %v2673
    %v2838 = vsel %vm2577, %v2611, %v2675
    %v2839 = vsel %vm2577, %v2612, %v2677
    %v2840 = vsel %vm2577, %v2613, %v2679
    %v2841 = vsel %vm2577, %v2614, %v2681
    %v2842 = vsel %vm2577, %v2615, %v2683
    %v2843 = vsel %vm2577, %v2616, %v2685
    %v2844 = vsel %vm2577, %v2617, %v2687
    %v2845 = vsel %vm2577, %v2618, %v2689
    %v2846 = vsel %vm2577, %v2619, %v2691
    %v2847 = vsel %vm2577, %v2620, %v2693
    %v2848 = vsel %vm2577, %v2621, %v2695
    %v2849 = vsel %vm2577, %v2622, %v2697
    %v2850 = vsel %vm2577, %v2623, %v2699
    %v2851 = vsel %vm2577, %v2624, %v2701
    %v2852 = vsel %vm2577, %v2625, %v2703
    %v2853 = vsel %vm2577, %v2626, %v2705
    %v2854 = vsel %vm2577, %v2627, %v2707
    %v2855 = vsel %vm2577, %v2628, %v2709
    %v2856 = vsel %vm2577, %v2629, %v2711
    %v2857 = vsel %vm2577, %v2630, %v2713
    %v2858 = vsel %vm2577, %v2631, %v2715
    %v2859 = vsel %vm2577, %v2632, %v2717
    %v2860 = vsel %vm2577, %v2633, %v2719
    %vm2861 = vcmask 785408
    %v2862 = vsel %vm2861, %v2833, %v2750
    %v2863 = vsel %vm2861, %v2834, %v2752
    %v2864 = vsel %vm2861, %v2835, %v2754
    %v2865 = vsel %vm2861, %v2836, %v2756
    %v2866 = vsel %vm2861, %v2837, %v2758
    %v2867 = vsel %vm2861, %v2838, %v2760
    %v2868 = vsel %vm2861, %v2839, %v2762
    %v2869 = vsel %vm2861, %v2840, %v2764
    %v2870 = vsel %vm2861, %v2841, %v2766
    %v2871 = vsel %vm2861, %v2842, %v2768
    %v2872 = vsel %vm2861, %v2843, %v2770
    %v2873 = vsel %vm2861, %v2844, %v2772
    %v2874 = vsel %vm2861, %v2845, %v2774
    %v2875 = vsel %vm2861, %v2846, %v2776
    %v2876 = vsel %vm2861, %v2847, %v2778
    %v2877 = vsel %vm2861, %v2848, %v2780
    %v2878 = vsel %vm2861, %v2849, %v2782
    %v2879 = vsel %vm2861, %v2850, %v2784
    %v2880 = vsel %vm2861, %v2851, %v2786
    %v2881 = vsel %vm2861, %v2852, %v2788
    %v2882 = vsel %vm2861, %v2853, %v2790
    %v2883 = vsel %vm2861, %v2854, %v2792
    %v2884 = vsel %vm2861, %v2855, %v2794
    %v2885 = vsel %vm2861, %v2856, %v2796
    %v2886 = vsel %vm2861, %v2857, %v2798
    %v2887 = vsel %vm2861, %v2858, %v2800
    %v2888 = vsel %vm2861, %v2859, %v2802
    %v2889 = vsel %vm2861, %v2860, %v2804
    %v2890 = vpack.c.bf16 %v2863, %v2862
    %v2891 = vpack.c.bf16 %v2752, %v2750
    %v2892 = vpack.c.bf16 %v2865, %v2864
    %v2893 = vpack.c.bf16 %v2756, %v2754
    %v2894 = vpack.c.bf16 %v2867, %v2866
    %v2895 = vpack.c.bf16 %v2760, %v2758
    %v2896 = vpack.c.bf16 %v2869, %v2868
    %v2897 = vpack.c.bf16 %v2764, %v2762
    %v2898 = vpack.c.bf16 %v2871, %v2870
    %v2899 = vpack.c.bf16 %v2768, %v2766
    %v2900 = vpack.c.bf16 %v2873, %v2872
    %v2901 = vpack.c.bf16 %v2772, %v2770
    %v2902 = vpack.c.bf16 %v2875, %v2874
    %v2903 = vpack.c.bf16 %v2776, %v2774
    %v2904 = vpack.c.bf16 %v2877, %v2876
    %v2905 = vpack.c.bf16 %v2780, %v2778
    %v2906 = vpack.c.bf16 %v2879, %v2878
    %v2907 = vpack.c.bf16 %v2784, %v2782
    %v2908 = vpack.c.bf16 %v2881, %v2880
    %v2909 = vpack.c.bf16 %v2788, %v2786
    %v2910 = vpack.c.bf16 %v2883, %v2882
    %v2911 = vpack.c.bf16 %v2792, %v2790
    %v2912 = vpack.c.bf16 %v2885, %v2884
    %v2913 = vpack.c.bf16 %v2796, %v2794
    %v2914 = vpack.c.bf16 %v2887, %v2886
    %v2915 = vpack.c.bf16 %v2800, %v2798
    %v2916 = vpack.c.bf16 %v2889, %v2888
    %v2917 = vpack.c.bf16 %v2804, %v2802
    %v2918 = vld [vmem:[#allocation12] sm:$0xf]
    %v2919 = vld [vmem:[#allocation12 + $0x4] sm:$0xf]
    %v2920 = vld [vmem:[#allocation12 + $0x8] sm:$0xf]
    %v2921 = vld [vmem:[#allocation12 + $0xc] sm:$0xf]
    %v2922 = vld [vmem:[#allocation12 + $0x10] sm:$0xf]
    %v2923 = vld [vmem:[#allocation12 + $0x14] sm:$0xf]
    %v2924 = vld [vmem:[#allocation12 + $0x18] sm:$0xf]
    %v2925 = vld [vmem:[#allocation12 + $0x1c] sm:$0xf]
    %v2926 = vld [vmem:[#allocation12 + $0x20] sm:$0xf]
    %v2927 = vld [vmem:[#allocation12 + $0x24] sm:$0xf]
    %v2928 = vld [vmem:[#allocation12 + $0x28] sm:$0xf]
    %v2929 = vld [vmem:[#allocation12 + $0x2c] sm:$0xf]
    %v2930 = vld [vmem:[#allocation12 + $0x30] sm:$0xf]
    %v2931 = vld [vmem:[#allocation12 + $0x34] sm:$0xf]
    %v2932 = vld [vmem:[#allocation12 + $0x38] sm:$0xf]
    %v2933 = vld [vmem:[#allocation12 + $0x3c] sm:$0xf]
    %v2934 = vld [vmem:[#allocation12 + $0x40] sm:$0xf]
    %v2935 = vld [vmem:[#allocation12 + $0x44] sm:$0xf]
    %v2936 = vld [vmem:[#allocation14] sm:$0x1]
    %v2938 = vlaneseq
    %v2939 = vshrl.u32 %v2938, 7
    %v2940 = vsub.s32 0, %v2939
    %v2941 = vrot.slane %v2936, %v2940
    %v2961 = vunpack.c.l.b16 %v2918
    %v2962 = vunpack.c.l.b16 %v2919
    %v2963 = vunpack.c.l.b16 %v2920
    %v2964 = vunpack.c.l.b16 %v2921
    %v2965 = vunpack.c.l.b16 %v2922
    %v2966 = vunpack.c.l.b16 %v2923
    %v2967 = vunpack.c.l.b16 %v2924
    %v2968 = vunpack.c.l.b16 %v2925
    %v2969 = vunpack.c.l.b16 %v2926
    %v2970 = vunpack.c.l.b16 %v2927
    %v2971 = vunpack.c.l.b16 %v2928
    %v2972 = vunpack.c.l.b16 %v2929
    %v2973 = vunpack.c.l.b16 %v2930
    %v2974 = vunpack.c.l.b16 %v2931
    %v2975 = vunpack.c.l.b16 %v2932
    %v2976 = vunpack.c.l.b16 %v2933
    %v2977 = vunpack.c.l.b16 %v2934
    %v2978 = vunpack.c.l.b16 %v2935
    %v2979 = vpack.c.b16 %v2962, %v2961
    %v2980 = vpack.c.b16 %v2964, %v2963
    %v2981 = vpack.c.b16 %v2966, %v2965
    %v2982 = vpack.c.b16 %v2968, %v2967
    %v2983 = vpack.c.b16 %v2970, %v2969
    %v2984 = vpack.c.b16 %v2972, %v2971
    %v2985 = vpack.c.b16 %v2974, %v2973
    %v2986 = vpack.c.b16 %v2976, %v2975
    %v2987 = vpack.c.b16 %v2978, %v2977
    %v2998 = vsel %vm1032, %v2891, 0
    %v3001 = vsel %vm1032, %v2893, 0
    %v3004 = vsel %vm1032, %v2895, 0
    %v3007 = vsel %vm1032, %v2897, 0
    %v3010 = vsel %vm1032, %v2899, 0
    %v3013 = vsel %vm1032, %v2901, 0
    %v3016 = vsel %vm1032, %v2903, 0
    %v3019 = vsel %vm1032, %v2905, 0
    %v3022 = vsel %vm1032, %v2907, 0
    %v3025 = vsel %vm1032, %v2909, 0
    %v3028 = vsel %vm1032, %v2911, 0
    %v3031 = vsel %vm1032, %v2913, 0
    %v3034 = vsel %vm1032, %v2915, 0
    %v3037 = vsel %vm1032, %v2917, 0
    %3039 = vmatprep.subr.bf16.mxu0 0
    %3040 = vmatpush1.bf16.msra.mxu0 %v2979
    %3041 = vmatprep.subr.bf16.mxu0 0
    %3042 = vmatpush1.bf16.msra.mxu0 %v2980
    %3043 = vmatprep.subr.bf16.mxu0 0
    %3044 = vmatpush1.bf16.msra.mxu0 %v2981
    %3045 = vmatprep.subr.bf16.mxu0 0
    %3046 = vmatpush1.bf16.msra.mxu0 %v2982
    %3047 = vmatprep.subr.bf16.mxu0 0
    %3048 = vmatpush1.bf16.msra.mxu0 %v2983
    %3049 = vmatprep.subr.bf16.mxu0 0
    %3050 = vmatpush1.bf16.msra.mxu0 %v2984
    %3051 = vmatprep.subr.bf16.mxu0 0
    %3052 = vmatpush1.bf16.msra.mxu0 %v2985
    %3053 = vmatprep.subr.bf16.mxu0 0
    %3054 = vmatpush1.bf16.msra.mxu0 %v2986
    %3055 = vmatprep.subr.bf16.mxu0 0
    %3056 = vmatpush1.bf16.msra.mxu0 %v2987
    %3057 = vmatprep.subr.bf16.mxu0 0
    %3058 = vmatpush1.bf16.msra.mxu0 0
    %3059 = vmatprep.subr.bf16.mxu0 0
    %3060 = vmatpush1.bf16.msra.mxu0 0
    %3061 = vmatprep.subr.bf16.mxu0 0
    %3062 = vmatpush1.bf16.msra.mxu0 0
    %3063 = vmatprep.subr.bf16.mxu0 0
    %3064 = vmatpush1.bf16.msra.mxu0 0
    %3065 = vmatprep.subr.bf16.mxu0 0
    %3066 = vmatpush1.bf16.msra.mxu0 0
    %3067 = vmatprep.subr.bf16.mxu0 0
    %3068 = vmatpush1.bf16.msra.mxu0 0
    %3069 = vmatprep.subr.bf16.mxu0 0
    %3070 = vmatpush1.bf16.msra.mxu0 0
    %3071 = vmatprep.mubr.bf16.mxu0 %v2998
    %3072 = vmatmul.mubr.bf16.gmra.mrb[0].mxu0 %v2890
    %v3073 = vpop.f32.mrb[0].mxu0
    %v3074 = vadd.f32 %v2941, %v3073
    %v3075 = vpop.f32.mrb[0].mxu0
    %v3076 = vpop.f32.mrb[0].mxu0
    %v3077 = vadd.f32 %v2941, %v3076
    %v3078 = vpop.f32.mrb[0].mxu0
    %3079 = vmatprep.mubr.bf16.mxu0 %v3001
    %3080 = vmatmul.mubr.bf16.gmra.mrb[0].mxu0 %v2892
    %v3081 = vpop.f32.mrb[0].mxu0
    %v3082 = vadd.f32 %v2941, %v3081
    %v3083 = vpop.f32.mrb[0].mxu0
    %v3084 = vpop.f32.mrb[0].mxu0
    %v3085 = vadd.f32 %v2941, %v3084
    %v3086 = vpop.f32.mrb[0].mxu0
    %3087 = vmatprep.mubr.bf16.mxu0 %v3004
    %3088 = vmatmul.mubr.bf16.gmra.mrb[0].mxu0 %v2894
    %v3089 = vpop.f32.mrb[0].mxu0
    %v3090 = vadd.f32 %v2941, %v3089
    %v3091 = vpop.f32.mrb[0].mxu0
    %v3092 = vpop.f32.mrb[0].mxu0
    %v3093 = vadd.f32 %v2941, %v3092
    %v3094 = vpop.f32.mrb[0].mxu0
    %3095 = vmatprep.mubr.bf16.mxu0 %v3007
    %3096 = vmatmul.mubr.bf16.gmra.mrb[0].mxu0 %v2896
    %v3097 = vpop.f32.mrb[0].mxu0
    %v3098 = vadd.f32 %v2941, %v3097
    %v3099 = vpop.f32.mrb[0].mxu0
    %v3100 = vpop.f32.mrb[0].mxu0
    %v3101 = vadd.f32 %v2941, %v3100
    %v3102 = vpop.f32.mrb[0].mxu0
    %3103 = vmatprep.mubr.bf16.mxu0 %v3010
    %3104 = vmatmul.mubr.bf16.gmra.mrb[0].mxu0 %v2898
    %v3105 = vpop.f32.mrb[0].mxu0
    %v3106 = vadd.f32 %v2941, %v3105
    %v3107 = vpop.f32.mrb[0].mxu0
    %v3108 = vpop.f32.mrb[0].mxu0
    %v3109 = vadd.f32 %v2941, %v3108
    %v3110 = vpop.f32.mrb[0].mxu0
    %3111 = vmatprep.mubr.bf16.mxu0 %v3013
    %3112 = vmatmul.mubr.bf16.gmra.mrb[0].mxu0 %v2900
    %v3113 = vpop.f32.mrb[0].mxu0
    %v3114 = vadd.f32 %v2941, %v3113
    %v3115 = vpop.f32.mrb[0].mxu0
    %v3116 = vpop.f32.mrb[0].mxu0
    %v3117 = vadd.f32 %v2941, %v3116
    %v3118 = vpop.f32.mrb[0].mxu0
    %3119 = vmatprep.mubr.bf16.mxu0 %v3016
    %3120 = vmatmul.mubr.bf16.gmra.mrb[0].mxu0 %v2902
    %v3121 = vpop.f32.mrb[0].mxu0
    %v3122 = vadd.f32 %v2941, %v3121
    %v3123 = vpop.f32.mrb[0].mxu0
    %v3124 = vpop.f32.mrb[0].mxu0
    %v3125 = vadd.f32 %v2941, %v3124
    %v3126 = vpop.f32.mrb[0].mxu0
    %3127 = vmatprep.mubr.bf16.mxu0 %v3019
    %3128 = vmatmul.mubr.bf16.gmra.mrb[0].mxu0 %v2904
    %v3129 = vpop.f32.mrb[0].mxu0
    %v3130 = vadd.f32 %v2941, %v3129
    %v3131 = vpop.f32.mrb[0].mxu0
    %v3132 = vpop.f32.mrb[0].mxu0
    %v3133 = vadd.f32 %v2941, %v3132
    %v3134 = vpop.f32.mrb[0].mxu0
    %3135 = vmatprep.mubr.bf16.mxu0 %v3022
    %3136 = vmatmul.mubr.bf16.gmra.mrb[0].mxu0 %v2906
    %v3137 = vpop.f32.mrb[0].mxu0
    %v3138 = vadd.f32 %v2941, %v3137
    %v3139 = vpop.f32.mrb[0].mxu0
    %v3140 = vpop.f32.mrb[0].mxu0
    %v3141 = vadd.f32 %v2941, %v3140
    %v3142 = vpop.f32.mrb[0].mxu0
    %3143 = vmatprep.mubr.bf16.mxu0 %v3025
    %3144 = vmatmul.mubr.bf16.gmra.mrb[0].mxu0 %v2908
    %v3145 = vpop.f32.mrb[0].mxu0
    %v3146 = vadd.f32 %v2941, %v3145
    %v3147 = vpop.f32.mrb[0].mxu0
    %v3148 = vpop.f32.mrb[0].mxu0
    %v3149 = vadd.f32 %v2941, %v3148
    %v3150 = vpop.f32.mrb[0].mxu0
    %3151 = vmatprep.mubr.bf16.mxu0 %v3028
    %3152 = vmatmul.mubr.bf16.gmra.mrb[0].mxu0 %v2910
    %v3153 = vpop.f32.mrb[0].mxu0
    %v3154 = vadd.f32 %v2941, %v3153
    %v3155 = vpop.f32.mrb[0].mxu0
    %v3156 = vpop.f32.mrb[0].mxu0
    %v3157 = vadd.f32 %v2941, %v3156
    %v3158 = vpop.f32.mrb[0].mxu0
    %3159 = vmatprep.mubr.bf16.mxu0 %v3031
    %3160 = vmatmul.mubr.bf16.gmra.mrb[0].mxu0 %v2912
    %v3161 = vpop.f32.mrb[0].mxu0
    %v3162 = vadd.f32 %v2941, %v3161
    %v3163 = vpop.f32.mrb[0].mxu0
    %v3164 = vpop.f32.mrb[0].mxu0
    %v3165 = vadd.f32 %v2941, %v3164
    %v3166 = vpop.f32.mrb[0].mxu0
    %3167 = vmatprep.mubr.bf16.mxu0 %v3034
    %3168 = vmatmul.mubr.bf16.gmra.mrb[0].mxu0 %v2914
    %v3169 = vpop.f32.mrb[0].mxu0
    %v3170 = vadd.f32 %v2941, %v3169
    %v3171 = vpop.f32.mrb[0].mxu0
    %v3172 = vpop.f32.mrb[0].mxu0
    %v3173 = vadd.f32 %v2941, %v3172
    %v3174 = vpop.f32.mrb[0].mxu0
    %3175 = vmatprep.mubr.bf16.mxu0 %v3037
    %3176 = vmatmul.mubr.bf16.gmra.mrb[0].mxu0 %v2916
    %v3177 = vpop.f32.mrb[0].mxu0
    %v3178 = vadd.f32 %v2941, %v3177
    %v3179 = vpop.f32.mrb[0].mxu0
    %v3180 = vpop.f32.mrb[0].mxu0
    %v3181 = vadd.f32 %v2941, %v3180
    %v3182 = vpop.f32.mrb[0].mxu0
    %3183 = vdwg.mxu0
    %v3184 = vxor.u32 %v3074, 2147483648
    %v3185 = vxor.u32 %v3077, 2147483648
    %v3186 = vxor.u32 %v3082, 2147483648
    %v3187 = vxor.u32 %v3085, 2147483648
    %v3188 = vxor.u32 %v3090, 2147483648
    %v3189 = vxor.u32 %v3093, 2147483648
    %v3190 = vxor.u32 %v3098, 2147483648
    %v3191 = vxor.u32 %v3101, 2147483648
    %v3192 = vxor.u32 %v3106, 2147483648
    %v3193 = vxor.u32 %v3109, 2147483648
    %v3194 = vxor.u32 %v3114, 2147483648
    %v3195 = vxor.u32 %v3117, 2147483648
    %v3196 = vxor.u32 %v3122, 2147483648
    %v3197 = vxor.u32 %v3125, 2147483648
    %v3198 = vxor.u32 %v3130, 2147483648
    %v3199 = vxor.u32 %v3133, 2147483648
    %v3200 = vxor.u32 %v3138, 2147483648
    %v3201 = vxor.u32 %v3141, 2147483648
    %v3202 = vxor.u32 %v3146, 2147483648
    %v3203 = vxor.u32 %v3149, 2147483648
    %v3204 = vxor.u32 %v3154, 2147483648
    %v3205 = vxor.u32 %v3157, 2147483648
    %v3206 = vxor.u32 %v3162, 2147483648
    %v3207 = vxor.u32 %v3165, 2147483648
    %v3208 = vxor.u32 %v3170, 2147483648
    %v3209 = vxor.u32 %v3173, 2147483648
    %v3210 = vxor.u32 %v3178, 2147483648
    %v3211 = vxor.u32 %v3181, 2147483648
    %v3212 = vmul.f32 %v3184, 1.442695
    %v3213 = vpow.pop %v3212
    %v3214 = vmul.f32 %v3185, 1.442695
    %v3215 = vpow.pop %v3214
    %v3216 = vmul.f32 %v3186, 1.442695
    %v3217 = vpow.pop %v3216
    %v3218 = vmul.f32 %v3187, 1.442695
    %v3219 = vpow.pop %v3218
    %v3220 = vmul.f32 %v3188, 1.442695
    %v3221 = vpow.pop %v3220
    %v3222 = vmul.f32 %v3189, 1.442695
    %v3223 = vpow.pop %v3222
    %v3224 = vmul.f32 %v3190, 1.442695
    %v3225 = vpow.pop %v3224
    %v3226 = vmul.f32 %v3191, 1.442695
    %v3227 = vpow.pop %v3226
    %v3228 = vmul.f32 %v3192, 1.442695
    %v3229 = vpow.pop %v3228
    %v3230 = vmul.f32 %v3193, 1.442695
    %v3231 = vpow.pop %v3230
    %v3232 = vmul.f32 %v3194, 1.442695
    %v3233 = vpow.pop %v3232
    %v3234 = vmul.f32 %v3195, 1.442695
    %v3235 = vpow.pop %v3234
    %v3236 = vmul.f32 %v3196, 1.442695
    %v3237 = vpow.pop %v3236
    %v3238 = vmul.f32 %v3197, 1.442695
    %v3239 = vpow.pop %v3238
    %v3240 = vmul.f32 %v3198, 1.442695
    %v3241 = vpow.pop %v3240
    %v3242 = vmul.f32 %v3199, 1.442695
    %v3243 = vpow.pop %v3242
    %v3244 = vmul.f32 %v3200, 1.442695
    %v3245 = vpow.pop %v3244
    %v3246 = vmul.f32 %v3201, 1.442695
    %v3247 = vpow.pop %v3246
    %v3248 = vmul.f32 %v3202, 1.442695
    %v3249 = vpow.pop %v3248
    %v3250 = vmul.f32 %v3203, 1.442695
    %v3251 = vpow.pop %v3250
    %v3252 = vmul.f32 %v3204, 1.442695
    %v3253 = vpow.pop %v3252
    %v3254 = vmul.f32 %v3205, 1.442695
    %v3255 = vpow.pop %v3254
    %v3256 = vmul.f32 %v3206, 1.442695
    %v3257 = vpow.pop %v3256
    %v3258 = vmul.f32 %v3207, 1.442695
    %v3259 = vpow.pop %v3258
    %v3260 = vmul.f32 %v3208, 1.442695
    %v3261 = vpow.pop %v3260
    %v3262 = vmul.f32 %v3209, 1.442695
    %v3263 = vpow.pop %v3262
    %v3264 = vmul.f32 %v3210, 1.442695
    %v3265 = vpow.pop %v3264
    %v3266 = vmul.f32 %v3211, 1.442695
    %v3267 = vpow.pop %v3266
    %v3268 = vadd.f32 %v3213, 1.0
    %v3269 = vadd.f32 %v3215, 1.0
    %v3270 = vadd.f32 %v3217, 1.0
    %v3271 = vadd.f32 %v3219, 1.0
    %v3272 = vadd.f32 %v3221, 1.0
    %v3273 = vadd.f32 %v3223, 1.0
    %v3274 = vadd.f32 %v3225, 1.0
    %v3275 = vadd.f32 %v3227, 1.0
    %v3276 = vadd.f32 %v3229, 1.0
    %v3277 = vadd.f32 %v3231, 1.0
    %v3278 = vadd.f32 %v3233, 1.0
    %v3279 = vadd.f32 %v3235, 1.0
    %v3280 = vadd.f32 %v3237, 1.0
    %v3281 = vadd.f32 %v3239, 1.0
    %v3282 = vadd.f32 %v3241, 1.0
    %v3283 = vadd.f32 %v3243, 1.0
    %v3284 = vadd.f32 %v3245, 1.0
    %v3285 = vadd.f32 %v3247, 1.0
    %v3286 = vadd.f32 %v3249, 1.0
    %v3287 = vadd.f32 %v3251, 1.0
    %v3288 = vadd.f32 %v3253, 1.0
    %v3289 = vadd.f32 %v3255, 1.0
    %v3290 = vadd.f32 %v3257, 1.0
    %v3291 = vadd.f32 %v3259, 1.0
    %v3292 = vadd.f32 %v3261, 1.0
    %v3293 = vadd.f32 %v3263, 1.0
    %v3294 = vadd.f32 %v3265, 1.0
    %v3295 = vadd.f32 %v3267, 1.0
    %v3296 = vrcp.pop %v3268
    %v3297 = vmul.f32 1.0, %v3296
    %v3298 = vrcp.pop %v3269
    %v3299 = vmul.f32 1.0, %v3298
    %v3300 = vrcp.pop %v3270
    %v3301 = vmul.f32 1.0, %v3300
    %v3302 = vrcp.pop %v3271
    %v3303 = vmul.f32 1.0, %v3302
    %v3304 = vrcp.pop %v3272
    %v3305 = vmul.f32 1.0, %v3304
    %v3306 = vrcp.pop %v3273
    %v3307 = vmul.f32 1.0, %v3306
    %v3308 = vrcp.pop %v3274
    %v3309 = vmul.f32 1.0, %v3308
    %v3310 = vrcp.pop %v3275
    %v3311 = vmul.f32 1.0, %v3310
    %v3312 = vrcp.pop %v3276
    %v3313 = vmul.f32 1.0, %v3312
    %v3314 = vrcp.pop %v3277
    %v3315 = vmul.f32 1.0, %v3314
    %v3316 = vrcp.pop %v3278
    %v3317 = vmul.f32 1.0, %v3316
    %v3318 = vrcp.pop %v3279
    %v3319 = vmul.f32 1.0, %v3318
    %v3320 = vrcp.pop %v3280
    %v3321 = vmul.f32 1.0, %v3320
    %v3322 = vrcp.pop %v3281
    %v3323 = vmul.f32 1.0, %v3322
    %v3324 = vrcp.pop %v3282
    %v3325 = vmul.f32 1.0, %v3324
    %v3326 = vrcp.pop %v3283
    %v3327 = vmul.f32 1.0, %v3326
    %v3328 = vrcp.pop %v3284
    %v3329 = vmul.f32 1.0, %v3328
    %v3330 = vrcp.pop %v3285
    %v3331 = vmul.f32 1.0, %v3330
    %v3332 = vrcp.pop %v3286
    %v3333 = vmul.f32 1.0, %v3332
    %v3334 = vrcp.pop %v3287
    %v3335 = vmul.f32 1.0, %v3334
    %v3336 = vrcp.pop %v3288
    %v3337 = vmul.f32 1.0, %v3336
    %v3338 = vrcp.pop %v3289
    %v3339 = vmul.f32 1.0, %v3338
    %v3340 = vrcp.pop %v3290
    %v3341 = vmul.f32 1.0, %v3340
    %v3342 = vrcp.pop %v3291
    %v3343 = vmul.f32 1.0, %v3342
    %v3344 = vrcp.pop %v3292
    %v3345 = vmul.f32 1.0, %v3344
    %v3346 = vrcp.pop %v3293
    %v3347 = vmul.f32 1.0, %v3346
    %v3348 = vrcp.pop %v3294
    %v3349 = vmul.f32 1.0, %v3348
    %v3350 = vrcp.pop %v3295
    %v3351 = vmul.f32 1.0, %v3350
    %v3352 = vmul.f32 %v3074, %v3297
    %v3353 = vmul.f32 %v3077, %v3299
    %v3354 = vmul.f32 %v3082, %v3301
    %v3355 = vmul.f32 %v3085, %v3303
    %v3356 = vmul.f32 %v3090, %v3305
    %v3357 = vmul.f32 %v3093, %v3307
    %v3358 = vmul.f32 %v3098, %v3309
    %v3359 = vmul.f32 %v3101, %v3311
    %v3360 = vmul.f32 %v3106, %v3313
    %v3361 = vmul.f32 %v3109, %v3315
    %v3362 = vmul.f32 %v3114, %v3317
    %v3363 = vmul.f32 %v3117, %v3319
    %v3364 = vmul.f32 %v3122, %v3321
    %v3365 = vmul.f32 %v3125, %v3323
    %v3366 = vmul.f32 %v3130, %v3325
    %v3367 = vmul.f32 %v3133, %v3327
    %v3368 = vmul.f32 %v3138, %v3329
    %v3369 = vmul.f32 %v3141, %v3331
    %v3370 = vmul.f32 %v3146, %v3333
    %v3371 = vmul.f32 %v3149, %v3335
    %v3372 = vmul.f32 %v3154, %v3337
    %v3373 = vmul.f32 %v3157, %v3339
    %v3374 = vmul.f32 %v3162, %v3341
    %v3375 = vmul.f32 %v3165, %v3343
    %v3376 = vmul.f32 %v3170, %v3345
    %v3377 = vmul.f32 %v3173, %v3347
    %v3378 = vmul.f32 %v3178, %v3349
    %v3379 = vmul.f32 %v3181, %v3351
    %3380 = vst.msk [vmem:[#allocation2 + $0x18] sm:$0xff] %vm2027, %v3352
    %3381 = vst.msk [vmem:[#allocation2 + $0x20] sm:$0xff] %vm2027, %v3353
    %3382 = vst.msk [vmem:[#allocation2 + $0x28] sm:$0xff] %vm2027, %v3354
    %3383 = vst.msk [vmem:[#allocation2 + $0x30] sm:$0xff] %vm2027, %v3355
    %3384 = vst.msk [vmem:[#allocation2 + $0x38] sm:$0xff] %vm2027, %v3356
    %3385 = vst.msk [vmem:[#allocation2 + $0x40] sm:$0xff] %vm2027, %v3357
    %3386 = vst.msk [vmem:[#allocation2 + $0x48] sm:$0xff] %vm2027, %v3358
    %3387 = vst.msk [vmem:[#allocation2 + $0x50] sm:$0xff] %vm2027, %v3359
    %3388 = vst.msk [vmem:[#allocation2 + $0x58] sm:$0xff] %vm2027, %v3360
    %3389 = vst.msk [vmem:[#allocation2 + $0x60] sm:$0xff] %vm2027, %v3361
    %3390 = vst.msk [vmem:[#allocation2 + $0x68] sm:$0xff] %vm2027, %v3362
    %3391 = vst.msk [vmem:[#allocation2 + $0x70] sm:$0xff] %vm2027, %v3363
    %3392 = vst.msk [vmem:[#allocation2 + $0x78] sm:$0xff] %vm2027, %v3364
    %3393 = vst.msk [vmem:[#allocation2 + $0x80] sm:$0xff] %vm2027, %v3365
    %3394 = vst.msk [vmem:[#allocation2 + $0x88] sm:$0xff] %vm2027, %v3366
    %3395 = vst.msk [vmem:[#allocation2 + $0x90] sm:$0xff] %vm2027, %v3367
    %3396 = vst.msk [vmem:[#allocation2 + $0x98] sm:$0xff] %vm2027, %v3368
    %3397 = vst.msk [vmem:[#allocation2 + $0xa0] sm:$0xff] %vm2027, %v3369
    %3398 = vst.msk [vmem:[#allocation2 + $0xa8] sm:$0xff] %vm2027, %v3370
    %3399 = vst.msk [vmem:[#allocation2 + $0xb0] sm:$0xff] %vm2027, %v3371
    %3400 = vst.msk [vmem:[#allocation2 + $0xb8] sm:$0xff] %vm2027, %v3372
    %3401 = vst.msk [vmem:[#allocation2 + $0xc0] sm:$0xff] %vm2027, %v3373
    %3402 = vst.msk [vmem:[#allocation2 + $0xc8] sm:$0xff] %vm2027, %v3374
    %3403 = vst.msk [vmem:[#allocation2 + $0xd0] sm:$0xff] %vm2027, %v3375
    %3404 = vst.msk [vmem:[#allocation2 + $0xd8] sm:$0xff] %vm2027, %v3376
    %3405 = vst.msk [vmem:[#allocation2 + $0xe0] sm:$0xff] %vm2027, %v3377
    %3406 = vst.msk [vmem:[#allocation2 + $0xe8] sm:$0xff] %vm2027, %v3378
    %3407 = vst.msk [vmem:[#allocation2 + $0xf0] sm:$0xff] %vm2027, %v3379
    %v3408 = vld [vmem:[#allocation2 + $0x10] sm:$0xff]
    %v3409 = vld [vmem:[#allocation2 + $0x18] sm:$0xff]
    %v3410 = vld [vmem:[#allocation2 + $0x20] sm:$0xff]
    %v3411 = vld [vmem:[#allocation2 + $0x28] sm:$0xff]
    %v3412 = vld [vmem:[#allocation2 + $0x30] sm:$0xff]
    %v3413 = vld [vmem:[#allocation2 + $0x38] sm:$0xff]
    %v3414 = vld [vmem:[#allocation2 + $0x40] sm:$0xff]
    %v3415 = vld [vmem:[#allocation2 + $0x48] sm:$0xff]
    %v3416 = vld [vmem:[#allocation2 + $0x50] sm:$0xff]
    %v3417 = vld [vmem:[#allocation2 + $0x58] sm:$0xff]
    %v3418 = vld [vmem:[#allocation2 + $0x60] sm:$0xff]
    %v3419 = vld [vmem:[#allocation2 + $0x68] sm:$0xff]
    %v3420 = vld [vmem:[#allocation2 + $0x70] sm:$0xff]
    %v3421 = vld [vmem:[#allocation2 + $0x78] sm:$0xff]
    %v3422 = vld [vmem:[#allocation2 + $0x80] sm:$0xff]
    %v3423 = vld [vmem:[#allocation2 + $0x88] sm:$0xff]
    %v3424 = vld [vmem:[#allocation2 + $0x90] sm:$0xff]
    %v3425 = vld [vmem:[#allocation2 + $0x98] sm:$0xff]
    %v3426 = vld [vmem:[#allocation2 + $0xa0] sm:$0xff]
    %v3427 = vld [vmem:[#allocation2 + $0xa8] sm:$0xff]
    %v3428 = vld [vmem:[#allocation2 + $0xb0] sm:$0xff]
    %v3429 = vld [vmem:[#allocation2 + $0xb8] sm:$0xff]
    %v3430 = vld [vmem:[#allocation2 + $0xc0] sm:$0xff]
    %v3431 = vld [vmem:[#allocation2 + $0xc8] sm:$0xff]
    %v3432 = vld [vmem:[#allocation2 + $0xd0] sm:$0xff]
    %v3433 = vld [vmem:[#allocation2 + $0xd8] sm:$0xff]
    %v3434 = vld [vmem:[#allocation2 + $0xe0] sm:$0xff]
    %v3435 = vld [vmem:[#allocation2 + $0xe8] sm:$0xff]
    %v3436 = vld [vmem:[#allocation2 + $0xf0] sm:$0xff]
    %v3437 = vld [vmem:[#allocation2 + $0xf8] sm:$0xff]
    %3466 = vrot.lane.b32.xlu0 %v3409, 84
    %v3467 = vpop.permute.xlu0 %3466
    %3468 = vrot.lane.b32.xlu0 %v3410, 84
    %v3469 = vpop.permute.xlu0 %3468
    %3470 = vrot.lane.b32.xlu0 %v3411, 84
    %v3471 = vpop.permute.xlu0 %3470
    %3472 = vrot.lane.b32.xlu0 %v3412, 84
    %v3473 = vpop.permute.xlu0 %3472
    %3474 = vrot.lane.b32.xlu0 %v3413, 84
    %v3475 = vpop.permute.xlu0 %3474
    %3476 = vrot.lane.b32.xlu0 %v3414, 84
    %v3477 = vpop.permute.xlu0 %3476
    %3478 = vrot.lane.b32.xlu0 %v3415, 84
    %v3479 = vpop.permute.xlu0 %3478
    %3480 = vrot.lane.b32.xlu0 %v3416, 84
    %v3481 = vpop.permute.xlu0 %3480
    %3482 = vrot.lane.b32.xlu0 %v3417, 84
    %v3483 = vpop.permute.xlu0 %3482
    %3484 = vrot.lane.b32.xlu0 %v3418, 84
    %v3485 = vpop.permute.xlu0 %3484
    %3486 = vrot.lane.b32.xlu0 %v3419, 84
    %v3487 = vpop.permute.xlu0 %3486
    %3488 = vrot.lane.b32.xlu0 %v3420, 84
    %v3489 = vpop.permute.xlu0 %3488
    %3490 = vrot.lane.b32.xlu0 %v3421, 84
    %v3491 = vpop.permute.xlu0 %3490
    %3492 = vrot.lane.b32.xlu0 %v3422, 84
    %v3493 = vpop.permute.xlu0 %3492
    %3494 = vrot.lane.b32.xlu0 %v3423, 84
    %v3495 = vpop.permute.xlu0 %3494
    %3496 = vrot.lane.b32.xlu0 %v3424, 84
    %v3497 = vpop.permute.xlu0 %3496
    %3498 = vrot.lane.b32.xlu0 %v3425, 84
    %v3499 = vpop.permute.xlu0 %3498
    %3500 = vrot.lane.b32.xlu0 %v3426, 84
    %v3501 = vpop.permute.xlu0 %3500
    %3502 = vrot.lane.b32.xlu0 %v3427, 84
    %v3503 = vpop.permute.xlu0 %3502
    %3504 = vrot.lane.b32.xlu0 %v3428, 84
    %v3505 = vpop.permute.xlu0 %3504
    %3506 = vrot.lane.b32.xlu0 %v3429, 84
    %v3507 = vpop.permute.xlu0 %3506
    %3508 = vrot.lane.b32.xlu0 %v3430, 84
    %v3509 = vpop.permute.xlu0 %3508
    %3510 = vrot.lane.b32.xlu0 %v3431, 84
    %v3511 = vpop.permute.xlu0 %3510
    %3512 = vrot.lane.b32.xlu0 %v3432, 84
    %v3513 = vpop.permute.xlu0 %3512
    %3514 = vrot.lane.b32.xlu0 %v3433, 84
    %v3515 = vpop.permute.xlu0 %3514
    %3516 = vrot.lane.b32.xlu0 %v3434, 84
    %v3517 = vpop.permute.xlu0 %3516
    %3518 = vrot.lane.b32.xlu0 %v3435, 84
    %v3519 = vpop.permute.xlu0 %3518
    %3520 = vrot.lane.b32.xlu0 %v3436, 84
    %v3521 = vpop.permute.xlu0 %3520
    %3551 = vrot.lane.b32.xlu0 %v3410, 40
    %v3552 = vpop.permute.xlu0 %3551
    %3553 = vrot.lane.b32.xlu0 %v3411, 40
    %v3554 = vpop.permute.xlu0 %3553
    %3555 = vrot.lane.b32.xlu0 %v3412, 40
    %v3556 = vpop.permute.xlu0 %3555
    %3557 = vrot.lane.b32.xlu0 %v3413, 40
    %v3558 = vpop.permute.xlu0 %3557
    %3559 = vrot.lane.b32.xlu0 %v3414, 40
    %v3560 = vpop.permute.xlu0 %3559
    %3561 = vrot.lane.b32.xlu0 %v3415, 40
    %v3562 = vpop.permute.xlu0 %3561
    %3563 = vrot.lane.b32.xlu0 %v3416, 40
    %v3564 = vpop.permute.xlu0 %3563
    %3565 = vrot.lane.b32.xlu0 %v3417, 40
    %v3566 = vpop.permute.xlu0 %3565
    %3567 = vrot.lane.b32.xlu0 %v3418, 40
    %v3568 = vpop.permute.xlu0 %3567
    %3569 = vrot.lane.b32.xlu0 %v3419, 40
    %v3570 = vpop.permute.xlu0 %3569
    %3571 = vrot.lane.b32.xlu0 %v3420, 40
    %v3572 = vpop.permute.xlu0 %3571
    %3573 = vrot.lane.b32.xlu0 %v3421, 40
    %v3574 = vpop.permute.xlu0 %3573
    %3575 = vrot.lane.b32.xlu0 %v3422, 40
    %v3576 = vpop.permute.xlu0 %3575
    %3577 = vrot.lane.b32.xlu0 %v3423, 40
    %v3578 = vpop.permute.xlu0 %3577
    %3579 = vrot.lane.b32.xlu0 %v3424, 40
    %v3580 = vpop.permute.xlu0 %3579
    %3581 = vrot.lane.b32.xlu0 %v3425, 40
    %v3582 = vpop.permute.xlu0 %3581
    %3583 = vrot.lane.b32.xlu0 %v3426, 40
    %v3584 = vpop.permute.xlu0 %3583
    %3585 = vrot.lane.b32.xlu0 %v3427, 40
    %v3586 = vpop.permute.xlu0 %3585
    %3587 = vrot.lane.b32.xlu0 %v3428, 40
    %v3588 = vpop.permute.xlu0 %3587
    %3589 = vrot.lane.b32.xlu0 %v3429, 40
    %v3590 = vpop.permute.xlu0 %3589
    %3591 = vrot.lane.b32.xlu0 %v3430, 40
    %v3592 = vpop.permute.xlu0 %3591
    %3593 = vrot.lane.b32.xlu0 %v3431, 40
    %v3594 = vpop.permute.xlu0 %3593
    %3595 = vrot.lane.b32.xlu0 %v3432, 40
    %v3596 = vpop.permute.xlu0 %3595
    %3597 = vrot.lane.b32.xlu0 %v3433, 40
    %v3598 = vpop.permute.xlu0 %3597
    %3599 = vrot.lane.b32.xlu0 %v3434, 40
    %v3600 = vpop.permute.xlu0 %3599
    %3601 = vrot.lane.b32.xlu0 %v3435, 40
    %v3602 = vpop.permute.xlu0 %3601
    %3603 = vrot.lane.b32.xlu0 %v3436, 40
    %v3604 = vpop.permute.xlu0 %3603
    %3605 = vrot.lane.b32.xlu0 %v3437, 40
    %v3606 = vpop.permute.xlu0 %3605
    %v3635 = vsel %vm2027, %v3408, %v3467
    %v3636 = vsel %vm2027, %v3409, %v3469
    %v3637 = vsel %vm2027, %v3410, %v3471
    %v3638 = vsel %vm2027, %v3411, %v3473
    %v3639 = vsel %vm2027, %v3412, %v3475
    %v3640 = vsel %vm2027, %v3413, %v3477
    %v3641 = vsel %vm2027, %v3414, %v3479
    %v3642 = vsel %vm2027, %v3415, %v3481
    %v3643 = vsel %vm2027, %v3416, %v3483
    %v3644 = vsel %vm2027, %v3417, %v3485
    %v3645 = vsel %vm2027, %v3418, %v3487
    %v3646 = vsel %vm2027, %v3419, %v3489
    %v3647 = vsel %vm2027, %v3420, %v3491
    %v3648 = vsel %vm2027, %v3421, %v3493
    %v3649 = vsel %vm2027, %v3422, %v3495
    %v3650 = vsel %vm2027, %v3423, %v3497
    %v3651 = vsel %vm2027, %v3424, %v3499
    %v3652 = vsel %vm2027, %v3425, %v3501
    %v3653 = vsel %vm2027, %v3426, %v3503
    %v3654 = vsel %vm2027, %v3427, %v3505
    %v3655 = vsel %vm2027, %v3428, %v3507
    %v3656 = vsel %vm2027, %v3429, %v3509
    %v3657 = vsel %vm2027, %v3430, %v3511
    %v3658 = vsel %vm2027, %v3431, %v3513
    %v3659 = vsel %vm2027, %v3432, %v3515
    %v3660 = vsel %vm2027, %v3433, %v3517
    %v3661 = vsel %vm2027, %v3434, %v3519
    %v3662 = vsel %vm2027, %v3435, %v3521
    %vm3663 = vcmask 326656
    %v3664 = vsel %vm3663, %v3467, %v3552
    %v3665 = vsel %vm3663, %v3469, %v3554
    %v3666 = vsel %vm3663, %v3471, %v3556
    %v3667 = vsel %vm3663, %v3473, %v3558
    %v3668 = vsel %vm3663, %v3475, %v3560
    %v3669 = vsel %vm3663, %v3477, %v3562
    %v3670 = vsel %vm3663, %v3479, %v3564
    %v3671 = vsel %vm3663, %v3481, %v3566
    %v3672 = vsel %vm3663, %v3483, %v3568
    %v3673 = vsel %vm3663, %v3485, %v3570
    %v3674 = vsel %vm3663, %v3487, %v3572
    %v3675 = vsel %vm3663, %v3489, %v3574
    %v3676 = vsel %vm3663, %v3491, %v3576
    %v3677 = vsel %vm3663, %v3493, %v3578
    %v3678 = vsel %vm3663, %v3495, %v3580
    %v3679 = vsel %vm3663, %v3497, %v3582
    %v3680 = vsel %vm3663, %v3499, %v3584
    %v3681 = vsel %vm3663, %v3501, %v3586
    %v3682 = vsel %vm3663, %v3503, %v3588
    %v3683 = vsel %vm3663, %v3505, %v3590
    %v3684 = vsel %vm3663, %v3507, %v3592
    %v3685 = vsel %vm3663, %v3509, %v3594
    %v3686 = vsel %vm3663, %v3511, %v3596
    %v3687 = vsel %vm3663, %v3513, %v3598
    %v3688 = vsel %vm3663, %v3515, %v3600
    %v3689 = vsel %vm3663, %v3517, %v3602
    %v3690 = vsel %vm3663, %v3519, %v3604
    %v3691 = vsel %vm3663, %v3521, %v3606
    %v3692 = vpack.c.bf16 %v3636, %v3635
    %v3693 = vpack.c.bf16 %v3665, %v3664
    %v3694 = vpack.c.bf16 %v3638, %v3637
    %v3695 = vpack.c.bf16 %v3667, %v3666
    %v3696 = vpack.c.bf16 %v3640, %v3639
    %v3697 = vpack.c.bf16 %v3669, %v3668
    %v3698 = vpack.c.bf16 %v3642, %v3641
    %v3699 = vpack.c.bf16 %v3671, %v3670
    %v3700 = vpack.c.bf16 %v3644, %v3643
    %v3701 = vpack.c.bf16 %v3673, %v3672
    %v3702 = vpack.c.bf16 %v3646, %v3645
    %v3703 = vpack.c.bf16 %v3675, %v3674
    %v3704 = vpack.c.bf16 %v3648, %v3647
    %v3705 = vpack.c.bf16 %v3677, %v3676
    %v3706 = vpack.c.bf16 %v3650, %v3649
    %v3707 = vpack.c.bf16 %v3679, %v3678
    %v3708 = vpack.c.bf16 %v3652, %v3651
    %v3709 = vpack.c.bf16 %v3681, %v3680
    %v3710 = vpack.c.bf16 %v3654, %v3653
    %v3711 = vpack.c.bf16 %v3683, %v3682
    %v3712 = vpack.c.bf16 %v3656, %v3655
    %v3713 = vpack.c.bf16 %v3685, %v3684
    %v3714 = vpack.c.bf16 %v3658, %v3657
    %v3715 = vpack.c.bf16 %v3687, %v3686
    %v3716 = vpack.c.bf16 %v3660, %v3659
    %v3717 = vpack.c.bf16 %v3689, %v3688
    %v3718 = vpack.c.bf16 %v3662, %v3661
    %v3719 = vpack.c.bf16 %v3691, %v3690
    %v3720 = vld [vmem:[%s7] sm:$0xf]
    %v3721 = vld [vmem:[%s7 + $0x4] sm:$0xf]
    %v3722 = vld [vmem:[%s7 + $0x8] sm:$0xf]
    %v3723 = vld [vmem:[%s7 + $0xc] sm:$0xf]
    %v3724 = vld [vmem:[%s7 + $0x10] sm:$0xf]
    %v3725 = vld [vmem:[%s7 + $0x14] sm:$0xf]
    %v3726 = vld [vmem:[%s7 + $0x18] sm:$0xf]
    %v3727 = vld [vmem:[%s7 + $0x1c] sm:$0xf]
    %v3728 = vld [vmem:[%s7 + $0x20] sm:$0xf]
    %v3729 = vld [vmem:[%s7 + $0x24] sm:$0xf]
    %v3730 = vld [vmem:[%s7 + $0x28] sm:$0xf]
    %v3731 = vld [vmem:[%s7 + $0x2c] sm:$0xf]
    %v3732 = vld [vmem:[%s7 + $0x30] sm:$0xf]
    %v3733 = vld [vmem:[%s7 + $0x34] sm:$0xf]
    %v3734 = vld [vmem:[%s7 + $0x38] sm:$0xf]
    %v3735 = vld [vmem:[%s7 + $0x3c] sm:$0xf]
    %v3736 = vld [vmem:[%s7 + $0x40] sm:$0xf]
    %v3737 = vld [vmem:[%s7 + $0x44] sm:$0xf]
    %v3738 = vld [vmem:[%s7 + $0x48] sm:$0xf]
    %v3739 = vld [vmem:[%s7 + $0x4c] sm:$0xf]
    %v3740 = vld [vmem:[%s7 + $0x50] sm:$0xf]
    %v3741 = vld [vmem:[%s7 + $0x54] sm:$0xf]
    %v3742 = vld [vmem:[%s7 + $0x58] sm:$0xf]
    %v3743 = vld [vmem:[%s7 + $0x5c] sm:$0xf]
    %v3744 = vld [vmem:[%s7 + $0x60] sm:$0xf]
    %v3745 = vld [vmem:[%s7 + $0x64] sm:$0xf]
    %v3746 = vld [vmem:[%s7 + $0x68] sm:$0xf]
    %v3747 = vld [vmem:[%s7 + $0x6c] sm:$0xf]
    %v3748 = vld [vmem:[%s7 + $0x70] sm:$0xf]
    %v3749 = vld [vmem:[%s7 + $0x74] sm:$0xf]
    %v3750 = vld [vmem:[%s7 + $0x78] sm:$0xf]
    %v3751 = vld [vmem:[%s7 + $0x7c] sm:$0x3]
    %v3752 = vld [vmem:[#allocation15] sm:$0x1]
    %v3754 = vlaneseq
    %v3755 = vshrl.u32 %v3754, 7
    %v3756 = vsub.s32 0, %v3755
    %v3757 = vrot.slane %v3752, %v3756
    %v3791 = vunpack.c.l.b16 %v3720
    %v3792 = vunpack.c.l.b16 %v3721
    %v3793 = vunpack.c.l.b16 %v3722
    %v3794 = vunpack.c.l.b16 %v3723
    %v3795 = vunpack.c.l.b16 %v3724
    %v3796 = vunpack.c.l.b16 %v3725
    %v3797 = vunpack.c.l.b16 %v3726
    %v3798 = vunpack.c.l.b16 %v3727
    %v3799 = vunpack.c.l.b16 %v3728
    %v3800 = vunpack.c.l.b16 %v3729
    %v3801 = vunpack.c.l.b16 %v3730
    %v3802 = vunpack.c.l.b16 %v3731
    %v3803 = vunpack.c.l.b16 %v3732
    %v3804 = vunpack.c.l.b16 %v3733
    %v3805 = vunpack.c.l.b16 %v3734
    %v3806 = vunpack.c.l.b16 %v3735
    %v3807 = vunpack.c.l.b16 %v3736
    %v3808 = vunpack.c.l.b16 %v3737
    %v3809 = vunpack.c.l.b16 %v3738
    %v3810 = vunpack.c.l.b16 %v3739
    %v3811 = vunpack.c.l.b16 %v3740
    %v3812 = vunpack.c.l.b16 %v3741
    %v3813 = vunpack.c.l.b16 %v3742
    %v3814 = vunpack.c.l.b16 %v3743
    %v3815 = vunpack.c.l.b16 %v3744
    %v3816 = vunpack.c.l.b16 %v3745
    %v3817 = vunpack.c.l.b16 %v3746
    %v3818 = vunpack.c.l.b16 %v3747
    %v3819 = vunpack.c.l.b16 %v3748
    %v3820 = vunpack.c.l.b16 %v3749
    %v3821 = vunpack.c.l.b16 %v3750
    %v3822 = vunpack.c.l.b16 %v3751
    %v3823 = vpack.c.b16 %v3792, %v3791
    %v3824 = vpack.c.b16 %v3794, %v3793
    %v3825 = vpack.c.b16 %v3796, %v3795
    %v3826 = vpack.c.b16 %v3798, %v3797
    %v3827 = vpack.c.b16 %v3800, %v3799
    %v3828 = vpack.c.b16 %v3802, %v3801
    %v3829 = vpack.c.b16 %v3804, %v3803
    %v3830 = vpack.c.b16 %v3806, %v3805
    %v3831 = vpack.c.b16 %v3808, %v3807
    %v3832 = vpack.c.b16 %v3810, %v3809
    %v3833 = vpack.c.b16 %v3812, %v3811
    %v3834 = vpack.c.b16 %v3814, %v3813
    %v3835 = vpack.c.b16 %v3816, %v3815
    %v3836 = vpack.c.b16 %v3818, %v3817
    %v3837 = vpack.c.b16 %v3820, %v3819
    %v3838 = vpack.c.b16 %v3822, %v3821
    %vm3854 = vcmask 1014784
    %v3856 = vsel %vm3854, %v3693, 0
    %v3859 = vsel %vm3854, %v3695, 0
    %v3862 = vsel %vm3854, %v3697, 0
    %v3865 = vsel %vm3854, %v3699, 0
    %v3868 = vsel %vm3854, %v3701, 0
    %v3871 = vsel %vm3854, %v3703, 0
    %v3874 = vsel %vm3854, %v3705, 0
    %v3877 = vsel %vm3854, %v3707, 0
    %v3880 = vsel %vm3854, %v3709, 0
    %v3883 = vsel %vm3854, %v3711, 0
    %v3886 = vsel %vm3854, %v3713, 0
    %v3889 = vsel %vm3854, %v3715, 0
    %v3892 = vsel %vm3854, %v3717, 0
    %v3895 = vsel %vm3854, %v3719, 0
    %v3898 = vsel %vm1198, %v3838, 0
    %3900 = vmatprep.subr.bf16.mxu0 0
    %3901 = vmatpush1.bf16.msra.mxu0 %v3823
    %3902 = vmatprep.subr.bf16.mxu0 0
    %3903 = vmatpush1.bf16.msra.mxu0 %v3824
    %3904 = vmatprep.subr.bf16.mxu0 0
    %3905 = vmatpush1.bf16.msra.mxu0 %v3825
    %3906 = vmatprep.subr.bf16.mxu0 0
    %3907 = vmatpush1.bf16.msra.mxu0 %v3826
    %3908 = vmatprep.subr.bf16.mxu0 0
    %3909 = vmatpush1.bf16.msra.mxu0 %v3827
    %3910 = vmatprep.subr.bf16.mxu0 0
    %3911 = vmatpush1.bf16.msra.mxu0 %v3828
    %3912 = vmatprep.subr.bf16.mxu0 0
    %3913 = vmatpush1.bf16.msra.mxu0 %v3829
    %3914 = vmatprep.subr.bf16.mxu0 0
    %3915 = vmatpush1.bf16.msra.mxu0 %v3830
    %3916 = vmatprep.subr.bf16.mxu0 0
    %3917 = vmatpush1.bf16.msra.mxu0 %v3831
    %3918 = vmatprep.subr.bf16.mxu0 0
    %3919 = vmatpush1.bf16.msra.mxu0 %v3832
    %3920 = vmatprep.subr.bf16.mxu0 0
    %3921 = vmatpush1.bf16.msra.mxu0 %v3833
    %3922 = vmatprep.subr.bf16.mxu0 0
    %3923 = vmatpush1.bf16.msra.mxu0 %v3834
    %3924 = vmatprep.subr.bf16.mxu0 0
    %3925 = vmatpush1.bf16.msra.mxu0 %v3835
    %3926 = vmatprep.subr.bf16.mxu0 0
    %3927 = vmatpush1.bf16.msra.mxu0 %v3836
    %3928 = vmatprep.subr.bf16.mxu0 0
    %3929 = vmatpush1.bf16.msra.mxu0 %v3837
    %3930 = vmatprep.subr.bf16.mxu0 0
    %3931 = vmatpush1.bf16.msra.mxu0 %v3898
    %3932 = vmatprep.mubr.bf16.mxu0 %v3856
    %3933 = vmatmul.mubr.bf16.gmra.mrb[0].mxu0 %v3692
    %v3934 = vpop.f32.mrb[0].mxu0
    %v3935 = vadd.f32 %v3757, %v3934
    %v3936 = vpop.f32.mrb[0].mxu0
    %v3937 = vpop.f32.mrb[0].mxu0
    %v3938 = vadd.f32 %v3757, %v3937
    %v3939 = vpop.f32.mrb[0].mxu0
    %3940 = vmatprep.mubr.bf16.mxu0 %v3859
    %3941 = vmatmul.mubr.bf16.gmra.mrb[0].mxu0 %v3694
    %v3942 = vpop.f32.mrb[0].mxu0
    %v3943 = vadd.f32 %v3757, %v3942
    %v3944 = vpop.f32.mrb[0].mxu0
    %v3945 = vpop.f32.mrb[0].mxu0
    %v3946 = vadd.f32 %v3757, %v3945
    %v3947 = vpop.f32.mrb[0].mxu0
    %3948 = vmatprep.mubr.bf16.mxu0 %v3862
    %3949 = vmatmul.mubr.bf16.gmra.mrb[0].mxu0 %v3696
    %v3950 = vpop.f32.mrb[0].mxu0
    %v3951 = vadd.f32 %v3757, %v3950
    %v3952 = vpop.f32.mrb[0].mxu0
    %v3953 = vpop.f32.mrb[0].mxu0
    %v3954 = vadd.f32 %v3757, %v3953
    %v3955 = vpop.f32.mrb[0].mxu0
    %3956 = vmatprep.mubr.bf16.mxu0 %v3865
    %3957 = vmatmul.mubr.bf16.gmra.mrb[0].mxu0 %v3698
    %v3958 = vpop.f32.mrb[0].mxu0
    %v3959 = vadd.f32 %v3757, %v3958
    %v3960 = vpop.f32.mrb[0].mxu0
    %v3961 = vpop.f32.mrb[0].mxu0
    %v3962 = vadd.f32 %v3757, %v3961
    %v3963 = vpop.f32.mrb[0].mxu0
    %3964 = vmatprep.mubr.bf16.mxu0 %v3868
    %3965 = vmatmul.mubr.bf16.gmra.mrb[0].mxu0 %v3700
    %v3966 = vpop.f32.mrb[0].mxu0
    %v3967 = vadd.f32 %v3757, %v3966
    %v3968 = vpop.f32.mrb[0].mxu0
    %v3969 = vpop.f32.mrb[0].mxu0
    %v3970 = vadd.f32 %v3757, %v3969
    %v3971 = vpop.f32.mrb[0].mxu0
    %3972 = vmatprep.mubr.bf16.mxu0 %v3871
    %3973 = vmatmul.mubr.bf16.gmra.mrb[0].mxu0 %v3702
    %v3974 = vpop.f32.mrb[0].mxu0
    %v3975 = vadd.f32 %v3757, %v3974
    %v3976 = vpop.f32.mrb[0].mxu0
    %v3977 = vpop.f32.mrb[0].mxu0
    %v3978 = vadd.f32 %v3757, %v3977
    %v3979 = vpop.f32.mrb[0].mxu0
    %3980 = vmatprep.mubr.bf16.mxu0 %v3874
    %3981 = vmatmul.mubr.bf16.gmra.mrb[0].mxu0 %v3704
    %v3982 = vpop.f32.mrb[0].mxu0
    %v3983 = vadd.f32 %v3757, %v3982
    %v3984 = vpop.f32.mrb[0].mxu0
    %v3985 = vpop.f32.mrb[0].mxu0
    %v3986 = vadd.f32 %v3757, %v3985
    %v3987 = vpop.f32.mrb[0].mxu0
    %3988 = vmatprep.mubr.bf16.mxu0 %v3877
    %3989 = vmatmul.mubr.bf16.gmra.mrb[0].mxu0 %v3706
    %v3990 = vpop.f32.mrb[0].mxu0
    %v3991 = vadd.f32 %v3757, %v3990
    %v3992 = vpop.f32.mrb[0].mxu0
    %v3993 = vpop.f32.mrb[0].mxu0
    %v3994 = vadd.f32 %v3757, %v3993
    %v3995 = vpop.f32.mrb[0].mxu0
    %3996 = vmatprep.mubr.bf16.mxu0 %v3880
    %3997 = vmatmul.mubr.bf16.gmra.mrb[0].mxu0 %v3708
    %v3998 = vpop.f32.mrb[0].mxu0
    %v3999 = vadd.f32 %v3757, %v3998
    %v4000 = vpop.f32.mrb[0].mxu0
    %v4001 = vpop.f32.mrb[0].mxu0
    %v4002 = vadd.f32 %v3757, %v4001
    %v4003 = vpop.f32.mrb[0].mxu0
    %4004 = vmatprep.mubr.bf16.mxu0 %v3883
    %4005 = vmatmul.mubr.bf16.gmra.mrb[0].mxu0 %v3710
    %v4006 = vpop.f32.mrb[0].mxu0
    %v4007 = vadd.f32 %v3757, %v4006
    %v4008 = vpop.f32.mrb[0].mxu0
    %v4009 = vpop.f32.mrb[0].mxu0
    %v4010 = vadd.f32 %v3757, %v4009
    %v4011 = vpop.f32.mrb[0].mxu0
    %4012 = vmatprep.mubr.bf16.mxu0 %v3886
    %4013 = vmatmul.mubr.bf16.gmra.mrb[0].mxu0 %v3712
    %v4014 = vpop.f32.mrb[0].mxu0
    %v4015 = vadd.f32 %v3757, %v4014
    %v4016 = vpop.f32.mrb[0].mxu0
    %v4017 = vpop.f32.mrb[0].mxu0
    %v4018 = vadd.f32 %v3757, %v4017
    %v4019 = vpop.f32.mrb[0].mxu0
    %4020 = vmatprep.mubr.bf16.mxu0 %v3889
    %4021 = vmatmul.mubr.bf16.gmra.mrb[0].mxu0 %v3714
    %v4022 = vpop.f32.mrb[0].mxu0
    %v4023 = vadd.f32 %v3757, %v4022
    %v4024 = vpop.f32.mrb[0].mxu0
    %v4025 = vpop.f32.mrb[0].mxu0
    %v4026 = vadd.f32 %v3757, %v4025
    %v4027 = vpop.f32.mrb[0].mxu0
    %4028 = vmatprep.mubr.bf16.mxu0 %v3892
    %4029 = vmatmul.mubr.bf16.gmra.mrb[0].mxu0 %v3716
    %v4030 = vpop.f32.mrb[0].mxu0
    %v4031 = vadd.f32 %v3757, %v4030
    %v4032 = vpop.f32.mrb[0].mxu0
    %v4033 = vpop.f32.mrb[0].mxu0
    %v4034 = vadd.f32 %v3757, %v4033
    %v4035 = vpop.f32.mrb[0].mxu0
    %4036 = vmatprep.mubr.bf16.mxu0 %v3895
    %4037 = vmatmul.mubr.bf16.gmra.mrb[0].mxu0 %v3718
    %v4038 = vpop.f32.mrb[0].mxu0
    %v4039 = vadd.f32 %v3757, %v4038
    %v4040 = vpop.f32.mrb[0].mxu0
    %v4041 = vpop.f32.mrb[0].mxu0
    %v4042 = vadd.f32 %v3757, %v4041
    %v4043 = vpop.f32.mrb[0].mxu0
    %4044 = vdwg.mxu0
    %v4045 = vxor.u32 %v3935, 2147483648
    %v4046 = vxor.u32 %v3938, 2147483648
    %v4047 = vxor.u32 %v3943, 2147483648
    %v4048 = vxor.u32 %v3946, 2147483648
    %v4049 = vxor.u32 %v3951, 2147483648
    %v4050 = vxor.u32 %v3954, 2147483648
    %v4051 = vxor.u32 %v3959, 2147483648
    %v4052 = vxor.u32 %v3962, 2147483648
    %v4053 = vxor.u32 %v3967, 2147483648
    %v4054 = vxor.u32 %v3970, 2147483648
    %v4055 = vxor.u32 %v3975, 2147483648
    %v4056 = vxor.u32 %v3978, 2147483648
    %v4057 = vxor.u32 %v3983, 2147483648
    %v4058 = vxor.u32 %v3986, 2147483648
    %v4059 = vxor.u32 %v3991, 2147483648
    %v4060 = vxor.u32 %v3994, 2147483648
    %v4061 = vxor.u32 %v3999, 2147483648
    %v4062 = vxor.u32 %v4002, 2147483648
    %v4063 = vxor.u32 %v4007, 2147483648
    %v4064 = vxor.u32 %v4010, 2147483648
    %v4065 = vxor.u32 %v4015, 2147483648
    %v4066 = vxor.u32 %v4018, 2147483648
    %v4067 = vxor.u32 %v4023, 2147483648
    %v4068 = vxor.u32 %v4026, 2147483648
    %v4069 = vxor.u32 %v4031, 2147483648
    %v4070 = vxor.u32 %v4034, 2147483648
    %v4071 = vxor.u32 %v4039, 2147483648
    %v4072 = vxor.u32 %v4042, 2147483648
    %v4073 = vmul.f32 %v4045, 1.442695
    %v4074 = vpow.pop %v4073
    %v4075 = vmul.f32 %v4046, 1.442695
    %v4076 = vpow.pop %v4075
    %v4077 = vmul.f32 %v4047, 1.442695
    %v4078 = vpow.pop %v4077
    %v4079 = vmul.f32 %v4048, 1.442695
    %v4080 = vpow.pop %v4079
    %v4081 = vmul.f32 %v4049, 1.442695
    %v4082 = vpow.pop %v4081
    %v4083 = vmul.f32 %v4050, 1.442695
    %v4084 = vpow.pop %v4083
    %v4085 = vmul.f32 %v4051, 1.442695
    %v4086 = vpow.pop %v4085
    %v4087 = vmul.f32 %v4052, 1.442695
    %v4088 = vpow.pop %v4087
    %v4089 = vmul.f32 %v4053, 1.442695
    %v4090 = vpow.pop %v4089
    %v4091 = vmul.f32 %v4054, 1.442695
    %v4092 = vpow.pop %v4091
    %v4093 = vmul.f32 %v4055, 1.442695
    %v4094 = vpow.pop %v4093
    %v4095 = vmul.f32 %v4056, 1.442695
    %v4096 = vpow.pop %v4095
    %v4097 = vmul.f32 %v4057, 1.442695
    %v4098 = vpow.pop %v4097
    %v4099 = vmul.f32 %v4058, 1.442695
    %v4100 = vpow.pop %v4099
    %v4101 = vmul.f32 %v4059, 1.442695
    %v4102 = vpow.pop %v4101
    %v4103 = vmul.f32 %v4060, 1.442695
    %v4104 = vpow.pop %v4103
    %v4105 = vmul.f32 %v4061, 1.442695
    %v4106 = vpow.pop %v4105
    %v4107 = vmul.f32 %v4062, 1.442695
    %v4108 = vpow.pop %v4107
    %v4109 = vmul.f32 %v4063, 1.442695
    %v4110 = vpow.pop %v4109
    %v4111 = vmul.f32 %v4064, 1.442695
    %v4112 = vpow.pop %v4111
    %v4113 = vmul.f32 %v4065, 1.442695
    %v4114 = vpow.pop %v4113
    %v4115 = vmul.f32 %v4066, 1.442695
    %v4116 = vpow.pop %v4115
    %v4117 = vmul.f32 %v4067, 1.442695
    %v4118 = vpow.pop %v4117
    %v4119 = vmul.f32 %v4068, 1.442695
    %v4120 = vpow.pop %v4119
    %v4121 = vmul.f32 %v4069, 1.442695
    %v4122 = vpow.pop %v4121
    %v4123 = vmul.f32 %v4070, 1.442695
    %v4124 = vpow.pop %v4123
    %v4125 = vmul.f32 %v4071, 1.442695
    %v4126 = vpow.pop %v4125
    %v4127 = vmul.f32 %v4072, 1.442695
    %v4128 = vpow.pop %v4127
    %v4129 = vadd.f32 %v4074, 1.0
    %v4130 = vadd.f32 %v4076, 1.0
    %v4131 = vadd.f32 %v4078, 1.0
    %v4132 = vadd.f32 %v4080, 1.0
    %v4133 = vadd.f32 %v4082, 1.0
    %v4134 = vadd.f32 %v4084, 1.0
    %v4135 = vadd.f32 %v4086, 1.0
    %v4136 = vadd.f32 %v4088, 1.0
    %v4137 = vadd.f32 %v4090, 1.0
    %v4138 = vadd.f32 %v4092, 1.0
    %v4139 = vadd.f32 %v4094, 1.0
    %v4140 = vadd.f32 %v4096, 1.0
    %v4141 = vadd.f32 %v4098, 1.0
    %v4142 = vadd.f32 %v4100, 1.0
    %v4143 = vadd.f32 %v4102, 1.0
    %v4144 = vadd.f32 %v4104, 1.0
    %v4145 = vadd.f32 %v4106, 1.0
    %v4146 = vadd.f32 %v4108, 1.0
    %v4147 = vadd.f32 %v4110, 1.0
    %v4148 = vadd.f32 %v4112, 1.0
    %v4149 = vadd.f32 %v4114, 1.0
    %v4150 = vadd.f32 %v4116, 1.0
    %v4151 = vadd.f32 %v4118, 1.0
    %v4152 = vadd.f32 %v4120, 1.0
    %v4153 = vadd.f32 %v4122, 1.0
    %v4154 = vadd.f32 %v4124, 1.0
    %v4155 = vadd.f32 %v4126, 1.0
    %v4156 = vadd.f32 %v4128, 1.0
    %v4157 = vrcp.pop %v4129
    %v4158 = vmul.f32 1.0, %v4157
    %v4159 = vrcp.pop %v4130
    %v4160 = vmul.f32 1.0, %v4159
    %v4161 = vrcp.pop %v4131
    %v4162 = vmul.f32 1.0, %v4161
    %v4163 = vrcp.pop %v4132
    %v4164 = vmul.f32 1.0, %v4163
    %v4165 = vrcp.pop %v4133
    %v4166 = vmul.f32 1.0, %v4165
    %v4167 = vrcp.pop %v4134
    %v4168 = vmul.f32 1.0, %v4167
    %v4169 = vrcp.pop %v4135
    %v4170 = vmul.f32 1.0, %v4169
    %v4171 = vrcp.pop %v4136
    %v4172 = vmul.f32 1.0, %v4171
    %v4173 = vrcp.pop %v4137
    %v4174 = vmul.f32 1.0, %v4173
    %v4175 = vrcp.pop %v4138
    %v4176 = vmul.f32 1.0, %v4175
    %v4177 = vrcp.pop %v4139
    %v4178 = vmul.f32 1.0, %v4177
    %v4179 = vrcp.pop %v4140
    %v4180 = vmul.f32 1.0, %v4179
    %v4181 = vrcp.pop %v4141
    %v4182 = vmul.f32 1.0, %v4181
    %v4183 = vrcp.pop %v4142
    %v4184 = vmul.f32 1.0, %v4183
    %v4185 = vrcp.pop %v4143
    %v4186 = vmul.f32 1.0, %v4185
    %v4187 = vrcp.pop %v4144
    %v4188 = vmul.f32 1.0, %v4187
    %v4189 = vrcp.pop %v4145
    %v4190 = vmul.f32 1.0, %v4189
    %v4191 = vrcp.pop %v4146
    %v4192 = vmul.f32 1.0, %v4191
    %v4193 = vrcp.pop %v4147
    %v4194 = vmul.f32 1.0, %v4193
    %v4195 = vrcp.pop %v4148
    %v4196 = vmul.f32 1.0, %v4195
    %v4197 = vrcp.pop %v4149
    %v4198 = vmul.f32 1.0, %v4197
    %v4199 = vrcp.pop %v4150
    %v4200 = vmul.f32 1.0, %v4199
    %v4201 = vrcp.pop %v4151
    %v4202 = vmul.f32 1.0, %v4201
    %v4203 = vrcp.pop %v4152
    %v4204 = vmul.f32 1.0, %v4203
    %v4205 = vrcp.pop %v4153
    %v4206 = vmul.f32 1.0, %v4205
    %v4207 = vrcp.pop %v4154
    %v4208 = vmul.f32 1.0, %v4207
    %v4209 = vrcp.pop %v4155
    %v4210 = vmul.f32 1.0, %v4209
    %v4211 = vrcp.pop %v4156
    %v4212 = vmul.f32 1.0, %v4211
    %v4213 = vmul.f32 %v3935, %v4158
    %v4214 = vmul.f32 %v3938, %v4160
    %v4215 = vmul.f32 %v3943, %v4162
    %v4216 = vmul.f32 %v3946, %v4164
    %v4217 = vmul.f32 %v3951, %v4166
    %v4218 = vmul.f32 %v3954, %v4168
    %v4219 = vmul.f32 %v3959, %v4170
    %v4220 = vmul.f32 %v3962, %v4172
    %v4221 = vmul.f32 %v3967, %v4174
    %v4222 = vmul.f32 %v3970, %v4176
    %v4223 = vmul.f32 %v3975, %v4178
    %v4224 = vmul.f32 %v3978, %v4180
    %v4225 = vmul.f32 %v3983, %v4182
    %v4226 = vmul.f32 %v3986, %v4184
    %v4227 = vmul.f32 %v3991, %v4186
    %v4228 = vmul.f32 %v3994, %v4188
    %v4229 = vmul.f32 %v3999, %v4190
    %v4230 = vmul.f32 %v4002, %v4192
    %v4231 = vmul.f32 %v4007, %v4194
    %v4232 = vmul.f32 %v4010, %v4196
    %v4233 = vmul.f32 %v4015, %v4198
    %v4234 = vmul.f32 %v4018, %v4200
    %v4235 = vmul.f32 %v4023, %v4202
    %v4236 = vmul.f32 %v4026, %v4204
    %v4237 = vmul.f32 %v4031, %v4206
    %v4238 = vmul.f32 %v4034, %v4208
    %v4239 = vmul.f32 %v4039, %v4210
    %v4240 = vmul.f32 %v4042, %v4212
    %4241 = vst [vmem:[#allocation3] sm:$0xff] 0.0
    %4242 = vst [vmem:[#allocation3 + $0x8] sm:$0xff] 0.0
    %4243 = vst [vmem:[#allocation3 + $0x10] sm:$0xff] 0.0
    %4244 = vst [vmem:[#allocation3 + $0x18] sm:$0xff] 0.0
    %4245 = vst [vmem:[#allocation3 + $0x20] sm:$0xff] 0.0
    %4246 = vst [vmem:[#allocation3 + $0x28] sm:$0xff] 0.0
    %4247 = vst [vmem:[#allocation3 + $0x30] sm:$0xff] 0.0
    %4248 = vst [vmem:[#allocation3 + $0x38] sm:$0xff] 0.0
    %4249 = vst [vmem:[#allocation3 + $0x40] sm:$0xff] 0.0
    %4250 = vst [vmem:[#allocation3 + $0x48] sm:$0xff] 0.0
    %4251 = vst [vmem:[#allocation3 + $0x50] sm:$0xff] 0.0
    %4252 = vst [vmem:[#allocation3 + $0x58] sm:$0xff] 0.0
    %4253 = vst [vmem:[#allocation3 + $0x60] sm:$0xff] 0.0
    %4254 = vst [vmem:[#allocation3 + $0x68] sm:$0xff] 0.0
    %4255 = vst [vmem:[#allocation3 + $0x70] sm:$0xff] 0.0
    %4256 = vst [vmem:[#allocation3 + $0x78] sm:$0xff] 0.0
    %4257 = vst [vmem:[#allocation3 + $0x80] sm:$0xff] 0.0
    %4258 = vst [vmem:[#allocation3 + $0x88] sm:$0xff] 0.0
    %4259 = vst [vmem:[#allocation3 + $0x90] sm:$0xff] 0.0
    %4260 = vst [vmem:[#allocation3 + $0x98] sm:$0xff] 0.0
    %4261 = vst [vmem:[#allocation3 + $0xa0] sm:$0xff] 0.0
    %4262 = vst [vmem:[#allocation3 + $0xa8] sm:$0xff] 0.0
    %4263 = vst [vmem:[#allocation3 + $0xb0] sm:$0xff] 0.0
    %4264 = vst [vmem:[#allocation3 + $0xb8] sm:$0xff] 0.0
    %vm4265 = vcmask 883712
    %4266 = vst.msk [vmem:[#allocation3] sm:$0xff] %vm4265, %v4213
    %4268 = vrot.lane.b32.xlu0 %v4214, 108
    %v4269 = vpop.permute.xlu0 %4268
    %vm4271 = vcmask 1048416
    %4272 = vst.msk [vmem:[#allocation3] sm:$0xff] %vm4271, %v4269
    %vm4273 = vcmask 719872
    %4274 = vst.msk [vmem:[#allocation3 + $0x8] sm:$0xff] %vm4273, %v4269
    %4276 = vrot.lane.b32.xlu0 %v4215, 88
    %v4277 = vpop.permute.xlu0 %4276
    %vm4279 = vcmask 1048256
    %4280 = vst.msk [vmem:[#allocation3 + $0x8] sm:$0xff] %vm4279, %v4277
    %vm4281 = vcmask 556032
    %4282 = vst.msk [vmem:[#allocation3 + $0x10] sm:$0xff] %vm4281, %v4277
    %4284 = vrot.lane.b32.xlu0 %v4216, 68
    %v4285 = vpop.permute.xlu0 %4284
    %vm4287 = vcmask 1048096
    %4288 = vst.msk [vmem:[#allocation3 + $0x10] sm:$0xff] %vm4287, %v4285
    %4289 = vst.msk [vmem:[#allocation3 + $0x18] sm:$0xff] %vm2577, %v4285
    %4291 = vrot.lane.b32.xlu0 %v4217, 48
    %v4292 = vpop.permute.xlu0 %4291
    %vm4294 = vcmask 1047936
    %4295 = vst.msk [vmem:[#allocation3 + $0x18] sm:$0xff] %vm4294, %v4292
    %4296 = vst.msk [vmem:[#allocation3 + $0x20] sm:$0xff] %vm1155, %v4292
    %4298 = vrot.lane.b32.xlu0 %v4218, 28
    %v4299 = vpop.permute.xlu0 %4298
    %vm4301 = vcmask 1047776
    %4302 = vst.msk [vmem:[#allocation3 + $0x20] sm:$0xff] %vm4301, %v4299
    %4303 = vst.msk [vmem:[#allocation3 + $0x28] sm:$0xff] %vm974, %v4299
    %4305 = vrot.lane.b32.xlu0 %v4219, 8
    %v4306 = vpop.permute.xlu0 %4305
    %vm4308 = vcmask 949312
    %4309 = vst.msk [vmem:[#allocation3 + $0x28] sm:$0xff] %vm4308, %v4306
    %4311 = vrot.lane.b32.xlu0 %v4220, 116
    %v4312 = vpop.permute.xlu0 %4311
    %vm4314 = vcmask 1048480
    %4315 = vst.msk [vmem:[#allocation3 + $0x28] sm:$0xff] %vm4314, %v4312
    %4316 = vst.msk [vmem:[#allocation3 + $0x30] sm:$0xff] %vm2861, %v4312
    %4318 = vrot.lane.b32.xlu0 %v4221, 96
    %v4319 = vpop.permute.xlu0 %4318
    %vm4321 = vcmask 1048320
    %4322 = vst.msk [vmem:[#allocation3 + $0x30] sm:$0xff] %vm4321, %v4319
    %vm4323 = vcmask 621568
    %4324 = vst.msk [vmem:[#allocation3 + $0x38] sm:$0xff] %vm4323, %v4319
    %4326 = vrot.lane.b32.xlu0 %v4222, 76
    %v4327 = vpop.permute.xlu0 %4326
    %vm4329 = vcmask 1048160
    %4330 = vst.msk [vmem:[#allocation3 + $0x38] sm:$0xff] %vm4329, %v4327
    %4331 = vst.msk [vmem:[#allocation3 + $0x40] sm:$0xff] %vm1998, %v4327
    %4333 = vrot.lane.b32.xlu0 %v4223, 56
    %v4334 = vpop.permute.xlu0 %4333
    %vm4336 = vcmask 1048000
    %4337 = vst.msk [vmem:[#allocation3 + $0x40] sm:$0xff] %vm4336, %v4334
    %vm4338 = vcmask 293888
    %4339 = vst.msk [vmem:[#allocation3 + $0x48] sm:$0xff] %vm4338, %v4334
    %4341 = vrot.lane.b32.xlu0 %v4224, 36
    %v4342 = vpop.permute.xlu0 %4341
    %vm4344 = vcmask 1047840
    %4345 = vst.msk [vmem:[#allocation3 + $0x48] sm:$0xff] %vm4344, %v4342
    %4346 = vst.msk [vmem:[#allocation3 + $0x50] sm:$0xff] %vm1032, %v4342
    %4348 = vrot.lane.b32.xlu0 %v4225, 16
    %v4349 = vpop.permute.xlu0 %4348
    %vm4351 = vcmask 1014912
    %4352 = vst.msk [vmem:[#allocation3 + $0x50] sm:$0xff] %vm4351, %v4349
    %4354 = vrot.lane.b32.xlu0 %v4226, 124
    %v4355 = vpop.permute.xlu0 %4354
    %vm4357 = vcmask 1048544
    %4358 = vst.msk [vmem:[#allocation3 + $0x50] sm:$0xff] %vm4357, %v4355
    %vm4359 = vcmask 850944
    %4360 = vst.msk [vmem:[#allocation3 + $0x58] sm:$0xff] %vm4359, %v4355
    %4362 = vrot.lane.b32.xlu0 %v4227, 104
    %v4363 = vpop.permute.xlu0 %4362
    %vm4365 = vcmask 1048384
    %4366 = vst.msk [vmem:[#allocation3 + $0x58] sm:$0xff] %vm4365, %v4363
    %4367 = vst.msk [vmem:[#allocation3 + $0x60] sm:$0xff] %vm2027, %v4363
    %4369 = vrot.lane.b32.xlu0 %v4228, 84
    %v4370 = vpop.permute.xlu0 %4369
    %vm4372 = vcmask 1048224
    %4373 = vst.msk [vmem:[#allocation3 + $0x60] sm:$0xff] %vm4372, %v4370
    %vm4374 = vcmask 523264
    %4375 = vst.msk [vmem:[#allocation3 + $0x68] sm:$0xff] %vm4374, %v4370
    %4377 = vrot.lane.b32.xlu0 %v4229, 64
    %v4378 = vpop.permute.xlu0 %4377
    %vm4380 = vcmask 1048064
    %4381 = vst.msk [vmem:[#allocation3 + $0x68] sm:$0xff] %vm4380, %v4378
    %vm4382 = vcmask 359424
    %4383 = vst.msk [vmem:[#allocation3 + $0x70] sm:$0xff] %vm4382, %v4378
    %4385 = vrot.lane.b32.xlu0 %v4230, 44
    %v4386 = vpop.permute.xlu0 %4385
    %vm4388 = vcmask 1047904
    %4389 = vst.msk [vmem:[#allocation3 + $0x70] sm:$0xff] %vm4388, %v4386
    %4390 = vst.msk [vmem:[#allocation3 + $0x78] sm:$0xff] %vm1090, %v4386
    %4392 = vrot.lane.b32.xlu0 %v4231, 24
    %v4393 = vpop.permute.xlu0 %4392
    %vm4395 = vcmask 1047744
    %4396 = vst.msk [vmem:[#allocation3 + $0x78] sm:$0xff] %vm4395, %v4393
    %4397 = vst.msk [vmem:[#allocation3 + $0x80] sm:$0xff] %vm292, %v4393
    %4399 = vrot.lane.b32.xlu0 %v4232, 4
    %v4400 = vpop.permute.xlu0 %4399
    %vm4402 = vcmask 916512
    %4403 = vst.msk [vmem:[#allocation3 + $0x80] sm:$0xff] %vm4402, %v4400
    %4405 = vrot.lane.b32.xlu0 %v4233, 112
    %v4406 = vpop.permute.xlu0 %4405
    %vm4408 = vcmask 1048448
    %4409 = vst.msk [vmem:[#allocation3 + $0x80] sm:$0xff] %vm4408, %v4406
    %vm4410 = vcmask 752640
    %4411 = vst.msk [vmem:[#allocation3 + $0x88] sm:$0xff] %vm4410, %v4406
    %4413 = vrot.lane.b32.xlu0 %v4234, 92
    %v4414 = vpop.permute.xlu0 %4413
    %vm4416 = vcmask 1048288
    %4417 = vst.msk [vmem:[#allocation3 + $0x88] sm:$0xff] %vm4416, %v4414
    %vm4418 = vcmask 588800
    %4419 = vst.msk [vmem:[#allocation3 + $0x90] sm:$0xff] %vm4418, %v4414
    %4421 = vrot.lane.b32.xlu0 %v4235, 72
    %v4422 = vpop.permute.xlu0 %4421
    %vm4424 = vcmask 1048128
    %4425 = vst.msk [vmem:[#allocation3 + $0x90] sm:$0xff] %vm4424, %v4422
    %vm4426 = vcmask 424960
    %4427 = vst.msk [vmem:[#allocation3 + $0x98] sm:$0xff] %vm4426, %v4422
    %4429 = vrot.lane.b32.xlu0 %v4236, 52
    %v4430 = vpop.permute.xlu0 %4429
    %vm4432 = vcmask 1047968
    %4433 = vst.msk [vmem:[#allocation3 + $0x98] sm:$0xff] %vm4432, %v4430
    %vm4434 = vcmask 261120
    %4435 = vst.msk [vmem:[#allocation3 + $0xa0] sm:$0xff] %vm4434, %v4430
    %4437 = vrot.lane.b32.xlu0 %v4237, 32
    %v4438 = vpop.permute.xlu0 %4437
    %vm4440 = vcmask 1047808
    %4441 = vst.msk [vmem:[#allocation3 + $0xa0] sm:$0xff] %vm4440, %v4438
    %4442 = vst.msk [vmem:[#allocation3 + $0xa8] sm:$0xff] %vm1003, %v4438
    %4444 = vrot.lane.b32.xlu0 %v4238, 12
    %v4445 = vpop.permute.xlu0 %4444
    %vm4447 = vcmask 982112
    %4448 = vst.msk [vmem:[#allocation3 + $0xa8] sm:$0xff] %vm4447, %v4445
    %4450 = vrot.lane.b32.xlu0 %v4239, 120
    %v4451 = vpop.permute.xlu0 %4450
    %vm4453 = vcmask 1048512
    %4454 = vst.msk [vmem:[#allocation3 + $0xa8] sm:$0xff] %vm4453, %v4451
    %vm4455 = vcmask 818176
    %4456 = vst.msk [vmem:[#allocation3 + $0xb0] sm:$0xff] %vm4455, %v4451
    %4458 = vrot.lane.b32.xlu0 %v4240, 100
    %v4459 = vpop.permute.xlu0 %4458
    %vm4461 = vcmask 1048352
    %4462 = vst.msk [vmem:[#allocation3 + $0xb0] sm:$0xff] %vm4461, %v4459
    %vm4463 = vcmask 654336
    %4464 = vst.msk [vmem:[#allocation3 + $0xb8] sm:$0xff] %vm4463, %v4459
    %s4465 = smul.u32 4, 64
    %s4466 = smul.u32 %s4465, 4
    %s4467 = sshll.u32 %s4466, 4
    %4468 = dma.done [#allocation5], %s4467
    %v4469 = vld [vmem:[#allocation3] sm:$0xff]
    %v4470 = vld [vmem:[#allocation3 + $0x8] sm:$0xff]
    %v4471 = vld [vmem:[#allocation3 + $0x10] sm:$0xff]
    %v4472 = vld [vmem:[#allocation3 + $0x18] sm:$0xff]
    %v4473 = vpack.c.bf16 %v4469, %v4469
    %v4474 = vpack.c.bf16 %v4470, %v4470
    %v4475 = vpack.c.bf16 %v4471, %v4471
    %v4476 = vpack.c.bf16 %v4472, %v4472
    %v4477 = vld [vmem:[#allocation4] sm:$0xff]
    %v4478 = vld [vmem:[#allocation4 + $0x8] sm:$0xff]
    %v4479 = vld [vmem:[#allocation4 + $0x10] sm:$0xff]
    %v4480 = vld [vmem:[#allocation4 + $0x18] sm:$0xff]
    %v4481 = vld [vmem:[#allocation4 + $0x20] sm:$0xff]
    %v4482 = vld [vmem:[#allocation4 + $0x28] sm:$0xff]
    %v4483 = vld [vmem:[#allocation4 + $0x30] sm:$0xff]
    %v4484 = vld [vmem:[#allocation4 + $0x38] sm:$0xff]
    %v4485 = vld [vmem:[#allocation4 + $0x40] sm:$0xff]
    %v4486 = vld [vmem:[#allocation4 + $0x48] sm:$0xff]
    %v4487 = vld [vmem:[#allocation4 + $0x50] sm:$0xff]
    %v4488 = vld [vmem:[#allocation4 + $0x58] sm:$0xff]
    %v4489 = vld [vmem:[#allocation4 + $0x60] sm:$0xff]
    %v4490 = vld [vmem:[#allocation4 + $0x68] sm:$0xff]
    %v4491 = vld [vmem:[#allocation4 + $0x70] sm:$0xff]
    %v4492 = vld [vmem:[#allocation4 + $0x78] sm:$0xff]
    %v4493 = vld [vmem:[#allocation4 + $0x80] sm:$0xff]
    %v4494 = vld [vmem:[#allocation4 + $0x88] sm:$0xff]
    %v4495 = vld [vmem:[#allocation4 + $0x90] sm:$0xff]
    %v4496 = vld [vmem:[#allocation4 + $0x98] sm:$0xff]
    %v4497 = vld [vmem:[#allocation4 + $0xa0] sm:$0xff]
    %v4498 = vld [vmem:[#allocation4 + $0xa8] sm:$0xff]
    %v4499 = vld [vmem:[#allocation4 + $0xb0] sm:$0xff]
    %v4500 = vld [vmem:[#allocation4 + $0xb8] sm:$0xff]
    %v4501 = vld [vmem:[#allocation4 + $0xc0] sm:$0xff]
    %v4502 = vld [vmem:[#allocation4 + $0xc8] sm:$0xff]
    %v4503 = vld [vmem:[#allocation4 + $0xd0] sm:$0xff]
    %v4504 = vld [vmem:[#allocation4 + $0xd8] sm:$0xff]
    %v4505 = vld [vmem:[#allocation4 + $0xe0] sm:$0xff]
    %v4506 = vld [vmem:[#allocation4 + $0xe8] sm:$0xff]
    %v4507 = vld [vmem:[#allocation4 + $0xf0] sm:$0xff]
    %v4508 = vld [vmem:[#allocation4 + $0xf8] sm:$0xff]
    %v4509 = vld [vmem:[#allocation4 + $0x100] sm:$0xff]
    %v4510 = vld [vmem:[#allocation4 + $0x108] sm:$0xff]
    %v4511 = vld [vmem:[#allocation4 + $0x110] sm:$0xff]
    %v4512 = vld [vmem:[#allocation4 + $0x118] sm:$0xff]
    %v4513 = vld [vmem:[#allocation4 + $0x120] sm:$0xff]
    %v4514 = vld [vmem:[#allocation4 + $0x128] sm:$0xff]
    %v4515 = vld [vmem:[#allocation4 + $0x130] sm:$0xff]
    %v4516 = vld [vmem:[#allocation4 + $0x138] sm:$0xff]
    %v4517 = vld [vmem:[#allocation4 + $0x140] sm:$0xff]
    %v4518 = vld [vmem:[#allocation4 + $0x148] sm:$0xff]
    %v4519 = vld [vmem:[#allocation4 + $0x150] sm:$0xff]
    %v4520 = vld [vmem:[#allocation4 + $0x158] sm:$0xff]
    %v4521 = vld [vmem:[#allocation4 + $0x160] sm:$0xff]
    %v4522 = vld [vmem:[#allocation4 + $0x168] sm:$0xff]
    %v4523 = vld [vmem:[#allocation4 + $0x170] sm:$0xff]
    %v4524 = vld [vmem:[#allocation4 + $0x178] sm:$0xff]
    %v4525 = vld [vmem:[#allocation4 + $0x180] sm:$0xff]
    %v4526 = vld [vmem:[#allocation4 + $0x188] sm:$0xff]
    %v4527 = vld [vmem:[#allocation4 + $0x190] sm:$0xff]
    %v4528 = vld [vmem:[#allocation4 + $0x198] sm:$0xff]
    %v4529 = vld [vmem:[#allocation4 + $0x1a0] sm:$0xff]
    %v4530 = vld [vmem:[#allocation4 + $0x1a8] sm:$0xff]
    %v4531 = vld [vmem:[#allocation4 + $0x1b0] sm:$0xff]
    %v4532 = vld [vmem:[#allocation4 + $0x1b8] sm:$0xff]
    %v4533 = vld [vmem:[#allocation4 + $0x1c0] sm:$0xff]
    %v4534 = vld [vmem:[#allocation4 + $0x1c8] sm:$0xff]
    %v4535 = vld [vmem:[#allocation4 + $0x1d0] sm:$0xff]
    %v4536 = vld [vmem:[#allocation4 + $0x1d8] sm:$0xff]
    %v4537 = vld [vmem:[#allocation4 + $0x1e0] sm:$0xff]
    %v4538 = vld [vmem:[#allocation4 + $0x1e8] sm:$0xff]
    %v4539 = vld [vmem:[#allocation4 + $0x1f0] sm:$0xff]
    %v4540 = vld [vmem:[#allocation4 + $0x1f8] sm:$0xff]
    %v4541 = vld [vmem:[#allocation4 + $0x200] sm:$0xff]
    %v4542 = vld [vmem:[#allocation4 + $0x208] sm:$0xff]
    %v4543 = vld [vmem:[#allocation4 + $0x210] sm:$0xff]
    %v4544 = vld [vmem:[#allocation4 + $0x218] sm:$0xff]
    %v4545 = vld [vmem:[#allocation4 + $0x220] sm:$0xff]
    %v4546 = vld [vmem:[#allocation4 + $0x228] sm:$0xff]
    %v4547 = vld [vmem:[#allocation4 + $0x230] sm:$0xff]
    %v4548 = vld [vmem:[#allocation4 + $0x238] sm:$0xff]
    %v4549 = vld [vmem:[#allocation4 + $0x240] sm:$0xff]
    %v4550 = vld [vmem:[#allocation4 + $0x248] sm:$0xff]
    %v4551 = vld [vmem:[#allocation4 + $0x250] sm:$0xff]
    %v4552 = vld [vmem:[#allocation4 + $0x258] sm:$0xff]
    %v4553 = vld [vmem:[#allocation4 + $0x260] sm:$0xff]
    %v4554 = vld [vmem:[#allocation4 + $0x268] sm:$0xff]
    %v4555 = vld [vmem:[#allocation4 + $0x270] sm:$0xff]
    %v4556 = vld [vmem:[#allocation4 + $0x278] sm:$0xff]
    %v4557 = vld [vmem:[#allocation4 + $0x280] sm:$0xff]
    %v4558 = vld [vmem:[#allocation4 + $0x288] sm:$0xff]
    %v4559 = vld [vmem:[#allocation4 + $0x290] sm:$0xff]
    %v4560 = vld [vmem:[#allocation4 + $0x298] sm:$0xff]
    %v4561 = vld [vmem:[#allocation4 + $0x2a0] sm:$0xff]
    %v4562 = vld [vmem:[#allocation4 + $0x2a8] sm:$0xff]
    %v4563 = vld [vmem:[#allocation4 + $0x2b0] sm:$0xff]
    %v4564 = vld [vmem:[#allocation4 + $0x2b8] sm:$0xff]
    %v4565 = vld [vmem:[#allocation4 + $0x2c0] sm:$0xff]
    %v4566 = vld [vmem:[#allocation4 + $0x2c8] sm:$0xff]
    %v4567 = vld [vmem:[#allocation4 + $0x2d0] sm:$0xff]
    %v4568 = vld [vmem:[#allocation4 + $0x2d8] sm:$0xff]
    %v4569 = vld [vmem:[#allocation4 + $0x2e0] sm:$0xff]
    %v4570 = vld [vmem:[#allocation4 + $0x2e8] sm:$0xff]
    %v4571 = vld [vmem:[#allocation4 + $0x2f0] sm:$0xff]
    %v4572 = vld [vmem:[#allocation4 + $0x2f8] sm:$0xff]
    %v4573 = vld [vmem:[#allocation4 + $0x300] sm:$0xff]
    %v4574 = vld [vmem:[#allocation4 + $0x308] sm:$0xff]
    %v4575 = vld [vmem:[#allocation4 + $0x310] sm:$0xff]
    %v4576 = vld [vmem:[#allocation4 + $0x318] sm:$0xff]
    %v4577 = vld [vmem:[#allocation4 + $0x320] sm:$0xff]
    %v4578 = vld [vmem:[#allocation4 + $0x328] sm:$0xff]
    %v4579 = vld [vmem:[#allocation4 + $0x330] sm:$0xff]
    %v4580 = vld [vmem:[#allocation4 + $0x338] sm:$0xff]
    %v4581 = vld [vmem:[#allocation4 + $0x340] sm:$0xff]
    %v4582 = vld [vmem:[#allocation4 + $0x348] sm:$0xff]
    %v4583 = vld [vmem:[#allocation4 + $0x350] sm:$0xff]
    %v4584 = vld [vmem:[#allocation4 + $0x358] sm:$0xff]
    %v4585 = vld [vmem:[#allocation4 + $0x360] sm:$0xff]
    %v4586 = vld [vmem:[#allocation4 + $0x368] sm:$0xff]
    %v4587 = vld [vmem:[#allocation4 + $0x370] sm:$0xff]
    %v4588 = vld [vmem:[#allocation4 + $0x378] sm:$0xff]
    %v4589 = vld [vmem:[#allocation4 + $0x380] sm:$0xff]
    %v4590 = vld [vmem:[#allocation4 + $0x388] sm:$0xff]
    %v4591 = vld [vmem:[#allocation4 + $0x390] sm:$0xff]
    %v4592 = vld [vmem:[#allocation4 + $0x398] sm:$0xff]
    %v4593 = vld [vmem:[#allocation4 + $0x3a0] sm:$0xff]
    %v4594 = vld [vmem:[#allocation4 + $0x3a8] sm:$0xff]
    %v4595 = vld [vmem:[#allocation4 + $0x3b0] sm:$0xff]
    %v4596 = vld [vmem:[#allocation4 + $0x3b8] sm:$0xff]
    %v4597 = vld [vmem:[#allocation4 + $0x3c0] sm:$0xff]
    %v4598 = vld [vmem:[#allocation4 + $0x3c8] sm:$0xff]
    %v4599 = vld [vmem:[#allocation4 + $0x3d0] sm:$0xff]
    %v4600 = vld [vmem:[#allocation4 + $0x3d8] sm:$0xff]
    %v4601 = vld [vmem:[#allocation4 + $0x3e0] sm:$0xff]
    %v4602 = vld [vmem:[#allocation4 + $0x3e8] sm:$0xff]
    %v4603 = vld [vmem:[#allocation4 + $0x3f0] sm:$0xff]
    %v4604 = vld [vmem:[#allocation4 + $0x3f8] sm:$0xff]
    %s4605 = scalar_lea.hbm %s9, 32768
    %s4607 = sshll.u32 1, 14
    %s4608 = sxor.u32 4294967295, %s4607
    %s4610 = sadd.s32 2, %s162
    %s4612 = sshll.u32 7, 26
    %s4613 = sxor.u32 4294967295, %s4612
    %s4614 = sand.u32 0, %s4613
    %s4615 = sshll.u32 %s4610, 26
    %s4616 = sor.u32 %s4614, %s4615
    %s4617 = sshll.u32 [#allocation4], 4
    %s4618 = int_to_ptr.vmem [resolvable:$true] %s4617
    %4621 = sst [smem:[#allocation27]] 512
    %s4622 = scalar_lea.smem [#allocation27], 1
    %4623 = sst [smem:[%s4622]] 512
    %s4624 = scalar_lea.smem [#allocation27], 2
    %4625 = sst [smem:[%s4624]] 4
    %s4626 = scalar_lea.smem [#allocation27], 3
    %4627 = sst [smem:[%s4626]] 64
    %s4628 = scalar_lea.smem [#allocation27], 4
    %4629 = sst [smem:[%s4628]] 128
    %s4630 = scalar_lea.smem [#allocation27], 5
    %4631 = sst [smem:[%s4630]] 2
    %s4632 = scalar_lea.smem [#allocation27], 6
    %4633 = sst [smem:[%s4632]] 256
    %s4634 = scalar_lea.smem [#allocation27], 7
    %4635 = sst [smem:[%s4634]] 64
    %s4636 = scalar_lea.smem [#allocation27], 8
    %4637 = sst [smem:[%s4636]] 4
    %4639 = dma.general %s4605, 16384, %s4618, [#allocation5], [#allocation26], [#allocation27], %s4616, 0
    %s4640 = sshll.u32 %s4466, 4
    %4641 = dma.done %s195, %s4640
    %v4642 = vld [vmem:[#allocation3 + $0x20] sm:$0xff]
    %v4643 = vld [vmem:[#allocation3 + $0x28] sm:$0xff]
    %v4644 = vld [vmem:[#allocation3 + $0x30] sm:$0xff]
    %v4645 = vld [vmem:[#allocation3 + $0x38] sm:$0xff]
    %v4646 = vpack.c.bf16 %v4642, %v4642
    %v4647 = vpack.c.bf16 %v4643, %v4643
    %v4648 = vpack.c.bf16 %v4644, %v4644
    %v4649 = vpack.c.bf16 %v4645, %v4645
    %v4650 = vld [vmem:[%s194] sm:$0xff]
    %v4651 = vld [vmem:[%s194 + $0x8] sm:$0xff]
    %v4652 = vld [vmem:[%s194 + $0x10] sm:$0xff]
    %v4653 = vld [vmem:[%s194 + $0x18] sm:$0xff]
    %v4654 = vld [vmem:[%s194 + $0x20] sm:$0xff]
    %v4655 = vld [vmem:[%s194 + $0x28] sm:$0xff]
    %v4656 = vld [vmem:[%s194 + $0x30] sm:$0xff]
    %v4657 = vld [vmem:[%s194 + $0x38] sm:$0xff]
    %v4658 = vld [vmem:[%s194 + $0x40] sm:$0xff]
    %v4659 = vld [vmem:[%s194 + $0x48] sm:$0xff]
    %v4660 = vld [vmem:[%s194 + $0x50] sm:$0xff]
    %v4661 = vld [vmem:[%s194 + $0x58] sm:$0xff]
    %v4662 = vld [vmem:[%s194 + $0x60] sm:$0xff]
    %v4663 = vld [vmem:[%s194 + $0x68] sm:$0xff]
    %v4664 = vld [vmem:[%s194 + $0x70] sm:$0xff]
    %v4665 = vld [vmem:[%s194 + $0x78] sm:$0xff]
    %v4666 = vld [vmem:[%s194 + $0x80] sm:$0xff]
    %v4667 = vld [vmem:[%s194 + $0x88] sm:$0xff]
    %v4668 = vld [vmem:[%s194 + $0x90] sm:$0xff]
    %v4669 = vld [vmem:[%s194 + $0x98] sm:$0xff]
    %v4670 = vld [vmem:[%s194 + $0xa0] sm:$0xff]
    %v4671 = vld [vmem:[%s194 + $0xa8] sm:$0xff]
    %v4672 = vld [vmem:[%s194 + $0xb0] sm:$0xff]
    %v4673 = vld [vmem:[%s194 + $0xb8] sm:$0xff]
    %v4674 = vld [vmem:[%s194 + $0xc0] sm:$0xff]
    %v4675 = vld [vmem:[%s194 + $0xc8] sm:$0xff]
    %v4676 = vld [vmem:[%s194 + $0xd0] sm:$0xff]
    %v4677 = vld [vmem:[%s194 + $0xd8] sm:$0xff]
    %v4678 = vld [vmem:[%s194 + $0xe0] sm:$0xff]
    %v4679 = vld [vmem:[%s194 + $0xe8] sm:$0xff]
    %v4680 = vld [vmem:[%s194 + $0xf0] sm:$0xff]
    %v4681 = vld [vmem:[%s194 + $0xf8] sm:$0xff]
    %v4682 = vld [vmem:[%s194 + $0x100] sm:$0xff]
    %v4683 = vld [vmem:[%s194 + $0x108] sm:$0xff]
    %v4684 = vld [vmem:[%s194 + $0x110] sm:$0xff]
    %v4685 = vld [vmem:[%s194 + $0x118] sm:$0xff]
    %v4686 = vld [vmem:[%s194 + $0x120] sm:$0xff]
    %v4687 = vld [vmem:[%s194 + $0x128] sm:$0xff]
    %v4688 = vld [vmem:[%s194 + $0x130] sm:$0xff]
    %v4689 = vld [vmem:[%s194 + $0x138] sm:$0xff]
    %v4690 = vld [vmem:[%s194 + $0x140] sm:$0xff]
    %v4691 = vld [vmem:[%s194 + $0x148] sm:$0xff]
    %v4692 = vld [vmem:[%s194 + $0x150] sm:$0xff]
    %v4693 = vld [vmem:[%s194 + $0x158] sm:$0xff]
    %v4694 = vld [vmem:[%s194 + $0x160] sm:$0xff]
    %v4695 = vld [vmem:[%s194 + $0x168] sm:$0xff]
    %v4696 = vld [vmem:[%s194 + $0x170] sm:$0xff]
    %v4697 = vld [vmem:[%s194 + $0x178] sm:$0xff]
    %v4698 = vld [vmem:[%s194 + $0x180] sm:$0xff]
    %v4699 = vld [vmem:[%s194 + $0x188] sm:$0xff]
    %v4700 = vld [vmem:[%s194 + $0x190] sm:$0xff]
    %v4701 = vld [vmem:[%s194 + $0x198] sm:$0xff]
    %v4702 = vld [vmem:[%s194 + $0x1a0] sm:$0xff]
    %v4703 = vld [vmem:[%s194 + $0x1a8] sm:$0xff]
    %v4704 = vld [vmem:[%s194 + $0x1b0] sm:$0xff]
    %v4705 = vld [vmem:[%s194 + $0x1b8] sm:$0xff]
    %v4706 = vld [vmem:[%s194 + $0x1c0] sm:$0xff]
    %v4707 = vld [vmem:[%s194 + $0x1c8] sm:$0xff]
    %v4708 = vld [vmem:[%s194 + $0x1d0] sm:$0xff]
    %v4709 = vld [vmem:[%s194 + $0x1d8] sm:$0xff]
    %v4710 = vld [vmem:[%s194 + $0x1e0] sm:$0xff]
    %v4711 = vld [vmem:[%s194 + $0x1e8] sm:$0xff]
    %v4712 = vld [vmem:[%s194 + $0x1f0] sm:$0xff]
    %v4713 = vld [vmem:[%s194 + $0x1f8] sm:$0xff]
    %v4714 = vld [vmem:[%s194 + $0x200] sm:$0xff]
    %v4715 = vld [vmem:[%s194 + $0x208] sm:$0xff]
    %v4716 = vld [vmem:[%s194 + $0x210] sm:$0xff]
    %v4717 = vld [vmem:[%s194 + $0x218] sm:$0xff]
    %v4718 = vld [vmem:[%s194 + $0x220] sm:$0xff]
    %v4719 = vld [vmem:[%s194 + $0x228] sm:$0xff]
    %v4720 = vld [vmem:[%s194 + $0x230] sm:$0xff]
    %v4721 = vld [vmem:[%s194 + $0x238] sm:$0xff]
    %v4722 = vld [vmem:[%s194 + $0x240] sm:$0xff]
    %v4723 = vld [vmem:[%s194 + $0x248] sm:$0xff]
    %v4724 = vld [vmem:[%s194 + $0x250] sm:$0xff]
    %v4725 = vld [vmem:[%s194 + $0x258] sm:$0xff]
    %v4726 = vld [vmem:[%s194 + $0x260] sm:$0xff]
    %v4727 = vld [vmem:[%s194 + $0x268] sm:$0xff]
    %v4728 = vld [vmem:[%s194 + $0x270] sm:$0xff]
    %v4729 = vld [vmem:[%s194 + $0x278] sm:$0xff]
    %v4730 = vld [vmem:[%s194 + $0x280] sm:$0xff]
    %v4731 = vld [vmem:[%s194 + $0x288] sm:$0xff]
    %v4732 = vld [vmem:[%s194 + $0x290] sm:$0xff]
    %v4733 = vld [vmem:[%s194 + $0x298] sm:$0xff]
    %v4734 = vld [vmem:[%s194 + $0x2a0] sm:$0xff]
    %v4735 = vld [vmem:[%s194 + $0x2a8] sm:$0xff]
    %v4736 = vld [vmem:[%s194 + $0x2b0] sm:$0xff]
    %v4737 = vld [vmem:[%s194 + $0x2b8] sm:$0xff]
    %v4738 = vld [vmem:[%s194 + $0x2c0] sm:$0xff]
    %v4739 = vld [vmem:[%s194 + $0x2c8] sm:$0xff]
    %v4740 = vld [vmem:[%s194 + $0x2d0] sm:$0xff]
    %v4741 = vld [vmem:[%s194 + $0x2d8] sm:$0xff]
    %v4742 = vld [vmem:[%s194 + $0x2e0] sm:$0xff]
    %v4743 = vld [vmem:[%s194 + $0x2e8] sm:$0xff]
    %v4744 = vld [vmem:[%s194 + $0x2f0] sm:$0xff]
    %v4745 = vld [vmem:[%s194 + $0x2f8] sm:$0xff]
    %v4746 = vld [vmem:[%s194 + $0x300] sm:$0xff]
    %v4747 = vld [vmem:[%s194 + $0x308] sm:$0xff]
    %v4748 = vld [vmem:[%s194 + $0x310] sm:$0xff]
    %v4749 = vld [vmem:[%s194 + $0x318] sm:$0xff]
    %v4750 = vld [vmem:[%s194 + $0x320] sm:$0xff]
    %v4751 = vld [vmem:[%s194 + $0x328] sm:$0xff]
    %v4752 = vld [vmem:[%s194 + $0x330] sm:$0xff]
    %v4753 = vld [vmem:[%s194 + $0x338] sm:$0xff]
    %v4754 = vld [vmem:[%s194 + $0x340] sm:$0xff]
    %v4755 = vld [vmem:[%s194 + $0x348] sm:$0xff]
    %v4756 = vld [vmem:[%s194 + $0x350] sm:$0xff]
    %v4757 = vld [vmem:[%s194 + $0x358] sm:$0xff]
    %v4758 = vld [vmem:[%s194 + $0x360] sm:$0xff]
    %v4759 = vld [vmem:[%s194 + $0x368] sm:$0xff]
    %v4760 = vld [vmem:[%s194 + $0x370] sm:$0xff]
    %v4761 = vld [vmem:[%s194 + $0x378] sm:$0xff]
    %v4762 = vld [vmem:[%s194 + $0x380] sm:$0xff]
    %v4763 = vld [vmem:[%s194 + $0x388] sm:$0xff]
    %v4764 = vld [vmem:[%s194 + $0x390] sm:$0xff]
    %v4765 = vld [vmem:[%s194 + $0x398] sm:$0xff]
    %v4766 = vld [vmem:[%s194 + $0x3a0] sm:$0xff]
    %v4767 = vld [vmem:[%s194 + $0x3a8] sm:$0xff]
    %v4768 = vld [vmem:[%s194 + $0x3b0] sm:$0xff]
    %v4769 = vld [vmem:[%s194 + $0x3b8] sm:$0xff]
    %v4770 = vld [vmem:[%s194 + $0x3c0] sm:$0xff]
    %v4771 = vld [vmem:[%s194 + $0x3c8] sm:$0xff]
    %v4772 = vld [vmem:[%s194 + $0x3d0] sm:$0xff]
    %v4773 = vld [vmem:[%s194 + $0x3d8] sm:$0xff]
    %v4774 = vld [vmem:[%s194 + $0x3e0] sm:$0xff]
    %v4775 = vld [vmem:[%s194 + $0x3e8] sm:$0xff]
    %v4776 = vld [vmem:[%s194 + $0x3f0] sm:$0xff]
    %v4777 = vld [vmem:[%s194 + $0x3f8] sm:$0xff]
    %4778 = vmatprep.subr.bf16.mxu0 %v4651
    %4779 = vmatpush1.bf16.msra.mxu0 %v4650
    %4780 = vmatprep.subr.bf16.mxu0 %v4655
    %4781 = vmatpush1.bf16.msra.mxu0 %v4654
    %4782 = vmatprep.subr.bf16.mxu0 %v4659
    %4783 = vmatpush1.bf16.msra.mxu0 %v4658
    %4784 = vmatprep.subr.bf16.mxu0 %v4663
    %4785 = vmatpush1.bf16.msra.mxu0 %v4662
    %4786 = vmatprep.subr.bf16.mxu0 %v4667
    %4787 = vmatpush1.bf16.msra.mxu0 %v4666
    %4788 = vmatprep.subr.bf16.mxu0 %v4671
    %4789 = vmatpush1.bf16.msra.mxu0 %v4670
    %4790 = vmatprep.subr.bf16.mxu0 %v4675
    %4791 = vmatpush1.bf16.msra.mxu0 %v4674
    %4792 = vmatprep.subr.bf16.mxu0 %v4679
    %4793 = vmatpush1.bf16.msra.mxu0 %v4678
    %4794 = vmatprep.subr.bf16.mxu0 %v4683
    %4795 = vmatpush1.bf16.msra.mxu0 %v4682
    %4796 = vmatprep.subr.bf16.mxu0 %v4687
    %4797 = vmatpush1.bf16.msra.mxu0 %v4686
    %4798 = vmatprep.subr.bf16.mxu0 %v4691
    %4799 = vmatpush1.bf16.msra.mxu0 %v4690
    %4800 = vmatprep.subr.bf16.mxu0 %v4695
    %4801 = vmatpush1.bf16.msra.mxu0 %v4694
    %4802 = vmatprep.subr.bf16.mxu0 %v4699
    %4803 = vmatpush1.bf16.msra.mxu0 %v4698
    %4804 = vmatprep.subr.bf16.mxu0 %v4703
    %4805 = vmatpush1.bf16.msra.mxu0 %v4702
    %4806 = vmatprep.subr.bf16.mxu0 %v4707
    %4807 = vmatpush1.bf16.msra.mxu0 %v4706
    %4808 = vmatprep.subr.bf16.mxu0 %v4711
    %4809 = vmatpush1.bf16.msra.mxu0 %v4710
    %4810 = vmatprep.mubr.bf16.mxu0 %v4647
    %4811 = vmatmul.mubr.bf16.gmra.mrb[0].mxu0 %v4646
    %v4812 = vpop.f32.mrb[0].mxu0
    %v4813 = vadd.f32 0.0, %v4812
    %v4814 = vpop.f32.mrb[0].mxu0
    %v4815 = vadd.f32 0.0, %v4814
    %v4816 = vpop.f32.mrb[0].mxu0
    %v4817 = vpop.f32.mrb[0].mxu0
    %4818 = vdwg.mxu0
    %4819 = vmatprep.subr.bf16.mxu0 %v4715
    %4820 = vmatpush1.bf16.msra.mxu0 %v4714
    %4821 = vmatprep.subr.bf16.mxu0 %v4719
    %4822 = vmatpush1.bf16.msra.mxu0 %v4718
    %4823 = vmatprep.subr.bf16.mxu0 %v4723
    %4824 = vmatpush1.bf16.msra.mxu0 %v4722
    %4825 = vmatprep.subr.bf16.mxu0 %v4727
    %4826 = vmatpush1.bf16.msra.mxu0 %v4726
    %4827 = vmatprep.subr.bf16.mxu0 %v4731
    %4828 = vmatpush1.bf16.msra.mxu0 %v4730
    %4829 = vmatprep.subr.bf16.mxu0 %v4735
    %4830 = vmatpush1.bf16.msra.mxu0 %v4734
    %4831 = vmatprep.subr.bf16.mxu0 %v4739
    %4832 = vmatpush1.bf16.msra.mxu0 %v4738
    %4833 = vmatprep.subr.bf16.mxu0 %v4743
    %4834 = vmatpush1.bf16.msra.mxu0 %v4742
    %4835 = vmatprep.subr.bf16.mxu0 %v4747
    %4836 = vmatpush1.bf16.msra.mxu0 %v4746
    %4837 = vmatprep.subr.bf16.mxu0 %v4751
    %4838 = vmatpush1.bf16.msra.mxu0 %v4750
    %4839 = vmatprep.subr.bf16.mxu0 %v4755
    %4840 = vmatpush1.bf16.msra.mxu0 %v4754
    %4841 = vmatprep.subr.bf16.mxu0 %v4759
    %4842 = vmatpush1.bf16.msra.mxu0 %v4758
    %4843 = vmatprep.subr.bf16.mxu0 %v4763
    %4844 = vmatpush1.bf16.msra.mxu0 %v4762
    %4845 = vmatprep.subr.bf16.mxu0 %v4767
    %4846 = vmatpush1.bf16.msra.mxu0 %v4766
    %4847 = vmatprep.subr.bf16.mxu0 %v4771
    %4848 = vmatpush1.bf16.msra.mxu0 %v4770
    %4849 = vmatprep.subr.bf16.mxu0 %v4775
    %4850 = vmatpush1.bf16.msra.mxu0 %v4774
    %4851 = vmatprep.mubr.bf16.mxu0 %v4649
    %4852 = vmatmul.mubr.bf16.gmra.mrb[0].mxu0 %v4648
    %v4853 = vpop.f32.mrb[0].mxu0
    %v4854 = vadd.f32 %v4813, %v4853
    %v4855 = vpop.f32.mrb[0].mxu0
    %v4856 = vadd.f32 %v4815, %v4855
    %v4857 = vpop.f32.mrb[0].mxu0
    %v4858 = vpop.f32.mrb[0].mxu0
    %4859 = vdwg.mxu0
    %4860 = vmatprep.subr.bf16.mxu0 %v4653
    %4861 = vmatpush1.bf16.msra.mxu0 %v4652
    %4862 = vmatprep.subr.bf16.mxu0 %v4657
    %4863 = vmatpush1.bf16.msra.mxu0 %v4656
    %4864 = vmatprep.subr.bf16.mxu0 %v4661
    %4865 = vmatpush1.bf16.msra.mxu0 %v4660
    %4866 = vmatprep.subr.bf16.mxu0 %v4665
    %4867 = vmatpush1.bf16.msra.mxu0 %v4664
    %4868 = vmatprep.subr.bf16.mxu0 %v4669
    %4869 = vmatpush1.bf16.msra.mxu0 %v4668
    %4870 = vmatprep.subr.bf16.mxu0 %v4673
    %4871 = vmatpush1.bf16.msra.mxu0 %v4672
    %4872 = vmatprep.subr.bf16.mxu0 %v4677
    %4873 = vmatpush1.bf16.msra.mxu0 %v4676
    %4874 = vmatprep.subr.bf16.mxu0 %v4681
    %4875 = vmatpush1.bf16.msra.mxu0 %v4680
    %4876 = vmatprep.subr.bf16.mxu0 %v4685
    %4877 = vmatpush1.bf16.msra.mxu0 %v4684
    %4878 = vmatprep.subr.bf16.mxu0 %v4689
    %4879 = vmatpush1.bf16.msra.mxu0 %v4688
    %4880 = vmatprep.subr.bf16.mxu0 %v4693
    %4881 = vmatpush1.bf16.msra.mxu0 %v4692
    %4882 = vmatprep.subr.bf16.mxu0 %v4697
    %4883 = vmatpush1.bf16.msra.mxu0 %v4696
    %4884 = vmatprep.subr.bf16.mxu0 %v4701
    %4885 = vmatpush1.bf16.msra.mxu0 %v4700
    %4886 = vmatprep.subr.bf16.mxu0 %v4705
    %4887 = vmatpush1.bf16.msra.mxu0 %v4704
    %4888 = vmatprep.subr.bf16.mxu0 %v4709
    %4889 = vmatpush1.bf16.msra.mxu0 %v4708
    %4890 = vmatprep.subr.bf16.mxu0 %v4713
    %4891 = vmatpush1.bf16.msra.mxu0 %v4712
    %4892 = vmatprep.mubr.bf16.mxu0 %v4647
    %4893 = vmatmul.mubr.bf16.gmra.mrb[0].mxu0 %v4646
    %v4894 = vpop.f32.mrb[0].mxu0
    %v4895 = vadd.f32 0.0, %v4894
    %v4896 = vpop.f32.mrb[0].mxu0
    %v4897 = vadd.f32 0.0, %v4896
    %v4898 = vpop.f32.mrb[0].mxu0
    %v4899 = vpop.f32.mrb[0].mxu0
    %4900 = vdwg.mxu0
    %4901 = vmatprep.subr.bf16.mxu0 %v4717
    %4902 = vmatpush1.bf16.msra.mxu0 %v4716
    %4903 = vmatprep.subr.bf16.mxu0 %v4721
    %4904 = vmatpush1.bf16.msra.mxu0 %v4720
    %4905 = vmatprep.subr.bf16.mxu0 %v4725
    %4906 = vmatpush1.bf16.msra.mxu0 %v4724
    %4907 = vmatprep.subr.bf16.mxu0 %v4729
    %4908 = vmatpush1.bf16.msra.mxu0 %v4728
    %4909 = vmatprep.subr.bf16.mxu0 %v4733
    %4910 = vmatpush1.bf16.msra.mxu0 %v4732
    %4911 = vmatprep.subr.bf16.mxu0 %v4737
    %4912 = vmatpush1.bf16.msra.mxu0 %v4736
    %4913 = vmatprep.subr.bf16.mxu0 %v4741
    %4914 = vmatpush1.bf16.msra.mxu0 %v4740
    %4915 = vmatprep.subr.bf16.mxu0 %v4745
    %4916 = vmatpush1.bf16.msra.mxu0 %v4744
    %4917 = vmatprep.subr.bf16.mxu0 %v4749
    %4918 = vmatpush1.bf16.msra.mxu0 %v4748
    %4919 = vmatprep.subr.bf16.mxu0 %v4753
    %4920 = vmatpush1.bf16.msra.mxu0 %v4752
    %4921 = vmatprep.subr.bf16.mxu0 %v4757
    %4922 = vmatpush1.bf16.msra.mxu0 %v4756
    %4923 = vmatprep.subr.bf16.mxu0 %v4761
    %4924 = vmatpush1.bf16.msra.mxu0 %v4760
    %4925 = vmatprep.subr.bf16.mxu0 %v4765
    %4926 = vmatpush1.bf16.msra.mxu0 %v4764
    %4927 = vmatprep.subr.bf16.mxu0 %v4769
    %4928 = vmatpush1.bf16.msra.mxu0 %v4768
    %4929 = vmatprep.subr.bf16.mxu0 %v4773
    %4930 = vmatpush1.bf16.msra.mxu0 %v4772
    %4931 = vmatprep.subr.bf16.mxu0 %v4777
    %4932 = vmatpush1.bf16.msra.mxu0 %v4776
    %4933 = vmatprep.mubr.bf16.mxu0 %v4649
    %4934 = vmatmul.mubr.bf16.gmra.mrb[0].mxu0 %v4648
    %v4935 = vpop.f32.mrb[0].mxu0
    %v4936 = vadd.f32 %v4895, %v4935
    %v4937 = vpop.f32.mrb[0].mxu0
    %v4938 = vadd.f32 %v4897, %v4937
    %v4939 = vpop.f32.mrb[0].mxu0
    %v4940 = vpop.f32.mrb[0].mxu0
    %4941 = vdwg.mxu0
    %4942 = vmatprep.subr.bf16.mxu0 %v4478
    %4943 = vmatpush1.bf16.msra.mxu0 %v4477
    %4944 = vmatprep.subr.bf16.mxu0 %v4482
    %4945 = vmatpush1.bf16.msra.mxu0 %v4481
    %4946 = vmatprep.subr.bf16.mxu0 %v4486
    %4947 = vmatpush1.bf16.msra.mxu0 %v4485
    %4948 = vmatprep.subr.bf16.mxu0 %v4490
    %4949 = vmatpush1.bf16.msra.mxu0 %v4489
    %4950 = vmatprep.subr.bf16.mxu0 %v4494
    %4951 = vmatpush1.bf16.msra.mxu0 %v4493
    %4952 = vmatprep.subr.bf16.mxu0 %v4498
    %4953 = vmatpush1.bf16.msra.mxu0 %v4497
    %4954 = vmatprep.subr.bf16.mxu0 %v4502
    %4955 = vmatpush1.bf16.msra.mxu0 %v4501
    %4956 = vmatprep.subr.bf16.mxu0 %v4506
    %4957 = vmatpush1.bf16.msra.mxu0 %v4505
    %4958 = vmatprep.subr.bf16.mxu0 %v4510
    %4959 = vmatpush1.bf16.msra.mxu0 %v4509
    %4960 = vmatprep.subr.bf16.mxu0 %v4514
    %4961 = vmatpush1.bf16.msra.mxu0 %v4513
    %4962 = vmatprep.subr.bf16.mxu0 %v4518
    %4963 = vmatpush1.bf16.msra.mxu0 %v4517
    %4964 = vmatprep.subr.bf16.mxu0 %v4522
    %4965 = vmatpush1.bf16.msra.mxu0 %v4521
    %4966 = vmatprep.subr.bf16.mxu0 %v4526
    %4967 = vmatpush1.bf16.msra.mxu0 %v4525
    %4968 = vmatprep.subr.bf16.mxu0 %v4530
    %4969 = vmatpush1.bf16.msra.mxu0 %v4529
    %4970 = vmatprep.subr.bf16.mxu0 %v4534
    %4971 = vmatpush1.bf16.msra.mxu0 %v4533
    %4972 = vmatprep.subr.bf16.mxu0 %v4538
    %4973 = vmatpush1.bf16.msra.mxu0 %v4537
    %4974 = vmatprep.mubr.bf16.mxu0 %v4474
    %4975 = vmatmul.mubr.bf16.gmra.mrb[0].mxu0 %v4473
    %v4976 = vpop.f32.mrb[0].mxu0
    %v4977 = vadd.f32 %v4854, %v4976
    %v4978 = vpop.f32.mrb[0].mxu0
    %v4979 = vadd.f32 %v4856, %v4978
    %v4980 = vpop.f32.mrb[0].mxu0
    %v4981 = vpop.f32.mrb[0].mxu0
    %4982 = vdwg.mxu0
    %4983 = vmatprep.subr.bf16.mxu0 %v4542
    %4984 = vmatpush1.bf16.msra.mxu0 %v4541
    %4985 = vmatprep.subr.bf16.mxu0 %v4546
    %4986 = vmatpush1.bf16.msra.mxu0 %v4545
    %4987 = vmatprep.subr.bf16.mxu0 %v4550
    %4988 = vmatpush1.bf16.msra.mxu0 %v4549
    %4989 = vmatprep.subr.bf16.mxu0 %v4554
    %4990 = vmatpush1.bf16.msra.mxu0 %v4553
    %4991 = vmatprep.subr.bf16.mxu0 %v4558
    %4992 = vmatpush1.bf16.msra.mxu0 %v4557
    %4993 = vmatprep.subr.bf16.mxu0 %v4562
    %4994 = vmatpush1.bf16.msra.mxu0 %v4561
    %4995 = vmatprep.subr.bf16.mxu0 %v4566
    %4996 = vmatpush1.bf16.msra.mxu0 %v4565
    %4997 = vmatprep.subr.bf16.mxu0 %v4570
    %4998 = vmatpush1.bf16.msra.mxu0 %v4569
    %4999 = vmatprep.subr.bf16.mxu0 %v4574
    %5000 = vmatpush1.bf16.msra.mxu0 %v4573
    %5001 = vmatprep.subr.bf16.mxu0 %v4578
    %5002 = vmatpush1.bf16.msra.mxu0 %v4577
    %5003 = vmatprep.subr.bf16.mxu0 %v4582
    %5004 = vmatpush1.bf16.msra.mxu0 %v4581
    %5005 = vmatprep.subr.bf16.mxu0 %v4586
    %5006 = vmatpush1.bf16.msra.mxu0 %v4585
    %5007 = vmatprep.subr.bf16.mxu0 %v4590
    %5008 = vmatpush1.bf16.msra.mxu0 %v4589
    %5009 = vmatprep.subr.bf16.mxu0 %v4594
    %5010 = vmatpush1.bf16.msra.mxu0 %v4593
    %5011 = vmatprep.subr.bf16.mxu0 %v4598
    %5012 = vmatpush1.bf16.msra.mxu0 %v4597
    %5013 = vmatprep.subr.bf16.mxu0 %v4602
    %5014 = vmatpush1.bf16.msra.mxu0 %v4601
    %5015 = vmatprep.mubr.bf16.mxu0 %v4476
    %5016 = vmatmul.mubr.bf16.gmra.mrb[0].mxu0 %v4475
    %v5017 = vpop.f32.mrb[0].mxu0
    %v5018 = vadd.f32 %v4977, %v5017
    %v5019 = vpop.f32.mrb[0].mxu0
    %v5020 = vadd.f32 %v4979, %v5019
    %v5021 = vpop.f32.mrb[0].mxu0
    %v5022 = vpop.f32.mrb[0].mxu0
    %5023 = vdwg.mxu0
    %5024 = vmatprep.subr.bf16.mxu0 %v4480
    %5025 = vmatpush1.bf16.msra.mxu0 %v4479
    %5026 = vmatprep.subr.bf16.mxu0 %v4484
    %5027 = vmatpush1.bf16.msra.mxu0 %v4483
    %5028 = vmatprep.subr.bf16.mxu0 %v4488
    %5029 = vmatpush1.bf16.msra.mxu0 %v4487
    %5030 = vmatprep.subr.bf16.mxu0 %v4492
    %5031 = vmatpush1.bf16.msra.mxu0 %v4491
    %5032 = vmatprep.subr.bf16.mxu0 %v4496
    %5033 = vmatpush1.bf16.msra.mxu0 %v4495
    %5034 = vmatprep.subr.bf16.mxu0 %v4500
    %5035 = vmatpush1.bf16.msra.mxu0 %v4499
    %5036 = vmatprep.subr.bf16.mxu0 %v4504
    %5037 = vmatpush1.bf16.msra.mxu0 %v4503
    %5038 = vmatprep.subr.bf16.mxu0 %v4508
    %5039 = vmatpush1.bf16.msra.mxu0 %v4507
    %5040 = vmatprep.subr.bf16.mxu0 %v4512
    %5041 = vmatpush1.bf16.msra.mxu0 %v4511
    %5042 = vmatprep.subr.bf16.mxu0 %v4516
    %5043 = vmatpush1.bf16.msra.mxu0 %v4515
    %5044 = vmatprep.subr.bf16.mxu0 %v4520
    %5045 = vmatpush1.bf16.msra.mxu0 %v4519
    %5046 = vmatprep.subr.bf16.mxu0 %v4524
    %5047 = vmatpush1.bf16.msra.mxu0 %v4523
    %5048 = vmatprep.subr.bf16.mxu0 %v4528
    %5049 = vmatpush1.bf16.msra.mxu0 %v4527
    %5050 = vmatprep.subr.bf16.mxu0 %v4532
    %5051 = vmatpush1.bf16.msra.mxu0 %v4531
    %5052 = vmatprep.subr.bf16.mxu0 %v4536
    %5053 = vmatpush1.bf16.msra.mxu0 %v4535
    %5054 = vmatprep.subr.bf16.mxu0 %v4540
    %5055 = vmatpush1.bf16.msra.mxu0 %v4539
    %5056 = vmatprep.mubr.bf16.mxu0 %v4474
    %5057 = vmatmul.mubr.bf16.gmra.mrb[0].mxu0 %v4473
    %v5058 = vpop.f32.mrb[0].mxu0
    %v5059 = vadd.f32 %v4936, %v5058
    %v5060 = vpop.f32.mrb[0].mxu0
    %v5061 = vadd.f32 %v4938, %v5060
    %v5062 = vpop.f32.mrb[0].mxu0
    %v5063 = vpop.f32.mrb[0].mxu0
    %5064 = vdwg.mxu0
    %5065 = vmatprep.subr.bf16.mxu0 %v4544
    %5066 = vmatpush1.bf16.msra.mxu0 %v4543
    %5067 = vmatprep.subr.bf16.mxu0 %v4548
    %5068 = vmatpush1.bf16.msra.mxu0 %v4547
    %5069 = vmatprep.subr.bf16.mxu0 %v4552
    %5070 = vmatpush1.bf16.msra.mxu0 %v4551
    %5071 = vmatprep.subr.bf16.mxu0 %v4556
    %5072 = vmatpush1.bf16.msra.mxu0 %v4555
    %5073 = vmatprep.subr.bf16.mxu0 %v4560
    %5074 = vmatpush1.bf16.msra.mxu0 %v4559
    %5075 = vmatprep.subr.bf16.mxu0 %v4564
    %5076 = vmatpush1.bf16.msra.mxu0 %v4563
    %5077 = vmatprep.subr.bf16.mxu0 %v4568
    %5078 = vmatpush1.bf16.msra.mxu0 %v4567
    %5079 = vmatprep.subr.bf16.mxu0 %v4572
    %5080 = vmatpush1.bf16.msra.mxu0 %v4571
    %5081 = vmatprep.subr.bf16.mxu0 %v4576
    %5082 = vmatpush1.bf16.msra.mxu0 %v4575
    %5083 = vmatprep.subr.bf16.mxu0 %v4580
    %5084 = vmatpush1.bf16.msra.mxu0 %v4579
    %5085 = vmatprep.subr.bf16.mxu0 %v4584
    %5086 = vmatpush1.bf16.msra.mxu0 %v4583
    %5087 = vmatprep.subr.bf16.mxu0 %v4588
    %5088 = vmatpush1.bf16.msra.mxu0 %v4587
    %5089 = vmatprep.subr.bf16.mxu0 %v4592
    %5090 = vmatpush1.bf16.msra.mxu0 %v4591
    %5091 = vmatprep.subr.bf16.mxu0 %v4596
    %5092 = vmatpush1.bf16.msra.mxu0 %v4595
    %5093 = vmatprep.subr.bf16.mxu0 %v4600
    %5094 = vmatpush1.bf16.msra.mxu0 %v4599
    %5095 = vmatprep.subr.bf16.mxu0 %v4604
    %5096 = vmatpush1.bf16.msra.mxu0 %v4603
    %5097 = vmatprep.mubr.bf16.mxu0 %v4476
    %5098 = vmatmul.mubr.bf16.gmra.mrb[0].mxu0 %v4475
    %v5099 = vpop.f32.mrb[0].mxu0
    %v5100 = vadd.f32 %v5059, %v5099
    %v5101 = vpop.f32.mrb[0].mxu0
    %v5102 = vadd.f32 %v5061, %v5101
    %v5103 = vpop.f32.mrb[0].mxu0
    %v5104 = vpop.f32.mrb[0].mxu0
    %5105 = vdwg.mxu0
    %s5106 = scalar_lea.hbm %s9, 49152
    %s5108 = sshll.u32 1, 14
    %s5109 = sxor.u32 4294967295, %s5108
    %s5111 = sadd.s32 2, %s162
    %s5113 = sshll.u32 7, 26
    %s5114 = sxor.u32 4294967295, %s5113
    %s5115 = sand.u32 0, %s5114
    %s5116 = sshll.u32 %s5111, 26
    %s5117 = sor.u32 %s5115, %s5116
    %s5118 = sshll.u32 %s194, 4
    %s5119 = int_to_ptr.vmem [resolvable:$true] %s5118
    %5122 = sst [smem:[#allocation29]] 512
    %s5123 = scalar_lea.smem [#allocation29], 1
    %5124 = sst [smem:[%s5123]] 512
    %s5125 = scalar_lea.smem [#allocation29], 2
    %5126 = sst [smem:[%s5125]] 4
    %s5127 = scalar_lea.smem [#allocation29], 3
    %5128 = sst [smem:[%s5127]] 64
    %s5129 = scalar_lea.smem [#allocation29], 4
    %5130 = sst [smem:[%s5129]] 128
    %s5131 = scalar_lea.smem [#allocation29], 5
    %5132 = sst [smem:[%s5131]] 2
    %s5133 = scalar_lea.smem [#allocation29], 6
    %5134 = sst [smem:[%s5133]] 256
    %s5135 = scalar_lea.smem [#allocation29], 7
    %5136 = sst [smem:[%s5135]] 64
    %s5137 = scalar_lea.smem [#allocation29], 8
    %5138 = sst [smem:[%s5137]] 4
    %5140 = dma.general %s5106, 16384, %s5119, %s195, [#allocation28], [#allocation29], %s5117, 0
    %s5141 = sshll.u32 %s4466, 4
    %5142 = dma.done [#allocation5], %s5141
    %v5143 = vld [vmem:[#allocation3 + $0x40] sm:$0xff]
    %v5144 = vld [vmem:[#allocation3 + $0x48] sm:$0xff]
    %v5145 = vld [vmem:[#allocation3 + $0x50] sm:$0xff]
    %v5146 = vld [vmem:[#allocation3 + $0x58] sm:$0xff]
    %v5147 = vpack.c.bf16 %v5143, %v5143
    %v5148 = vpack.c.bf16 %v5144, %v5144
    %v5149 = vpack.c.bf16 %v5145, %v5145
    %v5150 = vpack.c.bf16 %v5146, %v5146
    %v5151 = vld [vmem:[#allocation4] sm:$0xff]
    %v5152 = vld [vmem:[#allocation4 + $0x8] sm:$0xff]
    %v5153 = vld [vmem:[#allocation4 + $0x10] sm:$0xff]
    %v5154 = vld [vmem:[#allocation4 + $0x18] sm:$0xff]
    %v5155 = vld [vmem:[#allocation4 + $0x20] sm:$0xff]
    %v5156 = vld [vmem:[#allocation4 + $0x28] sm:$0xff]
    %v5157 = vld [vmem:[#allocation4 + $0x30] sm:$0xff]
    %v5158 = vld [vmem:[#allocation4 + $0x38] sm:$0xff]
    %v5159 = vld [vmem:[#allocation4 + $0x40] sm:$0xff]
    %v5160 = vld [vmem:[#allocation4 + $0x48] sm:$0xff]
    %v5161 = vld [vmem:[#allocation4 + $0x50] sm:$0xff]
    %v5162 = vld [vmem:[#allocation4 + $0x58] sm:$0xff]
    %v5163 = vld [vmem:[#allocation4 + $0x60] sm:$0xff]
    %v5164 = vld [vmem:[#allocation4 + $0x68] sm:$0xff]
    %v5165 = vld [vmem:[#allocation4 + $0x70] sm:$0xff]
    %v5166 = vld [vmem:[#allocation4 + $0x78] sm:$0xff]
    %v5167 = vld [vmem:[#allocation4 + $0x80] sm:$0xff]
    %v5168 = vld [vmem:[#allocation4 + $0x88] sm:$0xff]
    %v5169 = vld [vmem:[#allocation4 + $0x90] sm:$0xff]
    %v5170 = vld [vmem:[#allocation4 + $0x98] sm:$0xff]
    %v5171 = vld [vmem:[#allocation4 + $0xa0] sm:$0xff]
    %v5172 = vld [vmem:[#allocation4 + $0xa8] sm:$0xff]
    %v5173 = vld [vmem:[#allocation4 + $0xb0] sm:$0xff]
    %v5174 = vld [vmem:[#allocation4 + $0xb8] sm:$0xff]
    %v5175 = vld [vmem:[#allocation4 + $0xc0] sm:$0xff]
    %v5176 = vld [vmem:[#allocation4 + $0xc8] sm:$0xff]
    %v5177 = vld [vmem:[#allocation4 + $0xd0] sm:$0xff]
    %v5178 = vld [vmem:[#allocation4 + $0xd8] sm:$0xff]
    %v5179 = vld [vmem:[#allocation4 + $0xe0] sm:$0xff]
    %v5180 = vld [vmem:[#allocation4 + $0xe8] sm:$0xff]
    %v5181 = vld [vmem:[#allocation4 + $0xf0] sm:$0xff]
    %v5182 = vld [vmem:[#allocation4 + $0xf8] sm:$0xff]
    %v5183 = vld [vmem:[#allocation4 + $0x100] sm:$0xff]
    %v5184 = vld [vmem:[#allocation4 + $0x108] sm:$0xff]
    %v5185 = vld [vmem:[#allocation4 + $0x110] sm:$0xff]
    %v5186 = vld [vmem:[#allocation4 + $0x118] sm:$0xff]
    %v5187 = vld [vmem:[#allocation4 + $0x120] sm:$0xff]
    %v5188 = vld [vmem:[#allocation4 + $0x128] sm:$0xff]
    %v5189 = vld [vmem:[#allocation4 + $0x130] sm:$0xff]
    %v5190 = vld [vmem:[#allocation4 + $0x138] sm:$0xff]
    %v5191 = vld [vmem:[#allocation4 + $0x140] sm:$0xff]
    %v5192 = vld [vmem:[#allocation4 + $0x148] sm:$0xff]
    %v5193 = vld [vmem:[#allocation4 + $0x150] sm:$0xff]
    %v5194 = vld [vmem:[#allocation4 + $0x158] sm:$0xff]
    %v5195 = vld [vmem:[#allocation4 + $0x160] sm:$0xff]
    %v5196 = vld [vmem:[#allocation4 + $0x168] sm:$0xff]
    %v5197 = vld [vmem:[#allocation4 + $0x170] sm:$0xff]
    %v5198 = vld [vmem:[#allocation4 + $0x178] sm:$0xff]
    %v5199 = vld [vmem:[#allocation4 + $0x180] sm:$0xff]
    %v5200 = vld [vmem:[#allocation4 + $0x188] sm:$0xff]
    %v5201 = vld [vmem:[#allocation4 + $0x190] sm:$0xff]
    %v5202 = vld [vmem:[#allocation4 + $0x198] sm:$0xff]
    %v5203 = vld [vmem:[#allocation4 + $0x1a0] sm:$0xff]
    %v5204 = vld [vmem:[#allocation4 + $0x1a8] sm:$0xff]
    %v5205 = vld [vmem:[#allocation4 + $0x1b0] sm:$0xff]
    %v5206 = vld [vmem:[#allocation4 + $0x1b8] sm:$0xff]
    %v5207 = vld [vmem:[#allocation4 + $0x1c0] sm:$0xff]
    %v5208 = vld [vmem:[#allocation4 + $0x1c8] sm:$0xff]
    %v5209 = vld [vmem:[#allocation4 + $0x1d0] sm:$0xff]
    %v5210 = vld [vmem:[#allocation4 + $0x1d8] sm:$0xff]
    %v5211 = vld [vmem:[#allocation4 + $0x1e0] sm:$0xff]
    %v5212 = vld [vmem:[#allocation4 + $0x1e8] sm:$0xff]
    %v5213 = vld [vmem:[#allocation4 + $0x1f0] sm:$0xff]
    %v5214 = vld [vmem:[#allocation4 + $0x1f8] sm:$0xff]
    %v5215 = vld [vmem:[#allocation4 + $0x200] sm:$0xff]
    %v5216 = vld [vmem:[#allocation4 + $0x208] sm:$0xff]
    %v5217 = vld [vmem:[#allocation4 + $0x210] sm:$0xff]
    %v5218 = vld [vmem:[#allocation4 + $0x218] sm:$0xff]
    %v5219 = vld [vmem:[#allocation4 + $0x220] sm:$0xff]
    %v5220 = vld [vmem:[#allocation4 + $0x228] sm:$0xff]
    %v5221 = vld [vmem:[#allocation4 + $0x230] sm:$0xff]
    %v5222 = vld [vmem:[#allocation4 + $0x238] sm:$0xff]
    %v5223 = vld [vmem:[#allocation4 + $0x240] sm:$0xff]
    %v5224 = vld [vmem:[#allocation4 + $0x248] sm:$0xff]
    %v5225 = vld [vmem:[#allocation4 + $0x250] sm:$0xff]
    %v5226 = vld [vmem:[#allocation4 + $0x258] sm:$0xff]
    %v5227 = vld [vmem:[#allocation4 + $0x260] sm:$0xff]
    %v5228 = vld [vmem:[#allocation4 + $0x268] sm:$0xff]
    %v5229 = vld [vmem:[#allocation4 + $0x270] sm:$0xff]
    %v5230 = vld [vmem:[#allocation4 + $0x278] sm:$0xff]
    %v5231 = vld [vmem:[#allocation4 + $0x280] sm:$0xff]
    %v5232 = vld [vmem:[#allocation4 + $0x288] sm:$0xff]
    %v5233 = vld [vmem:[#allocation4 + $0x290] sm:$0xff]
    %v5234 = vld [vmem:[#allocation4 + $0x298] sm:$0xff]
    %v5235 = vld [vmem:[#allocation4 + $0x2a0] sm:$0xff]
    %v5236 = vld [vmem:[#allocation4 + $0x2a8] sm:$0xff]
    %v5237 = vld [vmem:[#allocation4 + $0x2b0] sm:$0xff]
    %v5238 = vld [vmem:[#allocation4 + $0x2b8] sm:$0xff]
    %v5239 = vld [vmem:[#allocation4 + $0x2c0] sm:$0xff]
    %v5240 = vld [vmem:[#allocation4 + $0x2c8] sm:$0xff]
    %v5241 = vld [vmem:[#allocation4 + $0x2d0] sm:$0xff]
    %v5242 = vld [vmem:[#allocation4 + $0x2d8] sm:$0xff]
    %v5243 = vld [vmem:[#allocation4 + $0x2e0] sm:$0xff]
    %v5244 = vld [vmem:[#allocation4 + $0x2e8] sm:$0xff]
    %v5245 = vld [vmem:[#allocation4 + $0x2f0] sm:$0xff]
    %v5246 = vld [vmem:[#allocation4 + $0x2f8] sm:$0xff]
    %v5247 = vld [vmem:[#allocation4 + $0x300] sm:$0xff]
    %v5248 = vld [vmem:[#allocation4 + $0x308] sm:$0xff]
    %v5249 = vld [vmem:[#allocation4 + $0x310] sm:$0xff]
    %v5250 = vld [vmem:[#allocation4 + $0x318] sm:$0xff]
    %v5251 = vld [vmem:[#allocation4 + $0x320] sm:$0xff]
    %v5252 = vld [vmem:[#allocation4 + $0x328] sm:$0xff]
    %v5253 = vld [vmem:[#allocation4 + $0x330] sm:$0xff]
    %v5254 = vld [vmem:[#allocation4 + $0x338] sm:$0xff]
    %v5255 = vld [vmem:[#allocation4 + $0x340] sm:$0xff]
    %v5256 = vld [vmem:[#allocation4 + $0x348] sm:$0xff]
    %v5257 = vld [vmem:[#allocation4 + $0x350] sm:$0xff]
    %v5258 = vld [vmem:[#allocation4 + $0x358] sm:$0xff]
    %v5259 = vld [vmem:[#allocation4 + $0x360] sm:$0xff]
    %v5260 = vld [vmem:[#allocation4 + $0x368] sm:$0xff]
    %v5261 = vld [vmem:[#allocation4 + $0x370] sm:$0xff]
    %v5262 = vld [vmem:[#allocation4 + $0x378] sm:$0xff]
    %v5263 = vld [vmem:[#allocation4 + $0x380] sm:$0xff]
    %v5264 = vld [vmem:[#allocation4 + $0x388] sm:$0xff]
    %v5265 = vld [vmem:[#allocation4 + $0x390] sm:$0xff]
    %v5266 = vld [vmem:[#allocation4 + $0x398] sm:$0xff]
    %v5267 = vld [vmem:[#allocation4 + $0x3a0] sm:$0xff]
    %v5268 = vld [vmem:[#allocation4 + $0x3a8] sm:$0xff]
    %v5269 = vld [vmem:[#allocation4 + $0x3b0] sm:$0xff]
    %v5270 = vld [vmem:[#allocation4 + $0x3b8] sm:$0xff]
    %v5271 = vld [vmem:[#allocation4 + $0x3c0] sm:$0xff]
    %v5272 = vld [vmem:[#allocation4 + $0x3c8] sm:$0xff]
    %v5273 = vld [vmem:[#allocation4 + $0x3d0] sm:$0xff]
    %v5274 = vld [vmem:[#allocation4 + $0x3d8] sm:$0xff]
    %v5275 = vld [vmem:[#allocation4 + $0x3e0] sm:$0xff]
    %v5276 = vld [vmem:[#allocation4 + $0x3e8] sm:$0xff]
    %v5277 = vld [vmem:[#allocation4 + $0x3f0] sm:$0xff]
    %v5278 = vld [vmem:[#allocation4 + $0x3f8] sm:$0xff]
    %5279 = vmatprep.subr.bf16.mxu0 %v5152
    %5280 = vmatpush1.bf16.msra.mxu0 %v5151
    %5281 = vmatprep.subr.bf16.mxu0 %v5156
    %5282 = vmatpush1.bf16.msra.mxu0 %v5155
    %5283 = vmatprep.subr.bf16.mxu0 %v5160
    %5284 = vmatpush1.bf16.msra.mxu0 %v5159
    %5285 = vmatprep.subr.bf16.mxu0 %v5164
    %5286 = vmatpush1.bf16.msra.mxu0 %v5163
    %5287 = vmatprep.subr.bf16.mxu0 %v5168
    %5288 = vmatpush1.bf16.msra.mxu0 %v5167
    %5289 = vmatprep.subr.bf16.mxu0 %v5172
    %5290 = vmatpush1.bf16.msra.mxu0 %v5171
    %5291 = vmatprep.subr.bf16.mxu0 %v5176
    %5292 = vmatpush1.bf16.msra.mxu0 %v5175
    %5293 = vmatprep.subr.bf16.mxu0 %v5180
    %5294 = vmatpush1.bf16.msra.mxu0 %v5179
    %5295 = vmatprep.subr.bf16.mxu0 %v5184
    %5296 = vmatpush1.bf16.msra.mxu0 %v5183
    %5297 = vmatprep.subr.bf16.mxu0 %v5188
    %5298 = vmatpush1.bf16.msra.mxu0 %v5187
    %5299 = vmatprep.subr.bf16.mxu0 %v5192
    %5300 = vmatpush1.bf16.msra.mxu0 %v5191
    %5301 = vmatprep.subr.bf16.mxu0 %v5196
    %5302 = vmatpush1.bf16.msra.mxu0 %v5195
    %5303 = vmatprep.subr.bf16.mxu0 %v5200
    %5304 = vmatpush1.bf16.msra.mxu0 %v5199
    %5305 = vmatprep.subr.bf16.mxu0 %v5204
    %5306 = vmatpush1.bf16.msra.mxu0 %v5203
    %5307 = vmatprep.subr.bf16.mxu0 %v5208
    %5308 = vmatpush1.bf16.msra.mxu0 %v5207
    %5309 = vmatprep.subr.bf16.mxu0 %v5212
    %5310 = vmatpush1.bf16.msra.mxu0 %v5211
    %5311 = vmatprep.mubr.bf16.mxu0 %v5148
    %5312 = vmatmul.mubr.bf16.gmra.mrb[0].mxu0 %v5147
    %v5313 = vpop.f32.mrb[0].mxu0
    %v5314 = vadd.f32 0.0, %v5313
    %v5315 = vpop.f32.mrb[0].mxu0
    %v5316 = vadd.f32 0.0, %v5315
    %v5317 = vpop.f32.mrb[0].mxu0
    %v5318 = vpop.f32.mrb[0].mxu0
    %5319 = vdwg.mxu0
    %5320 = vmatprep.subr.bf16.mxu0 %v5216
    %5321 = vmatpush1.bf16.msra.mxu0 %v5215
    %5322 = vmatprep.subr.bf16.mxu0 %v5220
    %5323 = vmatpush1.bf16.msra.mxu0 %v5219
    %5324 = vmatprep.subr.bf16.mxu0 %v5224
    %5325 = vmatpush1.bf16.msra.mxu0 %v5223
    %5326 = vmatprep.subr.bf16.mxu0 %v5228
    %5327 = vmatpush1.bf16.msra.mxu0 %v5227
    %5328 = vmatprep.subr.bf16.mxu0 %v5232
    %5329 = vmatpush1.bf16.msra.mxu0 %v5231
    %5330 = vmatprep.subr.bf16.mxu0 %v5236
    %5331 = vmatpush1.bf16.msra.mxu0 %v5235
    %5332 = vmatprep.subr.bf16.mxu0 %v5240
    %5333 = vmatpush1.bf16.msra.mxu0 %v5239
    %5334 = vmatprep.subr.bf16.mxu0 %v5244
    %5335 = vmatpush1.bf16.msra.mxu0 %v5243
    %5336 = vmatprep.subr.bf16.mxu0 %v5248
    %5337 = vmatpush1.bf16.msra.mxu0 %v5247
    %5338 = vmatprep.subr.bf16.mxu0 %v5252
    %5339 = vmatpush1.bf16.msra.mxu0 %v5251
    %5340 = vmatprep.subr.bf16.mxu0 %v5256
    %5341 = vmatpush1.bf16.msra.mxu0 %v5255
    %5342 = vmatprep.subr.bf16.mxu0 %v5260
    %5343 = vmatpush1.bf16.msra.mxu0 %v5259
    %5344 = vmatprep.subr.bf16.mxu0 %v5264
    %5345 = vmatpush1.bf16.msra.mxu0 %v5263
    %5346 = vmatprep.subr.bf16.mxu0 %v5268
    %5347 = vmatpush1.bf16.msra.mxu0 %v5267
    %5348 = vmatprep.subr.bf16.mxu0 %v5272
    %5349 = vmatpush1.bf16.msra.mxu0 %v5271
    %5350 = vmatprep.subr.bf16.mxu0 %v5276
    %5351 = vmatpush1.bf16.msra.mxu0 %v5275
    %5352 = vmatprep.mubr.bf16.mxu0 %v5150
    %5353 = vmatmul.mubr.bf16.gmra.mrb[0].mxu0 %v5149
    %v5354 = vpop.f32.mrb[0].mxu0
    %v5355 = vadd.f32 %v5314, %v5354
    %v5356 = vpop.f32.mrb[0].mxu0
    %v5357 = vadd.f32 %v5316, %v5356
    %v5358 = vpop.f32.mrb[0].mxu0
    %v5359 = vpop.f32.mrb[0].mxu0
    %5360 = vdwg.mxu0
    %5361 = vmatprep.subr.bf16.mxu0 %v5154
    %5362 = vmatpush1.bf16.msra.mxu0 %v5153
    %5363 = vmatprep.subr.bf16.mxu0 %v5158
    %5364 = vmatpush1.bf16.msra.mxu0 %v5157
    %5365 = vmatprep.subr.bf16.mxu0 %v5162
    %5366 = vmatpush1.bf16.msra.mxu0 %v5161
    %5367 = vmatprep.subr.bf16.mxu0 %v5166
    %5368 = vmatpush1.bf16.msra.mxu0 %v5165
    %5369 = vmatprep.subr.bf16.mxu0 %v5170
    %5370 = vmatpush1.bf16.msra.mxu0 %v5169
    %5371 = vmatprep.subr.bf16.mxu0 %v5174
    %5372 = vmatpush1.bf16.msra.mxu0 %v5173
    %5373 = vmatprep.subr.bf16.mxu0 %v5178
    %5374 = vmatpush1.bf16.msra.mxu0 %v5177
    %5375 = vmatprep.subr.bf16.mxu0 %v5182
    %5376 = vmatpush1.bf16.msra.mxu0 %v5181
    %5377 = vmatprep.subr.bf16.mxu0 %v5186
    %5378 = vmatpush1.bf16.msra.mxu0 %v5185
    %5379 = vmatprep.subr.bf16.mxu0 %v5190
    %5380 = vmatpush1.bf16.msra.mxu0 %v5189
    %5381 = vmatprep.subr.bf16.mxu0 %v5194
    %5382 = vmatpush1.bf16.msra.mxu0 %v5193
    %5383 = vmatprep.subr.bf16.mxu0 %v5198
    %5384 = vmatpush1.bf16.msra.mxu0 %v5197
    %5385 = vmatprep.subr.bf16.mxu0 %v5202
    %5386 = vmatpush1.bf16.msra.mxu0 %v5201
    %5387 = vmatprep.subr.bf16.mxu0 %v5206
    %5388 = vmatpush1.bf16.msra.mxu0 %v5205
    %5389 = vmatprep.subr.bf16.mxu0 %v5210
    %5390 = vmatpush1.bf16.msra.mxu0 %v5209
    %5391 = vmatprep.subr.bf16.mxu0 %v5214
    %5392 = vmatpush1.bf16.msra.mxu0 %v5213
    %5393 = vmatprep.mubr.bf16.mxu0 %v5148
    %5394 = vmatmul.mubr.bf16.gmra.mrb[0].mxu0 %v5147
    %v5395 = vpop.f32.mrb[0].mxu0
    %v5396 = vadd.f32 0.0, %v5395
    %v5397 = vpop.f32.mrb[0].mxu0
    %v5398 = vadd.f32 0.0, %v5397
    %v5399 = vpop.f32.mrb[0].mxu0
    %v5400 = vpop.f32.mrb[0].mxu0
    %5401 = vdwg.mxu0
    %5402 = vmatprep.subr.bf16.mxu0 %v5218
    %5403 = vmatpush1.bf16.msra.mxu0 %v5217
    %5404 = vmatprep.subr.bf16.mxu0 %v5222
    %5405 = vmatpush1.bf16.msra.mxu0 %v5221
    %5406 = vmatprep.subr.bf16.mxu0 %v5226
    %5407 = vmatpush1.bf16.msra.mxu0 %v5225
    %5408 = vmatprep.subr.bf16.mxu0 %v5230
    %5409 = vmatpush1.bf16.msra.mxu0 %v5229
    %5410 = vmatprep.subr.bf16.mxu0 %v5234
    %5411 = vmatpush1.bf16.msra.mxu0 %v5233
    %5412 = vmatprep.subr.bf16.mxu0 %v5238
    %5413 = vmatpush1.bf16.msra.mxu0 %v5237
    %5414 = vmatprep.subr.bf16.mxu0 %v5242
    %5415 = vmatpush1.bf16.msra.mxu0 %v5241
    %5416 = vmatprep.subr.bf16.mxu0 %v5246
    %5417 = vmatpush1.bf16.msra.mxu0 %v5245
    %5418 = vmatprep.subr.bf16.mxu0 %v5250
    %5419 = vmatpush1.bf16.msra.mxu0 %v5249
    %5420 = vmatprep.subr.bf16.mxu0 %v5254
    %5421 = vmatpush1.bf16.msra.mxu0 %v5253
    %5422 = vmatprep.subr.bf16.mxu0 %v5258
    %5423 = vmatpush1.bf16.msra.mxu0 %v5257
    %5424 = vmatprep.subr.bf16.mxu0 %v5262
    %5425 = vmatpush1.bf16.msra.mxu0 %v5261
    %5426 = vmatprep.subr.bf16.mxu0 %v5266
    %5427 = vmatpush1.bf16.msra.mxu0 %v5265
    %5428 = vmatprep.subr.bf16.mxu0 %v5270
    %5429 = vmatpush1.bf16.msra.mxu0 %v5269
    %5430 = vmatprep.subr.bf16.mxu0 %v5274
    %5431 = vmatpush1.bf16.msra.mxu0 %v5273
    %5432 = vmatprep.subr.bf16.mxu0 %v5278
    %5433 = vmatpush1.bf16.msra.mxu0 %v5277
    %5434 = vmatprep.mubr.bf16.mxu0 %v5150
    %5435 = vmatmul.mubr.bf16.gmra.mrb[0].mxu0 %v5149
    %v5436 = vpop.f32.mrb[0].mxu0
    %v5437 = vadd.f32 %v5396, %v5436
    %v5438 = vpop.f32.mrb[0].mxu0
    %v5439 = vadd.f32 %v5398, %v5438
    %v5440 = vpop.f32.mrb[0].mxu0
    %v5441 = vpop.f32.mrb[0].mxu0
    %5442 = vdwg.mxu0
    %v5443 = vadd.f32 %v5018, %v5355
    %v5444 = vadd.f32 %v5020, %v5357
    %v5445 = vadd.f32 %v5100, %v5437
    %v5446 = vadd.f32 %v5102, %v5439
    %s5447 = scalar_lea.hbm %s9, 65536
    %s5449 = sshll.u32 1, 14
    %s5450 = sxor.u32 4294967295, %s5449
    %s5452 = sadd.s32 2, %s162
    %s5454 = sshll.u32 7, 26
    %s5455 = sxor.u32 4294967295, %s5454
    %s5456 = sand.u32 0, %s5455
    %s5457 = sshll.u32 %s5452, 26
    %s5458 = sor.u32 %s5456, %s5457
    %s5459 = sshll.u32 [#allocation4], 4
    %s5460 = int_to_ptr.vmem [resolvable:$true] %s5459
    %5463 = sst [smem:[#allocation31]] 512
    %s5464 = scalar_lea.smem [#allocation31], 1
    %5465 = sst [smem:[%s5464]] 512
    %s5466 = scalar_lea.smem [#allocation31], 2
    %5467 = sst [smem:[%s5466]] 4
    %s5468 = scalar_lea.smem [#allocation31], 3
    %5469 = sst [smem:[%s5468]] 64
    %s5470 = scalar_lea.smem [#allocation31], 4
    %5471 = sst [smem:[%s5470]] 128
    %s5472 = scalar_lea.smem [#allocation31], 5
    %5473 = sst [smem:[%s5472]] 2
    %s5474 = scalar_lea.smem [#allocation31], 6
    %5475 = sst [smem:[%s5474]] 256
    %s5476 = scalar_lea.smem [#allocation31], 7
    %5477 = sst [smem:[%s5476]] 64
    %s5478 = scalar_lea.smem [#allocation31], 8
    %5479 = sst [smem:[%s5478]] 4
    %5481 = dma.general %s5447, 16384, %s5460, [#allocation5], [#allocation30], [#allocation31], %s5458, 0
    %s5482 = sshll.u32 %s4466, 4
    %5483 = dma.done %s195, %s5482
    %v5484 = vld [vmem:[#allocation3 + $0x60] sm:$0xff]
    %v5485 = vld [vmem:[#allocation3 + $0x68] sm:$0xff]
    %v5486 = vld [vmem:[#allocation3 + $0x70] sm:$0xff]
    %v5487 = vld [vmem:[#allocation3 + $0x78] sm:$0xff]
    %v5488 = vpack.c.bf16 %v5484, %v5484
    %v5489 = vpack.c.bf16 %v5485, %v5485
    %v5490 = vpack.c.bf16 %v5486, %v5486
    %v5491 = vpack.c.bf16 %v5487, %v5487
    %v5492 = vld [vmem:[%s194] sm:$0xff]
    %v5493 = vld [vmem:[%s194 + $0x8] sm:$0xff]
    %v5494 = vld [vmem:[%s194 + $0x10] sm:$0xff]
    %v5495 = vld [vmem:[%s194 + $0x18] sm:$0xff]
    %v5496 = vld [vmem:[%s194 + $0x20] sm:$0xff]
    %v5497 = vld [vmem:[%s194 + $0x28] sm:$0xff]
    %v5498 = vld [vmem:[%s194 + $0x30] sm:$0xff]
    %v5499 = vld [vmem:[%s194 + $0x38] sm:$0xff]
    %v5500 = vld [vmem:[%s194 + $0x40] sm:$0xff]
    %v5501 = vld [vmem:[%s194 + $0x48] sm:$0xff]
    %v5502 = vld [vmem:[%s194 + $0x50] sm:$0xff]
    %v5503 = vld [vmem:[%s194 + $0x58] sm:$0xff]
    %v5504 = vld [vmem:[%s194 + $0x60] sm:$0xff]
    %v5505 = vld [vmem:[%s194 + $0x68] sm:$0xff]
    %v5506 = vld [vmem:[%s194 + $0x70] sm:$0xff]
    %v5507 = vld [vmem:[%s194 + $0x78] sm:$0xff]
    %v5508 = vld [vmem:[%s194 + $0x80] sm:$0xff]
    %v5509 = vld [vmem:[%s194 + $0x88] sm:$0xff]
    %v5510 = vld [vmem:[%s194 + $0x90] sm:$0xff]
    %v5511 = vld [vmem:[%s194 + $0x98] sm:$0xff]
    %v5512 = vld [vmem:[%s194 + $0xa0] sm:$0xff]
    %v5513 = vld [vmem:[%s194 + $0xa8] sm:$0xff]
    %v5514 = vld [vmem:[%s194 + $0xb0] sm:$0xff]
    %v5515 = vld [vmem:[%s194 + $0xb8] sm:$0xff]
    %v5516 = vld [vmem:[%s194 + $0xc0] sm:$0xff]
    %v5517 = vld [vmem:[%s194 + $0xc8] sm:$0xff]
    %v5518 = vld [vmem:[%s194 + $0xd0] sm:$0xff]
    %v5519 = vld [vmem:[%s194 + $0xd8] sm:$0xff]
    %v5520 = vld [vmem:[%s194 + $0xe0] sm:$0xff]
    %v5521 = vld [vmem:[%s194 + $0xe8] sm:$0xff]
    %v5522 = vld [vmem:[%s194 + $0xf0] sm:$0xff]
    %v5523 = vld [vmem:[%s194 + $0xf8] sm:$0xff]
    %v5524 = vld [vmem:[%s194 + $0x100] sm:$0xff]
    %v5525 = vld [vmem:[%s194 + $0x108] sm:$0xff]
    %v5526 = vld [vmem:[%s194 + $0x110] sm:$0xff]
    %v5527 = vld [vmem:[%s194 + $0x118] sm:$0xff]
    %v5528 = vld [vmem:[%s194 + $0x120] sm:$0xff]
    %v5529 = vld [vmem:[%s194 + $0x128] sm:$0xff]
    %v5530 = vld [vmem:[%s194 + $0x130] sm:$0xff]
    %v5531 = vld [vmem:[%s194 + $0x138] sm:$0xff]
    %v5532 = vld [vmem:[%s194 + $0x140] sm:$0xff]
    %v5533 = vld [vmem:[%s194 + $0x148] sm:$0xff]
    %v5534 = vld [vmem:[%s194 + $0x150] sm:$0xff]
    %v5535 = vld [vmem:[%s194 + $0x158] sm:$0xff]
    %v5536 = vld [vmem:[%s194 + $0x160] sm:$0xff]
    %v5537 = vld [vmem:[%s194 + $0x168] sm:$0xff]
    %v5538 = vld [vmem:[%s194 + $0x170] sm:$0xff]
    %v5539 = vld [vmem:[%s194 + $0x178] sm:$0xff]
    %v5540 = vld [vmem:[%s194 + $0x180] sm:$0xff]
    %v5541 = vld [vmem:[%s194 + $0x188] sm:$0xff]
    %v5542 = vld [vmem:[%s194 + $0x190] sm:$0xff]
    %v5543 = vld [vmem:[%s194 + $0x198] sm:$0xff]
    %v5544 = vld [vmem:[%s194 + $0x1a0] sm:$0xff]
    %v5545 = vld [vmem:[%s194 + $0x1a8] sm:$0xff]
    %v5546 = vld [vmem:[%s194 + $0x1b0] sm:$0xff]
    %v5547 = vld [vmem:[%s194 + $0x1b8] sm:$0xff]
    %v5548 = vld [vmem:[%s194 + $0x1c0] sm:$0xff]
    %v5549 = vld [vmem:[%s194 + $0x1c8] sm:$0xff]
    %v5550 = vld [vmem:[%s194 + $0x1d0] sm:$0xff]
    %v5551 = vld [vmem:[%s194 + $0x1d8] sm:$0xff]
    %v5552 = vld [vmem:[%s194 + $0x1e0] sm:$0xff]
    %v5553 = vld [vmem:[%s194 + $0x1e8] sm:$0xff]
    %v5554 = vld [vmem:[%s194 + $0x1f0] sm:$0xff]
    %v5555 = vld [vmem:[%s194 + $0x1f8] sm:$0xff]
    %v5556 = vld [vmem:[%s194 + $0x200] sm:$0xff]
    %v5557 = vld [vmem:[%s194 + $0x208] sm:$0xff]
    %v5558 = vld [vmem:[%s194 + $0x210] sm:$0xff]
    %v5559 = vld [vmem:[%s194 + $0x218] sm:$0xff]
    %v5560 = vld [vmem:[%s194 + $0x220] sm:$0xff]
    %v5561 = vld [vmem:[%s194 + $0x228] sm:$0xff]
    %v5562 = vld [vmem:[%s194 + $0x230] sm:$0xff]
    %v5563 = vld [vmem:[%s194 + $0x238] sm:$0xff]
    %v5564 = vld [vmem:[%s194 + $0x240] sm:$0xff]
    %v5565 = vld [vmem:[%s194 + $0x248] sm:$0xff]
    %v5566 = vld [vmem:[%s194 + $0x250] sm:$0xff]
    %v5567 = vld [vmem:[%s194 + $0x258] sm:$0xff]
    %v5568 = vld [vmem:[%s194 + $0x260] sm:$0xff]
    %v5569 = vld [vmem:[%s194 + $0x268] sm:$0xff]
    %v5570 = vld [vmem:[%s194 + $0x270] sm:$0xff]
    %v5571 = vld [vmem:[%s194 + $0x278] sm:$0xff]
    %v5572 = vld [vmem:[%s194 + $0x280] sm:$0xff]
    %v5573 = vld [vmem:[%s194 + $0x288] sm:$0xff]
    %v5574 = vld [vmem:[%s194 + $0x290] sm:$0xff]
    %v5575 = vld [vmem:[%s194 + $0x298] sm:$0xff]
    %v5576 = vld [vmem:[%s194 + $0x2a0] sm:$0xff]
    %v5577 = vld [vmem:[%s194 + $0x2a8] sm:$0xff]
    %v5578 = vld [vmem:[%s194 + $0x2b0] sm:$0xff]
    %v5579 = vld [vmem:[%s194 + $0x2b8] sm:$0xff]
    %v5580 = vld [vmem:[%s194 + $0x2c0] sm:$0xff]
    %v5581 = vld [vmem:[%s194 + $0x2c8] sm:$0xff]
    %v5582 = vld [vmem:[%s194 + $0x2d0] sm:$0xff]
    %v5583 = vld [vmem:[%s194 + $0x2d8] sm:$0xff]
    %v5584 = vld [vmem:[%s194 + $0x2e0] sm:$0xff]
    %v5585 = vld [vmem:[%s194 + $0x2e8] sm:$0xff]
    %v5586 = vld [vmem:[%s194 + $0x2f0] sm:$0xff]
    %v5587 = vld [vmem:[%s194 + $0x2f8] sm:$0xff]
    %v5588 = vld [vmem:[%s194 + $0x300] sm:$0xff]
    %v5589 = vld [vmem:[%s194 + $0x308] sm:$0xff]
    %v5590 = vld [vmem:[%s194 + $0x310] sm:$0xff]
    %v5591 = vld [vmem:[%s194 + $0x318] sm:$0xff]
    %v5592 = vld [vmem:[%s194 + $0x320] sm:$0xff]
    %v5593 = vld [vmem:[%s194 + $0x328] sm:$0xff]
    %v5594 = vld [vmem:[%s194 + $0x330] sm:$0xff]
    %v5595 = vld [vmem:[%s194 + $0x338] sm:$0xff]
    %v5596 = vld [vmem:[%s194 + $0x340] sm:$0xff]
    %v5597 = vld [vmem:[%s194 + $0x348] sm:$0xff]
    %v5598 = vld [vmem:[%s194 + $0x350] sm:$0xff]
    %v5599 = vld [vmem:[%s194 + $0x358] sm:$0xff]
    %v5600 = vld [vmem:[%s194 + $0x360] sm:$0xff]
    %v5601 = vld [vmem:[%s194 + $0x368] sm:$0xff]
    %v5602 = vld [vmem:[%s194 + $0x370] sm:$0xff]
    %v5603 = vld [vmem:[%s194 + $0x378] sm:$0xff]
    %v5604 = vld [vmem:[%s194 + $0x380] sm:$0xff]
    %v5605 = vld [vmem:[%s194 + $0x388] sm:$0xff]
    %v5606 = vld [vmem:[%s194 + $0x390] sm:$0xff]
    %v5607 = vld [vmem:[%s194 + $0x398] sm:$0xff]
    %v5608 = vld [vmem:[%s194 + $0x3a0] sm:$0xff]
    %v5609 = vld [vmem:[%s194 + $0x3a8] sm:$0xff]
    %v5610 = vld [vmem:[%s194 + $0x3b0] sm:$0xff]
    %v5611 = vld [vmem:[%s194 + $0x3b8] sm:$0xff]
    %v5612 = vld [vmem:[%s194 + $0x3c0] sm:$0xff]
    %v5613 = vld [vmem:[%s194 + $0x3c8] sm:$0xff]
    %v5614 = vld [vmem:[%s194 + $0x3d0] sm:$0xff]
    %v5615 = vld [vmem:[%s194 + $0x3d8] sm:$0xff]
    %v5616 = vld [vmem:[%s194 + $0x3e0] sm:$0xff]
    %v5617 = vld [vmem:[%s194 + $0x3e8] sm:$0xff]
    %v5618 = vld [vmem:[%s194 + $0x3f0] sm:$0xff]
    %v5619 = vld [vmem:[%s194 + $0x3f8] sm:$0xff]
    %5620 = vmatprep.subr.bf16.mxu0 %v5493
    %5621 = vmatpush1.bf16.msra.mxu0 %v5492
    %5622 = vmatprep.subr.bf16.mxu0 %v5497
    %5623 = vmatpush1.bf16.msra.mxu0 %v5496
    %5624 = vmatprep.subr.bf16.mxu0 %v5501
    %5625 = vmatpush1.bf16.msra.mxu0 %v5500
    %5626 = vmatprep.subr.bf16.mxu0 %v5505
    %5627 = vmatpush1.bf16.msra.mxu0 %v5504
    %5628 = vmatprep.subr.bf16.mxu0 %v5509
    %5629 = vmatpush1.bf16.msra.mxu0 %v5508
    %5630 = vmatprep.subr.bf16.mxu0 %v5513
    %5631 = vmatpush1.bf16.msra.mxu0 %v5512
    %5632 = vmatprep.subr.bf16.mxu0 %v5517
    %5633 = vmatpush1.bf16.msra.mxu0 %v5516
    %5634 = vmatprep.subr.bf16.mxu0 %v5521
    %5635 = vmatpush1.bf16.msra.mxu0 %v5520
    %5636 = vmatprep.subr.bf16.mxu0 %v5525
    %5637 = vmatpush1.bf16.msra.mxu0 %v5524
    %5638 = vmatprep.subr.bf16.mxu0 %v5529
    %5639 = vmatpush1.bf16.msra.mxu0 %v5528
    %5640 = vmatprep.subr.bf16.mxu0 %v5533
    %5641 = vmatpush1.bf16.msra.mxu0 %v5532
    %5642 = vmatprep.subr.bf16.mxu0 %v5537
    %5643 = vmatpush1.bf16.msra.mxu0 %v5536
    %5644 = vmatprep.subr.bf16.mxu0 %v5541
    %5645 = vmatpush1.bf16.msra.mxu0 %v5540
    %5646 = vmatprep.subr.bf16.mxu0 %v5545
    %5647 = vmatpush1.bf16.msra.mxu0 %v5544
    %5648 = vmatprep.subr.bf16.mxu0 %v5549
    %5649 = vmatpush1.bf16.msra.mxu0 %v5548
    %5650 = vmatprep.subr.bf16.mxu0 %v5553
    %5651 = vmatpush1.bf16.msra.mxu0 %v5552
    %5652 = vmatprep.mubr.bf16.mxu0 %v5489
    %5653 = vmatmul.mubr.bf16.gmra.mrb[0].mxu0 %v5488
    %v5654 = vpop.f32.mrb[0].mxu0
    %v5655 = vadd.f32 0.0, %v5654
    %v5656 = vpop.f32.mrb[0].mxu0
    %v5657 = vadd.f32 0.0, %v5656
    %v5658 = vpop.f32.mrb[0].mxu0
    %v5659 = vpop.f32.mrb[0].mxu0
    %5660 = vdwg.mxu0
    %5661 = vmatprep.subr.bf16.mxu0 %v5557
    %5662 = vmatpush1.bf16.msra.mxu0 %v5556
    %5663 = vmatprep.subr.bf16.mxu0 %v5561
    %5664 = vmatpush1.bf16.msra.mxu0 %v5560
    %5665 = vmatprep.subr.bf16.mxu0 %v5565
    %5666 = vmatpush1.bf16.msra.mxu0 %v5564
    %5667 = vmatprep.subr.bf16.mxu0 %v5569
    %5668 = vmatpush1.bf16.msra.mxu0 %v5568
    %5669 = vmatprep.subr.bf16.mxu0 %v5573
    %5670 = vmatpush1.bf16.msra.mxu0 %v5572
    %5671 = vmatprep.subr.bf16.mxu0 %v5577
    %5672 = vmatpush1.bf16.msra.mxu0 %v5576
    %5673 = vmatprep.subr.bf16.mxu0 %v5581
    %5674 = vmatpush1.bf16.msra.mxu0 %v5580
    %5675 = vmatprep.subr.bf16.mxu0 %v5585
    %5676 = vmatpush1.bf16.msra.mxu0 %v5584
    %5677 = vmatprep.subr.bf16.mxu0 %v5589
    %5678 = vmatpush1.bf16.msra.mxu0 %v5588
    %5679 = vmatprep.subr.bf16.mxu0 %v5593
    %5680 = vmatpush1.bf16.msra.mxu0 %v5592
    %5681 = vmatprep.subr.bf16.mxu0 %v5597
    %5682 = vmatpush1.bf16.msra.mxu0 %v5596
    %5683 = vmatprep.subr.bf16.mxu0 %v5601
    %5684 = vmatpush1.bf16.msra.mxu0 %v5600
    %5685 = vmatprep.subr.bf16.mxu0 %v5605
    %5686 = vmatpush1.bf16.msra.mxu0 %v5604
    %5687 = vmatprep.subr.bf16.mxu0 %v5609
    %5688 = vmatpush1.bf16.msra.mxu0 %v5608
    %5689 = vmatprep.subr.bf16.mxu0 %v5613
    %5690 = vmatpush1.bf16.msra.mxu0 %v5612
    %5691 = vmatprep.subr.bf16.mxu0 %v5617
    %5692 = vmatpush1.bf16.msra.mxu0 %v5616
    %5693 = vmatprep.mubr.bf16.mxu0 %v5491
    %5694 = vmatmul.mubr.bf16.gmra.mrb[0].mxu0 %v5490
    %v5695 = vpop.f32.mrb[0].mxu0
    %v5696 = vadd.f32 %v5655, %v5695
    %v5697 = vpop.f32.mrb[0].mxu0
    %v5698 = vadd.f32 %v5657, %v5697
    %v5699 = vpop.f32.mrb[0].mxu0
    %v5700 = vpop.f32.mrb[0].mxu0
    %5701 = vdwg.mxu0
    %5702 = vmatprep.subr.bf16.mxu0 %v5495
    %5703 = vmatpush1.bf16.msra.mxu0 %v5494
    %5704 = vmatprep.subr.bf16.mxu0 %v5499
    %5705 = vmatpush1.bf16.msra.mxu0 %v5498
    %5706 = vmatprep.subr.bf16.mxu0 %v5503
    %5707 = vmatpush1.bf16.msra.mxu0 %v5502
    %5708 = vmatprep.subr.bf16.mxu0 %v5507
    %5709 = vmatpush1.bf16.msra.mxu0 %v5506
    %5710 = vmatprep.subr.bf16.mxu0 %v5511
    %5711 = vmatpush1.bf16.msra.mxu0 %v5510
    %5712 = vmatprep.subr.bf16.mxu0 %v5515
    %5713 = vmatpush1.bf16.msra.mxu0 %v5514
    %5714 = vmatprep.subr.bf16.mxu0 %v5519
    %5715 = vmatpush1.bf16.msra.mxu0 %v5518
    %5716 = vmatprep.subr.bf16.mxu0 %v5523
    %5717 = vmatpush1.bf16.msra.mxu0 %v5522
    %5718 = vmatprep.subr.bf16.mxu0 %v5527
    %5719 = vmatpush1.bf16.msra.mxu0 %v5526
    %5720 = vmatprep.subr.bf16.mxu0 %v5531
    %5721 = vmatpush1.bf16.msra.mxu0 %v5530
    %5722 = vmatprep.subr.bf16.mxu0 %v5535
    %5723 = vmatpush1.bf16.msra.mxu0 %v5534
    %5724 = vmatprep.subr.bf16.mxu0 %v5539
    %5725 = vmatpush1.bf16.msra.mxu0 %v5538
    %5726 = vmatprep.subr.bf16.mxu0 %v5543
    %5727 = vmatpush1.bf16.msra.mxu0 %v5542
    %5728 = vmatprep.subr.bf16.mxu0 %v5547
    %5729 = vmatpush1.bf16.msra.mxu0 %v5546
    %5730 = vmatprep.subr.bf16.mxu0 %v5551
    %5731 = vmatpush1.bf16.msra.mxu0 %v5550
    %5732 = vmatprep.subr.bf16.mxu0 %v5555
    %5733 = vmatpush1.bf16.msra.mxu0 %v5554
    %5734 = vmatprep.mubr.bf16.mxu0 %v5489
    %5735 = vmatmul.mubr.bf16.gmra.mrb[0].mxu0 %v5488
    %v5736 = vpop.f32.mrb[0].mxu0
    %v5737 = vadd.f32 0.0, %v5736
    %v5738 = vpop.f32.mrb[0].mxu0
    %v5739 = vadd.f32 0.0, %v5738
    %v5740 = vpop.f32.mrb[0].mxu0
    %v5741 = vpop.f32.mrb[0].mxu0
    %5742 = vdwg.mxu0
    %5743 = vmatprep.subr.bf16.mxu0 %v5559
    %5744 = vmatpush1.bf16.msra.mxu0 %v5558
    %5745 = vmatprep.subr.bf16.mxu0 %v5563
    %5746 = vmatpush1.bf16.msra.mxu0 %v5562
    %5747 = vmatprep.subr.bf16.mxu0 %v5567
    %5748 = vmatpush1.bf16.msra.mxu0 %v5566
    %5749 = vmatprep.subr.bf16.mxu0 %v5571
    %5750 = vmatpush1.bf16.msra.mxu0 %v5570
    %5751 = vmatprep.subr.bf16.mxu0 %v5575
    %5752 = vmatpush1.bf16.msra.mxu0 %v5574
    %5753 = vmatprep.subr.bf16.mxu0 %v5579
    %5754 = vmatpush1.bf16.msra.mxu0 %v5578
    %5755 = vmatprep.subr.bf16.mxu0 %v5583
    %5756 = vmatpush1.bf16.msra.mxu0 %v5582
    %5757 = vmatprep.subr.bf16.mxu0 %v5587
    %5758 = vmatpush1.bf16.msra.mxu0 %v5586
    %5759 = vmatprep.subr.bf16.mxu0 %v5591
    %5760 = vmatpush1.bf16.msra.mxu0 %v5590
    %5761 = vmatprep.subr.bf16.mxu0 %v5595
    %5762 = vmatpush1.bf16.msra.mxu0 %v5594
    %5763 = vmatprep.subr.bf16.mxu0 %v5599
    %5764 = vmatpush1.bf16.msra.mxu0 %v5598
    %5765 = vmatprep.subr.bf16.mxu0 %v5603
    %5766 = vmatpush1.bf16.msra.mxu0 %v5602
    %5767 = vmatprep.subr.bf16.mxu0 %v5607
    %5768 = vmatpush1.bf16.msra.mxu0 %v5606
    %5769 = vmatprep.subr.bf16.mxu0 %v5611
    %5770 = vmatpush1.bf16.msra.mxu0 %v5610
    %5771 = vmatprep.subr.bf16.mxu0 %v5615
    %5772 = vmatpush1.bf16.msra.mxu0 %v5614
    %5773 = vmatprep.subr.bf16.mxu0 %v5619
    %5774 = vmatpush1.bf16.msra.mxu0 %v5618
    %5775 = vmatprep.mubr.bf16.mxu0 %v5491
    %5776 = vmatmul.mubr.bf16.gmra.mrb[0].mxu0 %v5490
    %v5777 = vpop.f32.mrb[0].mxu0
    %v5778 = vadd.f32 %v5737, %v5777
    %v5779 = vpop.f32.mrb[0].mxu0
    %v5780 = vadd.f32 %v5739, %v5779
    %v5781 = vpop.f32.mrb[0].mxu0
    %v5782 = vpop.f32.mrb[0].mxu0
    %5783 = vdwg.mxu0
    %v5784 = vadd.f32 %v5443, %v5696
    %v5785 = vadd.f32 %v5444, %v5698
    %v5786 = vadd.f32 %v5445, %v5778
    %v5787 = vadd.f32 %v5446, %v5780
    %s5788 = scalar_lea.hbm %s9, 81920
    %s5790 = sshll.u32 1, 14
    %s5791 = sxor.u32 4294967295, %s5790
    %s5793 = sadd.s32 2, %s162
    %s5795 = sshll.u32 7, 26
    %s5796 = sxor.u32 4294967295, %s5795
    %s5797 = sand.u32 0, %s5796
    %s5798 = sshll.u32 %s5793, 26
    %s5799 = sor.u32 %s5797, %s5798
    %s5800 = sshll.u32 %s194, 4
    %s5801 = int_to_ptr.vmem [resolvable:$true] %s5800
    %5804 = sst [smem:[#allocation33]] 512
    %s5805 = scalar_lea.smem [#allocation33], 1
    %5806 = sst [smem:[%s5805]] 512
    %s5807 = scalar_lea.smem [#allocation33], 2
    %5808 = sst [smem:[%s5807]] 4
    %s5809 = scalar_lea.smem [#allocation33], 3
    %5810 = sst [smem:[%s5809]] 64
    %s5811 = scalar_lea.smem [#allocation33], 4
    %5812 = sst [smem:[%s5811]] 128
    %s5813 = scalar_lea.smem [#allocation33], 5
    %5814 = sst [smem:[%s5813]] 2
    %s5815 = scalar_lea.smem [#allocation33], 6
    %5816 = sst [smem:[%s5815]] 256
    %s5817 = scalar_lea.smem [#allocation33], 7
    %5818 = sst [smem:[%s5817]] 64
    %s5819 = scalar_lea.smem [#allocation33], 8
    %5820 = sst [smem:[%s5819]] 4
    %5822 = dma.general %s5788, 16384, %s5801, %s195, [#allocation32], [#allocation33], %s5799, 0
    %s5823 = sshll.u32 %s4466, 4
    %5824 = dma.done [#allocation5], %s5823
    %v5825 = vld [vmem:[#allocation3 + $0x80] sm:$0xff]
    %v5826 = vld [vmem:[#allocation3 + $0x88] sm:$0xff]
    %v5827 = vld [vmem:[#allocation3 + $0x90] sm:$0xff]
    %v5828 = vld [vmem:[#allocation3 + $0x98] sm:$0xff]
    %v5829 = vpack.c.bf16 %v5825, %v5825
    %v5830 = vpack.c.bf16 %v5826, %v5826
    %v5831 = vpack.c.bf16 %v5827, %v5827
    %v5832 = vpack.c.bf16 %v5828, %v5828
    %v5833 = vld [vmem:[#allocation4] sm:$0xff]
    %v5834 = vld [vmem:[#allocation4 + $0x8] sm:$0xff]
    %v5835 = vld [vmem:[#allocation4 + $0x10] sm:$0xff]
    %v5836 = vld [vmem:[#allocation4 + $0x18] sm:$0xff]
    %v5837 = vld [vmem:[#allocation4 + $0x20] sm:$0xff]
    %v5838 = vld [vmem:[#allocation4 + $0x28] sm:$0xff]
    %v5839 = vld [vmem:[#allocation4 + $0x30] sm:$0xff]
    %v5840 = vld [vmem:[#allocation4 + $0x38] sm:$0xff]
    %v5841 = vld [vmem:[#allocation4 + $0x40] sm:$0xff]
    %v5842 = vld [vmem:[#allocation4 + $0x48] sm:$0xff]
    %v5843 = vld [vmem:[#allocation4 + $0x50] sm:$0xff]
    %v5844 = vld [vmem:[#allocation4 + $0x58] sm:$0xff]
    %v5845 = vld [vmem:[#allocation4 + $0x60] sm:$0xff]
    %v5846 = vld [vmem:[#allocation4 + $0x68] sm:$0xff]
    %v5847 = vld [vmem:[#allocation4 + $0x70] sm:$0xff]
    %v5848 = vld [vmem:[#allocation4 + $0x78] sm:$0xff]
    %v5849 = vld [vmem:[#allocation4 + $0x80] sm:$0xff]
    %v5850 = vld [vmem:[#allocation4 + $0x88] sm:$0xff]
    %v5851 = vld [vmem:[#allocation4 + $0x90] sm:$0xff]
    %v5852 = vld [vmem:[#allocation4 + $0x98] sm:$0xff]
    %v5853 = vld [vmem:[#allocation4 + $0xa0] sm:$0xff]
    %v5854 = vld [vmem:[#allocation4 + $0xa8] sm:$0xff]
    %v5855 = vld [vmem:[#allocation4 + $0xb0] sm:$0xff]
    %v5856 = vld [vmem:[#allocation4 + $0xb8] sm:$0xff]
    %v5857 = vld [vmem:[#allocation4 + $0xc0] sm:$0xff]
    %v5858 = vld [vmem:[#allocation4 + $0xc8] sm:$0xff]
    %v5859 = vld [vmem:[#allocation4 + $0xd0] sm:$0xff]
    %v5860 = vld [vmem:[#allocation4 + $0xd8] sm:$0xff]
    %v5861 = vld [vmem:[#allocation4 + $0xe0] sm:$0xff]
    %v5862 = vld [vmem:[#allocation4 + $0xe8] sm:$0xff]
    %v5863 = vld [vmem:[#allocation4 + $0xf0] sm:$0xff]
    %v5864 = vld [vmem:[#allocation4 + $0xf8] sm:$0xff]
    %v5865 = vld [vmem:[#allocation4 + $0x100] sm:$0xff]
    %v5866 = vld [vmem:[#allocation4 + $0x108] sm:$0xff]
    %v5867 = vld [vmem:[#allocation4 + $0x110] sm:$0xff]
    %v5868 = vld [vmem:[#allocation4 + $0x118] sm:$0xff]
    %v5869 = vld [vmem:[#allocation4 + $0x120] sm:$0xff]
    %v5870 = vld [vmem:[#allocation4 + $0x128] sm:$0xff]
    %v5871 = vld [vmem:[#allocation4 + $0x130] sm:$0xff]
    %v5872 = vld [vmem:[#allocation4 + $0x138] sm:$0xff]
    %v5873 = vld [vmem:[#allocation4 + $0x140] sm:$0xff]
    %v5874 = vld [vmem:[#allocation4 + $0x148] sm:$0xff]
    %v5875 = vld [vmem:[#allocation4 + $0x150] sm:$0xff]
    %v5876 = vld [vmem:[#allocation4 + $0x158] sm:$0xff]
    %v5877 = vld [vmem:[#allocation4 + $0x160] sm:$0xff]
    %v5878 = vld [vmem:[#allocation4 + $0x168] sm:$0xff]
    %v5879 = vld [vmem:[#allocation4 + $0x170] sm:$0xff]
    %v5880 = vld [vmem:[#allocation4 + $0x178] sm:$0xff]
    %v5881 = vld [vmem:[#allocation4 + $0x180] sm:$0xff]
    %v5882 = vld [vmem:[#allocation4 + $0x188] sm:$0xff]
    %v5883 = vld [vmem:[#allocation4 + $0x190] sm:$0xff]
    %v5884 = vld [vmem:[#allocation4 + $0x198] sm:$0xff]
    %v5885 = vld [vmem:[#allocation4 + $0x1a0] sm:$0xff]
    %v5886 = vld [vmem:[#allocation4 + $0x1a8] sm:$0xff]
    %v5887 = vld [vmem:[#allocation4 + $0x1b0] sm:$0xff]
    %v5888 = vld [vmem:[#allocation4 + $0x1b8] sm:$0xff]
    %v5889 = vld [vmem:[#allocation4 + $0x1c0] sm:$0xff]
    %v5890 = vld [vmem:[#allocation4 + $0x1c8] sm:$0xff]
    %v5891 = vld [vmem:[#allocation4 + $0x1d0] sm:$0xff]
    %v5892 = vld [vmem:[#allocation4 + $0x1d8] sm:$0xff]
    %v5893 = vld [vmem:[#allocation4 + $0x1e0] sm:$0xff]
    %v5894 = vld [vmem:[#allocation4 + $0x1e8] sm:$0xff]
    %v5895 = vld [vmem:[#allocation4 + $0x1f0] sm:$0xff]
    %v5896 = vld [vmem:[#allocation4 + $0x1f8] sm:$0xff]
    %v5897 = vld [vmem:[#allocation4 + $0x200] sm:$0xff]
    %v5898 = vld [vmem:[#allocation4 + $0x208] sm:$0xff]
    %v5899 = vld [vmem:[#allocation4 + $0x210] sm:$0xff]
    %v5900 = vld [vmem:[#allocation4 + $0x218] sm:$0xff]
    %v5901 = vld [vmem:[#allocation4 + $0x220] sm:$0xff]
    %v5902 = vld [vmem:[#allocation4 + $0x228] sm:$0xff]
    %v5903 = vld [vmem:[#allocation4 + $0x230] sm:$0xff]
    %v5904 = vld [vmem:[#allocation4 + $0x238] sm:$0xff]
    %v5905 = vld [vmem:[#allocation4 + $0x240] sm:$0xff]
    %v5906 = vld [vmem:[#allocation4 + $0x248] sm:$0xff]
    %v5907 = vld [vmem:[#allocation4 + $0x250] sm:$0xff]
    %v5908 = vld [vmem:[#allocation4 + $0x258] sm:$0xff]
    %v5909 = vld [vmem:[#allocation4 + $0x260] sm:$0xff]
    %v5910 = vld [vmem:[#allocation4 + $0x268] sm:$0xff]
    %v5911 = vld [vmem:[#allocation4 + $0x270] sm:$0xff]
    %v5912 = vld [vmem:[#allocation4 + $0x278] sm:$0xff]
    %v5913 = vld [vmem:[#allocation4 + $0x280] sm:$0xff]
    %v5914 = vld [vmem:[#allocation4 + $0x288] sm:$0xff]
    %v5915 = vld [vmem:[#allocation4 + $0x290] sm:$0xff]
    %v5916 = vld [vmem:[#allocation4 + $0x298] sm:$0xff]
    %v5917 = vld [vmem:[#allocation4 + $0x2a0] sm:$0xff]
    %v5918 = vld [vmem:[#allocation4 + $0x2a8] sm:$0xff]
    %v5919 = vld [vmem:[#allocation4 + $0x2b0] sm:$0xff]
    %v5920 = vld [vmem:[#allocation4 + $0x2b8] sm:$0xff]
    %v5921 = vld [vmem:[#allocation4 + $0x2c0] sm:$0xff]
    %v5922 = vld [vmem:[#allocation4 + $0x2c8] sm:$0xff]
    %v5923 = vld [vmem:[#allocation4 + $0x2d0] sm:$0xff]
    %v5924 = vld [vmem:[#allocation4 + $0x2d8] sm:$0xff]
    %v5925 = vld [vmem:[#allocation4 + $0x2e0] sm:$0xff]
    %v5926 = vld [vmem:[#allocation4 + $0x2e8] sm:$0xff]
    %v5927 = vld [vmem:[#allocation4 + $0x2f0] sm:$0xff]
    %v5928 = vld [vmem:[#allocation4 + $0x2f8] sm:$0xff]
    %v5929 = vld [vmem:[#allocation4 + $0x300] sm:$0xff]
    %v5930 = vld [vmem:[#allocation4 + $0x308] sm:$0xff]
    %v5931 = vld [vmem:[#allocation4 + $0x310] sm:$0xff]
    %v5932 = vld [vmem:[#allocation4 + $0x318] sm:$0xff]
    %v5933 = vld [vmem:[#allocation4 + $0x320] sm:$0xff]
    %v5934 = vld [vmem:[#allocation4 + $0x328] sm:$0xff]
    %v5935 = vld [vmem:[#allocation4 + $0x330] sm:$0xff]
    %v5936 = vld [vmem:[#allocation4 + $0x338] sm:$0xff]
    %v5937 = vld [vmem:[#allocation4 + $0x340] sm:$0xff]
    %v5938 = vld [vmem:[#allocation4 + $0x348] sm:$0xff]
    %v5939 = vld [vmem:[#allocation4 + $0x350] sm:$0xff]
    %v5940 = vld [vmem:[#allocation4 + $0x358] sm:$0xff]
    %v5941 = vld [vmem:[#allocation4 + $0x360] sm:$0xff]
    %v5942 = vld [vmem:[#allocation4 + $0x368] sm:$0xff]
    %v5943 = vld [vmem:[#allocation4 + $0x370] sm:$0xff]
    %v5944 = vld [vmem:[#allocation4 + $0x378] sm:$0xff]
    %v5945 = vld [vmem:[#allocation4 + $0x380] sm:$0xff]
    %v5946 = vld [vmem:[#allocation4 + $0x388] sm:$0xff]
    %v5947 = vld [vmem:[#allocation4 + $0x390] sm:$0xff]
    %v5948 = vld [vmem:[#allocation4 + $0x398] sm:$0xff]
    %v5949 = vld [vmem:[#allocation4 + $0x3a0] sm:$0xff]
    %v5950 = vld [vmem:[#allocation4 + $0x3a8] sm:$0xff]
    %v5951 = vld [vmem:[#allocation4 + $0x3b0] sm:$0xff]
    %v5952 = vld [vmem:[#allocation4 + $0x3b8] sm:$0xff]
    %v5953 = vld [vmem:[#allocation4 + $0x3c0] sm:$0xff]
    %v5954 = vld [vmem:[#allocation4 + $0x3c8] sm:$0xff]
    %v5955 = vld [vmem:[#allocation4 + $0x3d0] sm:$0xff]
    %v5956 = vld [vmem:[#allocation4 + $0x3d8] sm:$0xff]
    %v5957 = vld [vmem:[#allocation4 + $0x3e0] sm:$0xff]
    %v5958 = vld [vmem:[#allocation4 + $0x3e8] sm:$0xff]
    %v5959 = vld [vmem:[#allocation4 + $0x3f0] sm:$0xff]
    %v5960 = vld [vmem:[#allocation4 + $0x3f8] sm:$0xff]
    %5961 = vmatprep.subr.bf16.mxu0 %v5834
    %5962 = vmatpush1.bf16.msra.mxu0 %v5833
    %5963 = vmatprep.subr.bf16.mxu0 %v5838
    %5964 = vmatpush1.bf16.msra.mxu0 %v5837
    %5965 = vmatprep.subr.bf16.mxu0 %v5842
    %5966 = vmatpush1.bf16.msra.mxu0 %v5841
    %5967 = vmatprep.subr.bf16.mxu0 %v5846
    %5968 = vmatpush1.bf16.msra.mxu0 %v5845
    %5969 = vmatprep.subr.bf16.mxu0 %v5850
    %5970 = vmatpush1.bf16.msra.mxu0 %v5849
    %5971 = vmatprep.subr.bf16.mxu0 %v5854
    %5972 = vmatpush1.bf16.msra.mxu0 %v5853
    %5973 = vmatprep.subr.bf16.mxu0 %v5858
    %5974 = vmatpush1.bf16.msra.mxu0 %v5857
    %5975 = vmatprep.subr.bf16.mxu0 %v5862
    %5976 = vmatpush1.bf16.msra.mxu0 %v5861
    %5977 = vmatprep.subr.bf16.mxu0 %v5866
    %5978 = vmatpush1.bf16.msra.mxu0 %v5865
    %5979 = vmatprep.subr.bf16.mxu0 %v5870
    %5980 = vmatpush1.bf16.msra.mxu0 %v5869
    %5981 = vmatprep.subr.bf16.mxu0 %v5874
    %5982 = vmatpush1.bf16.msra.mxu0 %v5873
    %5983 = vmatprep.subr.bf16.mxu0 %v5878
    %5984 = vmatpush1.bf16.msra.mxu0 %v5877
    %5985 = vmatprep.subr.bf16.mxu0 %v5882
    %5986 = vmatpush1.bf16.msra.mxu0 %v5881
    %5987 = vmatprep.subr.bf16.mxu0 %v5886
    %5988 = vmatpush1.bf16.msra.mxu0 %v5885
    %5989 = vmatprep.subr.bf16.mxu0 %v5890
    %5990 = vmatpush1.bf16.msra.mxu0 %v5889
    %5991 = vmatprep.subr.bf16.mxu0 %v5894
    %5992 = vmatpush1.bf16.msra.mxu0 %v5893
    %5993 = vmatprep.mubr.bf16.mxu0 %v5830
    %5994 = vmatmul.mubr.bf16.gmra.mrb[0].mxu0 %v5829
    %v5995 = vpop.f32.mrb[0].mxu0
    %v5996 = vadd.f32 0.0, %v5995
    %v5997 = vpop.f32.mrb[0].mxu0
    %v5998 = vadd.f32 0.0, %v5997
    %v5999 = vpop.f32.mrb[0].mxu0
    %v6000 = vpop.f32.mrb[0].mxu0
    %6001 = vdwg.mxu0
    %6002 = vmatprep.subr.bf16.mxu0 %v5898
    %6003 = vmatpush1.bf16.msra.mxu0 %v5897
    %6004 = vmatprep.subr.bf16.mxu0 %v5902
    %6005 = vmatpush1.bf16.msra.mxu0 %v5901
    %6006 = vmatprep.subr.bf16.mxu0 %v5906
    %6007 = vmatpush1.bf16.msra.mxu0 %v5905
    %6008 = vmatprep.subr.bf16.mxu0 %v5910
    %6009 = vmatpush1.bf16.msra.mxu0 %v5909
    %6010 = vmatprep.subr.bf16.mxu0 %v5914
    %6011 = vmatpush1.bf16.msra.mxu0 %v5913
    %6012 = vmatprep.subr.bf16.mxu0 %v5918
    %6013 = vmatpush1.bf16.msra.mxu0 %v5917
    %6014 = vmatprep.subr.bf16.mxu0 %v5922
    %6015 = vmatpush1.bf16.msra.mxu0 %v5921
    %6016 = vmatprep.subr.bf16.mxu0 %v5926
    %6017 = vmatpush1.bf16.msra.mxu0 %v5925
    %6018 = vmatprep.subr.bf16.mxu0 %v5930
    %6019 = vmatpush1.bf16.msra.mxu0 %v5929
    %6020 = vmatprep.subr.bf16.mxu0 %v5934
    %6021 = vmatpush1.bf16.msra.mxu0 %v5933
    %6022 = vmatprep.subr.bf16.mxu0 %v5938
    %6023 = vmatpush1.bf16.msra.mxu0 %v5937
    %6024 = vmatprep.subr.bf16.mxu0 %v5942
    %6025 = vmatpush1.bf16.msra.mxu0 %v5941
    %6026 = vmatprep.subr.bf16.mxu0 %v5946
    %6027 = vmatpush1.bf16.msra.mxu0 %v5945
    %6028 = vmatprep.subr.bf16.mxu0 %v5950
    %6029 = vmatpush1.bf16.msra.mxu0 %v5949
    %6030 = vmatprep.subr.bf16.mxu0 %v5954
    %6031 = vmatpush1.bf16.msra.mxu0 %v5953
    %6032 = vmatprep.subr.bf16.mxu0 %v5958
    %6033 = vmatpush1.bf16.msra.mxu0 %v5957
    %6034 = vmatprep.mubr.bf16.mxu0 %v5832
    %6035 = vmatmul.mubr.bf16.gmra.mrb[0].mxu0 %v5831
    %v6036 = vpop.f32.mrb[0].mxu0
    %v6037 = vadd.f32 %v5996, %v6036
    %v6038 = vpop.f32.mrb[0].mxu0
    %v6039 = vadd.f32 %v5998, %v6038
    %v6040 = vpop.f32.mrb[0].mxu0
    %v6041 = vpop.f32.mrb[0].mxu0
    %6042 = vdwg.mxu0
    %6043 = vmatprep.subr.bf16.mxu0 %v5836
    %6044 = vmatpush1.bf16.msra.mxu0 %v5835
    %6045 = vmatprep.subr.bf16.mxu0 %v5840
    %6046 = vmatpush1.bf16.msra.mxu0 %v5839
    %6047 = vmatprep.subr.bf16.mxu0 %v5844
    %6048 = vmatpush1.bf16.msra.mxu0 %v5843
    %6049 = vmatprep.subr.bf16.mxu0 %v5848
    %6050 = vmatpush1.bf16.msra.mxu0 %v5847
    %6051 = vmatprep.subr.bf16.mxu0 %v5852
    %6052 = vmatpush1.bf16.msra.mxu0 %v5851
    %6053 = vmatprep.subr.bf16.mxu0 %v5856
    %6054 = vmatpush1.bf16.msra.mxu0 %v5855
    %6055 = vmatprep.subr.bf16.mxu0 %v5860
    %6056 = vmatpush1.bf16.msra.mxu0 %v5859
    %6057 = vmatprep.subr.bf16.mxu0 %v5864
    %6058 = vmatpush1.bf16.msra.mxu0 %v5863
    %6059 = vmatprep.subr.bf16.mxu0 %v5868
    %6060 = vmatpush1.bf16.msra.mxu0 %v5867
    %6061 = vmatprep.subr.bf16.mxu0 %v5872
    %6062 = vmatpush1.bf16.msra.mxu0 %v5871
    %6063 = vmatprep.subr.bf16.mxu0 %v5876
    %6064 = vmatpush1.bf16.msra.mxu0 %v5875
    %6065 = vmatprep.subr.bf16.mxu0 %v5880
    %6066 = vmatpush1.bf16.msra.mxu0 %v5879
    %6067 = vmatprep.subr.bf16.mxu0 %v5884
    %6068 = vmatpush1.bf16.msra.mxu0 %v5883
    %6069 = vmatprep.subr.bf16.mxu0 %v5888
    %6070 = vmatpush1.bf16.msra.mxu0 %v5887
    %6071 = vmatprep.subr.bf16.mxu0 %v5892
    %6072 = vmatpush1.bf16.msra.mxu0 %v5891
    %6073 = vmatprep.subr.bf16.mxu0 %v5896
    %6074 = vmatpush1.bf16.msra.mxu0 %v5895
    %6075 = vmatprep.mubr.bf16.mxu0 %v5830
    %6076 = vmatmul.mubr.bf16.gmra.mrb[0].mxu0 %v5829
    %v6077 = vpop.f32.mrb[0].mxu0
    %v6078 = vadd.f32 0.0, %v6077
    %v6079 = vpop.f32.mrb[0].mxu0
    %v6080 = vadd.f32 0.0, %v6079
    %v6081 = vpop.f32.mrb[0].mxu0
    %v6082 = vpop.f32.mrb[0].mxu0
    %6083 = vdwg.mxu0
    %6084 = vmatprep.subr.bf16.mxu0 %v5900
    %6085 = vmatpush1.bf16.msra.mxu0 %v5899
    %6086 = vmatprep.subr.bf16.mxu0 %v5904
    %6087 = vmatpush1.bf16.msra.mxu0 %v5903
    %6088 = vmatprep.subr.bf16.mxu0 %v5908
    %6089 = vmatpush1.bf16.msra.mxu0 %v5907
    %6090 = vmatprep.subr.bf16.mxu0 %v5912
    %6091 = vmatpush1.bf16.msra.mxu0 %v5911
    %6092 = vmatprep.subr.bf16.mxu0 %v5916
    %6093 = vmatpush1.bf16.msra.mxu0 %v5915
    %6094 = vmatprep.subr.bf16.mxu0 %v5920
    %6095 = vmatpush1.bf16.msra.mxu0 %v5919
    %6096 = vmatprep.subr.bf16.mxu0 %v5924
    %6097 = vmatpush1.bf16.msra.mxu0 %v5923
    %6098 = vmatprep.subr.bf16.mxu0 %v5928
    %6099 = vmatpush1.bf16.msra.mxu0 %v5927
    %6100 = vmatprep.subr.bf16.mxu0 %v5932
    %6101 = vmatpush1.bf16.msra.mxu0 %v5931
    %6102 = vmatprep.subr.bf16.mxu0 %v5936
    %6103 = vmatpush1.bf16.msra.mxu0 %v5935
    %6104 = vmatprep.subr.bf16.mxu0 %v5940
    %6105 = vmatpush1.bf16.msra.mxu0 %v5939
    %6106 = vmatprep.subr.bf16.mxu0 %v5944
    %6107 = vmatpush1.bf16.msra.mxu0 %v5943
    %6108 = vmatprep.subr.bf16.mxu0 %v5948
    %6109 = vmatpush1.bf16.msra.mxu0 %v5947
    %6110 = vmatprep.subr.bf16.mxu0 %v5952
    %6111 = vmatpush1.bf16.msra.mxu0 %v5951
    %6112 = vmatprep.subr.bf16.mxu0 %v5956
    %6113 = vmatpush1.bf16.msra.mxu0 %v5955
    %6114 = vmatprep.subr.bf16.mxu0 %v5960
    %6115 = vmatpush1.bf16.msra.mxu0 %v5959
    %6116 = vmatprep.mubr.bf16.mxu0 %v5832
    %6117 = vmatmul.mubr.bf16.gmra.mrb[0].mxu0 %v5831
    %v6118 = vpop.f32.mrb[0].mxu0
    %v6119 = vadd.f32 %v6078, %v6118
    %v6120 = vpop.f32.mrb[0].mxu0
    %v6121 = vadd.f32 %v6080, %v6120
    %v6122 = vpop.f32.mrb[0].mxu0
    %v6123 = vpop.f32.mrb[0].mxu0
    %6124 = vdwg.mxu0
    %v6125 = vadd.f32 %v5784, %v6037
    %v6126 = vadd.f32 %v5785, %v6039
    %v6127 = vadd.f32 %v5786, %v6119
    %v6128 = vadd.f32 %v5787, %v6121
    %s6129 = sshll.u32 %s4466, 4
    %6130 = dma.done %s195, %s6129
    %v6131 = vld [vmem:[#allocation3 + $0xa0] sm:$0xff]
    %v6132 = vld [vmem:[#allocation3 + $0xa8] sm:$0xff]
    %v6133 = vld [vmem:[#allocation3 + $0xb0] sm:$0xff]
    %v6134 = vld [vmem:[#allocation3 + $0xb8] sm:$0xff]
    %v6135 = vpack.c.bf16 %v6131, %v6131
    %v6136 = vpack.c.bf16 %v6132, %v6132
    %v6137 = vpack.c.bf16 %v6133, %v6133
    %v6138 = vpack.c.bf16 %v6134, %v6134
    %v6139 = vld [vmem:[%s194] sm:$0xff]
    %v6140 = vld [vmem:[%s194 + $0x8] sm:$0xff]
    %v6141 = vld [vmem:[%s194 + $0x10] sm:$0xff]
    %v6142 = vld [vmem:[%s194 + $0x18] sm:$0xff]
    %v6143 = vld [vmem:[%s194 + $0x20] sm:$0xff]
    %v6144 = vld [vmem:[%s194 + $0x28] sm:$0xff]
    %v6145 = vld [vmem:[%s194 + $0x30] sm:$0xff]
    %v6146 = vld [vmem:[%s194 + $0x38] sm:$0xff]
    %v6147 = vld [vmem:[%s194 + $0x40] sm:$0xff]
    %v6148 = vld [vmem:[%s194 + $0x48] sm:$0xff]
    %v6149 = vld [vmem:[%s194 + $0x50] sm:$0xff]
    %v6150 = vld [vmem:[%s194 + $0x58] sm:$0xff]
    %v6151 = vld [vmem:[%s194 + $0x60] sm:$0xff]
    %v6152 = vld [vmem:[%s194 + $0x68] sm:$0xff]
    %v6153 = vld [vmem:[%s194 + $0x70] sm:$0xff]
    %v6154 = vld [vmem:[%s194 + $0x78] sm:$0xff]
    %v6155 = vld [vmem:[%s194 + $0x80] sm:$0xff]
    %v6156 = vld [vmem:[%s194 + $0x88] sm:$0xff]
    %v6157 = vld [vmem:[%s194 + $0x90] sm:$0xff]
    %v6158 = vld [vmem:[%s194 + $0x98] sm:$0xff]
    %v6159 = vld [vmem:[%s194 + $0xa0] sm:$0xff]
    %v6160 = vld [vmem:[%s194 + $0xa8] sm:$0xff]
    %v6161 = vld [vmem:[%s194 + $0xb0] sm:$0xff]
    %v6162 = vld [vmem:[%s194 + $0xb8] sm:$0xff]
    %v6163 = vld [vmem:[%s194 + $0xc0] sm:$0xff]
    %v6164 = vld [vmem:[%s194 + $0xc8] sm:$0xff]
    %v6165 = vld [vmem:[%s194 + $0xd0] sm:$0xff]
    %v6166 = vld [vmem:[%s194 + $0xd8] sm:$0xff]
    %v6167 = vld [vmem:[%s194 + $0xe0] sm:$0xff]
    %v6168 = vld [vmem:[%s194 + $0xe8] sm:$0xff]
    %v6169 = vld [vmem:[%s194 + $0xf0] sm:$0xff]
    %v6170 = vld [vmem:[%s194 + $0xf8] sm:$0xff]
    %v6171 = vld [vmem:[%s194 + $0x100] sm:$0xff]
    %v6172 = vld [vmem:[%s194 + $0x108] sm:$0xff]
    %v6173 = vld [vmem:[%s194 + $0x110] sm:$0xff]
    %v6174 = vld [vmem:[%s194 + $0x118] sm:$0xff]
    %v6175 = vld [vmem:[%s194 + $0x120] sm:$0xff]
    %v6176 = vld [vmem:[%s194 + $0x128] sm:$0xff]
    %v6177 = vld [vmem:[%s194 + $0x130] sm:$0xff]
    %v6178 = vld [vmem:[%s194 + $0x138] sm:$0xff]
    %v6179 = vld [vmem:[%s194 + $0x140] sm:$0xff]
    %v6180 = vld [vmem:[%s194 + $0x148] sm:$0xff]
    %v6181 = vld [vmem:[%s194 + $0x150] sm:$0xff]
    %v6182 = vld [vmem:[%s194 + $0x158] sm:$0xff]
    %v6183 = vld [vmem:[%s194 + $0x160] sm:$0xff]
    %v6184 = vld [vmem:[%s194 + $0x168] sm:$0xff]
    %v6185 = vld [vmem:[%s194 + $0x170] sm:$0xff]
    %v6186 = vld [vmem:[%s194 + $0x178] sm:$0xff]
    %v6187 = vld [vmem:[%s194 + $0x180] sm:$0xff]
    %v6188 = vld [vmem:[%s194 + $0x188] sm:$0xff]
    %v6189 = vld [vmem:[%s194 + $0x190] sm:$0xff]
    %v6190 = vld [vmem:[%s194 + $0x198] sm:$0xff]
    %v6191 = vld [vmem:[%s194 + $0x1a0] sm:$0xff]
    %v6192 = vld [vmem:[%s194 + $0x1a8] sm:$0xff]
    %v6193 = vld [vmem:[%s194 + $0x1b0] sm:$0xff]
    %v6194 = vld [vmem:[%s194 + $0x1b8] sm:$0xff]
    %v6195 = vld [vmem:[%s194 + $0x1c0] sm:$0xff]
    %v6196 = vld [vmem:[%s194 + $0x1c8] sm:$0xff]
    %v6197 = vld [vmem:[%s194 + $0x1d0] sm:$0xff]
    %v6198 = vld [vmem:[%s194 + $0x1d8] sm:$0xff]
    %v6199 = vld [vmem:[%s194 + $0x1e0] sm:$0xff]
    %v6200 = vld [vmem:[%s194 + $0x1e8] sm:$0xff]
    %v6201 = vld [vmem:[%s194 + $0x1f0] sm:$0xff]
    %v6202 = vld [vmem:[%s194 + $0x1f8] sm:$0xff]
    %v6203 = vld [vmem:[%s194 + $0x200] sm:$0xff]
    %v6204 = vld [vmem:[%s194 + $0x208] sm:$0xff]
    %v6205 = vld [vmem:[%s194 + $0x210] sm:$0xff]
    %v6206 = vld [vmem:[%s194 + $0x218] sm:$0xff]
    %v6207 = vld [vmem:[%s194 + $0x220] sm:$0xff]
    %v6208 = vld [vmem:[%s194 + $0x228] sm:$0xff]
    %v6209 = vld [vmem:[%s194 + $0x230] sm:$0xff]
    %v6210 = vld [vmem:[%s194 + $0x238] sm:$0xff]
    %v6211 = vld [vmem:[%s194 + $0x240] sm:$0xff]
    %v6212 = vld [vmem:[%s194 + $0x248] sm:$0xff]
    %v6213 = vld [vmem:[%s194 + $0x250] sm:$0xff]
    %v6214 = vld [vmem:[%s194 + $0x258] sm:$0xff]
    %v6215 = vld [vmem:[%s194 + $0x260] sm:$0xff]
    %v6216 = vld [vmem:[%s194 + $0x268] sm:$0xff]
    %v6217 = vld [vmem:[%s194 + $0x270] sm:$0xff]
    %v6218 = vld [vmem:[%s194 + $0x278] sm:$0xff]
    %v6219 = vld [vmem:[%s194 + $0x280] sm:$0xff]
    %v6220 = vld [vmem:[%s194 + $0x288] sm:$0xff]
    %v6221 = vld [vmem:[%s194 + $0x290] sm:$0xff]
    %v6222 = vld [vmem:[%s194 + $0x298] sm:$0xff]
    %v6223 = vld [vmem:[%s194 + $0x2a0] sm:$0xff]
    %v6224 = vld [vmem:[%s194 + $0x2a8] sm:$0xff]
    %v6225 = vld [vmem:[%s194 + $0x2b0] sm:$0xff]
    %v6226 = vld [vmem:[%s194 + $0x2b8] sm:$0xff]
    %v6227 = vld [vmem:[%s194 + $0x2c0] sm:$0xff]
    %v6228 = vld [vmem:[%s194 + $0x2c8] sm:$0xff]
    %v6229 = vld [vmem:[%s194 + $0x2d0] sm:$0xff]
    %v6230 = vld [vmem:[%s194 + $0x2d8] sm:$0xff]
    %v6231 = vld [vmem:[%s194 + $0x2e0] sm:$0xff]
    %v6232 = vld [vmem:[%s194 + $0x2e8] sm:$0xff]
    %v6233 = vld [vmem:[%s194 + $0x2f0] sm:$0xff]
    %v6234 = vld [vmem:[%s194 + $0x2f8] sm:$0xff]
    %v6235 = vld [vmem:[%s194 + $0x300] sm:$0xff]
    %v6236 = vld [vmem:[%s194 + $0x308] sm:$0xff]
    %v6237 = vld [vmem:[%s194 + $0x310] sm:$0xff]
    %v6238 = vld [vmem:[%s194 + $0x318] sm:$0xff]
    %v6239 = vld [vmem:[%s194 + $0x320] sm:$0xff]
    %v6240 = vld [vmem:[%s194 + $0x328] sm:$0xff]
    %v6241 = vld [vmem:[%s194 + $0x330] sm:$0xff]
    %v6242 = vld [vmem:[%s194 + $0x338] sm:$0xff]
    %v6243 = vld [vmem:[%s194 + $0x340] sm:$0xff]
    %v6244 = vld [vmem:[%s194 + $0x348] sm:$0xff]
    %v6245 = vld [vmem:[%s194 + $0x350] sm:$0xff]
    %v6246 = vld [vmem:[%s194 + $0x358] sm:$0xff]
    %v6247 = vld [vmem:[%s194 + $0x360] sm:$0xff]
    %v6248 = vld [vmem:[%s194 + $0x368] sm:$0xff]
    %v6249 = vld [vmem:[%s194 + $0x370] sm:$0xff]
    %v6250 = vld [vmem:[%s194 + $0x378] sm:$0xff]
    %v6251 = vld [vmem:[%s194 + $0x380] sm:$0xff]
    %v6252 = vld [vmem:[%s194 + $0x388] sm:$0xff]
    %v6253 = vld [vmem:[%s194 + $0x390] sm:$0xff]
    %v6254 = vld [vmem:[%s194 + $0x398] sm:$0xff]
    %v6255 = vld [vmem:[%s194 + $0x3a0] sm:$0xff]
    %v6256 = vld [vmem:[%s194 + $0x3a8] sm:$0xff]
    %v6257 = vld [vmem:[%s194 + $0x3b0] sm:$0xff]
    %v6258 = vld [vmem:[%s194 + $0x3b8] sm:$0xff]
    %v6259 = vld [vmem:[%s194 + $0x3c0] sm:$0xff]
    %v6260 = vld [vmem:[%s194 + $0x3c8] sm:$0xff]
    %v6261 = vld [vmem:[%s194 + $0x3d0] sm:$0xff]
    %v6262 = vld [vmem:[%s194 + $0x3d8] sm:$0xff]
    %v6263 = vld [vmem:[%s194 + $0x3e0] sm:$0xff]
    %v6264 = vld [vmem:[%s194 + $0x3e8] sm:$0xff]
    %v6265 = vld [vmem:[%s194 + $0x3f0] sm:$0xff]
    %v6266 = vld [vmem:[%s194 + $0x3f8] sm:$0xff]
    %6267 = vmatprep.subr.bf16.mxu0 %v6140
    %6268 = vmatpush1.bf16.msra.mxu0 %v6139
    %6269 = vmatprep.subr.bf16.mxu0 %v6144
    %6270 = vmatpush1.bf16.msra.mxu0 %v6143
    %6271 = vmatprep.subr.bf16.mxu0 %v6148
    %6272 = vmatpush1.bf16.msra.mxu0 %v6147
    %6273 = vmatprep.subr.bf16.mxu0 %v6152
    %6274 = vmatpush1.bf16.msra.mxu0 %v6151
    %6275 = vmatprep.subr.bf16.mxu0 %v6156
    %6276 = vmatpush1.bf16.msra.mxu0 %v6155
    %6277 = vmatprep.subr.bf16.mxu0 %v6160
    %6278 = vmatpush1.bf16.msra.mxu0 %v6159
    %6279 = vmatprep.subr.bf16.mxu0 %v6164
    %6280 = vmatpush1.bf16.msra.mxu0 %v6163
    %6281 = vmatprep.subr.bf16.mxu0 %v6168
    %6282 = vmatpush1.bf16.msra.mxu0 %v6167
    %6283 = vmatprep.subr.bf16.mxu0 %v6172
    %6284 = vmatpush1.bf16.msra.mxu0 %v6171
    %6285 = vmatprep.subr.bf16.mxu0 %v6176
    %6286 = vmatpush1.bf16.msra.mxu0 %v6175
    %6287 = vmatprep.subr.bf16.mxu0 %v6180
    %6288 = vmatpush1.bf16.msra.mxu0 %v6179
    %6289 = vmatprep.subr.bf16.mxu0 %v6184
    %6290 = vmatpush1.bf16.msra.mxu0 %v6183
    %6291 = vmatprep.subr.bf16.mxu0 %v6188
    %6292 = vmatpush1.bf16.msra.mxu0 %v6187
    %6293 = vmatprep.subr.bf16.mxu0 %v6192
    %6294 = vmatpush1.bf16.msra.mxu0 %v6191
    %6295 = vmatprep.subr.bf16.mxu0 %v6196
    %6296 = vmatpush1.bf16.msra.mxu0 %v6195
    %6297 = vmatprep.subr.bf16.mxu0 %v6200
    %6298 = vmatpush1.bf16.msra.mxu0 %v6199
    %6299 = vmatprep.mubr.bf16.mxu0 %v6136
    %6300 = vmatmul.mubr.bf16.gmra.mrb[0].mxu0 %v6135
    %v6301 = vpop.f32.mrb[0].mxu0
    %v6302 = vadd.f32 0.0, %v6301
    %v6303 = vpop.f32.mrb[0].mxu0
    %v6304 = vadd.f32 0.0, %v6303
    %v6305 = vpop.f32.mrb[0].mxu0
    %v6306 = vpop.f32.mrb[0].mxu0
    %6307 = vdwg.mxu0
    %6308 = vmatprep.subr.bf16.mxu0 %v6204
    %6309 = vmatpush1.bf16.msra.mxu0 %v6203
    %6310 = vmatprep.subr.bf16.mxu0 %v6208
    %6311 = vmatpush1.bf16.msra.mxu0 %v6207
    %6312 = vmatprep.subr.bf16.mxu0 %v6212
    %6313 = vmatpush1.bf16.msra.mxu0 %v6211
    %6314 = vmatprep.subr.bf16.mxu0 %v6216
    %6315 = vmatpush1.bf16.msra.mxu0 %v6215
    %6316 = vmatprep.subr.bf16.mxu0 %v6220
    %6317 = vmatpush1.bf16.msra.mxu0 %v6219
    %6318 = vmatprep.subr.bf16.mxu0 %v6224
    %6319 = vmatpush1.bf16.msra.mxu0 %v6223
    %6320 = vmatprep.subr.bf16.mxu0 %v6228
    %6321 = vmatpush1.bf16.msra.mxu0 %v6227
    %6322 = vmatprep.subr.bf16.mxu0 %v6232
    %6323 = vmatpush1.bf16.msra.mxu0 %v6231
    %6324 = vmatprep.subr.bf16.mxu0 %v6236
    %6325 = vmatpush1.bf16.msra.mxu0 %v6235
    %6326 = vmatprep.subr.bf16.mxu0 %v6240
    %6327 = vmatpush1.bf16.msra.mxu0 %v6239
    %6328 = vmatprep.subr.bf16.mxu0 %v6244
    %6329 = vmatpush1.bf16.msra.mxu0 %v6243
    %6330 = vmatprep.subr.bf16.mxu0 %v6248
    %6331 = vmatpush1.bf16.msra.mxu0 %v6247
    %6332 = vmatprep.subr.bf16.mxu0 %v6252
    %6333 = vmatpush1.bf16.msra.mxu0 %v6251
    %6334 = vmatprep.subr.bf16.mxu0 %v6256
    %6335 = vmatpush1.bf16.msra.mxu0 %v6255
    %6336 = vmatprep.subr.bf16.mxu0 %v6260
    %6337 = vmatpush1.bf16.msra.mxu0 %v6259
    %6338 = vmatprep.subr.bf16.mxu0 %v6264
    %6339 = vmatpush1.bf16.msra.mxu0 %v6263
    %6340 = vmatprep.mubr.bf16.mxu0 %v6138
    %6341 = vmatmul.mubr.bf16.gmra.mrb[0].mxu0 %v6137
    %v6342 = vpop.f32.mrb[0].mxu0
    %v6343 = vadd.f32 %v6302, %v6342
    %v6344 = vpop.f32.mrb[0].mxu0
    %v6345 = vadd.f32 %v6304, %v6344
    %v6346 = vpop.f32.mrb[0].mxu0
    %v6347 = vpop.f32.mrb[0].mxu0
    %6348 = vdwg.mxu0
    %6349 = vmatprep.subr.bf16.mxu0 %v6142
    %6350 = vmatpush1.bf16.msra.mxu0 %v6141
    %6351 = vmatprep.subr.bf16.mxu0 %v6146
    %6352 = vmatpush1.bf16.msra.mxu0 %v6145
    %6353 = vmatprep.subr.bf16.mxu0 %v6150
    %6354 = vmatpush1.bf16.msra.mxu0 %v6149
    %6355 = vmatprep.subr.bf16.mxu0 %v6154
    %6356 = vmatpush1.bf16.msra.mxu0 %v6153
    %6357 = vmatprep.subr.bf16.mxu0 %v6158
    %6358 = vmatpush1.bf16.msra.mxu0 %v6157
    %6359 = vmatprep.subr.bf16.mxu0 %v6162
    %6360 = vmatpush1.bf16.msra.mxu0 %v6161
    %6361 = vmatprep.subr.bf16.mxu0 %v6166
    %6362 = vmatpush1.bf16.msra.mxu0 %v6165
    %6363 = vmatprep.subr.bf16.mxu0 %v6170
    %6364 = vmatpush1.bf16.msra.mxu0 %v6169
    %6365 = vmatprep.subr.bf16.mxu0 %v6174
    %6366 = vmatpush1.bf16.msra.mxu0 %v6173
    %6367 = vmatprep.subr.bf16.mxu0 %v6178
    %6368 = vmatpush1.bf16.msra.mxu0 %v6177
    %6369 = vmatprep.subr.bf16.mxu0 %v6182
    %6370 = vmatpush1.bf16.msra.mxu0 %v6181
    %6371 = vmatprep.subr.bf16.mxu0 %v6186
    %6372 = vmatpush1.bf16.msra.mxu0 %v6185
    %6373 = vmatprep.subr.bf16.mxu0 %v6190
    %6374 = vmatpush1.bf16.msra.mxu0 %v6189
    %6375 = vmatprep.subr.bf16.mxu0 %v6194
    %6376 = vmatpush1.bf16.msra.mxu0 %v6193
    %6377 = vmatprep.subr.bf16.mxu0 %v6198
    %6378 = vmatpush1.bf16.msra.mxu0 %v6197
    %6379 = vmatprep.subr.bf16.mxu0 %v6202
    %6380 = vmatpush1.bf16.msra.mxu0 %v6201
    %6381 = vmatprep.mubr.bf16.mxu0 %v6136
    %6382 = vmatmul.mubr.bf16.gmra.mrb[0].mxu0 %v6135
    %v6383 = vpop.f32.mrb[0].mxu0
    %v6384 = vadd.f32 0.0, %v6383
    %v6385 = vpop.f32.mrb[0].mxu0
    %v6386 = vadd.f32 0.0, %v6385
    %v6387 = vpop.f32.mrb[0].mxu0
    %v6388 = vpop.f32.mrb[0].mxu0
    %6389 = vdwg.mxu0
    %6390 = vmatprep.subr.bf16.mxu0 %v6206
    %6391 = vmatpush1.bf16.msra.mxu0 %v6205
    %6392 = vmatprep.subr.bf16.mxu0 %v6210
    %6393 = vmatpush1.bf16.msra.mxu0 %v6209
    %6394 = vmatprep.subr.bf16.mxu0 %v6214
    %6395 = vmatpush1.bf16.msra.mxu0 %v6213
    %6396 = vmatprep.subr.bf16.mxu0 %v6218
    %6397 = vmatpush1.bf16.msra.mxu0 %v6217
    %6398 = vmatprep.subr.bf16.mxu0 %v6222
    %6399 = vmatpush1.bf16.msra.mxu0 %v6221
    %6400 = vmatprep.subr.bf16.mxu0 %v6226
    %6401 = vmatpush1.bf16.msra.mxu0 %v6225
    %6402 = vmatprep.subr.bf16.mxu0 %v6230
    %6403 = vmatpush1.bf16.msra.mxu0 %v6229
    %6404 = vmatprep.subr.bf16.mxu0 %v6234
    %6405 = vmatpush1.bf16.msra.mxu0 %v6233
    %6406 = vmatprep.subr.bf16.mxu0 %v6238
    %6407 = vmatpush1.bf16.msra.mxu0 %v6237
    %6408 = vmatprep.subr.bf16.mxu0 %v6242
    %6409 = vmatpush1.bf16.msra.mxu0 %v6241
    %6410 = vmatprep.subr.bf16.mxu0 %v6246
    %6411 = vmatpush1.bf16.msra.mxu0 %v6245
    %6412 = vmatprep.subr.bf16.mxu0 %v6250
    %6413 = vmatpush1.bf16.msra.mxu0 %v6249
    %6414 = vmatprep.subr.bf16.mxu0 %v6254
    %6415 = vmatpush1.bf16.msra.mxu0 %v6253
    %6416 = vmatprep.subr.bf16.mxu0 %v6258
    %6417 = vmatpush1.bf16.msra.mxu0 %v6257
    %6418 = vmatprep.subr.bf16.mxu0 %v6262
    %6419 = vmatpush1.bf16.msra.mxu0 %v6261
    %6420 = vmatprep.subr.bf16.mxu0 %v6266
    %6421 = vmatpush1.bf16.msra.mxu0 %v6265
    %6422 = vmatprep.mubr.bf16.mxu0 %v6138
    %6423 = vmatmul.mubr.bf16.gmra.mrb[0].mxu0 %v6137
    %v6424 = vpop.f32.mrb[0].mxu0
    %v6425 = vadd.f32 %v6384, %v6424
    %v6426 = vpop.f32.mrb[0].mxu0
    %v6427 = vadd.f32 %v6386, %v6426
    %v6428 = vpop.f32.mrb[0].mxu0
    %v6429 = vpop.f32.mrb[0].mxu0
    %6430 = vdwg.mxu0
    %v6431 = vadd.f32 %v6125, %v6343
    %v6432 = vadd.f32 %v6126, %v6345
    %v6433 = vadd.f32 %v6127, %v6425
    %v6434 = vadd.f32 %v6128, %v6427
    %v6435 = vld [vmem:[#allocation17] sm:$0xf]
    %v6437 = vlaneseq
    %v6438 = vshrl.u32 %v6437, 7
    %v6439 = vsub.s32 0, %v6438
    %v6440 = vrot.slane %v6435, %v6439
    %v6441 = vlaneseq
    %v6442 = vshrl.u32 %v6441, 7
    %v6443 = vsub.s32 1, %v6442
    %v6444 = vrot.slane %v6435, %v6443
    %v6445 = vlaneseq
    %v6446 = vshrl.u32 %v6445, 7
    %v6447 = vsub.s32 2, %v6446
    %v6448 = vrot.slane %v6435, %v6447
    %v6449 = vlaneseq
    %v6450 = vshrl.u32 %v6449, 7
    %v6451 = vsub.s32 3, %v6450
    %v6452 = vrot.slane %v6435, %v6451
    %v6457 = vadd.f32 %v6431, %v6440
    %v6458 = vadd.f32 %v6432, %v6444
    %v6459 = vadd.f32 %v6433, %v6448
    %v6460 = vadd.f32 %v6434, %v6452
    %v6461 = vxor.u32 %v6457, 2147483648
    %v6462 = vxor.u32 %v6458, 2147483648
    %v6463 = vxor.u32 %v6459, 2147483648
    %v6464 = vxor.u32 %v6460, 2147483648
    %v6465 = vmul.f32 %v6461, 1.442695
    %v6466 = vpow.pop %v6465
    %v6467 = vmul.f32 %v6462, 1.442695
    %v6468 = vpow.pop %v6467
    %v6469 = vmul.f32 %v6463, 1.442695
    %v6470 = vpow.pop %v6469
    %v6471 = vmul.f32 %v6464, 1.442695
    %v6472 = vpow.pop %v6471
    %v6473 = vadd.f32 %v6466, 1.0
    %v6474 = vadd.f32 %v6468, 1.0
    %v6475 = vadd.f32 %v6470, 1.0
    %v6476 = vadd.f32 %v6472, 1.0
    %v6477 = vrcp.pop %v6473
    %v6478 = vmul.f32 1.0, %v6477
    %v6479 = vrcp.pop %v6474
    %v6480 = vmul.f32 1.0, %v6479
    %v6481 = vrcp.pop %v6475
    %v6482 = vmul.f32 1.0, %v6481
    %v6483 = vrcp.pop %v6476
    %v6484 = vmul.f32 1.0, %v6483
    %v6485 = vmul.f32 %v6457, %v6478
    %v6486 = vmul.f32 %v6458, %v6480
    %v6487 = vmul.f32 %v6459, %v6482
    %v6488 = vmul.f32 %v6460, %v6484
    %v6489 = vpack.c.bf16 %v6485, %v6485
    %v6490 = vpack.c.bf16 %v6486, %v6486
    %v6491 = vpack.c.bf16 %v6487, %v6487
    %v6492 = vpack.c.bf16 %v6488, %v6488
    %v6493 = vld [vmem:[%s11] sm:$0xf]
    %v6494 = vld [vmem:[%s11 + $0x4] sm:$0xf]
    %v6495 = vld [vmem:[%s11 + $0x8] sm:$0xf]
    %v6496 = vld [vmem:[%s11 + $0xc] sm:$0xf]
    %v6497 = vld [vmem:[%s11 + $0x10] sm:$0xf]
    %v6498 = vld [vmem:[%s11 + $0x14] sm:$0xf]
    %v6499 = vld [vmem:[%s11 + $0x18] sm:$0xf]
    %v6500 = vld [vmem:[%s11 + $0x1c] sm:$0xf]
    %v6501 = vld [vmem:[%s11 + $0x20] sm:$0xf]
    %v6502 = vld [vmem:[%s11 + $0x24] sm:$0xf]
    %v6503 = vld [vmem:[%s11 + $0x28] sm:$0xf]
    %v6504 = vld [vmem:[%s11 + $0x2c] sm:$0xf]
    %v6505 = vld [vmem:[%s11 + $0x30] sm:$0xf]
    %v6506 = vld [vmem:[%s11 + $0x34] sm:$0xf]
    %v6507 = vld [vmem:[%s11 + $0x38] sm:$0xf]
    %v6508 = vld [vmem:[%s11 + $0x3c] sm:$0xf]
    %v6509 = vld [vmem:[%s11 + $0x40] sm:$0xf]
    %v6510 = vld [vmem:[%s11 + $0x44] sm:$0xf]
    %v6511 = vld [vmem:[%s11 + $0x48] sm:$0xf]
    %v6512 = vld [vmem:[%s11 + $0x4c] sm:$0xf]
    %v6513 = vld [vmem:[%s11 + $0x50] sm:$0xf]
    %v6514 = vld [vmem:[%s11 + $0x54] sm:$0xf]
    %v6515 = vld [vmem:[%s11 + $0x58] sm:$0xf]
    %v6516 = vld [vmem:[%s11 + $0x5c] sm:$0xf]
    %v6517 = vld [vmem:[%s11 + $0x60] sm:$0xf]
    %v6518 = vld [vmem:[%s11 + $0x64] sm:$0xf]
    %v6519 = vld [vmem:[%s11 + $0x68] sm:$0xf]
    %v6520 = vld [vmem:[%s11 + $0x6c] sm:$0xf]
    %v6521 = vld [vmem:[%s11 + $0x70] sm:$0xf]
    %v6522 = vld [vmem:[%s11 + $0x74] sm:$0xf]
    %v6523 = vld [vmem:[%s11 + $0x78] sm:$0xf]
    %v6524 = vld [vmem:[%s11 + $0x7c] sm:$0xf]
    %v6525 = vld [vmem:[%s11 + $0x80] sm:$0xf]
    %v6526 = vld [vmem:[%s11 + $0x84] sm:$0xf]
    %v6527 = vld [vmem:[%s11 + $0x88] sm:$0xf]
    %v6528 = vld [vmem:[%s11 + $0x8c] sm:$0xf]
    %v6529 = vld [vmem:[%s11 + $0x90] sm:$0xf]
    %v6530 = vld [vmem:[%s11 + $0x94] sm:$0xf]
    %v6531 = vld [vmem:[%s11 + $0x98] sm:$0xf]
    %v6532 = vld [vmem:[%s11 + $0x9c] sm:$0xf]
    %v6533 = vld [vmem:[%s11 + $0xa0] sm:$0xf]
    %v6534 = vld [vmem:[%s11 + $0xa4] sm:$0xf]
    %v6535 = vld [vmem:[%s11 + $0xa8] sm:$0xf]
    %v6536 = vld [vmem:[%s11 + $0xac] sm:$0xf]
    %v6537 = vld [vmem:[%s11 + $0xb0] sm:$0xf]
    %v6538 = vld [vmem:[%s11 + $0xb4] sm:$0xf]
    %v6539 = vld [vmem:[%s11 + $0xb8] sm:$0xf]
    %v6540 = vld [vmem:[%s11 + $0xbc] sm:$0xf]
    %v6541 = vld [vmem:[%s11 + $0xc0] sm:$0xf]
    %v6542 = vld [vmem:[%s11 + $0xc4] sm:$0xf]
    %v6543 = vld [vmem:[%s11 + $0xc8] sm:$0xf]
    %v6544 = vld [vmem:[%s11 + $0xcc] sm:$0xf]
    %v6545 = vld [vmem:[%s11 + $0xd0] sm:$0xf]
    %v6546 = vld [vmem:[%s11 + $0xd4] sm:$0xf]
    %v6547 = vld [vmem:[%s11 + $0xd8] sm:$0xf]
    %v6548 = vld [vmem:[%s11 + $0xdc] sm:$0xf]
    %v6549 = vld [vmem:[%s11 + $0xe0] sm:$0xf]
    %v6550 = vld [vmem:[%s11 + $0xe4] sm:$0xf]
    %v6551 = vld [vmem:[%s11 + $0xe8] sm:$0xf]
    %v6552 = vld [vmem:[%s11 + $0xec] sm:$0xf]
    %v6553 = vld [vmem:[%s11 + $0xf0] sm:$0xf]
    %v6554 = vld [vmem:[%s11 + $0xf4] sm:$0xf]
    %v6555 = vld [vmem:[%s11 + $0xf8] sm:$0xf]
    %v6556 = vld [vmem:[%s11 + $0xfc] sm:$0xf]
    %v6557 = vld [vmem:[#allocation18] sm:$0x1]
    %v6559 = vlaneseq
    %v6560 = vshrl.u32 %v6559, 7
    %v6561 = vsub.s32 0, %v6560
    %v6562 = vrot.slane %v6557, %v6561
    %v6628 = vunpack.c.l.b16 %v6493
    %v6629 = vunpack.c.l.b16 %v6494
    %v6630 = vunpack.c.l.b16 %v6495
    %v6631 = vunpack.c.l.b16 %v6496
    %v6632 = vunpack.c.l.b16 %v6497
    %v6633 = vunpack.c.l.b16 %v6498
    %v6634 = vunpack.c.l.b16 %v6499
    %v6635 = vunpack.c.l.b16 %v6500
    %v6636 = vunpack.c.l.b16 %v6501
    %v6637 = vunpack.c.l.b16 %v6502
    %v6638 = vunpack.c.l.b16 %v6503
    %v6639 = vunpack.c.l.b16 %v6504
    %v6640 = vunpack.c.l.b16 %v6505
    %v6641 = vunpack.c.l.b16 %v6506
    %v6642 = vunpack.c.l.b16 %v6507
    %v6643 = vunpack.c.l.b16 %v6508
    %v6644 = vunpack.c.l.b16 %v6509
    %v6645 = vunpack.c.l.b16 %v6510
    %v6646 = vunpack.c.l.b16 %v6511
    %v6647 = vunpack.c.l.b16 %v6512
    %v6648 = vunpack.c.l.b16 %v6513
    %v6649 = vunpack.c.l.b16 %v6514
    %v6650 = vunpack.c.l.b16 %v6515
    %v6651 = vunpack.c.l.b16 %v6516
    %v6652 = vunpack.c.l.b16 %v6517
    %v6653 = vunpack.c.l.b16 %v6518
    %v6654 = vunpack.c.l.b16 %v6519
    %v6655 = vunpack.c.l.b16 %v6520
    %v6656 = vunpack.c.l.b16 %v6521
    %v6657 = vunpack.c.l.b16 %v6522
    %v6658 = vunpack.c.l.b16 %v6523
    %v6659 = vunpack.c.l.b16 %v6524
    %v6660 = vunpack.c.l.b16 %v6525
    %v6661 = vunpack.c.l.b16 %v6526
    %v6662 = vunpack.c.l.b16 %v6527
    %v6663 = vunpack.c.l.b16 %v6528
    %v6664 = vunpack.c.l.b16 %v6529
    %v6665 = vunpack.c.l.b16 %v6530
    %v6666 = vunpack.c.l.b16 %v6531
    %v6667 = vunpack.c.l.b16 %v6532
    %v6668 = vunpack.c.l.b16 %v6533
    %v6669 = vunpack.c.l.b16 %v6534
    %v6670 = vunpack.c.l.b16 %v6535
    %v6671 = vunpack.c.l.b16 %v6536
    %v6672 = vunpack.c.l.b16 %v6537
    %v6673 = vunpack.c.l.b16 %v6538
    %v6674 = vunpack.c.l.b16 %v6539
    %v6675 = vunpack.c.l.b16 %v6540
    %v6676 = vunpack.c.l.b16 %v6541
    %v6677 = vunpack.c.l.b16 %v6542
    %v6678 = vunpack.c.l.b16 %v6543
    %v6679 = vunpack.c.l.b16 %v6544
    %v6680 = vunpack.c.l.b16 %v6545
    %v6681 = vunpack.c.l.b16 %v6546
    %v6682 = vunpack.c.l.b16 %v6547
    %v6683 = vunpack.c.l.b16 %v6548
    %v6684 = vunpack.c.l.b16 %v6549
    %v6685 = vunpack.c.l.b16 %v6550
    %v6686 = vunpack.c.l.b16 %v6551
    %v6687 = vunpack.c.l.b16 %v6552
    %v6688 = vunpack.c.l.b16 %v6553
    %v6689 = vunpack.c.l.b16 %v6554
    %v6690 = vunpack.c.l.b16 %v6555
    %v6691 = vunpack.c.l.b16 %v6556
    %v6692 = vpack.c.b16 %v6629, %v6628
    %v6693 = vpack.c.b16 %v6631, %v6630
    %v6694 = vpack.c.b16 %v6633, %v6632
    %v6695 = vpack.c.b16 %v6635, %v6634
    %v6696 = vpack.c.b16 %v6637, %v6636
    %v6697 = vpack.c.b16 %v6639, %v6638
    %v6698 = vpack.c.b16 %v6641, %v6640
    %v6699 = vpack.c.b16 %v6643, %v6642
    %v6700 = vpack.c.b16 %v6645, %v6644
    %v6701 = vpack.c.b16 %v6647, %v6646
    %v6702 = vpack.c.b16 %v6649, %v6648
    %v6703 = vpack.c.b16 %v6651, %v6650
    %v6704 = vpack.c.b16 %v6653, %v6652
    %v6705 = vpack.c.b16 %v6655, %v6654
    %v6706 = vpack.c.b16 %v6657, %v6656
    %v6707 = vpack.c.b16 %v6659, %v6658
    %v6708 = vpack.c.b16 %v6661, %v6660
    %v6709 = vpack.c.b16 %v6663, %v6662
    %v6710 = vpack.c.b16 %v6665, %v6664
    %v6711 = vpack.c.b16 %v6667, %v6666
    %v6712 = vpack.c.b16 %v6669, %v6668
    %v6713 = vpack.c.b16 %v6671, %v6670
    %v6714 = vpack.c.b16 %v6673, %v6672
    %v6715 = vpack.c.b16 %v6675, %v6674
    %v6716 = vpack.c.b16 %v6677, %v6676
    %v6717 = vpack.c.b16 %v6679, %v6678
    %v6718 = vpack.c.b16 %v6681, %v6680
    %v6719 = vpack.c.b16 %v6683, %v6682
    %v6720 = vpack.c.b16 %v6685, %v6684
    %v6721 = vpack.c.b16 %v6687, %v6686
    %v6722 = vpack.c.b16 %v6689, %v6688
    %v6723 = vpack.c.b16 %v6691, %v6690
    %6756 = vmatprep.subr.bf16.mxu0 0
    %6757 = vmatpush1.bf16.msra.mxu0 %v6692
    %6758 = vmatprep.subr.bf16.mxu0 0
    %6759 = vmatpush1.bf16.msra.mxu0 %v6693
    %6760 = vmatprep.subr.bf16.mxu0 0
    %6761 = vmatpush1.bf16.msra.mxu0 %v6694
    %6762 = vmatprep.subr.bf16.mxu0 0
    %6763 = vmatpush1.bf16.msra.mxu0 %v6695
    %6764 = vmatprep.subr.bf16.mxu0 0
    %6765 = vmatpush1.bf16.msra.mxu0 %v6696
    %6766 = vmatprep.subr.bf16.mxu0 0
    %6767 = vmatpush1.bf16.msra.mxu0 %v6697
    %6768 = vmatprep.subr.bf16.mxu0 0
    %6769 = vmatpush1.bf16.msra.mxu0 %v6698
    %6770 = vmatprep.subr.bf16.mxu0 0
    %6771 = vmatpush1.bf16.msra.mxu0 %v6699
    %6772 = vmatprep.subr.bf16.mxu0 0
    %6773 = vmatpush1.bf16.msra.mxu0 %v6700
    %6774 = vmatprep.subr.bf16.mxu0 0
    %6775 = vmatpush1.bf16.msra.mxu0 %v6701
    %6776 = vmatprep.subr.bf16.mxu0 0
    %6777 = vmatpush1.bf16.msra.mxu0 %v6702
    %6778 = vmatprep.subr.bf16.mxu0 0
    %6779 = vmatpush1.bf16.msra.mxu0 %v6703
    %6780 = vmatprep.subr.bf16.mxu0 0
    %6781 = vmatpush1.bf16.msra.mxu0 %v6704
    %6782 = vmatprep.subr.bf16.mxu0 0
    %6783 = vmatpush1.bf16.msra.mxu0 %v6705
    %6784 = vmatprep.subr.bf16.mxu0 0
    %6785 = vmatpush1.bf16.msra.mxu0 %v6706
    %6786 = vmatprep.subr.bf16.mxu0 0
    %6787 = vmatpush1.bf16.msra.mxu0 %v6707
    %6788 = vmatprep.mubr.bf16.mxu0 %v6490
    %6789 = vmatmul.mubr.bf16.gmra.mrb[0].mxu0 %v6489
    %v6790 = vpop.f32.mrb[0].mxu0
    %v6791 = vadd.f32 %v6562, %v6790
    %v6792 = vpop.f32.mrb[0].mxu0
    %v6793 = vpop.f32.mrb[0].mxu0
    %v6794 = vpop.f32.mrb[0].mxu0
    %6795 = vdwg.mxu0
    %6796 = vmatprep.subr.bf16.mxu0 0
    %6797 = vmatpush1.bf16.msra.mxu0 %v6708
    %6798 = vmatprep.subr.bf16.mxu0 0
    %6799 = vmatpush1.bf16.msra.mxu0 %v6709
    %6800 = vmatprep.subr.bf16.mxu0 0
    %6801 = vmatpush1.bf16.msra.mxu0 %v6710
    %6802 = vmatprep.subr.bf16.mxu0 0
    %6803 = vmatpush1.bf16.msra.mxu0 %v6711
    %6804 = vmatprep.subr.bf16.mxu0 0
    %6805 = vmatpush1.bf16.msra.mxu0 %v6712
    %6806 = vmatprep.subr.bf16.mxu0 0
    %6807 = vmatpush1.bf16.msra.mxu0 %v6713
    %6808 = vmatprep.subr.bf16.mxu0 0
    %6809 = vmatpush1.bf16.msra.mxu0 %v6714
    %6810 = vmatprep.subr.bf16.mxu0 0
    %6811 = vmatpush1.bf16.msra.mxu0 %v6715
    %6812 = vmatprep.subr.bf16.mxu0 0
    %6813 = vmatpush1.bf16.msra.mxu0 %v6716
    %6814 = vmatprep.subr.bf16.mxu0 0
    %6815 = vmatpush1.bf16.msra.mxu0 %v6717
    %6816 = vmatprep.subr.bf16.mxu0 0
    %6817 = vmatpush1.bf16.msra.mxu0 %v6718
    %6818 = vmatprep.subr.bf16.mxu0 0
    %6819 = vmatpush1.bf16.msra.mxu0 %v6719
    %6820 = vmatprep.subr.bf16.mxu0 0
    %6821 = vmatpush1.bf16.msra.mxu0 %v6720
    %6822 = vmatprep.subr.bf16.mxu0 0
    %6823 = vmatpush1.bf16.msra.mxu0 %v6721
    %6824 = vmatprep.subr.bf16.mxu0 0
    %6825 = vmatpush1.bf16.msra.mxu0 %v6722
    %6826 = vmatprep.subr.bf16.mxu0 0
    %6827 = vmatpush1.bf16.msra.mxu0 %v6723
    %6828 = vmatprep.mubr.bf16.mxu0 %v6492
    %6829 = vmatmul.mubr.bf16.gmra.mrb[0].mxu0 %v6491
    %v6830 = vpop.f32.mrb[0].mxu0
    %v6831 = vadd.f32 %v6791, %v6830
    %v6832 = vpop.f32.mrb[0].mxu0
    %v6833 = vpop.f32.mrb[0].mxu0
    %v6834 = vpop.f32.mrb[0].mxu0
    %6835 = vdwg.mxu0
    %v6836 = vxor.u32 %v6831, 2147483648
    %v6837 = vmul.f32 %v6836, 1.442695
    %v6838 = vpow.pop %v6837
    %v6839 = vadd.f32 %v6838, 1.0
    %v6840 = vrcp.pop %v6839
    %v6841 = vmul.f32 1.0, %v6840
    %v6842 = vmul.f32 %v6831, %v6841
    %v6843 = vpack.c.bf16 %v6842, %v6842
    %v6844 = vld [vmem:[%s13] sm:$0xf]
    %v6845 = vld [vmem:[%s13 + $0x4] sm:$0xf]
    %v6846 = vld [vmem:[%s13 + $0x8] sm:$0xf]
    %v6847 = vld [vmem:[%s13 + $0xc] sm:$0xf]
    %v6848 = vld [vmem:[%s13 + $0x10] sm:$0xf]
    %v6849 = vld [vmem:[%s13 + $0x14] sm:$0xf]
    %v6850 = vld [vmem:[%s13 + $0x18] sm:$0xf]
    %v6851 = vld [vmem:[%s13 + $0x1c] sm:$0xf]
    %v6852 = vld [vmem:[#allocation20] sm:$0x1]
    %v6854 = vlaneseq
    %v6855 = vshrl.u32 %v6854, 7
    %v6856 = vsub.s32 0, %v6855
    %v6857 = vrot.slane %v6852, %v6856
    %v6867 = vunpack.c.l.b16 %v6844
    %v6868 = vunpack.c.l.b16 %v6845
    %v6869 = vunpack.c.l.b16 %v6846
    %v6870 = vunpack.c.l.b16 %v6847
    %v6871 = vunpack.c.l.b16 %v6848
    %v6872 = vunpack.c.l.b16 %v6849
    %v6873 = vunpack.c.l.b16 %v6850
    %v6874 = vunpack.c.l.b16 %v6851
    %v6875 = vpack.c.b16 %v6868, %v6867
    %v6876 = vpack.c.b16 %v6870, %v6869
    %v6877 = vpack.c.b16 %v6872, %v6871
    %v6878 = vpack.c.b16 %v6874, %v6873
    %v6884 = vsel %vm4374, %v6843, 0
    %6886 = vmatprep.subr.bf16.mxu0 0
    %6887 = vmatpush1.bf16.msra.mxu0 %v6875
    %6888 = vmatprep.subr.bf16.mxu0 0
    %6889 = vmatpush1.bf16.msra.mxu0 %v6876
    %6890 = vmatprep.subr.bf16.mxu0 0
    %6891 = vmatpush1.bf16.msra.mxu0 %v6877
    %6892 = vmatprep.subr.bf16.mxu0 0
    %6893 = vmatpush1.bf16.msra.mxu0 %v6878
    %6894 = vmatprep.subr.bf16.mxu0 0
    %6895 = vmatpush1.bf16.msra.mxu0 0
    %6896 = vmatprep.subr.bf16.mxu0 0
    %6897 = vmatpush1.bf16.msra.mxu0 0
    %6898 = vmatprep.subr.bf16.mxu0 0
    %6899 = vmatpush1.bf16.msra.mxu0 0
    %6900 = vmatprep.subr.bf16.mxu0 0
    %6901 = vmatpush1.bf16.msra.mxu0 0
    %6902 = vmatprep.subr.bf16.mxu0 0
    %6903 = vmatpush1.bf16.msra.mxu0 0
    %6904 = vmatprep.subr.bf16.mxu0 0
    %6905 = vmatpush1.bf16.msra.mxu0 0
    %6906 = vmatprep.subr.bf16.mxu0 0
    %6907 = vmatpush1.bf16.msra.mxu0 0
    %6908 = vmatprep.subr.bf16.mxu0 0
    %6909 = vmatpush1.bf16.msra.mxu0 0
    %6910 = vmatprep.subr.bf16.mxu0 0
    %6911 = vmatpush1.bf16.msra.mxu0 0
    %6912 = vmatprep.subr.bf16.mxu0 0
    %6913 = vmatpush1.bf16.msra.mxu0 0
    %6914 = vmatprep.subr.bf16.mxu0 0
    %6915 = vmatpush1.bf16.msra.mxu0 0
    %6916 = vmatprep.subr.bf16.mxu0 0
    %6917 = vmatpush1.bf16.msra.mxu0 0
    %6918 = vmatprep.mubr.bf16.mxu0 0
    %6919 = vmatmul.mubr.bf16.gmra.mrb[0].mxu0 %v6884
    %v6920 = vpop.f32.mrb[0].mxu0
    %v6921 = vadd.f32 %v6857, %v6920
    %v6922 = vpop.f32.mrb[0].mxu0
    %v6923 = vpop.f32.mrb[0].mxu0
    %v6924 = vpop.f32.mrb[0].mxu0
    %6925 = vdwg.mxu0
    %vm6926 = vcmask 222208
    %6927 = vst.msk [vmem:[#allocation21] sm:$0x3] %vm6926, %v6921
    // Predicated region
    $region94: #{conv1d_model_forward.1} parent=1 // pred_check
      _
    $region95: #{conv1d_model_forward.1} parent=1 // pred_check_branch
      %6929 = sbr.rel (0) target = $region97
    $region96: #{conv1d_model_forward.1} parent=1 // pred_region
      %s6931 = ssub.s32 32, 32
      %6932 = vsyncadd [#allocation8], %s6931
      %s6934 = sshll.u32 [#allocation21], 4
      %s6935 = int_to_ptr.vmem [resolvable:$true] %s6934
      %6937 = dma.vmem_to_hbm [thread:$0]  %s6935, 32, %s15, [#allocation8]
    $region97: #{conv1d_model_forward.1} parent=1 // pred_fallthru
      _
    // Predicated region
    $region98: #{conv1d_model_forward.1} parent=1 // pred_check
      _
    $region99: #{conv1d_model_forward.1} parent=1 // pred_check_branch
      %6939 = sbr.rel (0) target = $region101
    $region100: #{conv1d_model_forward.1} parent=1 // pred_region
      %6940 = dma.done [#allocation8], 32
    $region101: #{conv1d_model_forward.1} parent=1 // pred_fallthru
      _
    %6941 = vsyncpa [#allocation7], 1
    %6942 = vsyncpa [#allocation10], 1
    %6943 = vsyncpa [#allocation13], 1
    %6944 = vsyncpa [#allocation16], 1
    %6945 = vsyncpa [#allocation19], 1
    %6946 = vsyncpa [#allocation8], 1
  %6947 = vsyncmov [#allocation5]
  %s6948 = vpop.sfrf %6947
  %p6949 = scmp.eq.s32.totalorder %s6948, 0
  %p6950 = pneg %p6949
  %6952 = shalt.err (%p6950)
  %s6953 = scalar_lea.sflag [#allocation5], 1
  %6954 = vsyncmov %s6953
  %s6955 = vpop.sfrf %6954
  %p6956 = scmp.eq.s32.totalorder %s6955, 0
  %p6957 = pneg %p6956
  %6959 = shalt.err (%p6957)

</llo_original>
